<compile_context>
chip_gen: v6e
topology: v6e:2x2x1
jax: 0.10.0
libtpu: 0.0.40
codegen_flags: <defaults>
</compile_context>

<pallas_src>
import functools

import jax
import jax.numpy as jnp
from jax.experimental import pallas as pl
from jax.experimental.pallas import tpu as pltpu


# ----------------------------------------------------------------------------
# Fused Pallas kernel
# ----------------------------------------------------------------------------
def _fused_kernel(tok_ref, mask_ref, embtbl_ref,
                  convw_ref, convb_ref, fcw_ref, fcb_ref,
                  wih1_ref, whh1_ref, b1_ref,
                  wih2_ref, whh2_ref, b2_ref,
                  linw_ref, linb_ref, smaxw_ref, smaxb_ref,
                  out_ref,
                  o1f_ref, o1b_ref, o2f_ref, o2b_ref,
                  *, S, B, Tw, H, Ks):
    N = S * B
    V = embtbl_ref.shape[0]

    # ---- Embedding: one-hot matmul; rows are word-major (row = w*N + n) ----
    ids = tok_ref[...]                                         # (Tw*N, 1) int32
    iota = jax.lax.broadcasted_iota(jnp.int32, (Tw * N, V), 1)
    onehot = (iota == ids).astype(jnp.float32)                 # (Tw*N, V)
    emb = jnp.dot(onehot, embtbl_ref[...],
                  preferred_element_type=jnp.float32)          # (Tw*N, C)

    mask = mask_ref[...]                                       # (N, 1)

    # ---- CNN: per-tap projections (9 matmuls), shifted add + ReLU + maxpool --
    n_taps = sum(Ks)
    P = [jnp.dot(emb, convw_ref[j], preferred_element_type=jnp.float32)
         for j in range(n_taps)]                               # each (Tw*N, F)
    pooled = []
    off = 0
    for ci, K in enumerate(Ks):
        b_c = convb_ref[ci]                                    # (1, F)
        m = None
        for t in range(Tw - K + 1):
            acc = P[off][t * N:(t + 1) * N, :]
            for k in range(1, K):
                acc = acc + P[off + k][(t + k) * N:(t + k + 1) * N, :]
            acc = jnp.maximum(acc + b_c, 0.0)                  # ReLU
            m = acc if m is None else jnp.maximum(m, acc)      # max over time
        pooled.append(m)                                       # (N, F)
        off += K

    # ---- FC over concat(pooled) as partial matmuls, ReLU, umask ----
    feat = fcb_ref[...]                                        # (1, cnn_out)
    for ci in range(len(Ks)):
        feat = feat + jnp.dot(pooled[ci], fcw_ref[ci],
                              preferred_element_type=jnp.float32)
    feat = jnp.maximum(feat, 0.0) * mask                       # (N, cnn_out)

    # ---- Fused fwd+bwd LSTM layer (x@Wih hoisted; one 256-wide matmul/step) --
    def bilstm(gates_in, whh_ref, of_ref, ob_ref):
        # gates_in: (N, 8H), bias already folded in.  Lanes [0,4H) = forward
        # gates (i,f,g,o), lanes [4H,8H) = backward gates.
        whh = whh_ref[...]                                     # (H, 8H)
        h = jnp.zeros((2 * B, H), jnp.float32)                 # rows 0:B fwd, B:2B bwd
        c = jnp.zeros((2 * B, H), jnp.float32)
        for t in range(S):
            r = S - 1 - t
            R = jnp.dot(h, whh, preferred_element_type=jnp.float32)   # (2B, 8H)
            gf = gates_in[t * B:(t + 1) * B, 0:4 * H] + R[0:B, 0:4 * H]
            gb = gates_in[r * B:(r + 1) * B, 4 * H:8 * H] + R[B:2 * B, 4 * H:8 * H]
            g = jnp.concatenate([gf, gb], axis=0)              # (2B, 4H)
            i_g = jax.nn.sigmoid(g[:, 0:H])
            f_g = jax.nn.sigmoid(g[:, H:2 * H])
            g_g = jnp.tanh(g[:, 2 * H:3 * H])
            o_g = jax.nn.sigmoid(g[:, 3 * H:4 * H])
            c = f_g * c + i_g * g_g
            h = o_g * jnp.tanh(c)
            of_ref[t * B:(t + 1) * B, :] = h[0:B, :]           # fwd output, time t
            ob_ref[r * B:(r + 1) * B, :] = h[B:2 * B, :]       # bwd output, time r

    # Layer 1
    gi1 = jnp.dot(feat, wih1_ref[...],
                  preferred_element_type=jnp.float32) + b1_ref[...]    # (N, 8H)
    bilstm(gi1, whh1_ref, o1f_ref, o1b_ref)

    # Layer 2 (input = [h1_f | h1_b] via partial matmuls; no concatenation)
    x2f = o1f_ref[...]
    x2b = o1b_ref[...]
    wih2 = wih2_ref[...]                                       # (2H, 8H)
    gi2 = (jnp.dot(x2f, wih2[0:H, :], preferred_element_type=jnp.float32)
           + jnp.dot(x2b, wih2[H:2 * H, :], preferred_element_type=jnp.float32)
           + b2_ref[...])
    bilstm(gi2, whh2_ref, o2f_ref, o2b_ref)

    # ---- Head: *umask, Linear+ReLU (partial matmuls), smax_fc, log_softmax ---
    hf = o2f_ref[...] * mask
    hb = o2b_ref[...] * mask
    linw = linw_ref[...]                                       # (2H, D_h)
    hid = jnp.maximum(
        jnp.dot(hf, linw[0:H, :], preferred_element_type=jnp.float32)
        + jnp.dot(hb, linw[H:2 * H, :], preferred_element_type=jnp.float32)
        + linb_ref[...], 0.0)                                  # (N, D_h)
    logits = (jnp.dot(hid, smaxw_ref[...], preferred_element_type=jnp.float32)
              + smaxb_ref[...])                                # (N, n_classes)
    mx = jnp.max(logits, axis=-1, keepdims=True)
    z = logits - mx
    lse = jnp.log(jnp.sum(jnp.exp(z), axis=-1, keepdims=True))
    out_ref[...] = z - lse


# ----------------------------------------------------------------------------
# pallas_call wrapper (single launch for the whole forward)
# ----------------------------------------------------------------------------
def _full_spec(shape):
    nd = len(shape)
    return pl.BlockSpec(shape, lambda i, _nd=nd: (0,) * _nd)


def end2end_forward(tokens, umask, p):
    S, B, Tw = tokens.shape
    N = S * B
    H = p["l1f_whh"].shape[0]
    F = p["conv2_w"].shape[-1]
    n_classes = p["smax_w"].shape[-1]
    Ks = (2, 3, 4)

    # Word-major flat token ids: row = w*N + (s*B + b).
    tok_wm = jnp.transpose(tokens, (2, 0, 1)).reshape(Tw * N, 1).astype(jnp.int32)
    # umask is (batch, seq_len); flat mask row n = s*B + b -> umask[b, s].
    mask_flat = umask.T.reshape(N, 1).astype(jnp.float32)

    # Pack weights (in practice this would be done once ahead of time).
    convw = jnp.concatenate([p["conv2_w"], p["conv3_w"], p["conv4_w"]], axis=0)  # (9,C,F)
    convb = jnp.stack([p["conv2_b"], p["conv3_b"], p["conv4_b"]], axis=0)        # (3,1,F)
    fcw = p["fc_w"].reshape(len(Ks), F, -1)                                      # (3,F,out)
    wih1 = jnp.concatenate([p["l1f_wih"], p["l1b_wih"]], axis=1)   # (cnn_out, 8H)
    whh1 = jnp.concatenate([p["l1f_whh"], p["l1b_whh"]], axis=1)   # (H, 8H)
    b1 = jnp.concatenate([p["l1f_b"], p["l1b_b"]], axis=1)         # (1, 8H)
    wih2 = jnp.concatenate([p["l2f_wih"], p["l2b_wih"]], axis=1)   # (2H, 8H)
    whh2 = jnp.concatenate([p["l2f_whh"], p["l2b_whh"]], axis=1)   # (H, 8H)
    b2 = jnp.concatenate([p["l2f_b"], p["l2b_b"]], axis=1)         # (1, 8H)

    args = (tok_wm, mask_flat, p["emb"], convw, convb, fcw, p["fc_b"],
            wih1, whh1, b1, wih2, whh2, b2,
            p["lin_w"], p["lin_b"], p["smax_w"], p["smax_b"])

    kernel = functools.partial(_fused_kernel, S=S, B=B, Tw=Tw, H=H, Ks=Ks)
    out = pl.pallas_call(
        kernel,
        out_shape=jax.ShapeDtypeStruct((N, n_classes), jnp.float32),
        grid=(1,),
        in_specs=[_full_spec(a.shape) for a in args],
        out_specs=pl.BlockSpec((N, n_classes), lambda i: (0, 0)),
        scratch_shapes=[pltpu.VMEM((N, H), jnp.float32)] * 4,
        compiler_params=pltpu.CompilerParams(dimension_semantics=("arbitrary",)),
    )(*args)
    return out.reshape(S, B, n_classes)


# ----------------------------------------------------------------------------
# Pure-JAX reference (for correctness check)
# ----------------------------------------------------------------------------
def reference_forward(tokens, umask, p):
    S, B, Tw = tokens.shape
    N = S * B
    emb = jnp.take(p["emb"], tokens.reshape(N, Tw), axis=0).astype(jnp.float32)
    mask_flat = umask.T.reshape(N, 1).astype(jnp.float32)

    pooled = []
    for name, K in (("conv2", 2), ("conv3", 3), ("conv4", 4)):
        w, b = p[name + "_w"], p[name + "_b"]
        outs = []
        for t in range(Tw - K + 1):
            acc = b
            for k in range(K):
                acc = acc + emb[:, t + k, :] @ w[k]
            outs.append(jnp.maximum(acc, 0.0))
        pooled.append(jnp.max(jnp.stack(outs, 0), axis=0))
    cat = jnp.concatenate(pooled, -1)
    feat = jnp.maximum(cat @ p["fc_w"] + p["fc_b"], 0.0) * mask_flat
    feats = feat.reshape(S, B, -1)

    def lstm_ref(x, wih, whh, b):
        Sx, Bx, _ = x.shape
        H = whh.shape[0]
        h = jnp.zeros((Bx, H), jnp.float32)
        c = jnp.zeros((Bx, H), jnp.float32)
        outs = []
        for t in range(Sx):
            g = x[t] @ wih + h @ whh + b
            i = jax.nn.sigmoid(g[:, 0:H])
            f = jax.nn.sigmoid(g[:, H:2 * H])
            gg = jnp.tanh(g[:, 2 * H:3 * H])
            o = jax.nn.sigmoid(g[:, 3 * H:4 * H])
            c = f * c + i * gg
            h = o * jnp.tanh(c)
            outs.append(h)
        return jnp.stack(outs, 0)

    hf1 = lstm_ref(feats, p["l1f_wih"], p["l1f_whh"], p["l1f_b"])
    hb1 = jnp.flip(lstm_ref(jnp.flip(feats, 0),
                            p["l1b_wih"], p["l1b_whh"], p["l1b_b"]), 0)
    x2 = jnp.concatenate([hf1, hb1], -1)
    hf2 = lstm_ref(x2, p["l2f_wih"], p["l2f_whh"], p["l2f_b"])
    hb2 = jnp.flip(lstm_ref(jnp.flip(x2, 0),
                            p["l2b_wih"], p["l2b_whh"], p["l2b_b"]), 0)
    lstm_out = jnp.concatenate([hf2, hb2], -1)

    x = lstm_out.reshape(N, -1) * mask_flat
    h = jnp.maximum(x @ p["lin_w"] + p["lin_b"], 0.0)
    logits = h @ p["smax_w"] + p["smax_b"]
    return jax.nn.log_softmax(logits, -1).reshape(S, B, -1)


# ----------------------------------------------------------------------------
# Deterministic parameter construction
# ----------------------------------------------------------------------------
def make_params(key, vocab_size, emb_dim, cnn_filters, cnn_out, D_e, D_h, n_classes):
    keys = iter(jax.random.split(key, 40))

    def w(shape, scale=0.1):
        return (scale * jax.random.normal(next(keys), shape)).astype(jnp.float32)

    H = D_e
    p = {
        "emb": w((vocab_size, emb_dim), 0.5),
        "conv2_w": w((2, emb_dim, cnn_filters)), "conv2_b": w((1, cnn_filters), 0.05),
        "conv3_w": w((3, emb_dim, cnn_filters)), "conv3_b": w((1, cnn_filters), 0.05),
        "conv4_w": w((4, emb_dim, cnn_filters)), "conv4_b": w((1, cnn_filters), 0.05),
        "fc_w": w((3 * cnn_filters, cnn_out)), "fc_b": w((1, cnn_out), 0.05),
        # LSTM layer 1 (input = cnn_out), fwd + bwd; gate order i,f,g,o.
        "l1f_wih": w((cnn_out, 4 * H)), "l1f_whh": w((H, 4 * H)), "l1f_b": w((1, 4 * H), 0.05),
        "l1b_wih": w((cnn_out, 4 * H)), "l1b_whh": w((H, 4 * H)), "l1b_b": w((1, 4 * H), 0.05),
        # LSTM layer 2 (input = 2*H), fwd + bwd.
        "l2f_wih": w((2 * H, 4 * H)), "l2f_whh": w((H, 4 * H)), "l2f_b": w((1, 4 * H), 0.05),
        "l2b_wih": w((2 * H, 4 * H)), "l2b_whh": w((H, 4 * H)), "l2b_b": w((1, 4 * H), 0.05),
        # classifier
        "lin_w": w((2 * H, D_h)), "lin_b": w((1, D_h), 0.05),
        "smax_w": w((D_h, n_classes)), "smax_b": w((1, n_classes), 0.05),
    }
    return p


# ----------------------------------------------------------------------------
if __name__ == "__main__":
    # Small shapes consistent with the module.
    seq_len, batch, num_words = 8, 2, 12
    vocab_size, emb_dim = 50, 32
    cnn_filters, cnn_out = 16, 32
    D_e, D_h, n_classes = 32, 32, 7

    key = jax.random.PRNGKey(0)
    kp, kt = jax.random.split(key)
    params = make_params(kp, vocab_size, emb_dim, cnn_filters, cnn_out,
                         D_e, D_h, n_classes)

    tokens = jax.random.randint(kt, (seq_len, batch, num_words), 0, vocab_size,
                                dtype=jnp.int32)
    # umask: (batch, seq_len); last two utterances of the second dialogue are padding.
    umask = jnp.ones((batch, seq_len), jnp.float32).at[1, 6:].set(0.0)

    fwd = jax.jit(end2end_forward)
    out = fwd(tokens, umask, params)
    out = jax.block_until_ready(out)

    ref = reference_forward(tokens, umask, params)
    assert out.shape == (seq_len, batch, n_classes)
    assert bool(jnp.allclose(out, ref, atol=5e-3, rtol=5e-3)), "mismatch vs reference"

    print("KERNEL_OK")
</pallas_src>

<mosaic_0001>
module attributes {stable_mosaic.version = 11 : i64} {
  func.func @_fused_kernel(%arg0: i32, %arg1: memref<192x1xi32, #tpu.memory_space<vmem>>, %arg2: memref<16x1xf32, #tpu.memory_space<vmem>>, %arg3: memref<50x32xf32, #tpu.memory_space<vmem>>, %arg4: memref<9x32x16xf32, #tpu.memory_space<vmem>>, %arg5: memref<3x1x16xf32, #tpu.memory_space<vmem>>, %arg6: memref<3x16x32xf32, #tpu.memory_space<vmem>>, %arg7: memref<1x32xf32, #tpu.memory_space<vmem>>, %arg8: memref<32x256xf32, #tpu.memory_space<vmem>>, %arg9: memref<32x256xf32, #tpu.memory_space<vmem>>, %arg10: memref<1x256xf32, #tpu.memory_space<vmem>>, %arg11: memref<64x256xf32, #tpu.memory_space<vmem>>, %arg12: memref<32x256xf32, #tpu.memory_space<vmem>>, %arg13: memref<1x256xf32, #tpu.memory_space<vmem>>, %arg14: memref<64x32xf32, #tpu.memory_space<vmem>>, %arg15: memref<1x32xf32, #tpu.memory_space<vmem>>, %arg16: memref<32x7xf32, #tpu.memory_space<vmem>>, %arg17: memref<1x7xf32, #tpu.memory_space<vmem>>, %arg18: memref<16x7xf32, #tpu.memory_space<vmem>>, %arg19: memref<16x32xf32, #tpu.memory_space<vmem>>, %arg20: memref<16x32xf32, #tpu.memory_space<vmem>>, %arg21: memref<16x32xf32, #tpu.memory_space<vmem>>, %arg22: memref<16x32xf32, #tpu.memory_space<vmem>>) attributes {dimension_semantics = [#tpu.dimension_semantics<arbitrary>], iteration_bounds = array<i64: 1>, scalar_prefetch = 0 : i64, scratch_operands = 4 : i64, tpu.core_type = #tpu.core_type<tc>, window_params = [{pipeline_mode = #tpu.pipeline_mode<synchronous>, transform_indices = @transform_0, window_bounds = array<i64: 192, 1>}, {pipeline_mode = #tpu.pipeline_mode<synchronous>, transform_indices = @transform_1, window_bounds = array<i64: 16, 1>}, {pipeline_mode = #tpu.pipeline_mode<synchronous>, transform_indices = @transform_2, window_bounds = array<i64: 50, 32>}, {pipeline_mode = #tpu.pipeline_mode<synchronous>, transform_indices = @transform_3, window_bounds = array<i64: 9, 32, 16>}, {pipeline_mode = #tpu.pipeline_mode<synchronous>, transform_indices = @transform_4, window_bounds = array<i64: 3, 1, 16>}, {pipeline_mode = #tpu.pipeline_mode<synchronous>, transform_indices = @transform_5, window_bounds = array<i64: 3, 16, 32>}, {pipeline_mode = #tpu.pipeline_mode<synchronous>, transform_indices = @transform_6, window_bounds = array<i64: 1, 32>}, {pipeline_mode = #tpu.pipeline_mode<synchronous>, transform_indices = @transform_7, window_bounds = array<i64: 32, 256>}, {pipeline_mode = #tpu.pipeline_mode<synchronous>, transform_indices = @transform_8, window_bounds = array<i64: 32, 256>}, {pipeline_mode = #tpu.pipeline_mode<synchronous>, transform_indices = @transform_9, window_bounds = array<i64: 1, 256>}, {pipeline_mode = #tpu.pipeline_mode<synchronous>, transform_indices = @transform_10, window_bounds = array<i64: 64, 256>}, {pipeline_mode = #tpu.pipeline_mode<synchronous>, transform_indices = @transform_11, window_bounds = array<i64: 32, 256>}, {pipeline_mode = #tpu.pipeline_mode<synchronous>, transform_indices = @transform_12, window_bounds = array<i64: 1, 256>}, {pipeline_mode = #tpu.pipeline_mode<synchronous>, transform_indices = @transform_13, window_bounds = array<i64: 64, 32>}, {pipeline_mode = #tpu.pipeline_mode<synchronous>, transform_indices = @transform_14, window_bounds = array<i64: 1, 32>}, {pipeline_mode = #tpu.pipeline_mode<synchronous>, transform_indices = @transform_15, window_bounds = array<i64: 32, 7>}, {pipeline_mode = #tpu.pipeline_mode<synchronous>, transform_indices = @transform_16, window_bounds = array<i64: 1, 7>}, {pipeline_mode = #tpu.pipeline_mode<synchronous>, transform_indices = @transform_17, window_bounds = array<i64: 16, 7>}]} {
    %c0 = arith.constant 0 : index
    %c0_0 = arith.constant 0 : index
    %0 = vector.load %arg1[%c0, %c0_0] : memref<192x1xi32, #tpu.memory_space<vmem>>, vector<192x1xi32>
    %1 = tpu.iota {dimensions = array<i32: 1>} : vector<192x50xi32>
    %2 = vector.broadcast %0 : vector<192x1xi32> to vector<192x50xi32>
    %3 = arith.cmpi eq, %1, %2 : vector<192x50xi32>
    %4 = arith.extui %3 : vector<192x50xi1> to vector<192x50xi32>
    %5 = arith.sitofp %4 : vector<192x50xi32> to vector<192x50xf32>
    %c0_1 = arith.constant 0 : index
    %c0_2 = arith.constant 0 : index
    %6 = vector.load %arg3[%c0_1, %c0_2] : memref<50x32xf32, #tpu.memory_space<vmem>>, vector<50x32xf32>
    %cst = arith.constant dense<0.000000e+00> : vector<192x32xf32>
    %7 = tpu.matmul %5, %6, %cst {dimension_numbers = #tpu.dot_dimension_numbers<[1], [0], [0], [1], [0, 0, 1, 1], [], []>} : vector<192x50xf32>, vector<50x32xf32>, vector<192x32xf32> -> vector<192x32xf32>
    %c0_3 = arith.constant 0 : index
    %c0_4 = arith.constant 0 : index
    %8 = vector.load %arg2[%c0_3, %c0_4] : memref<16x1xf32, #tpu.memory_space<vmem>>, vector<16x1xf32>
    %c0_5 = arith.constant 0 : index
    %c0_6 = arith.constant 0 : index
    %c0_7 = arith.constant 0 : index
    %9 = vector.load %arg4[%c0_5, %c0_6, %c0_7] : memref<9x32x16xf32, #tpu.memory_space<vmem>>, vector<1x32x16xf32>
    %10 = vector.shape_cast %9 : vector<1x32x16xf32> to vector<32x16xf32>
    %cst_8 = arith.constant dense<0.000000e+00> : vector<192x16xf32>
    %11 = tpu.matmul %7, %10, %cst_8 {dimension_numbers = #tpu.dot_dimension_numbers<[1], [0], [0], [1], [0, 0, 1, 1], [], []>} : vector<192x32xf32>, vector<32x16xf32>, vector<192x16xf32> -> vector<192x16xf32>
    %c1 = arith.constant 1 : index
    %c0_9 = arith.constant 0 : index
    %c0_10 = arith.constant 0 : index
    %12 = vector.load %arg4[%c1, %c0_9, %c0_10] : memref<9x32x16xf32, #tpu.memory_space<vmem>>, vector<1x32x16xf32>
    %13 = vector.shape_cast %12 : vector<1x32x16xf32> to vector<32x16xf32>
    %cst_11 = arith.constant dense<0.000000e+00> : vector<192x16xf32>
    %14 = tpu.matmul %7, %13, %cst_11 {dimension_numbers = #tpu.dot_dimension_numbers<[1], [0], [0], [1], [0, 0, 1, 1], [], []>} : vector<192x32xf32>, vector<32x16xf32>, vector<192x16xf32> -> vector<192x16xf32>
    %c2 = arith.constant 2 : index
    %c0_12 = arith.constant 0 : index
    %c0_13 = arith.constant 0 : index
    %15 = vector.load %arg4[%c2, %c0_12, %c0_13] : memref<9x32x16xf32, #tpu.memory_space<vmem>>, vector<1x32x16xf32>
    %16 = vector.shape_cast %15 : vector<1x32x16xf32> to vector<32x16xf32>
    %cst_14 = arith.constant dense<0.000000e+00> : vector<192x16xf32>
    %17 = tpu.matmul %7, %16, %cst_14 {dimension_numbers = #tpu.dot_dimension_numbers<[1], [0], [0], [1], [0, 0, 1, 1], [], []>} : vector<192x32xf32>, vector<32x16xf32>, vector<192x16xf32> -> vector<192x16xf32>
    %c3 = arith.constant 3 : index
    %c0_15 = arith.constant 0 : index
    %c0_16 = arith.constant 0 : index
    %18 = vector.load %arg4[%c3, %c0_15, %c0_16] : memref<9x32x16xf32, #tpu.memory_space<vmem>>, vector<1x32x16xf32>
    %19 = vector.shape_cast %18 : vector<1x32x16xf32> to vector<32x16xf32>
    %cst_17 = arith.constant dense<0.000000e+00> : vector<192x16xf32>
    %20 = tpu.matmul %7, %19, %cst_17 {dimension_numbers = #tpu.dot_dimension_numbers<[1], [0], [0], [1], [0, 0, 1, 1], [], []>} : vector<192x32xf32>, vector<32x16xf32>, vector<192x16xf32> -> vector<192x16xf32>
    %c4 = arith.constant 4 : index
    %c0_18 = arith.constant 0 : index
    %c0_19 = arith.constant 0 : index
    %21 = vector.load %arg4[%c4, %c0_18, %c0_19] : memref<9x32x16xf32, #tpu.memory_space<vmem>>, vector<1x32x16xf32>
    %22 = vector.shape_cast %21 : vector<1x32x16xf32> to vector<32x16xf32>
    %cst_20 = arith.constant dense<0.000000e+00> : vector<192x16xf32>
    %23 = tpu.matmul %7, %22, %cst_20 {dimension_numbers = #tpu.dot_dimension_numbers<[1], [0], [0], [1], [0, 0, 1, 1], [], []>} : vector<192x32xf32>, vector<32x16xf32>, vector<192x16xf32> -> vector<192x16xf32>
    %c5 = arith.constant 5 : index
    %c0_21 = arith.constant 0 : index
    %c0_22 = arith.constant 0 : index
    %24 = vector.load %arg4[%c5, %c0_21, %c0_22] : memref<9x32x16xf32, #tpu.memory_space<vmem>>, vector<1x32x16xf32>
    %25 = vector.shape_cast %24 : vector<1x32x16xf32> to vector<32x16xf32>
    %cst_23 = arith.constant dense<0.000000e+00> : vector<192x16xf32>
    %26 = tpu.matmul %7, %25, %cst_23 {dimension_numbers = #tpu.dot_dimension_numbers<[1], [0], [0], [1], [0, 0, 1, 1], [], []>} : vector<192x32xf32>, vector<32x16xf32>, vector<192x16xf32> -> vector<192x16xf32>
    %c6 = arith.constant 6 : index
    %c0_24 = arith.constant 0 : index
    %c0_25 = arith.constant 0 : index
    %27 = vector.load %arg4[%c6, %c0_24, %c0_25] : memref<9x32x16xf32, #tpu.memory_space<vmem>>, vector<1x32x16xf32>
    %28 = vector.shape_cast %27 : vector<1x32x16xf32> to vector<32x16xf32>
    %cst_26 = arith.constant dense<0.000000e+00> : vector<192x16xf32>
    %29 = tpu.matmul %7, %28, %cst_26 {dimension_numbers = #tpu.dot_dimension_numbers<[1], [0], [0], [1], [0, 0, 1, 1], [], []>} : vector<192x32xf32>, vector<32x16xf32>, vector<192x16xf32> -> vector<192x16xf32>
    %c7 = arith.constant 7 : index
    %c0_27 = arith.constant 0 : index
    %c0_28 = arith.constant 0 : index
    %30 = vector.load %arg4[%c7, %c0_27, %c0_28] : memref<9x32x16xf32, #tpu.memory_space<vmem>>, vector<1x32x16xf32>
    %31 = vector.shape_cast %30 : vector<1x32x16xf32> to vector<32x16xf32>
    %cst_29 = arith.constant dense<0.000000e+00> : vector<192x16xf32>
    %32 = tpu.matmul %7, %31, %cst_29 {dimension_numbers = #tpu.dot_dimension_numbers<[1], [0], [0], [1], [0, 0, 1, 1], [], []>} : vector<192x32xf32>, vector<32x16xf32>, vector<192x16xf32> -> vector<192x16xf32>
    %c8 = arith.constant 8 : index
    %c0_30 = arith.constant 0 : index
    %c0_31 = arith.constant 0 : index
    %33 = vector.load %arg4[%c8, %c0_30, %c0_31] : memref<9x32x16xf32, #tpu.memory_space<vmem>>, vector<1x32x16xf32>
    %34 = vector.shape_cast %33 : vector<1x32x16xf32> to vector<32x16xf32>
    %cst_32 = arith.constant dense<0.000000e+00> : vector<192x16xf32>
    %35 = tpu.matmul %7, %34, %cst_32 {dimension_numbers = #tpu.dot_dimension_numbers<[1], [0], [0], [1], [0, 0, 1, 1], [], []>} : vector<192x32xf32>, vector<32x16xf32>, vector<192x16xf32> -> vector<192x16xf32>
    %c0_33 = arith.constant 0 : index
    %c0_34 = arith.constant 0 : index
    %c0_35 = arith.constant 0 : index
    %36 = vector.load %arg5[%c0_33, %c0_34, %c0_35] : memref<3x1x16xf32, #tpu.memory_space<vmem>>, vector<1x1x16xf32>
    %37 = vector.shape_cast %36 : vector<1x1x16xf32> to vector<1x16xf32>
    %38 = vector.extract_strided_slice %11 {offsets = [0, 0], sizes = [16, 16], strides = [1, 1]} : vector<192x16xf32> to vector<16x16xf32>
    %39 = vector.extract_strided_slice %14 {offsets = [16, 0], sizes = [16, 16], strides = [1, 1]} : vector<192x16xf32> to vector<16x16xf32>
    %40 = arith.addf %38, %39 : vector<16x16xf32>
    %41 = vector.broadcast %37 : vector<1x16xf32> to vector<16x16xf32>
    %42 = arith.addf %40, %41 : vector<16x16xf32>
    %cst_36 = arith.constant 0.000000e+00 : f32
    %43 = vector.broadcast %cst_36 : f32 to vector<16x16xf32>
    %44 = arith.maximumf %42, %43 : vector<16x16xf32>
    %45 = vector.extract_strided_slice %11 {offsets = [16, 0], sizes = [16, 16], strides = [1, 1]} : vector<192x16xf32> to vector<16x16xf32>
    %46 = vector.extract_strided_slice %14 {offsets = [32, 0], sizes = [16, 16], strides = [1, 1]} : vector<192x16xf32> to vector<16x16xf32>
    %47 = arith.addf %45, %46 : vector<16x16xf32>
    %48 = vector.broadcast %37 : vector<1x16xf32> to vector<16x16xf32>
    %49 = arith.addf %47, %48 : vector<16x16xf32>
    %cst_37 = arith.constant 0.000000e+00 : f32
    %50 = vector.broadcast %cst_37 : f32 to vector<16x16xf32>
    %51 = arith.maximumf %49, %50 : vector<16x16xf32>
    %52 = arith.maximumf %44, %51 : vector<16x16xf32>
    %53 = vector.extract_strided_slice %11 {offsets = [32, 0], sizes = [16, 16], strides = [1, 1]} : vector<192x16xf32> to vector<16x16xf32>
    %54 = vector.extract_strided_slice %14 {offsets = [48, 0], sizes = [16, 16], strides = [1, 1]} : vector<192x16xf32> to vector<16x16xf32>
    %55 = arith.addf %53, %54 : vector<16x16xf32>
    %56 = vector.broadcast %37 : vector<1x16xf32> to vector<16x16xf32>
    %57 = arith.addf %55, %56 : vector<16x16xf32>
    %cst_38 = arith.constant 0.000000e+00 : f32
    %58 = vector.broadcast %cst_38 : f32 to vector<16x16xf32>
    %59 = arith.maximumf %57, %58 : vector<16x16xf32>
    %60 = arith.maximumf %52, %59 : vector<16x16xf32>
    %61 = vector.extract_strided_slice %11 {offsets = [48, 0], sizes = [16, 16], strides = [1, 1]} : vector<192x16xf32> to vector<16x16xf32>
    %62 = vector.extract_strided_slice %14 {offsets = [64, 0], sizes = [16, 16], strides = [1, 1]} : vector<192x16xf32> to vector<16x16xf32>
    %63 = arith.addf %61, %62 : vector<16x16xf32>
    %64 = vector.broadcast %37 : vector<1x16xf32> to vector<16x16xf32>
    %65 = arith.addf %63, %64 : vector<16x16xf32>
    %cst_39 = arith.constant 0.000000e+00 : f32
    %66 = vector.broadcast %cst_39 : f32 to vector<16x16xf32>
    %67 = arith.maximumf %65, %66 : vector<16x16xf32>
    %68 = arith.maximumf %60, %67 : vector<16x16xf32>
    %69 = vector.extract_strided_slice %11 {offsets = [64, 0], sizes = [16, 16], strides = [1, 1]} : vector<192x16xf32> to vector<16x16xf32>
    %70 = vector.extract_strided_slice %14 {offsets = [80, 0], sizes = [16, 16], strides = [1, 1]} : vector<192x16xf32> to vector<16x16xf32>
    %71 = arith.addf %69, %70 : vector<16x16xf32>
    %72 = vector.broadcast %37 : vector<1x16xf32> to vector<16x16xf32>
    %73 = arith.addf %71, %72 : vector<16x16xf32>
    %cst_40 = arith.constant 0.000000e+00 : f32
    %74 = vector.broadcast %cst_40 : f32 to vector<16x16xf32>
    %75 = arith.maximumf %73, %74 : vector<16x16xf32>
    %76 = arith.maximumf %68, %75 : vector<16x16xf32>
    %77 = vector.extract_strided_slice %11 {offsets = [80, 0], sizes = [16, 16], strides = [1, 1]} : vector<192x16xf32> to vector<16x16xf32>
    %78 = vector.extract_strided_slice %14 {offsets = [96, 0], sizes = [16, 16], strides = [1, 1]} : vector<192x16xf32> to vector<16x16xf32>
    %79 = arith.addf %77, %78 : vector<16x16xf32>
    %80 = vector.broadcast %37 : vector<1x16xf32> to vector<16x16xf32>
    %81 = arith.addf %79, %80 : vector<16x16xf32>
    %cst_41 = arith.constant 0.000000e+00 : f32
    %82 = vector.broadcast %cst_41 : f32 to vector<16x16xf32>
    %83 = arith.maximumf %81, %82 : vector<16x16xf32>
    %84 = arith.maximumf %76, %83 : vector<16x16xf32>
    %85 = vector.extract_strided_slice %11 {offsets = [96, 0], sizes = [16, 16], strides = [1, 1]} : vector<192x16xf32> to vector<16x16xf32>
    %86 = vector.extract_strided_slice %14 {offsets = [112, 0], sizes = [16, 16], strides = [1, 1]} : vector<192x16xf32> to vector<16x16xf32>
    %87 = arith.addf %85, %86 : vector<16x16xf32>
    %88 = vector.broadcast %37 : vector<1x16xf32> to vector<16x16xf32>
    %89 = arith.addf %87, %88 : vector<16x16xf32>
    %cst_42 = arith.constant 0.000000e+00 : f32
    %90 = vector.broadcast %cst_42 : f32 to vector<16x16xf32>
    %91 = arith.maximumf %89, %90 : vector<16x16xf32>
    %92 = arith.maximumf %84, %91 : vector<16x16xf32>
    %93 = vector.extract_strided_slice %11 {offsets = [112, 0], sizes = [16, 16], strides = [1, 1]} : vector<192x16xf32> to vector<16x16xf32>
    %94 = vector.extract_strided_slice %14 {offsets = [128, 0], sizes = [16, 16], strides = [1, 1]} : vector<192x16xf32> to vector<16x16xf32>
    %95 = arith.addf %93, %94 : vector<16x16xf32>
    %96 = vector.broadcast %37 : vector<1x16xf32> to vector<16x16xf32>
    %97 = arith.addf %95, %96 : vector<16x16xf32>
    %cst_43 = arith.constant 0.000000e+00 : f32
    %98 = vector.broadcast %cst_43 : f32 to vector<16x16xf32>
    %99 = arith.maximumf %97, %98 : vector<16x16xf32>
    %100 = arith.maximumf %92, %99 : vector<16x16xf32>
    %101 = vector.extract_strided_slice %11 {offsets = [128, 0], sizes = [16, 16], strides = [1, 1]} : vector<192x16xf32> to vector<16x16xf32>
    %102 = vector.extract_strided_slice %14 {offsets = [144, 0], sizes = [16, 16], strides = [1, 1]} : vector<192x16xf32> to vector<16x16xf32>
    %103 = arith.addf %101, %102 : vector<16x16xf32>
    %104 = vector.broadcast %37 : vector<1x16xf32> to vector<16x16xf32>
    %105 = arith.addf %103, %104 : vector<16x16xf32>
    %cst_44 = arith.constant 0.000000e+00 : f32
    %106 = vector.broadcast %cst_44 : f32 to vector<16x16xf32>
    %107 = arith.maximumf %105, %106 : vector<16x16xf32>
    %108 = arith.maximumf %100, %107 : vector<16x16xf32>
    %109 = vector.extract_strided_slice %11 {offsets = [144, 0], sizes = [16, 16], strides = [1, 1]} : vector<192x16xf32> to vector<16x16xf32>
    %110 = vector.extract_strided_slice %14 {offsets = [160, 0], sizes = [16, 16], strides = [1, 1]} : vector<192x16xf32> to vector<16x16xf32>
    %111 = arith.addf %109, %110 : vector<16x16xf32>
    %112 = vector.broadcast %37 : vector<1x16xf32> to vector<16x16xf32>
    %113 = arith.addf %111, %112 : vector<16x16xf32>
    %cst_45 = arith.constant 0.000000e+00 : f32
    %114 = vector.broadcast %cst_45 : f32 to vector<16x16xf32>
    %115 = arith.maximumf %113, %114 : vector<16x16xf32>
    %116 = arith.maximumf %108, %115 : vector<16x16xf32>
    %117 = vector.extract_strided_slice %11 {offsets = [160, 0], sizes = [16, 16], strides = [1, 1]} : vector<192x16xf32> to vector<16x16xf32>
    %118 = vector.extract_strided_slice %14 {offsets = [176, 0], sizes = [16, 16], strides = [1, 1]} : vector<192x16xf32> to vector<16x16xf32>
    %119 = arith.addf %117, %118 : vector<16x16xf32>
    %120 = vector.broadcast %37 : vector<1x16xf32> to vector<16x16xf32>
    %121 = arith.addf %119, %120 : vector<16x16xf32>
    %cst_46 = arith.constant 0.000000e+00 : f32
    %122 = vector.broadcast %cst_46 : f32 to vector<16x16xf32>
    %123 = arith.maximumf %121, %122 : vector<16x16xf32>
    %124 = arith.maximumf %116, %123 : vector<16x16xf32>
    %c1_47 = arith.constant 1 : index
    %c0_48 = arith.constant 0 : index
    %c0_49 = arith.constant 0 : index
    %125 = vector.load %arg5[%c1_47, %c0_48, %c0_49] : memref<3x1x16xf32, #tpu.memory_space<vmem>>, vector<1x1x16xf32>
    %126 = vector.shape_cast %125 : vector<1x1x16xf32> to vector<1x16xf32>
    %127 = vector.extract_strided_slice %17 {offsets = [0, 0], sizes = [16, 16], strides = [1, 1]} : vector<192x16xf32> to vector<16x16xf32>
    %128 = vector.extract_strided_slice %20 {offsets = [16, 0], sizes = [16, 16], strides = [1, 1]} : vector<192x16xf32> to vector<16x16xf32>
    %129 = arith.addf %127, %128 : vector<16x16xf32>
    %130 = vector.extract_strided_slice %23 {offsets = [32, 0], sizes = [16, 16], strides = [1, 1]} : vector<192x16xf32> to vector<16x16xf32>
    %131 = arith.addf %129, %130 : vector<16x16xf32>
    %132 = vector.broadcast %126 : vector<1x16xf32> to vector<16x16xf32>
    %133 = arith.addf %131, %132 : vector<16x16xf32>
    %cst_50 = arith.constant 0.000000e+00 : f32
    %134 = vector.broadcast %cst_50 : f32 to vector<16x16xf32>
    %135 = arith.maximumf %133, %134 : vector<16x16xf32>
    %136 = vector.extract_strided_slice %17 {offsets = [16, 0], sizes = [16, 16], strides = [1, 1]} : vector<192x16xf32> to vector<16x16xf32>
    %137 = vector.extract_strided_slice %20 {offsets = [32, 0], sizes = [16, 16], strides = [1, 1]} : vector<192x16xf32> to vector<16x16xf32>
    %138 = arith.addf %136, %137 : vector<16x16xf32>
    %139 = vector.extract_strided_slice %23 {offsets = [48, 0], sizes = [16, 16], strides = [1, 1]} : vector<192x16xf32> to vector<16x16xf32>
    %140 = arith.addf %138, %139 : vector<16x16xf32>
    %141 = vector.broadcast %126 : vector<1x16xf32> to vector<16x16xf32>
    %142 = arith.addf %140, %141 : vector<16x16xf32>
    %cst_51 = arith.constant 0.000000e+00 : f32
    %143 = vector.broadcast %cst_51 : f32 to vector<16x16xf32>
    %144 = arith.maximumf %142, %143 : vector<16x16xf32>
    %145 = arith.maximumf %135, %144 : vector<16x16xf32>
    %146 = vector.extract_strided_slice %17 {offsets = [32, 0], sizes = [16, 16], strides = [1, 1]} : vector<192x16xf32> to vector<16x16xf32>
    %147 = vector.extract_strided_slice %20 {offsets = [48, 0], sizes = [16, 16], strides = [1, 1]} : vector<192x16xf32> to vector<16x16xf32>
    %148 = arith.addf %146, %147 : vector<16x16xf32>
    %149 = vector.extract_strided_slice %23 {offsets = [64, 0], sizes = [16, 16], strides = [1, 1]} : vector<192x16xf32> to vector<16x16xf32>
    %150 = arith.addf %148, %149 : vector<16x16xf32>
    %151 = vector.broadcast %126 : vector<1x16xf32> to vector<16x16xf32>
    %152 = arith.addf %150, %151 : vector<16x16xf32>
    %cst_52 = arith.constant 0.000000e+00 : f32
    %153 = vector.broadcast %cst_52 : f32 to vector<16x16xf32>
    %154 = arith.maximumf %152, %153 : vector<16x16xf32>
    %155 = arith.maximumf %145, %154 : vector<16x16xf32>
    %156 = vector.extract_strided_slice %17 {offsets = [48, 0], sizes = [16, 16], strides = [1, 1]} : vector<192x16xf32> to vector<16x16xf32>
    %157 = vector.extract_strided_slice %20 {offsets = [64, 0], sizes = [16, 16], strides = [1, 1]} : vector<192x16xf32> to vector<16x16xf32>
    %158 = arith.addf %156, %157 : vector<16x16xf32>
    %159 = vector.extract_strided_slice %23 {offsets = [80, 0], sizes = [16, 16], strides = [1, 1]} : vector<192x16xf32> to vector<16x16xf32>
    %160 = arith.addf %158, %159 : vector<16x16xf32>
    %161 = vector.broadcast %126 : vector<1x16xf32> to vector<16x16xf32>
    %162 = arith.addf %160, %161 : vector<16x16xf32>
    %cst_53 = arith.constant 0.000000e+00 : f32
    %163 = vector.broadcast %cst_53 : f32 to vector<16x16xf32>
    %164 = arith.maximumf %162, %163 : vector<16x16xf32>
    %165 = arith.maximumf %155, %164 : vector<16x16xf32>
    %166 = vector.extract_strided_slice %17 {offsets = [64, 0], sizes = [16, 16], strides = [1, 1]} : vector<192x16xf32> to vector<16x16xf32>
    %167 = vector.extract_strided_slice %20 {offsets = [80, 0], sizes = [16, 16], strides = [1, 1]} : vector<192x16xf32> to vector<16x16xf32>
    %168 = arith.addf %166, %167 : vector<16x16xf32>
    %169 = vector.extract_strided_slice %23 {offsets = [96, 0], sizes = [16, 16], strides = [1, 1]} : vector<192x16xf32> to vector<16x16xf32>
    %170 = arith.addf %168, %169 : vector<16x16xf32>
    %171 = vector.broadcast %126 : vector<1x16xf32> to vector<16x16xf32>
    %172 = arith.addf %170, %171 : vector<16x16xf32>
    %cst_54 = arith.constant 0.000000e+00 : f32
    %173 = vector.broadcast %cst_54 : f32 to vector<16x16xf32>
    %174 = arith.maximumf %172, %173 : vector<16x16xf32>
    %175 = arith.maximumf %165, %174 : vector<16x16xf32>
    %176 = vector.extract_strided_slice %17 {offsets = [80, 0], sizes = [16, 16], strides = [1, 1]} : vector<192x16xf32> to vector<16x16xf32>
    %177 = vector.extract_strided_slice %20 {offsets = [96, 0], sizes = [16, 16], strides = [1, 1]} : vector<192x16xf32> to vector<16x16xf32>
    %178 = arith.addf %176, %177 : vector<16x16xf32>
    %179 = vector.extract_strided_slice %23 {offsets = [112, 0], sizes = [16, 16], strides = [1, 1]} : vector<192x16xf32> to vector<16x16xf32>
    %180 = arith.addf %178, %179 : vector<16x16xf32>
    %181 = vector.broadcast %126 : vector<1x16xf32> to vector<16x16xf32>
    %182 = arith.addf %180, %181 : vector<16x16xf32>
    %cst_55 = arith.constant 0.000000e+00 : f32
    %183 = vector.broadcast %cst_55 : f32 to vector<16x16xf32>
    %184 = arith.maximumf %182, %183 : vector<16x16xf32>
    %185 = arith.maximumf %175, %184 : vector<16x16xf32>
    %186 = vector.extract_strided_slice %17 {offsets = [96, 0], sizes = [16, 16], strides = [1, 1]} : vector<192x16xf32> to vector<16x16xf32>
    %187 = vector.extract_strided_slice %20 {offsets = [112, 0], sizes = [16, 16], strides = [1, 1]} : vector<192x16xf32> to vector<16x16xf32>
    %188 = arith.addf %186, %187 : vector<16x16xf32>
    %189 = vector.extract_strided_slice %23 {offsets = [128, 0], sizes = [16, 16], strides = [1, 1]} : vector<192x16xf32> to vector<16x16xf32>
    %190 = arith.addf %188, %189 : vector<16x16xf32>
    %191 = vector.broadcast %126 : vector<1x16xf32> to vector<16x16xf32>
    %192 = arith.addf %190, %191 : vector<16x16xf32>
    %cst_56 = arith.constant 0.000000e+00 : f32
    %193 = vector.broadcast %cst_56 : f32 to vector<16x16xf32>
    %194 = arith.maximumf %192, %193 : vector<16x16xf32>
    %195 = arith.maximumf %185, %194 : vector<16x16xf32>
    %196 = vector.extract_strided_slice %17 {offsets = [112, 0], sizes = [16, 16], strides = [1, 1]} : vector<192x16xf32> to vector<16x16xf32>
    %197 = vector.extract_strided_slice %20 {offsets = [128, 0], sizes = [16, 16], strides = [1, 1]} : vector<192x16xf32> to vector<16x16xf32>
    %198 = arith.addf %196, %197 : vector<16x16xf32>
    %199 = vector.extract_strided_slice %23 {offsets = [144, 0], sizes = [16, 16], strides = [1, 1]} : vector<192x16xf32> to vector<16x16xf32>
    %200 = arith.addf %198, %199 : vector<16x16xf32>
    %201 = vector.broadcast %126 : vector<1x16xf32> to vector<16x16xf32>
    %202 = arith.addf %200, %201 : vector<16x16xf32>
    %cst_57 = arith.constant 0.000000e+00 : f32
    %203 = vector.broadcast %cst_57 : f32 to vector<16x16xf32>
    %204 = arith.maximumf %202, %203 : vector<16x16xf32>
    %205 = arith.maximumf %195, %204 : vector<16x16xf32>
    %206 = vector.extract_strided_slice %17 {offsets = [128, 0], sizes = [16, 16], strides = [1, 1]} : vector<192x16xf32> to vector<16x16xf32>
    %207 = vector.extract_strided_slice %20 {offsets = [144, 0], sizes = [16, 16], strides = [1, 1]} : vector<192x16xf32> to vector<16x16xf32>
    %208 = arith.addf %206, %207 : vector<16x16xf32>
    %209 = vector.extract_strided_slice %23 {offsets = [160, 0], sizes = [16, 16], strides = [1, 1]} : vector<192x16xf32> to vector<16x16xf32>
    %210 = arith.addf %208, %209 : vector<16x16xf32>
    %211 = vector.broadcast %126 : vector<1x16xf32> to vector<16x16xf32>
    %212 = arith.addf %210, %211 : vector<16x16xf32>
    %cst_58 = arith.constant 0.000000e+00 : f32
    %213 = vector.broadcast %cst_58 : f32 to vector<16x16xf32>
    %214 = arith.maximumf %212, %213 : vector<16x16xf32>
    %215 = arith.maximumf %205, %214 : vector<16x16xf32>
    %216 = vector.extract_strided_slice %17 {offsets = [144, 0], sizes = [16, 16], strides = [1, 1]} : vector<192x16xf32> to vector<16x16xf32>
    %217 = vector.extract_strided_slice %20 {offsets = [160, 0], sizes = [16, 16], strides = [1, 1]} : vector<192x16xf32> to vector<16x16xf32>
    %218 = arith.addf %216, %217 : vector<16x16xf32>
    %219 = vector.extract_strided_slice %23 {offsets = [176, 0], sizes = [16, 16], strides = [1, 1]} : vector<192x16xf32> to vector<16x16xf32>
    %220 = arith.addf %218, %219 : vector<16x16xf32>
    %221 = vector.broadcast %126 : vector<1x16xf32> to vector<16x16xf32>
    %222 = arith.addf %220, %221 : vector<16x16xf32>
    %cst_59 = arith.constant 0.000000e+00 : f32
    %223 = vector.broadcast %cst_59 : f32 to vector<16x16xf32>
    %224 = arith.maximumf %222, %223 : vector<16x16xf32>
    %225 = arith.maximumf %215, %224 : vector<16x16xf32>
    %c2_60 = arith.constant 2 : index
    %c0_61 = arith.constant 0 : index
    %c0_62 = arith.constant 0 : index
    %226 = vector.load %arg5[%c2_60, %c0_61, %c0_62] : memref<3x1x16xf32, #tpu.memory_space<vmem>>, vector<1x1x16xf32>
    %227 = vector.shape_cast %226 : vector<1x1x16xf32> to vector<1x16xf32>
    %228 = vector.extract_strided_slice %26 {offsets = [0, 0], sizes = [16, 16], strides = [1, 1]} : vector<192x16xf32> to vector<16x16xf32>
    %229 = vector.extract_strided_slice %29 {offsets = [16, 0], sizes = [16, 16], strides = [1, 1]} : vector<192x16xf32> to vector<16x16xf32>
    %230 = arith.addf %228, %229 : vector<16x16xf32>
    %231 = vector.extract_strided_slice %32 {offsets = [32, 0], sizes = [16, 16], strides = [1, 1]} : vector<192x16xf32> to vector<16x16xf32>
    %232 = arith.addf %230, %231 : vector<16x16xf32>
    %233 = vector.extract_strided_slice %35 {offsets = [48, 0], sizes = [16, 16], strides = [1, 1]} : vector<192x16xf32> to vector<16x16xf32>
    %234 = arith.addf %232, %233 : vector<16x16xf32>
    %235 = vector.broadcast %227 : vector<1x16xf32> to vector<16x16xf32>
    %236 = arith.addf %234, %235 : vector<16x16xf32>
    %cst_63 = arith.constant 0.000000e+00 : f32
    %237 = vector.broadcast %cst_63 : f32 to vector<16x16xf32>
    %238 = arith.maximumf %236, %237 : vector<16x16xf32>
    %239 = vector.extract_strided_slice %26 {offsets = [16, 0], sizes = [16, 16], strides = [1, 1]} : vector<192x16xf32> to vector<16x16xf32>
    %240 = vector.extract_strided_slice %29 {offsets = [32, 0], sizes = [16, 16], strides = [1, 1]} : vector<192x16xf32> to vector<16x16xf32>
    %241 = arith.addf %239, %240 : vector<16x16xf32>
    %242 = vector.extract_strided_slice %32 {offsets = [48, 0], sizes = [16, 16], strides = [1, 1]} : vector<192x16xf32> to vector<16x16xf32>
    %243 = arith.addf %241, %242 : vector<16x16xf32>
    %244 = vector.extract_strided_slice %35 {offsets = [64, 0], sizes = [16, 16], strides = [1, 1]} : vector<192x16xf32> to vector<16x16xf32>
    %245 = arith.addf %243, %244 : vector<16x16xf32>
    %246 = vector.broadcast %227 : vector<1x16xf32> to vector<16x16xf32>
    %247 = arith.addf %245, %246 : vector<16x16xf32>
    %cst_64 = arith.constant 0.000000e+00 : f32
    %248 = vector.broadcast %cst_64 : f32 to vector<16x16xf32>
    %249 = arith.maximumf %247, %248 : vector<16x16xf32>
    %250 = arith.maximumf %238, %249 : vector<16x16xf32>
    %251 = vector.extract_strided_slice %26 {offsets = [32, 0], sizes = [16, 16], strides = [1, 1]} : vector<192x16xf32> to vector<16x16xf32>
    %252 = vector.extract_strided_slice %29 {offsets = [48, 0], sizes = [16, 16], strides = [1, 1]} : vector<192x16xf32> to vector<16x16xf32>
    %253 = arith.addf %251, %252 : vector<16x16xf32>
    %254 = vector.extract_strided_slice %32 {offsets = [64, 0], sizes = [16, 16], strides = [1, 1]} : vector<192x16xf32> to vector<16x16xf32>
    %255 = arith.addf %253, %254 : vector<16x16xf32>
    %256 = vector.extract_strided_slice %35 {offsets = [80, 0], sizes = [16, 16], strides = [1, 1]} : vector<192x16xf32> to vector<16x16xf32>
    %257 = arith.addf %255, %256 : vector<16x16xf32>
    %258 = vector.broadcast %227 : vector<1x16xf32> to vector<16x16xf32>
    %259 = arith.addf %257, %258 : vector<16x16xf32>
    %cst_65 = arith.constant 0.000000e+00 : f32
    %260 = vector.broadcast %cst_65 : f32 to vector<16x16xf32>
    %261 = arith.maximumf %259, %260 : vector<16x16xf32>
    %262 = arith.maximumf %250, %261 : vector<16x16xf32>
    %263 = vector.extract_strided_slice %26 {offsets = [48, 0], sizes = [16, 16], strides = [1, 1]} : vector<192x16xf32> to vector<16x16xf32>
    %264 = vector.extract_strided_slice %29 {offsets = [64, 0], sizes = [16, 16], strides = [1, 1]} : vector<192x16xf32> to vector<16x16xf32>
    %265 = arith.addf %263, %264 : vector<16x16xf32>
    %266 = vector.extract_strided_slice %32 {offsets = [80, 0], sizes = [16, 16], strides = [1, 1]} : vector<192x16xf32> to vector<16x16xf32>
    %267 = arith.addf %265, %266 : vector<16x16xf32>
    %268 = vector.extract_strided_slice %35 {offsets = [96, 0], sizes = [16, 16], strides = [1, 1]} : vector<192x16xf32> to vector<16x16xf32>
    %269 = arith.addf %267, %268 : vector<16x16xf32>
    %270 = vector.broadcast %227 : vector<1x16xf32> to vector<16x16xf32>
    %271 = arith.addf %269, %270 : vector<16x16xf32>
    %cst_66 = arith.constant 0.000000e+00 : f32
    %272 = vector.broadcast %cst_66 : f32 to vector<16x16xf32>
    %273 = arith.maximumf %271, %272 : vector<16x16xf32>
    %274 = arith.maximumf %262, %273 : vector<16x16xf32>
    %275 = vector.extract_strided_slice %26 {offsets = [64, 0], sizes = [16, 16], strides = [1, 1]} : vector<192x16xf32> to vector<16x16xf32>
    %276 = vector.extract_strided_slice %29 {offsets = [80, 0], sizes = [16, 16], strides = [1, 1]} : vector<192x16xf32> to vector<16x16xf32>
    %277 = arith.addf %275, %276 : vector<16x16xf32>
    %278 = vector.extract_strided_slice %32 {offsets = [96, 0], sizes = [16, 16], strides = [1, 1]} : vector<192x16xf32> to vector<16x16xf32>
    %279 = arith.addf %277, %278 : vector<16x16xf32>
    %280 = vector.extract_strided_slice %35 {offsets = [112, 0], sizes = [16, 16], strides = [1, 1]} : vector<192x16xf32> to vector<16x16xf32>
    %281 = arith.addf %279, %280 : vector<16x16xf32>
    %282 = vector.broadcast %227 : vector<1x16xf32> to vector<16x16xf32>
    %283 = arith.addf %281, %282 : vector<16x16xf32>
    %cst_67 = arith.constant 0.000000e+00 : f32
    %284 = vector.broadcast %cst_67 : f32 to vector<16x16xf32>
    %285 = arith.maximumf %283, %284 : vector<16x16xf32>
    %286 = arith.maximumf %274, %285 : vector<16x16xf32>
    %287 = vector.extract_strided_slice %26 {offsets = [80, 0], sizes = [16, 16], strides = [1, 1]} : vector<192x16xf32> to vector<16x16xf32>
    %288 = vector.extract_strided_slice %29 {offsets = [96, 0], sizes = [16, 16], strides = [1, 1]} : vector<192x16xf32> to vector<16x16xf32>
    %289 = arith.addf %287, %288 : vector<16x16xf32>
    %290 = vector.extract_strided_slice %32 {offsets = [112, 0], sizes = [16, 16], strides = [1, 1]} : vector<192x16xf32> to vector<16x16xf32>
    %291 = arith.addf %289, %290 : vector<16x16xf32>
    %292 = vector.extract_strided_slice %35 {offsets = [128, 0], sizes = [16, 16], strides = [1, 1]} : vector<192x16xf32> to vector<16x16xf32>
    %293 = arith.addf %291, %292 : vector<16x16xf32>
    %294 = vector.broadcast %227 : vector<1x16xf32> to vector<16x16xf32>
    %295 = arith.addf %293, %294 : vector<16x16xf32>
    %cst_68 = arith.constant 0.000000e+00 : f32
    %296 = vector.broadcast %cst_68 : f32 to vector<16x16xf32>
    %297 = arith.maximumf %295, %296 : vector<16x16xf32>
    %298 = arith.maximumf %286, %297 : vector<16x16xf32>
    %299 = vector.extract_strided_slice %26 {offsets = [96, 0], sizes = [16, 16], strides = [1, 1]} : vector<192x16xf32> to vector<16x16xf32>
    %300 = vector.extract_strided_slice %29 {offsets = [112, 0], sizes = [16, 16], strides = [1, 1]} : vector<192x16xf32> to vector<16x16xf32>
    %301 = arith.addf %299, %300 : vector<16x16xf32>
    %302 = vector.extract_strided_slice %32 {offsets = [128, 0], sizes = [16, 16], strides = [1, 1]} : vector<192x16xf32> to vector<16x16xf32>
    %303 = arith.addf %301, %302 : vector<16x16xf32>
    %304 = vector.extract_strided_slice %35 {offsets = [144, 0], sizes = [16, 16], strides = [1, 1]} : vector<192x16xf32> to vector<16x16xf32>
    %305 = arith.addf %303, %304 : vector<16x16xf32>
    %306 = vector.broadcast %227 : vector<1x16xf32> to vector<16x16xf32>
    %307 = arith.addf %305, %306 : vector<16x16xf32>
    %cst_69 = arith.constant 0.000000e+00 : f32
    %308 = vector.broadcast %cst_69 : f32 to vector<16x16xf32>
    %309 = arith.maximumf %307, %308 : vector<16x16xf32>
    %310 = arith.maximumf %298, %309 : vector<16x16xf32>
    %311 = vector.extract_strided_slice %26 {offsets = [112, 0], sizes = [16, 16], strides = [1, 1]} : vector<192x16xf32> to vector<16x16xf32>
    %312 = vector.extract_strided_slice %29 {offsets = [128, 0], sizes = [16, 16], strides = [1, 1]} : vector<192x16xf32> to vector<16x16xf32>
    %313 = arith.addf %311, %312 : vector<16x16xf32>
    %314 = vector.extract_strided_slice %32 {offsets = [144, 0], sizes = [16, 16], strides = [1, 1]} : vector<192x16xf32> to vector<16x16xf32>
    %315 = arith.addf %313, %314 : vector<16x16xf32>
    %316 = vector.extract_strided_slice %35 {offsets = [160, 0], sizes = [16, 16], strides = [1, 1]} : vector<192x16xf32> to vector<16x16xf32>
    %317 = arith.addf %315, %316 : vector<16x16xf32>
    %318 = vector.broadcast %227 : vector<1x16xf32> to vector<16x16xf32>
    %319 = arith.addf %317, %318 : vector<16x16xf32>
    %cst_70 = arith.constant 0.000000e+00 : f32
    %320 = vector.broadcast %cst_70 : f32 to vector<16x16xf32>
    %321 = arith.maximumf %319, %320 : vector<16x16xf32>
    %322 = arith.maximumf %310, %321 : vector<16x16xf32>
    %323 = vector.extract_strided_slice %26 {offsets = [128, 0], sizes = [16, 16], strides = [1, 1]} : vector<192x16xf32> to vector<16x16xf32>
    %324 = vector.extract_strided_slice %29 {offsets = [144, 0], sizes = [16, 16], strides = [1, 1]} : vector<192x16xf32> to vector<16x16xf32>
    %325 = arith.addf %323, %324 : vector<16x16xf32>
    %326 = vector.extract_strided_slice %32 {offsets = [160, 0], sizes = [16, 16], strides = [1, 1]} : vector<192x16xf32> to vector<16x16xf32>
    %327 = arith.addf %325, %326 : vector<16x16xf32>
    %328 = vector.extract_strided_slice %35 {offsets = [176, 0], sizes = [16, 16], strides = [1, 1]} : vector<192x16xf32> to vector<16x16xf32>
    %329 = arith.addf %327, %328 : vector<16x16xf32>
    %330 = vector.broadcast %227 : vector<1x16xf32> to vector<16x16xf32>
    %331 = arith.addf %329, %330 : vector<16x16xf32>
    %cst_71 = arith.constant 0.000000e+00 : f32
    %332 = vector.broadcast %cst_71 : f32 to vector<16x16xf32>
    %333 = arith.maximumf %331, %332 : vector<16x16xf32>
    %334 = arith.maximumf %322, %333 : vector<16x16xf32>
    %c0_72 = arith.constant 0 : index
    %c0_73 = arith.constant 0 : index
    %335 = vector.load %arg7[%c0_72, %c0_73] : memref<1x32xf32, #tpu.memory_space<vmem>>, vector<1x32xf32>
    %c0_74 = arith.constant 0 : index
    %c0_75 = arith.constant 0 : index
    %c0_76 = arith.constant 0 : index
    %336 = vector.load %arg6[%c0_74, %c0_75, %c0_76] : memref<3x16x32xf32, #tpu.memory_space<vmem>>, vector<1x16x32xf32>
    %337 = vector.shape_cast %336 : vector<1x16x32xf32> to vector<16x32xf32>
    %cst_77 = arith.constant dense<0.000000e+00> : vector<16x32xf32>
    %338 = tpu.matmul %124, %337, %cst_77 {dimension_numbers = #tpu.dot_dimension_numbers<[1], [0], [0], [1], [0, 0, 1, 1], [], []>} : vector<16x16xf32>, vector<16x32xf32>, vector<16x32xf32> -> vector<16x32xf32>
    %339 = vector.broadcast %335 : vector<1x32xf32> to vector<16x32xf32>
    %340 = arith.addf %339, %338 : vector<16x32xf32>
    %c1_78 = arith.constant 1 : index
    %c0_79 = arith.constant 0 : index
    %c0_80 = arith.constant 0 : index
    %341 = vector.load %arg6[%c1_78, %c0_79, %c0_80] : memref<3x16x32xf32, #tpu.memory_space<vmem>>, vector<1x16x32xf32>
    %342 = vector.shape_cast %341 : vector<1x16x32xf32> to vector<16x32xf32>
    %cst_81 = arith.constant dense<0.000000e+00> : vector<16x32xf32>
    %343 = tpu.matmul %225, %342, %cst_81 {dimension_numbers = #tpu.dot_dimension_numbers<[1], [0], [0], [1], [0, 0, 1, 1], [], []>} : vector<16x16xf32>, vector<16x32xf32>, vector<16x32xf32> -> vector<16x32xf32>
    %344 = arith.addf %340, %343 : vector<16x32xf32>
    %c2_82 = arith.constant 2 : index
    %c0_83 = arith.constant 0 : index
    %c0_84 = arith.constant 0 : index
    %345 = vector.load %arg6[%c2_82, %c0_83, %c0_84] : memref<3x16x32xf32, #tpu.memory_space<vmem>>, vector<1x16x32xf32>
    %346 = vector.shape_cast %345 : vector<1x16x32xf32> to vector<16x32xf32>
    %cst_85 = arith.constant dense<0.000000e+00> : vector<16x32xf32>
    %347 = tpu.matmul %334, %346, %cst_85 {dimension_numbers = #tpu.dot_dimension_numbers<[1], [0], [0], [1], [0, 0, 1, 1], [], []>} : vector<16x16xf32>, vector<16x32xf32>, vector<16x32xf32> -> vector<16x32xf32>
    %348 = arith.addf %344, %347 : vector<16x32xf32>
    %cst_86 = arith.constant 0.000000e+00 : f32
    %349 = vector.broadcast %cst_86 : f32 to vector<16x32xf32>
    %350 = arith.maximumf %348, %349 : vector<16x32xf32>
    %351 = vector.broadcast %8 : vector<16x1xf32> to vector<16x32xf32>
    %352 = arith.mulf %350, %351 : vector<16x32xf32>
    %c0_87 = arith.constant 0 : index
    %c0_88 = arith.constant 0 : index
    %353 = vector.load %arg8[%c0_87, %c0_88] : memref<32x256xf32, #tpu.memory_space<vmem>>, vector<32x256xf32>
    %cst_89 = arith.constant dense<0.000000e+00> : vector<16x256xf32>
    %354 = tpu.matmul %352, %353, %cst_89 {dimension_numbers = #tpu.dot_dimension_numbers<[1], [0], [0], [1], [0, 0, 1, 1], [], []>} : vector<16x32xf32>, vector<32x256xf32>, vector<16x256xf32> -> vector<16x256xf32>
    %c0_90 = arith.constant 0 : index
    %c0_91 = arith.constant 0 : index
    %355 = vector.load %arg10[%c0_90, %c0_91] : memref<1x256xf32, #tpu.memory_space<vmem>>, vector<1x256xf32>
    %356 = vector.broadcast %355 : vector<1x256xf32> to vector<16x256xf32>
    %357 = arith.addf %354, %356 : vector<16x256xf32>
    %c0_92 = arith.constant 0 : index
    %c0_93 = arith.constant 0 : index
    %358 = vector.load %arg9[%c0_92, %c0_93] : memref<32x256xf32, #tpu.memory_space<vmem>>, vector<32x256xf32>
    %cst_94 = arith.constant 0.000000e+00 : f32
    %359 = vector.broadcast %cst_94 : f32 to vector<4x32xf32>
    %cst_95 = arith.constant 0.000000e+00 : f32
    %360 = vector.broadcast %cst_95 : f32 to vector<4x32xf32>
    %cst_96 = arith.constant dense<0.000000e+00> : vector<4x256xf32>
    %361 = tpu.matmul %359, %358, %cst_96 {dimension_numbers = #tpu.dot_dimension_numbers<[1], [0], [0], [1], [0, 0, 1, 1], [], []>} : vector<4x32xf32>, vector<32x256xf32>, vector<4x256xf32> -> vector<4x256xf32>
    %362 = vector.extract_strided_slice %357 {offsets = [0, 0], sizes = [2, 128], strides = [1, 1]} : vector<16x256xf32> to vector<2x128xf32>
    %363 = vector.extract_strided_slice %361 {offsets = [0, 0], sizes = [2, 128], strides = [1, 1]} : vector<4x256xf32> to vector<2x128xf32>
    %364 = arith.addf %362, %363 : vector<2x128xf32>
    %365 = vector.extract_strided_slice %357 {offsets = [14, 128], sizes = [2, 128], strides = [1, 1]} : vector<16x256xf32> to vector<2x128xf32>
    %366 = vector.extract_strided_slice %361 {offsets = [2, 128], sizes = [2, 128], strides = [1, 1]} : vector<4x256xf32> to vector<2x128xf32>
    %367 = arith.addf %365, %366 : vector<2x128xf32>
    %368 = tpu.concatenate %364, %367 in 0 : vector<2x128xf32>, vector<2x128xf32> -> vector<4x128xf32>
    %369 = vector.extract_strided_slice %368 {offsets = [0, 0], sizes = [4, 32], strides = [1, 1]} : vector<4x128xf32> to vector<4x32xf32>
    %370 = arith.negf %369 : vector<4x32xf32>
    %371 = math.exp %370 : vector<4x32xf32>
    %cst_97 = arith.constant 1.000000e+00 : f32
    %372 = vector.broadcast %cst_97 : f32 to vector<4x32xf32>
    %373 = arith.addf %372, %371 : vector<4x32xf32>
    %374 = arith.divf %372, %373 : vector<4x32xf32>
    %375 = vector.extract_strided_slice %368 {offsets = [0, 32], sizes = [4, 32], strides = [1, 1]} : vector<4x128xf32> to vector<4x32xf32>
    %376 = arith.negf %375 : vector<4x32xf32>
    %377 = math.exp %376 : vector<4x32xf32>
    %cst_98 = arith.constant 1.000000e+00 : f32
    %378 = vector.broadcast %cst_98 : f32 to vector<4x32xf32>
    %379 = arith.addf %378, %377 : vector<4x32xf32>
    %380 = arith.divf %378, %379 : vector<4x32xf32>
    %381 = vector.extract_strided_slice %368 {offsets = [0, 64], sizes = [4, 32], strides = [1, 1]} : vector<4x128xf32> to vector<4x32xf32>
    %382 = math.tanh %381 : vector<4x32xf32>
    %383 = vector.extract_strided_slice %368 {offsets = [0, 96], sizes = [4, 32], strides = [1, 1]} : vector<4x128xf32> to vector<4x32xf32>
    %384 = arith.negf %383 : vector<4x32xf32>
    %385 = math.exp %384 : vector<4x32xf32>
    %cst_99 = arith.constant 1.000000e+00 : f32
    %386 = vector.broadcast %cst_99 : f32 to vector<4x32xf32>
    %387 = arith.addf %386, %385 : vector<4x32xf32>
    %388 = arith.divf %386, %387 : vector<4x32xf32>
    %389 = arith.mulf %380, %360 : vector<4x32xf32>
    %390 = arith.mulf %374, %382 : vector<4x32xf32>
    %391 = arith.addf %389, %390 : vector<4x32xf32>
    %392 = math.tanh %391 : vector<4x32xf32>
    %393 = arith.mulf %388, %392 : vector<4x32xf32>
    %394 = vector.extract_strided_slice %393 {offsets = [0, 0], sizes = [2, 32], strides = [1, 1]} : vector<4x32xf32> to vector<2x32xf32>
    %c0_100 = arith.constant 0 : index
    %c0_101 = arith.constant 0 : index
    %395 = vector.load %arg19[%c0_100, %c0_101] : memref<16x32xf32, #tpu.memory_space<vmem>>, vector<2x32xf32>
    tpu.vector_store %arg19[%c0_100, %c0_101], %394 {strides = array<i32>} : memref<16x32xf32, #tpu.memory_space<vmem>>, vector<2x32xf32>,
    %396 = vector.extract_strided_slice %393 {offsets = [2, 0], sizes = [2, 32], strides = [1, 1]} : vector<4x32xf32> to vector<2x32xf32>
    %c14 = arith.constant 14 : index
    %c0_102 = arith.constant 0 : index
    %397 = vector.load %arg20[%c14, %c0_102] : memref<16x32xf32, #tpu.memory_space<vmem>>, vector<2x32xf32>
    tpu.vector_store %arg20[%c14, %c0_102], %396 {strides = array<i32>} : memref<16x32xf32, #tpu.memory_space<vmem>>, vector<2x32xf32>,
    %cst_103 = arith.constant dense<0.000000e+00> : vector<4x256xf32>
    %398 = tpu.matmul %393, %358, %cst_103 {dimension_numbers = #tpu.dot_dimension_numbers<[1], [0], [0], [1], [0, 0, 1, 1], [], []>} : vector<4x32xf32>, vector<32x256xf32>, vector<4x256xf32> -> vector<4x256xf32>
    %399 = vector.extract_strided_slice %357 {offsets = [2, 0], sizes = [2, 128], strides = [1, 1]} : vector<16x256xf32> to vector<2x128xf32>
    %400 = vector.extract_strided_slice %398 {offsets = [0, 0], sizes = [2, 128], strides = [1, 1]} : vector<4x256xf32> to vector<2x128xf32>
    %401 = arith.addf %399, %400 : vector<2x128xf32>
    %402 = vector.extract_strided_slice %357 {offsets = [12, 128], sizes = [2, 128], strides = [1, 1]} : vector<16x256xf32> to vector<2x128xf32>
    %403 = vector.extract_strided_slice %398 {offsets = [2, 128], sizes = [2, 128], strides = [1, 1]} : vector<4x256xf32> to vector<2x128xf32>
    %404 = arith.addf %402, %403 : vector<2x128xf32>
    %405 = tpu.concatenate %401, %404 in 0 : vector<2x128xf32>, vector<2x128xf32> -> vector<4x128xf32>
    %406 = vector.extract_strided_slice %405 {offsets = [0, 0], sizes = [4, 32], strides = [1, 1]} : vector<4x128xf32> to vector<4x32xf32>
    %407 = arith.negf %406 : vector<4x32xf32>
    %408 = math.exp %407 : vector<4x32xf32>
    %cst_104 = arith.constant 1.000000e+00 : f32
    %409 = vector.broadcast %cst_104 : f32 to vector<4x32xf32>
    %410 = arith.addf %409, %408 : vector<4x32xf32>
    %411 = arith.divf %409, %410 : vector<4x32xf32>
    %412 = vector.extract_strided_slice %405 {offsets = [0, 32], sizes = [4, 32], strides = [1, 1]} : vector<4x128xf32> to vector<4x32xf32>
    %413 = arith.negf %412 : vector<4x32xf32>
    %414 = math.exp %413 : vector<4x32xf32>
    %cst_105 = arith.constant 1.000000e+00 : f32
    %415 = vector.broadcast %cst_105 : f32 to vector<4x32xf32>
    %416 = arith.addf %415, %414 : vector<4x32xf32>
    %417 = arith.divf %415, %416 : vector<4x32xf32>
    %418 = vector.extract_strided_slice %405 {offsets = [0, 64], sizes = [4, 32], strides = [1, 1]} : vector<4x128xf32> to vector<4x32xf32>
    %419 = math.tanh %418 : vector<4x32xf32>
    %420 = vector.extract_strided_slice %405 {offsets = [0, 96], sizes = [4, 32], strides = [1, 1]} : vector<4x128xf32> to vector<4x32xf32>
    %421 = arith.negf %420 : vector<4x32xf32>
    %422 = math.exp %421 : vector<4x32xf32>
    %cst_106 = arith.constant 1.000000e+00 : f32
    %423 = vector.broadcast %cst_106 : f32 to vector<4x32xf32>
    %424 = arith.addf %423, %422 : vector<4x32xf32>
    %425 = arith.divf %423, %424 : vector<4x32xf32>
    %426 = arith.mulf %417, %391 : vector<4x32xf32>
    %427 = arith.mulf %411, %419 : vector<4x32xf32>
    %428 = arith.addf %426, %427 : vector<4x32xf32>
    %429 = math.tanh %428 : vector<4x32xf32>
    %430 = arith.mulf %425, %429 : vector<4x32xf32>
    %431 = vector.extract_strided_slice %430 {offsets = [0, 0], sizes = [2, 32], strides = [1, 1]} : vector<4x32xf32> to vector<2x32xf32>
    %c2_107 = arith.constant 2 : index
    %c0_108 = arith.constant 0 : index
    %432 = vector.load %arg19[%c2_107, %c0_108] : memref<16x32xf32, #tpu.memory_space<vmem>>, vector<2x32xf32>
    tpu.vector_store %arg19[%c2_107, %c0_108], %431 {strides = array<i32>} : memref<16x32xf32, #tpu.memory_space<vmem>>, vector<2x32xf32>,
    %433 = vector.extract_strided_slice %430 {offsets = [2, 0], sizes = [2, 32], strides = [1, 1]} : vector<4x32xf32> to vector<2x32xf32>
    %c12 = arith.constant 12 : index
    %c0_109 = arith.constant 0 : index
    %434 = vector.load %arg20[%c12, %c0_109] : memref<16x32xf32, #tpu.memory_space<vmem>>, vector<2x32xf32>
    tpu.vector_store %arg20[%c12, %c0_109], %433 {strides = array<i32>} : memref<16x32xf32, #tpu.memory_space<vmem>>, vector<2x32xf32>,
    %cst_110 = arith.constant dense<0.000000e+00> : vector<4x256xf32>
    %435 = tpu.matmul %430, %358, %cst_110 {dimension_numbers = #tpu.dot_dimension_numbers<[1], [0], [0], [1], [0, 0, 1, 1], [], []>} : vector<4x32xf32>, vector<32x256xf32>, vector<4x256xf32> -> vector<4x256xf32>
    %436 = vector.extract_strided_slice %357 {offsets = [4, 0], sizes = [2, 128], strides = [1, 1]} : vector<16x256xf32> to vector<2x128xf32>
    %437 = vector.extract_strided_slice %435 {offsets = [0, 0], sizes = [2, 128], strides = [1, 1]} : vector<4x256xf32> to vector<2x128xf32>
    %438 = arith.addf %436, %437 : vector<2x128xf32>
    %439 = vector.extract_strided_slice %357 {offsets = [10, 128], sizes = [2, 128], strides = [1, 1]} : vector<16x256xf32> to vector<2x128xf32>
    %440 = vector.extract_strided_slice %435 {offsets = [2, 128], sizes = [2, 128], strides = [1, 1]} : vector<4x256xf32> to vector<2x128xf32>
    %441 = arith.addf %439, %440 : vector<2x128xf32>
    %442 = tpu.concatenate %438, %441 in 0 : vector<2x128xf32>, vector<2x128xf32> -> vector<4x128xf32>
    %443 = vector.extract_strided_slice %442 {offsets = [0, 0], sizes = [4, 32], strides = [1, 1]} : vector<4x128xf32> to vector<4x32xf32>
    %444 = arith.negf %443 : vector<4x32xf32>
    %445 = math.exp %444 : vector<4x32xf32>
    %cst_111 = arith.constant 1.000000e+00 : f32
    %446 = vector.broadcast %cst_111 : f32 to vector<4x32xf32>
    %447 = arith.addf %446, %445 : vector<4x32xf32>
    %448 = arith.divf %446, %447 : vector<4x32xf32>
    %449 = vector.extract_strided_slice %442 {offsets = [0, 32], sizes = [4, 32], strides = [1, 1]} : vector<4x128xf32> to vector<4x32xf32>
    %450 = arith.negf %449 : vector<4x32xf32>
    %451 = math.exp %450 : vector<4x32xf32>
    %cst_112 = arith.constant 1.000000e+00 : f32
    %452 = vector.broadcast %cst_112 : f32 to vector<4x32xf32>
    %453 = arith.addf %452, %451 : vector<4x32xf32>
    %454 = arith.divf %452, %453 : vector<4x32xf32>
    %455 = vector.extract_strided_slice %442 {offsets = [0, 64], sizes = [4, 32], strides = [1, 1]} : vector<4x128xf32> to vector<4x32xf32>
    %456 = math.tanh %455 : vector<4x32xf32>
    %457 = vector.extract_strided_slice %442 {offsets = [0, 96], sizes = [4, 32], strides = [1, 1]} : vector<4x128xf32> to vector<4x32xf32>
    %458 = arith.negf %457 : vector<4x32xf32>
    %459 = math.exp %458 : vector<4x32xf32>
    %cst_113 = arith.constant 1.000000e+00 : f32
    %460 = vector.broadcast %cst_113 : f32 to vector<4x32xf32>
    %461 = arith.addf %460, %459 : vector<4x32xf32>
    %462 = arith.divf %460, %461 : vector<4x32xf32>
    %463 = arith.mulf %454, %428 : vector<4x32xf32>
    %464 = arith.mulf %448, %456 : vector<4x32xf32>
    %465 = arith.addf %463, %464 : vector<4x32xf32>
    %466 = math.tanh %465 : vector<4x32xf32>
    %467 = arith.mulf %462, %466 : vector<4x32xf32>
    %468 = vector.extract_strided_slice %467 {offsets = [0, 0], sizes = [2, 32], strides = [1, 1]} : vector<4x32xf32> to vector<2x32xf32>
    %c4_114 = arith.constant 4 : index
    %c0_115 = arith.constant 0 : index
    %469 = vector.load %arg19[%c4_114, %c0_115] : memref<16x32xf32, #tpu.memory_space<vmem>>, vector<2x32xf32>
    tpu.vector_store %arg19[%c4_114, %c0_115], %468 {strides = array<i32>} : memref<16x32xf32, #tpu.memory_space<vmem>>, vector<2x32xf32>,
    %470 = vector.extract_strided_slice %467 {offsets = [2, 0], sizes = [2, 32], strides = [1, 1]} : vector<4x32xf32> to vector<2x32xf32>
    %c10 = arith.constant 10 : index
    %c0_116 = arith.constant 0 : index
    %471 = vector.load %arg20[%c10, %c0_116] : memref<16x32xf32, #tpu.memory_space<vmem>>, vector<2x32xf32>
    tpu.vector_store %arg20[%c10, %c0_116], %470 {strides = array<i32>} : memref<16x32xf32, #tpu.memory_space<vmem>>, vector<2x32xf32>,
    %cst_117 = arith.constant dense<0.000000e+00> : vector<4x256xf32>
    %472 = tpu.matmul %467, %358, %cst_117 {dimension_numbers = #tpu.dot_dimension_numbers<[1], [0], [0], [1], [0, 0, 1, 1], [], []>} : vector<4x32xf32>, vector<32x256xf32>, vector<4x256xf32> -> vector<4x256xf32>
    %473 = vector.extract_strided_slice %357 {offsets = [6, 0], sizes = [2, 128], strides = [1, 1]} : vector<16x256xf32> to vector<2x128xf32>
    %474 = vector.extract_strided_slice %472 {offsets = [0, 0], sizes = [2, 128], strides = [1, 1]} : vector<4x256xf32> to vector<2x128xf32>
    %475 = arith.addf %473, %474 : vector<2x128xf32>
    %476 = vector.extract_strided_slice %357 {offsets = [8, 128], sizes = [2, 128], strides = [1, 1]} : vector<16x256xf32> to vector<2x128xf32>
    %477 = vector.extract_strided_slice %472 {offsets = [2, 128], sizes = [2, 128], strides = [1, 1]} : vector<4x256xf32> to vector<2x128xf32>
    %478 = arith.addf %476, %477 : vector<2x128xf32>
    %479 = tpu.concatenate %475, %478 in 0 : vector<2x128xf32>, vector<2x128xf32> -> vector<4x128xf32>
    %480 = vector.extract_strided_slice %479 {offsets = [0, 0], sizes = [4, 32], strides = [1, 1]} : vector<4x128xf32> to vector<4x32xf32>
    %481 = arith.negf %480 : vector<4x32xf32>
    %482 = math.exp %481 : vector<4x32xf32>
    %cst_118 = arith.constant 1.000000e+00 : f32
    %483 = vector.broadcast %cst_118 : f32 to vector<4x32xf32>
    %484 = arith.addf %483, %482 : vector<4x32xf32>
    %485 = arith.divf %483, %484 : vector<4x32xf32>
    %486 = vector.extract_strided_slice %479 {offsets = [0, 32], sizes = [4, 32], strides = [1, 1]} : vector<4x128xf32> to vector<4x32xf32>
    %487 = arith.negf %486 : vector<4x32xf32>
    %488 = math.exp %487 : vector<4x32xf32>
    %cst_119 = arith.constant 1.000000e+00 : f32
    %489 = vector.broadcast %cst_119 : f32 to vector<4x32xf32>
    %490 = arith.addf %489, %488 : vector<4x32xf32>
    %491 = arith.divf %489, %490 : vector<4x32xf32>
    %492 = vector.extract_strided_slice %479 {offsets = [0, 64], sizes = [4, 32], strides = [1, 1]} : vector<4x128xf32> to vector<4x32xf32>
    %493 = math.tanh %492 : vector<4x32xf32>
    %494 = vector.extract_strided_slice %479 {offsets = [0, 96], sizes = [4, 32], strides = [1, 1]} : vector<4x128xf32> to vector<4x32xf32>
    %495 = arith.negf %494 : vector<4x32xf32>
    %496 = math.exp %495 : vector<4x32xf32>
    %cst_120 = arith.constant 1.000000e+00 : f32
    %497 = vector.broadcast %cst_120 : f32 to vector<4x32xf32>
    %498 = arith.addf %497, %496 : vector<4x32xf32>
    %499 = arith.divf %497, %498 : vector<4x32xf32>
    %500 = arith.mulf %491, %465 : vector<4x32xf32>
    %501 = arith.mulf %485, %493 : vector<4x32xf32>
    %502 = arith.addf %500, %501 : vector<4x32xf32>
    %503 = math.tanh %502 : vector<4x32xf32>
    %504 = arith.mulf %499, %503 : vector<4x32xf32>
    %505 = vector.extract_strided_slice %504 {offsets = [0, 0], sizes = [2, 32], strides = [1, 1]} : vector<4x32xf32> to vector<2x32xf32>
    %c6_121 = arith.constant 6 : index
    %c0_122 = arith.constant 0 : index
    %506 = vector.load %arg19[%c6_121, %c0_122] : memref<16x32xf32, #tpu.memory_space<vmem>>, vector<2x32xf32>
    tpu.vector_store %arg19[%c6_121, %c0_122], %505 {strides = array<i32>} : memref<16x32xf32, #tpu.memory_space<vmem>>, vector<2x32xf32>,
    %507 = vector.extract_strided_slice %504 {offsets = [2, 0], sizes = [2, 32], strides = [1, 1]} : vector<4x32xf32> to vector<2x32xf32>
    %c8_123 = arith.constant 8 : index
    %c0_124 = arith.constant 0 : index
    %508 = vector.load %arg20[%c8_123, %c0_124] : memref<16x32xf32, #tpu.memory_space<vmem>>, vector<2x32xf32>
    tpu.vector_store %arg20[%c8_123, %c0_124], %507 {strides = array<i32>} : memref<16x32xf32, #tpu.memory_space<vmem>>, vector<2x32xf32>,
    %cst_125 = arith.constant dense<0.000000e+00> : vector<4x256xf32>
    %509 = tpu.matmul %504, %358, %cst_125 {dimension_numbers = #tpu.dot_dimension_numbers<[1], [0], [0], [1], [0, 0, 1, 1], [], []>} : vector<4x32xf32>, vector<32x256xf32>, vector<4x256xf32> -> vector<4x256xf32>
    %510 = vector.extract_strided_slice %357 {offsets = [8, 0], sizes = [2, 128], strides = [1, 1]} : vector<16x256xf32> to vector<2x128xf32>
    %511 = vector.extract_strided_slice %509 {offsets = [0, 0], sizes = [2, 128], strides = [1, 1]} : vector<4x256xf32> to vector<2x128xf32>
    %512 = arith.addf %510, %511 : vector<2x128xf32>
    %513 = vector.extract_strided_slice %357 {offsets = [6, 128], sizes = [2, 128], strides = [1, 1]} : vector<16x256xf32> to vector<2x128xf32>
    %514 = vector.extract_strided_slice %509 {offsets = [2, 128], sizes = [2, 128], strides = [1, 1]} : vector<4x256xf32> to vector<2x128xf32>
    %515 = arith.addf %513, %514 : vector<2x128xf32>
    %516 = tpu.concatenate %512, %515 in 0 : vector<2x128xf32>, vector<2x128xf32> -> vector<4x128xf32>
    %517 = vector.extract_strided_slice %516 {offsets = [0, 0], sizes = [4, 32], strides = [1, 1]} : vector<4x128xf32> to vector<4x32xf32>
    %518 = arith.negf %517 : vector<4x32xf32>
    %519 = math.exp %518 : vector<4x32xf32>
    %cst_126 = arith.constant 1.000000e+00 : f32
    %520 = vector.broadcast %cst_126 : f32 to vector<4x32xf32>
    %521 = arith.addf %520, %519 : vector<4x32xf32>
    %522 = arith.divf %520, %521 : vector<4x32xf32>
    %523 = vector.extract_strided_slice %516 {offsets = [0, 32], sizes = [4, 32], strides = [1, 1]} : vector<4x128xf32> to vector<4x32xf32>
    %524 = arith.negf %523 : vector<4x32xf32>
    %525 = math.exp %524 : vector<4x32xf32>
    %cst_127 = arith.constant 1.000000e+00 : f32
    %526 = vector.broadcast %cst_127 : f32 to vector<4x32xf32>
    %527 = arith.addf %526, %525 : vector<4x32xf32>
    %528 = arith.divf %526, %527 : vector<4x32xf32>
    %529 = vector.extract_strided_slice %516 {offsets = [0, 64], sizes = [4, 32], strides = [1, 1]} : vector<4x128xf32> to vector<4x32xf32>
    %530 = math.tanh %529 : vector<4x32xf32>
    %531 = vector.extract_strided_slice %516 {offsets = [0, 96], sizes = [4, 32], strides = [1, 1]} : vector<4x128xf32> to vector<4x32xf32>
    %532 = arith.negf %531 : vector<4x32xf32>
    %533 = math.exp %532 : vector<4x32xf32>
    %cst_128 = arith.constant 1.000000e+00 : f32
    %534 = vector.broadcast %cst_128 : f32 to vector<4x32xf32>
    %535 = arith.addf %534, %533 : vector<4x32xf32>
    %536 = arith.divf %534, %535 : vector<4x32xf32>
    %537 = arith.mulf %528, %502 : vector<4x32xf32>
    %538 = arith.mulf %522, %530 : vector<4x32xf32>
    %539 = arith.addf %537, %538 : vector<4x32xf32>
    %540 = math.tanh %539 : vector<4x32xf32>
    %541 = arith.mulf %536, %540 : vector<4x32xf32>
    %542 = vector.extract_strided_slice %541 {offsets = [0, 0], sizes = [2, 32], strides = [1, 1]} : vector<4x32xf32> to vector<2x32xf32>
    %c8_129 = arith.constant 8 : index
    %c0_130 = arith.constant 0 : index
    %543 = vector.load %arg19[%c8_129, %c0_130] : memref<16x32xf32, #tpu.memory_space<vmem>>, vector<2x32xf32>
    tpu.vector_store %arg19[%c8_129, %c0_130], %542 {strides = array<i32>} : memref<16x32xf32, #tpu.memory_space<vmem>>, vector<2x32xf32>,
    %544 = vector.extract_strided_slice %541 {offsets = [2, 0], sizes = [2, 32], strides = [1, 1]} : vector<4x32xf32> to vector<2x32xf32>
    %c6_131 = arith.constant 6 : index
    %c0_132 = arith.constant 0 : index
    %545 = vector.load %arg20[%c6_131, %c0_132] : memref<16x32xf32, #tpu.memory_space<vmem>>, vector<2x32xf32>
    tpu.vector_store %arg20[%c6_131, %c0_132], %544 {strides = array<i32>} : memref<16x32xf32, #tpu.memory_space<vmem>>, vector<2x32xf32>,
    %cst_133 = arith.constant dense<0.000000e+00> : vector<4x256xf32>
    %546 = tpu.matmul %541, %358, %cst_133 {dimension_numbers = #tpu.dot_dimension_numbers<[1], [0], [0], [1], [0, 0, 1, 1], [], []>} : vector<4x32xf32>, vector<32x256xf32>, vector<4x256xf32> -> vector<4x256xf32>
    %547 = vector.extract_strided_slice %357 {offsets = [10, 0], sizes = [2, 128], strides = [1, 1]} : vector<16x256xf32> to vector<2x128xf32>
    %548 = vector.extract_strided_slice %546 {offsets = [0, 0], sizes = [2, 128], strides = [1, 1]} : vector<4x256xf32> to vector<2x128xf32>
    %549 = arith.addf %547, %548 : vector<2x128xf32>
    %550 = vector.extract_strided_slice %357 {offsets = [4, 128], sizes = [2, 128], strides = [1, 1]} : vector<16x256xf32> to vector<2x128xf32>
    %551 = vector.extract_strided_slice %546 {offsets = [2, 128], sizes = [2, 128], strides = [1, 1]} : vector<4x256xf32> to vector<2x128xf32>
    %552 = arith.addf %550, %551 : vector<2x128xf32>
    %553 = tpu.concatenate %549, %552 in 0 : vector<2x128xf32>, vector<2x128xf32> -> vector<4x128xf32>
    %554 = vector.extract_strided_slice %553 {offsets = [0, 0], sizes = [4, 32], strides = [1, 1]} : vector<4x128xf32> to vector<4x32xf32>
    %555 = arith.negf %554 : vector<4x32xf32>
    %556 = math.exp %555 : vector<4x32xf32>
    %cst_134 = arith.constant 1.000000e+00 : f32
    %557 = vector.broadcast %cst_134 : f32 to vector<4x32xf32>
    %558 = arith.addf %557, %556 : vector<4x32xf32>
    %559 = arith.divf %557, %558 : vector<4x32xf32>
    %560 = vector.extract_strided_slice %553 {offsets = [0, 32], sizes = [4, 32], strides = [1, 1]} : vector<4x128xf32> to vector<4x32xf32>
    %561 = arith.negf %560 : vector<4x32xf32>
    %562 = math.exp %561 : vector<4x32xf32>
    %cst_135 = arith.constant 1.000000e+00 : f32
    %563 = vector.broadcast %cst_135 : f32 to vector<4x32xf32>
    %564 = arith.addf %563, %562 : vector<4x32xf32>
    %565 = arith.divf %563, %564 : vector<4x32xf32>
    %566 = vector.extract_strided_slice %553 {offsets = [0, 64], sizes = [4, 32], strides = [1, 1]} : vector<4x128xf32> to vector<4x32xf32>
    %567 = math.tanh %566 : vector<4x32xf32>
    %568 = vector.extract_strided_slice %553 {offsets = [0, 96], sizes = [4, 32], strides = [1, 1]} : vector<4x128xf32> to vector<4x32xf32>
    %569 = arith.negf %568 : vector<4x32xf32>
    %570 = math.exp %569 : vector<4x32xf32>
    %cst_136 = arith.constant 1.000000e+00 : f32
    %571 = vector.broadcast %cst_136 : f32 to vector<4x32xf32>
    %572 = arith.addf %571, %570 : vector<4x32xf32>
    %573 = arith.divf %571, %572 : vector<4x32xf32>
    %574 = arith.mulf %565, %539 : vector<4x32xf32>
    %575 = arith.mulf %559, %567 : vector<4x32xf32>
    %576 = arith.addf %574, %575 : vector<4x32xf32>
    %577 = math.tanh %576 : vector<4x32xf32>
    %578 = arith.mulf %573, %577 : vector<4x32xf32>
    %579 = vector.extract_strided_slice %578 {offsets = [0, 0], sizes = [2, 32], strides = [1, 1]} : vector<4x32xf32> to vector<2x32xf32>
    %c10_137 = arith.constant 10 : index
    %c0_138 = arith.constant 0 : index
    %580 = vector.load %arg19[%c10_137, %c0_138] : memref<16x32xf32, #tpu.memory_space<vmem>>, vector<2x32xf32>
    tpu.vector_store %arg19[%c10_137, %c0_138], %579 {strides = array<i32>} : memref<16x32xf32, #tpu.memory_space<vmem>>, vector<2x32xf32>,
    %581 = vector.extract_strided_slice %578 {offsets = [2, 0], sizes = [2, 32], strides = [1, 1]} : vector<4x32xf32> to vector<2x32xf32>
    %c4_139 = arith.constant 4 : index
    %c0_140 = arith.constant 0 : index
    %582 = vector.load %arg20[%c4_139, %c0_140] : memref<16x32xf32, #tpu.memory_space<vmem>>, vector<2x32xf32>
    tpu.vector_store %arg20[%c4_139, %c0_140], %581 {strides = array<i32>} : memref<16x32xf32, #tpu.memory_space<vmem>>, vector<2x32xf32>,
    %cst_141 = arith.constant dense<0.000000e+00> : vector<4x256xf32>
    %583 = tpu.matmul %578, %358, %cst_141 {dimension_numbers = #tpu.dot_dimension_numbers<[1], [0], [0], [1], [0, 0, 1, 1], [], []>} : vector<4x32xf32>, vector<32x256xf32>, vector<4x256xf32> -> vector<4x256xf32>
    %584 = vector.extract_strided_slice %357 {offsets = [12, 0], sizes = [2, 128], strides = [1, 1]} : vector<16x256xf32> to vector<2x128xf32>
    %585 = vector.extract_strided_slice %583 {offsets = [0, 0], sizes = [2, 128], strides = [1, 1]} : vector<4x256xf32> to vector<2x128xf32>
    %586 = arith.addf %584, %585 : vector<2x128xf32>
    %587 = vector.extract_strided_slice %357 {offsets = [2, 128], sizes = [2, 128], strides = [1, 1]} : vector<16x256xf32> to vector<2x128xf32>
    %588 = vector.extract_strided_slice %583 {offsets = [2, 128], sizes = [2, 128], strides = [1, 1]} : vector<4x256xf32> to vector<2x128xf32>
    %589 = arith.addf %587, %588 : vector<2x128xf32>
    %590 = tpu.concatenate %586, %589 in 0 : vector<2x128xf32>, vector<2x128xf32> -> vector<4x128xf32>
    %591 = vector.extract_strided_slice %590 {offsets = [0, 0], sizes = [4, 32], strides = [1, 1]} : vector<4x128xf32> to vector<4x32xf32>
    %592 = arith.negf %591 : vector<4x32xf32>
    %593 = math.exp %592 : vector<4x32xf32>
    %cst_142 = arith.constant 1.000000e+00 : f32
    %594 = vector.broadcast %cst_142 : f32 to vector<4x32xf32>
    %595 = arith.addf %594, %593 : vector<4x32xf32>
    %596 = arith.divf %594, %595 : vector<4x32xf32>
    %597 = vector.extract_strided_slice %590 {offsets = [0, 32], sizes = [4, 32], strides = [1, 1]} : vector<4x128xf32> to vector<4x32xf32>
    %598 = arith.negf %597 : vector<4x32xf32>
    %599 = math.exp %598 : vector<4x32xf32>
    %cst_143 = arith.constant 1.000000e+00 : f32
    %600 = vector.broadcast %cst_143 : f32 to vector<4x32xf32>
    %601 = arith.addf %600, %599 : vector<4x32xf32>
    %602 = arith.divf %600, %601 : vector<4x32xf32>
    %603 = vector.extract_strided_slice %590 {offsets = [0, 64], sizes = [4, 32], strides = [1, 1]} : vector<4x128xf32> to vector<4x32xf32>
    %604 = math.tanh %603 : vector<4x32xf32>
    %605 = vector.extract_strided_slice %590 {offsets = [0, 96], sizes = [4, 32], strides = [1, 1]} : vector<4x128xf32> to vector<4x32xf32>
    %606 = arith.negf %605 : vector<4x32xf32>
    %607 = math.exp %606 : vector<4x32xf32>
    %cst_144 = arith.constant 1.000000e+00 : f32
    %608 = vector.broadcast %cst_144 : f32 to vector<4x32xf32>
    %609 = arith.addf %608, %607 : vector<4x32xf32>
    %610 = arith.divf %608, %609 : vector<4x32xf32>
    %611 = arith.mulf %602, %576 : vector<4x32xf32>
    %612 = arith.mulf %596, %604 : vector<4x32xf32>
    %613 = arith.addf %611, %612 : vector<4x32xf32>
    %614 = math.tanh %613 : vector<4x32xf32>
    %615 = arith.mulf %610, %614 : vector<4x32xf32>
    %616 = vector.extract_strided_slice %615 {offsets = [0, 0], sizes = [2, 32], strides = [1, 1]} : vector<4x32xf32> to vector<2x32xf32>
    %c12_145 = arith.constant 12 : index
    %c0_146 = arith.constant 0 : index
    %617 = vector.load %arg19[%c12_145, %c0_146] : memref<16x32xf32, #tpu.memory_space<vmem>>, vector<2x32xf32>
    tpu.vector_store %arg19[%c12_145, %c0_146], %616 {strides = array<i32>} : memref<16x32xf32, #tpu.memory_space<vmem>>, vector<2x32xf32>,
    %618 = vector.extract_strided_slice %615 {offsets = [2, 0], sizes = [2, 32], strides = [1, 1]} : vector<4x32xf32> to vector<2x32xf32>
    %c2_147 = arith.constant 2 : index
    %c0_148 = arith.constant 0 : index
    %619 = vector.load %arg20[%c2_147, %c0_148] : memref<16x32xf32, #tpu.memory_space<vmem>>, vector<2x32xf32>
    tpu.vector_store %arg20[%c2_147, %c0_148], %618 {strides = array<i32>} : memref<16x32xf32, #tpu.memory_space<vmem>>, vector<2x32xf32>,
    %cst_149 = arith.constant dense<0.000000e+00> : vector<4x256xf32>
    %620 = tpu.matmul %615, %358, %cst_149 {dimension_numbers = #tpu.dot_dimension_numbers<[1], [0], [0], [1], [0, 0, 1, 1], [], []>} : vector<4x32xf32>, vector<32x256xf32>, vector<4x256xf32> -> vector<4x256xf32>
    %621 = vector.extract_strided_slice %357 {offsets = [14, 0], sizes = [2, 128], strides = [1, 1]} : vector<16x256xf32> to vector<2x128xf32>
    %622 = vector.extract_strided_slice %620 {offsets = [0, 0], sizes = [2, 128], strides = [1, 1]} : vector<4x256xf32> to vector<2x128xf32>
    %623 = arith.addf %621, %622 : vector<2x128xf32>
    %624 = vector.extract_strided_slice %357 {offsets = [0, 128], sizes = [2, 128], strides = [1, 1]} : vector<16x256xf32> to vector<2x128xf32>
    %625 = vector.extract_strided_slice %620 {offsets = [2, 128], sizes = [2, 128], strides = [1, 1]} : vector<4x256xf32> to vector<2x128xf32>
    %626 = arith.addf %624, %625 : vector<2x128xf32>
    %627 = tpu.concatenate %623, %626 in 0 : vector<2x128xf32>, vector<2x128xf32> -> vector<4x128xf32>
    %628 = vector.extract_strided_slice %627 {offsets = [0, 0], sizes = [4, 32], strides = [1, 1]} : vector<4x128xf32> to vector<4x32xf32>
    %629 = arith.negf %628 : vector<4x32xf32>
    %630 = math.exp %629 : vector<4x32xf32>
    %cst_150 = arith.constant 1.000000e+00 : f32
    %631 = vector.broadcast %cst_150 : f32 to vector<4x32xf32>
    %632 = arith.addf %631, %630 : vector<4x32xf32>
    %633 = arith.divf %631, %632 : vector<4x32xf32>
    %634 = vector.extract_strided_slice %627 {offsets = [0, 32], sizes = [4, 32], strides = [1, 1]} : vector<4x128xf32> to vector<4x32xf32>
    %635 = arith.negf %634 : vector<4x32xf32>
    %636 = math.exp %635 : vector<4x32xf32>
    %cst_151 = arith.constant 1.000000e+00 : f32
    %637 = vector.broadcast %cst_151 : f32 to vector<4x32xf32>
    %638 = arith.addf %637, %636 : vector<4x32xf32>
    %639 = arith.divf %637, %638 : vector<4x32xf32>
    %640 = vector.extract_strided_slice %627 {offsets = [0, 64], sizes = [4, 32], strides = [1, 1]} : vector<4x128xf32> to vector<4x32xf32>
    %641 = math.tanh %640 : vector<4x32xf32>
    %642 = vector.extract_strided_slice %627 {offsets = [0, 96], sizes = [4, 32], strides = [1, 1]} : vector<4x128xf32> to vector<4x32xf32>
    %643 = arith.negf %642 : vector<4x32xf32>
    %644 = math.exp %643 : vector<4x32xf32>
    %cst_152 = arith.constant 1.000000e+00 : f32
    %645 = vector.broadcast %cst_152 : f32 to vector<4x32xf32>
    %646 = arith.addf %645, %644 : vector<4x32xf32>
    %647 = arith.divf %645, %646 : vector<4x32xf32>
    %648 = arith.mulf %639, %613 : vector<4x32xf32>
    %649 = arith.mulf %633, %641 : vector<4x32xf32>
    %650 = arith.addf %648, %649 : vector<4x32xf32>
    %651 = math.tanh %650 : vector<4x32xf32>
    %652 = arith.mulf %647, %651 : vector<4x32xf32>
    %653 = vector.extract_strided_slice %652 {offsets = [0, 0], sizes = [2, 32], strides = [1, 1]} : vector<4x32xf32> to vector<2x32xf32>
    %c14_153 = arith.constant 14 : index
    %c0_154 = arith.constant 0 : index
    %654 = vector.load %arg19[%c14_153, %c0_154] : memref<16x32xf32, #tpu.memory_space<vmem>>, vector<2x32xf32>
    tpu.vector_store %arg19[%c14_153, %c0_154], %653 {strides = array<i32>} : memref<16x32xf32, #tpu.memory_space<vmem>>, vector<2x32xf32>,
    %655 = vector.extract_strided_slice %652 {offsets = [2, 0], sizes = [2, 32], strides = [1, 1]} : vector<4x32xf32> to vector<2x32xf32>
    %c0_155 = arith.constant 0 : index
    %c0_156 = arith.constant 0 : index
    %656 = vector.load %arg20[%c0_155, %c0_156] : memref<16x32xf32, #tpu.memory_space<vmem>>, vector<2x32xf32>
    tpu.vector_store %arg20[%c0_155, %c0_156], %655 {strides = array<i32>} : memref<16x32xf32, #tpu.memory_space<vmem>>, vector<2x32xf32>,
    %c0_157 = arith.constant 0 : index
    %c0_158 = arith.constant 0 : index
    %657 = vector.load %arg19[%c0_157, %c0_158] : memref<16x32xf32, #tpu.memory_space<vmem>>, vector<16x32xf32>
    %c0_159 = arith.constant 0 : index
    %c0_160 = arith.constant 0 : index
    %658 = vector.load %arg20[%c0_159, %c0_160] : memref<16x32xf32, #tpu.memory_space<vmem>>, vector<16x32xf32>
    %c0_161 = arith.constant 0 : index
    %c0_162 = arith.constant 0 : index
    %659 = vector.load %arg11[%c0_161, %c0_162] : memref<64x256xf32, #tpu.memory_space<vmem>>, vector<64x256xf32>
    %660 = vector.extract_strided_slice %659 {offsets = [0, 0], sizes = [32, 256], strides = [1, 1]} : vector<64x256xf32> to vector<32x256xf32>
    %cst_163 = arith.constant dense<0.000000e+00> : vector<16x256xf32>
    %661 = tpu.matmul %657, %660, %cst_163 {dimension_numbers = #tpu.dot_dimension_numbers<[1], [0], [0], [1], [0, 0, 1, 1], [], []>} : vector<16x32xf32>, vector<32x256xf32>, vector<16x256xf32> -> vector<16x256xf32>
    %662 = vector.extract_strided_slice %659 {offsets = [32, 0], sizes = [32, 256], strides = [1, 1]} : vector<64x256xf32> to vector<32x256xf32>
    %cst_164 = arith.constant dense<0.000000e+00> : vector<16x256xf32>
    %663 = tpu.matmul %658, %662, %cst_164 {dimension_numbers = #tpu.dot_dimension_numbers<[1], [0], [0], [1], [0, 0, 1, 1], [], []>} : vector<16x32xf32>, vector<32x256xf32>, vector<16x256xf32> -> vector<16x256xf32>
    %664 = arith.addf %661, %663 : vector<16x256xf32>
    %c0_165 = arith.constant 0 : index
    %c0_166 = arith.constant 0 : index
    %665 = vector.load %arg13[%c0_165, %c0_166] : memref<1x256xf32, #tpu.memory_space<vmem>>, vector<1x256xf32>
    %666 = vector.broadcast %665 : vector<1x256xf32> to vector<16x256xf32>
    %667 = arith.addf %664, %666 : vector<16x256xf32>
    %c0_167 = arith.constant 0 : index
    %c0_168 = arith.constant 0 : index
    %668 = vector.load %arg12[%c0_167, %c0_168] : memref<32x256xf32, #tpu.memory_space<vmem>>, vector<32x256xf32>
    %cst_169 = arith.constant 0.000000e+00 : f32
    %669 = vector.broadcast %cst_169 : f32 to vector<4x32xf32>
    %cst_170 = arith.constant 0.000000e+00 : f32
    %670 = vector.broadcast %cst_170 : f32 to vector<4x32xf32>
    %cst_171 = arith.constant dense<0.000000e+00> : vector<4x256xf32>
    %671 = tpu.matmul %669, %668, %cst_171 {dimension_numbers = #tpu.dot_dimension_numbers<[1], [0], [0], [1], [0, 0, 1, 1], [], []>} : vector<4x32xf32>, vector<32x256xf32>, vector<4x256xf32> -> vector<4x256xf32>
    %672 = vector.extract_strided_slice %667 {offsets = [0, 0], sizes = [2, 128], strides = [1, 1]} : vector<16x256xf32> to vector<2x128xf32>
    %673 = vector.extract_strided_slice %671 {offsets = [0, 0], sizes = [2, 128], strides = [1, 1]} : vector<4x256xf32> to vector<2x128xf32>
    %674 = arith.addf %672, %673 : vector<2x128xf32>
    %675 = vector.extract_strided_slice %667 {offsets = [14, 128], sizes = [2, 128], strides = [1, 1]} : vector<16x256xf32> to vector<2x128xf32>
    %676 = vector.extract_strided_slice %671 {offsets = [2, 128], sizes = [2, 128], strides = [1, 1]} : vector<4x256xf32> to vector<2x128xf32>
    %677 = arith.addf %675, %676 : vector<2x128xf32>
    %678 = tpu.concatenate %674, %677 in 0 : vector<2x128xf32>, vector<2x128xf32> -> vector<4x128xf32>
    %679 = vector.extract_strided_slice %678 {offsets = [0, 0], sizes = [4, 32], strides = [1, 1]} : vector<4x128xf32> to vector<4x32xf32>
    %680 = arith.negf %679 : vector<4x32xf32>
    %681 = math.exp %680 : vector<4x32xf32>
    %cst_172 = arith.constant 1.000000e+00 : f32
    %682 = vector.broadcast %cst_172 : f32 to vector<4x32xf32>
    %683 = arith.addf %682, %681 : vector<4x32xf32>
    %684 = arith.divf %682, %683 : vector<4x32xf32>
    %685 = vector.extract_strided_slice %678 {offsets = [0, 32], sizes = [4, 32], strides = [1, 1]} : vector<4x128xf32> to vector<4x32xf32>
    %686 = arith.negf %685 : vector<4x32xf32>
    %687 = math.exp %686 : vector<4x32xf32>
    %cst_173 = arith.constant 1.000000e+00 : f32
    %688 = vector.broadcast %cst_173 : f32 to vector<4x32xf32>
    %689 = arith.addf %688, %687 : vector<4x32xf32>
    %690 = arith.divf %688, %689 : vector<4x32xf32>
    %691 = vector.extract_strided_slice %678 {offsets = [0, 64], sizes = [4, 32], strides = [1, 1]} : vector<4x128xf32> to vector<4x32xf32>
    %692 = math.tanh %691 : vector<4x32xf32>
    %693 = vector.extract_strided_slice %678 {offsets = [0, 96], sizes = [4, 32], strides = [1, 1]} : vector<4x128xf32> to vector<4x32xf32>
    %694 = arith.negf %693 : vector<4x32xf32>
    %695 = math.exp %694 : vector<4x32xf32>
    %cst_174 = arith.constant 1.000000e+00 : f32
    %696 = vector.broadcast %cst_174 : f32 to vector<4x32xf32>
    %697 = arith.addf %696, %695 : vector<4x32xf32>
    %698 = arith.divf %696, %697 : vector<4x32xf32>
    %699 = arith.mulf %690, %670 : vector<4x32xf32>
    %700 = arith.mulf %684, %692 : vector<4x32xf32>
    %701 = arith.addf %699, %700 : vector<4x32xf32>
    %702 = math.tanh %701 : vector<4x32xf32>
    %703 = arith.mulf %698, %702 : vector<4x32xf32>
    %704 = vector.extract_strided_slice %703 {offsets = [0, 0], sizes = [2, 32], strides = [1, 1]} : vector<4x32xf32> to vector<2x32xf32>
    %c0_175 = arith.constant 0 : index
    %c0_176 = arith.constant 0 : index
    %705 = vector.load %arg21[%c0_175, %c0_176] : memref<16x32xf32, #tpu.memory_space<vmem>>, vector<2x32xf32>
    tpu.vector_store %arg21[%c0_175, %c0_176], %704 {strides = array<i32>} : memref<16x32xf32, #tpu.memory_space<vmem>>, vector<2x32xf32>,
    %706 = vector.extract_strided_slice %703 {offsets = [2, 0], sizes = [2, 32], strides = [1, 1]} : vector<4x32xf32> to vector<2x32xf32>
    %c14_177 = arith.constant 14 : index
    %c0_178 = arith.constant 0 : index
    %707 = vector.load %arg22[%c14_177, %c0_178] : memref<16x32xf32, #tpu.memory_space<vmem>>, vector<2x32xf32>
    tpu.vector_store %arg22[%c14_177, %c0_178], %706 {strides = array<i32>} : memref<16x32xf32, #tpu.memory_space<vmem>>, vector<2x32xf32>,
    %cst_179 = arith.constant dense<0.000000e+00> : vector<4x256xf32>
    %708 = tpu.matmul %703, %668, %cst_179 {dimension_numbers = #tpu.dot_dimension_numbers<[1], [0], [0], [1], [0, 0, 1, 1], [], []>} : vector<4x32xf32>, vector<32x256xf32>, vector<4x256xf32> -> vector<4x256xf32>
    %709 = vector.extract_strided_slice %667 {offsets = [2, 0], sizes = [2, 128], strides = [1, 1]} : vector<16x256xf32> to vector<2x128xf32>
    %710 = vector.extract_strided_slice %708 {offsets = [0, 0], sizes = [2, 128], strides = [1, 1]} : vector<4x256xf32> to vector<2x128xf32>
    %711 = arith.addf %709, %710 : vector<2x128xf32>
    %712 = vector.extract_strided_slice %667 {offsets = [12, 128], sizes = [2, 128], strides = [1, 1]} : vector<16x256xf32> to vector<2x128xf32>
    %713 = vector.extract_strided_slice %708 {offsets = [2, 128], sizes = [2, 128], strides = [1, 1]} : vector<4x256xf32> to vector<2x128xf32>
    %714 = arith.addf %712, %713 : vector<2x128xf32>
    %715 = tpu.concatenate %711, %714 in 0 : vector<2x128xf32>, vector<2x128xf32> -> vector<4x128xf32>
    %716 = vector.extract_strided_slice %715 {offsets = [0, 0], sizes = [4, 32], strides = [1, 1]} : vector<4x128xf32> to vector<4x32xf32>
    %717 = arith.negf %716 : vector<4x32xf32>
    %718 = math.exp %717 : vector<4x32xf32>
    %cst_180 = arith.constant 1.000000e+00 : f32
    %719 = vector.broadcast %cst_180 : f32 to vector<4x32xf32>
    %720 = arith.addf %719, %718 : vector<4x32xf32>
    %721 = arith.divf %719, %720 : vector<4x32xf32>
    %722 = vector.extract_strided_slice %715 {offsets = [0, 32], sizes = [4, 32], strides = [1, 1]} : vector<4x128xf32> to vector<4x32xf32>
    %723 = arith.negf %722 : vector<4x32xf32>
    %724 = math.exp %723 : vector<4x32xf32>
    %cst_181 = arith.constant 1.000000e+00 : f32
    %725 = vector.broadcast %cst_181 : f32 to vector<4x32xf32>
    %726 = arith.addf %725, %724 : vector<4x32xf32>
    %727 = arith.divf %725, %726 : vector<4x32xf32>
    %728 = vector.extract_strided_slice %715 {offsets = [0, 64], sizes = [4, 32], strides = [1, 1]} : vector<4x128xf32> to vector<4x32xf32>
    %729 = math.tanh %728 : vector<4x32xf32>
    %730 = vector.extract_strided_slice %715 {offsets = [0, 96], sizes = [4, 32], strides = [1, 1]} : vector<4x128xf32> to vector<4x32xf32>
    %731 = arith.negf %730 : vector<4x32xf32>
    %732 = math.exp %731 : vector<4x32xf32>
    %cst_182 = arith.constant 1.000000e+00 : f32
    %733 = vector.broadcast %cst_182 : f32 to vector<4x32xf32>
    %734 = arith.addf %733, %732 : vector<4x32xf32>
    %735 = arith.divf %733, %734 : vector<4x32xf32>
    %736 = arith.mulf %727, %701 : vector<4x32xf32>
    %737 = arith.mulf %721, %729 : vector<4x32xf32>
    %738 = arith.addf %736, %737 : vector<4x32xf32>
    %739 = math.tanh %738 : vector<4x32xf32>
    %740 = arith.mulf %735, %739 : vector<4x32xf32>
    %741 = vector.extract_strided_slice %740 {offsets = [0, 0], sizes = [2, 32], strides = [1, 1]} : vector<4x32xf32> to vector<2x32xf32>
    %c2_183 = arith.constant 2 : index
    %c0_184 = arith.constant 0 : index
    %742 = vector.load %arg21[%c2_183, %c0_184] : memref<16x32xf32, #tpu.memory_space<vmem>>, vector<2x32xf32>
    tpu.vector_store %arg21[%c2_183, %c0_184], %741 {strides = array<i32>} : memref<16x32xf32, #tpu.memory_space<vmem>>, vector<2x32xf32>,
    %743 = vector.extract_strided_slice %740 {offsets = [2, 0], sizes = [2, 32], strides = [1, 1]} : vector<4x32xf32> to vector<2x32xf32>
    %c12_185 = arith.constant 12 : index
    %c0_186 = arith.constant 0 : index
    %744 = vector.load %arg22[%c12_185, %c0_186] : memref<16x32xf32, #tpu.memory_space<vmem>>, vector<2x32xf32>
    tpu.vector_store %arg22[%c12_185, %c0_186], %743 {strides = array<i32>} : memref<16x32xf32, #tpu.memory_space<vmem>>, vector<2x32xf32>,
    %cst_187 = arith.constant dense<0.000000e+00> : vector<4x256xf32>
    %745 = tpu.matmul %740, %668, %cst_187 {dimension_numbers = #tpu.dot_dimension_numbers<[1], [0], [0], [1], [0, 0, 1, 1], [], []>} : vector<4x32xf32>, vector<32x256xf32>, vector<4x256xf32> -> vector<4x256xf32>
    %746 = vector.extract_strided_slice %667 {offsets = [4, 0], sizes = [2, 128], strides = [1, 1]} : vector<16x256xf32> to vector<2x128xf32>
    %747 = vector.extract_strided_slice %745 {offsets = [0, 0], sizes = [2, 128], strides = [1, 1]} : vector<4x256xf32> to vector<2x128xf32>
    %748 = arith.addf %746, %747 : vector<2x128xf32>
    %749 = vector.extract_strided_slice %667 {offsets = [10, 128], sizes = [2, 128], strides = [1, 1]} : vector<16x256xf32> to vector<2x128xf32>
    %750 = vector.extract_strided_slice %745 {offsets = [2, 128], sizes = [2, 128], strides = [1, 1]} : vector<4x256xf32> to vector<2x128xf32>
    %751 = arith.addf %749, %750 : vector<2x128xf32>
    %752 = tpu.concatenate %748, %751 in 0 : vector<2x128xf32>, vector<2x128xf32> -> vector<4x128xf32>
    %753 = vector.extract_strided_slice %752 {offsets = [0, 0], sizes = [4, 32], strides = [1, 1]} : vector<4x128xf32> to vector<4x32xf32>
    %754 = arith.negf %753 : vector<4x32xf32>
    %755 = math.exp %754 : vector<4x32xf32>
    %cst_188 = arith.constant 1.000000e+00 : f32
    %756 = vector.broadcast %cst_188 : f32 to vector<4x32xf32>
    %757 = arith.addf %756, %755 : vector<4x32xf32>
    %758 = arith.divf %756, %757 : vector<4x32xf32>
    %759 = vector.extract_strided_slice %752 {offsets = [0, 32], sizes = [4, 32], strides = [1, 1]} : vector<4x128xf32> to vector<4x32xf32>
    %760 = arith.negf %759 : vector<4x32xf32>
    %761 = math.exp %760 : vector<4x32xf32>
    %cst_189 = arith.constant 1.000000e+00 : f32
    %762 = vector.broadcast %cst_189 : f32 to vector<4x32xf32>
    %763 = arith.addf %762, %761 : vector<4x32xf32>
    %764 = arith.divf %762, %763 : vector<4x32xf32>
    %765 = vector.extract_strided_slice %752 {offsets = [0, 64], sizes = [4, 32], strides = [1, 1]} : vector<4x128xf32> to vector<4x32xf32>
    %766 = math.tanh %765 : vector<4x32xf32>
    %767 = vector.extract_strided_slice %752 {offsets = [0, 96], sizes = [4, 32], strides = [1, 1]} : vector<4x128xf32> to vector<4x32xf32>
    %768 = arith.negf %767 : vector<4x32xf32>
    %769 = math.exp %768 : vector<4x32xf32>
    %cst_190 = arith.constant 1.000000e+00 : f32
    %770 = vector.broadcast %cst_190 : f32 to vector<4x32xf32>
    %771 = arith.addf %770, %769 : vector<4x32xf32>
    %772 = arith.divf %770, %771 : vector<4x32xf32>
    %773 = arith.mulf %764, %738 : vector<4x32xf32>
    %774 = arith.mulf %758, %766 : vector<4x32xf32>
    %775 = arith.addf %773, %774 : vector<4x32xf32>
    %776 = math.tanh %775 : vector<4x32xf32>
    %777 = arith.mulf %772, %776 : vector<4x32xf32>
    %778 = vector.extract_strided_slice %777 {offsets = [0, 0], sizes = [2, 32], strides = [1, 1]} : vector<4x32xf32> to vector<2x32xf32>
    %c4_191 = arith.constant 4 : index
    %c0_192 = arith.constant 0 : index
    %779 = vector.load %arg21[%c4_191, %c0_192] : memref<16x32xf32, #tpu.memory_space<vmem>>, vector<2x32xf32>
    tpu.vector_store %arg21[%c4_191, %c0_192], %778 {strides = array<i32>} : memref<16x32xf32, #tpu.memory_space<vmem>>, vector<2x32xf32>,
    %780 = vector.extract_strided_slice %777 {offsets = [2, 0], sizes = [2, 32], strides = [1, 1]} : vector<4x32xf32> to vector<2x32xf32>
    %c10_193 = arith.constant 10 : index
    %c0_194 = arith.constant 0 : index
    %781 = vector.load %arg22[%c10_193, %c0_194] : memref<16x32xf32, #tpu.memory_space<vmem>>, vector<2x32xf32>
    tpu.vector_store %arg22[%c10_193, %c0_194], %780 {strides = array<i32>} : memref<16x32xf32, #tpu.memory_space<vmem>>, vector<2x32xf32>,
    %cst_195 = arith.constant dense<0.000000e+00> : vector<4x256xf32>
    %782 = tpu.matmul %777, %668, %cst_195 {dimension_numbers = #tpu.dot_dimension_numbers<[1], [0], [0], [1], [0, 0, 1, 1], [], []>} : vector<4x32xf32>, vector<32x256xf32>, vector<4x256xf32> -> vector<4x256xf32>
    %783 = vector.extract_strided_slice %667 {offsets = [6, 0], sizes = [2, 128], strides = [1, 1]} : vector<16x256xf32> to vector<2x128xf32>
    %784 = vector.extract_strided_slice %782 {offsets = [0, 0], sizes = [2, 128], strides = [1, 1]} : vector<4x256xf32> to vector<2x128xf32>
    %785 = arith.addf %783, %784 : vector<2x128xf32>
    %786 = vector.extract_strided_slice %667 {offsets = [8, 128], sizes = [2, 128], strides = [1, 1]} : vector<16x256xf32> to vector<2x128xf32>
    %787 = vector.extract_strided_slice %782 {offsets = [2, 128], sizes = [2, 128], strides = [1, 1]} : vector<4x256xf32> to vector<2x128xf32>
    %788 = arith.addf %786, %787 : vector<2x128xf32>
    %789 = tpu.concatenate %785, %788 in 0 : vector<2x128xf32>, vector<2x128xf32> -> vector<4x128xf32>
    %790 = vector.extract_strided_slice %789 {offsets = [0, 0], sizes = [4, 32], strides = [1, 1]} : vector<4x128xf32> to vector<4x32xf32>
    %791 = arith.negf %790 : vector<4x32xf32>
    %792 = math.exp %791 : vector<4x32xf32>
    %cst_196 = arith.constant 1.000000e+00 : f32
    %793 = vector.broadcast %cst_196 : f32 to vector<4x32xf32>
    %794 = arith.addf %793, %792 : vector<4x32xf32>
    %795 = arith.divf %793, %794 : vector<4x32xf32>
    %796 = vector.extract_strided_slice %789 {offsets = [0, 32], sizes = [4, 32], strides = [1, 1]} : vector<4x128xf32> to vector<4x32xf32>
    %797 = arith.negf %796 : vector<4x32xf32>
    %798 = math.exp %797 : vector<4x32xf32>
    %cst_197 = arith.constant 1.000000e+00 : f32
    %799 = vector.broadcast %cst_197 : f32 to vector<4x32xf32>
    %800 = arith.addf %799, %798 : vector<4x32xf32>
    %801 = arith.divf %799, %800 : vector<4x32xf32>
    %802 = vector.extract_strided_slice %789 {offsets = [0, 64], sizes = [4, 32], strides = [1, 1]} : vector<4x128xf32> to vector<4x32xf32>
    %803 = math.tanh %802 : vector<4x32xf32>
    %804 = vector.extract_strided_slice %789 {offsets = [0, 96], sizes = [4, 32], strides = [1, 1]} : vector<4x128xf32> to vector<4x32xf32>
    %805 = arith.negf %804 : vector<4x32xf32>
    %806 = math.exp %805 : vector<4x32xf32>
    %cst_198 = arith.constant 1.000000e+00 : f32
    %807 = vector.broadcast %cst_198 : f32 to vector<4x32xf32>
    %808 = arith.addf %807, %806 : vector<4x32xf32>
    %809 = arith.divf %807, %808 : vector<4x32xf32>
    %810 = arith.mulf %801, %775 : vector<4x32xf32>
    %811 = arith.mulf %795, %803 : vector<4x32xf32>
    %812 = arith.addf %810, %811 : vector<4x32xf32>
    %813 = math.tanh %812 : vector<4x32xf32>
    %814 = arith.mulf %809, %813 : vector<4x32xf32>
    %815 = vector.extract_strided_slice %814 {offsets = [0, 0], sizes = [2, 32], strides = [1, 1]} : vector<4x32xf32> to vector<2x32xf32>
    %c6_199 = arith.constant 6 : index
    %c0_200 = arith.constant 0 : index
    %816 = vector.load %arg21[%c6_199, %c0_200] : memref<16x32xf32, #tpu.memory_space<vmem>>, vector<2x32xf32>
    tpu.vector_store %arg21[%c6_199, %c0_200], %815 {strides = array<i32>} : memref<16x32xf32, #tpu.memory_space<vmem>>, vector<2x32xf32>,
    %817 = vector.extract_strided_slice %814 {offsets = [2, 0], sizes = [2, 32], strides = [1, 1]} : vector<4x32xf32> to vector<2x32xf32>
    %c8_201 = arith.constant 8 : index
    %c0_202 = arith.constant 0 : index
    %818 = vector.load %arg22[%c8_201, %c0_202] : memref<16x32xf32, #tpu.memory_space<vmem>>, vector<2x32xf32>
    tpu.vector_store %arg22[%c8_201, %c0_202], %817 {strides = array<i32>} : memref<16x32xf32, #tpu.memory_space<vmem>>, vector<2x32xf32>,
    %cst_203 = arith.constant dense<0.000000e+00> : vector<4x256xf32>
    %819 = tpu.matmul %814, %668, %cst_203 {dimension_numbers = #tpu.dot_dimension_numbers<[1], [0], [0], [1], [0, 0, 1, 1], [], []>} : vector<4x32xf32>, vector<32x256xf32>, vector<4x256xf32> -> vector<4x256xf32>
    %820 = vector.extract_strided_slice %667 {offsets = [8, 0], sizes = [2, 128], strides = [1, 1]} : vector<16x256xf32> to vector<2x128xf32>
    %821 = vector.extract_strided_slice %819 {offsets = [0, 0], sizes = [2, 128], strides = [1, 1]} : vector<4x256xf32> to vector<2x128xf32>
    %822 = arith.addf %820, %821 : vector<2x128xf32>
    %823 = vector.extract_strided_slice %667 {offsets = [6, 128], sizes = [2, 128], strides = [1, 1]} : vector<16x256xf32> to vector<2x128xf32>
    %824 = vector.extract_strided_slice %819 {offsets = [2, 128], sizes = [2, 128], strides = [1, 1]} : vector<4x256xf32> to vector<2x128xf32>
    %825 = arith.addf %823, %824 : vector<2x128xf32>
    %826 = tpu.concatenate %822, %825 in 0 : vector<2x128xf32>, vector<2x128xf32> -> vector<4x128xf32>
    %827 = vector.extract_strided_slice %826 {offsets = [0, 0], sizes = [4, 32], strides = [1, 1]} : vector<4x128xf32> to vector<4x32xf32>
    %828 = arith.negf %827 : vector<4x32xf32>
    %829 = math.exp %828 : vector<4x32xf32>
    %cst_204 = arith.constant 1.000000e+00 : f32
    %830 = vector.broadcast %cst_204 : f32 to vector<4x32xf32>
    %831 = arith.addf %830, %829 : vector<4x32xf32>
    %832 = arith.divf %830, %831 : vector<4x32xf32>
    %833 = vector.extract_strided_slice %826 {offsets = [0, 32], sizes = [4, 32], strides = [1, 1]} : vector<4x128xf32> to vector<4x32xf32>
    %834 = arith.negf %833 : vector<4x32xf32>
    %835 = math.exp %834 : vector<4x32xf32>
    %cst_205 = arith.constant 1.000000e+00 : f32
    %836 = vector.broadcast %cst_205 : f32 to vector<4x32xf32>
    %837 = arith.addf %836, %835 : vector<4x32xf32>
    %838 = arith.divf %836, %837 : vector<4x32xf32>
    %839 = vector.extract_strided_slice %826 {offsets = [0, 64], sizes = [4, 32], strides = [1, 1]} : vector<4x128xf32> to vector<4x32xf32>
    %840 = math.tanh %839 : vector<4x32xf32>
    %841 = vector.extract_strided_slice %826 {offsets = [0, 96], sizes = [4, 32], strides = [1, 1]} : vector<4x128xf32> to vector<4x32xf32>
    %842 = arith.negf %841 : vector<4x32xf32>
    %843 = math.exp %842 : vector<4x32xf32>
    %cst_206 = arith.constant 1.000000e+00 : f32
    %844 = vector.broadcast %cst_206 : f32 to vector<4x32xf32>
    %845 = arith.addf %844, %843 : vector<4x32xf32>
    %846 = arith.divf %844, %845 : vector<4x32xf32>
    %847 = arith.mulf %838, %812 : vector<4x32xf32>
    %848 = arith.mulf %832, %840 : vector<4x32xf32>
    %849 = arith.addf %847, %848 : vector<4x32xf32>
    %850 = math.tanh %849 : vector<4x32xf32>
    %851 = arith.mulf %846, %850 : vector<4x32xf32>
    %852 = vector.extract_strided_slice %851 {offsets = [0, 0], sizes = [2, 32], strides = [1, 1]} : vector<4x32xf32> to vector<2x32xf32>
    %c8_207 = arith.constant 8 : index
    %c0_208 = arith.constant 0 : index
    %853 = vector.load %arg21[%c8_207, %c0_208] : memref<16x32xf32, #tpu.memory_space<vmem>>, vector<2x32xf32>
    tpu.vector_store %arg21[%c8_207, %c0_208], %852 {strides = array<i32>} : memref<16x32xf32, #tpu.memory_space<vmem>>, vector<2x32xf32>,
    %854 = vector.extract_strided_slice %851 {offsets = [2, 0], sizes = [2, 32], strides = [1, 1]} : vector<4x32xf32> to vector<2x32xf32>
    %c6_209 = arith.constant 6 : index
    %c0_210 = arith.constant 0 : index
    %855 = vector.load %arg22[%c6_209, %c0_210] : memref<16x32xf32, #tpu.memory_space<vmem>>, vector<2x32xf32>
    tpu.vector_store %arg22[%c6_209, %c0_210], %854 {strides = array<i32>} : memref<16x32xf32, #tpu.memory_space<vmem>>, vector<2x32xf32>,
    %cst_211 = arith.constant dense<0.000000e+00> : vector<4x256xf32>
    %856 = tpu.matmul %851, %668, %cst_211 {dimension_numbers = #tpu.dot_dimension_numbers<[1], [0], [0], [1], [0, 0, 1, 1], [], []>} : vector<4x32xf32>, vector<32x256xf32>, vector<4x256xf32> -> vector<4x256xf32>
    %857 = vector.extract_strided_slice %667 {offsets = [10, 0], sizes = [2, 128], strides = [1, 1]} : vector<16x256xf32> to vector<2x128xf32>
    %858 = vector.extract_strided_slice %856 {offsets = [0, 0], sizes = [2, 128], strides = [1, 1]} : vector<4x256xf32> to vector<2x128xf32>
    %859 = arith.addf %857, %858 : vector<2x128xf32>
    %860 = vector.extract_strided_slice %667 {offsets = [4, 128], sizes = [2, 128], strides = [1, 1]} : vector<16x256xf32> to vector<2x128xf32>
    %861 = vector.extract_strided_slice %856 {offsets = [2, 128], sizes = [2, 128], strides = [1, 1]} : vector<4x256xf32> to vector<2x128xf32>
    %862 = arith.addf %860, %861 : vector<2x128xf32>
    %863 = tpu.concatenate %859, %862 in 0 : vector<2x128xf32>, vector<2x128xf32> -> vector<4x128xf32>
    %864 = vector.extract_strided_slice %863 {offsets = [0, 0], sizes = [4, 32], strides = [1, 1]} : vector<4x128xf32> to vector<4x32xf32>
    %865 = arith.negf %864 : vector<4x32xf32>
    %866 = math.exp %865 : vector<4x32xf32>
    %cst_212 = arith.constant 1.000000e+00 : f32
    %867 = vector.broadcast %cst_212 : f32 to vector<4x32xf32>
    %868 = arith.addf %867, %866 : vector<4x32xf32>
    %869 = arith.divf %867, %868 : vector<4x32xf32>
    %870 = vector.extract_strided_slice %863 {offsets = [0, 32], sizes = [4, 32], strides = [1, 1]} : vector<4x128xf32> to vector<4x32xf32>
    %871 = arith.negf %870 : vector<4x32xf32>
    %872 = math.exp %871 : vector<4x32xf32>
    %cst_213 = arith.constant 1.000000e+00 : f32
    %873 = vector.broadcast %cst_213 : f32 to vector<4x32xf32>
    %874 = arith.addf %873, %872 : vector<4x32xf32>
    %875 = arith.divf %873, %874 : vector<4x32xf32>
    %876 = vector.extract_strided_slice %863 {offsets = [0, 64], sizes = [4, 32], strides = [1, 1]} : vector<4x128xf32> to vector<4x32xf32>
    %877 = math.tanh %876 : vector<4x32xf32>
    %878 = vector.extract_strided_slice %863 {offsets = [0, 96], sizes = [4, 32], strides = [1, 1]} : vector<4x128xf32> to vector<4x32xf32>
    %879 = arith.negf %878 : vector<4x32xf32>
    %880 = math.exp %879 : vector<4x32xf32>
    %cst_214 = arith.constant 1.000000e+00 : f32
    %881 = vector.broadcast %cst_214 : f32 to vector<4x32xf32>
    %882 = arith.addf %881, %880 : vector<4x32xf32>
    %883 = arith.divf %881, %882 : vector<4x32xf32>
    %884 = arith.mulf %875, %849 : vector<4x32xf32>
    %885 = arith.mulf %869, %877 : vector<4x32xf32>
    %886 = arith.addf %884, %885 : vector<4x32xf32>
    %887 = math.tanh %886 : vector<4x32xf32>
    %888 = arith.mulf %883, %887 : vector<4x32xf32>
    %889 = vector.extract_strided_slice %888 {offsets = [0, 0], sizes = [2, 32], strides = [1, 1]} : vector<4x32xf32> to vector<2x32xf32>
    %c10_215 = arith.constant 10 : index
    %c0_216 = arith.constant 0 : index
    %890 = vector.load %arg21[%c10_215, %c0_216] : memref<16x32xf32, #tpu.memory_space<vmem>>, vector<2x32xf32>
    tpu.vector_store %arg21[%c10_215, %c0_216], %889 {strides = array<i32>} : memref<16x32xf32, #tpu.memory_space<vmem>>, vector<2x32xf32>,
    %891 = vector.extract_strided_slice %888 {offsets = [2, 0], sizes = [2, 32], strides = [1, 1]} : vector<4x32xf32> to vector<2x32xf32>
    %c4_217 = arith.constant 4 : index
    %c0_218 = arith.constant 0 : index
    %892 = vector.load %arg22[%c4_217, %c0_218] : memref<16x32xf32, #tpu.memory_space<vmem>>, vector<2x32xf32>
    tpu.vector_store %arg22[%c4_217, %c0_218], %891 {strides = array<i32>} : memref<16x32xf32, #tpu.memory_space<vmem>>, vector<2x32xf32>,
    %cst_219 = arith.constant dense<0.000000e+00> : vector<4x256xf32>
    %893 = tpu.matmul %888, %668, %cst_219 {dimension_numbers = #tpu.dot_dimension_numbers<[1], [0], [0], [1], [0, 0, 1, 1], [], []>} : vector<4x32xf32>, vector<32x256xf32>, vector<4x256xf32> -> vector<4x256xf32>
    %894 = vector.extract_strided_slice %667 {offsets = [12, 0], sizes = [2, 128], strides = [1, 1]} : vector<16x256xf32> to vector<2x128xf32>
    %895 = vector.extract_strided_slice %893 {offsets = [0, 0], sizes = [2, 128], strides = [1, 1]} : vector<4x256xf32> to vector<2x128xf32>
    %896 = arith.addf %894, %895 : vector<2x128xf32>
    %897 = vector.extract_strided_slice %667 {offsets = [2, 128], sizes = [2, 128], strides = [1, 1]} : vector<16x256xf32> to vector<2x128xf32>
    %898 = vector.extract_strided_slice %893 {offsets = [2, 128], sizes = [2, 128], strides = [1, 1]} : vector<4x256xf32> to vector<2x128xf32>
    %899 = arith.addf %897, %898 : vector<2x128xf32>
    %900 = tpu.concatenate %896, %899 in 0 : vector<2x128xf32>, vector<2x128xf32> -> vector<4x128xf32>
    %901 = vector.extract_strided_slice %900 {offsets = [0, 0], sizes = [4, 32], strides = [1, 1]} : vector<4x128xf32> to vector<4x32xf32>
    %902 = arith.negf %901 : vector<4x32xf32>
    %903 = math.exp %902 : vector<4x32xf32>
    %cst_220 = arith.constant 1.000000e+00 : f32
    %904 = vector.broadcast %cst_220 : f32 to vector<4x32xf32>
    %905 = arith.addf %904, %903 : vector<4x32xf32>
    %906 = arith.divf %904, %905 : vector<4x32xf32>
    %907 = vector.extract_strided_slice %900 {offsets = [0, 32], sizes = [4, 32], strides = [1, 1]} : vector<4x128xf32> to vector<4x32xf32>
    %908 = arith.negf %907 : vector<4x32xf32>
    %909 = math.exp %908 : vector<4x32xf32>
    %cst_221 = arith.constant 1.000000e+00 : f32
    %910 = vector.broadcast %cst_221 : f32 to vector<4x32xf32>
    %911 = arith.addf %910, %909 : vector<4x32xf32>
    %912 = arith.divf %910, %911 : vector<4x32xf32>
    %913 = vector.extract_strided_slice %900 {offsets = [0, 64], sizes = [4, 32], strides = [1, 1]} : vector<4x128xf32> to vector<4x32xf32>
    %914 = math.tanh %913 : vector<4x32xf32>
    %915 = vector.extract_strided_slice %900 {offsets = [0, 96], sizes = [4, 32], strides = [1, 1]} : vector<4x128xf32> to vector<4x32xf32>
    %916 = arith.negf %915 : vector<4x32xf32>
    %917 = math.exp %916 : vector<4x32xf32>
    %cst_222 = arith.constant 1.000000e+00 : f32
    %918 = vector.broadcast %cst_222 : f32 to vector<4x32xf32>
    %919 = arith.addf %918, %917 : vector<4x32xf32>
    %920 = arith.divf %918, %919 : vector<4x32xf32>
    %921 = arith.mulf %912, %886 : vector<4x32xf32>
    %922 = arith.mulf %906, %914 : vector<4x32xf32>
    %923 = arith.addf %921, %922 : vector<4x32xf32>
    %924 = math.tanh %923 : vector<4x32xf32>
    %925 = arith.mulf %920, %924 : vector<4x32xf32>
    %926 = vector.extract_strided_slice %925 {offsets = [0, 0], sizes = [2, 32], strides = [1, 1]} : vector<4x32xf32> to vector<2x32xf32>
    %c12_223 = arith.constant 12 : index
    %c0_224 = arith.constant 0 : index
    %927 = vector.load %arg21[%c12_223, %c0_224] : memref<16x32xf32, #tpu.memory_space<vmem>>, vector<2x32xf32>
    tpu.vector_store %arg21[%c12_223, %c0_224], %926 {strides = array<i32>} : memref<16x32xf32, #tpu.memory_space<vmem>>, vector<2x32xf32>,
    %928 = vector.extract_strided_slice %925 {offsets = [2, 0], sizes = [2, 32], strides = [1, 1]} : vector<4x32xf32> to vector<2x32xf32>
    %c2_225 = arith.constant 2 : index
    %c0_226 = arith.constant 0 : index
    %929 = vector.load %arg22[%c2_225, %c0_226] : memref<16x32xf32, #tpu.memory_space<vmem>>, vector<2x32xf32>
    tpu.vector_store %arg22[%c2_225, %c0_226], %928 {strides = array<i32>} : memref<16x32xf32, #tpu.memory_space<vmem>>, vector<2x32xf32>,
    %cst_227 = arith.constant dense<0.000000e+00> : vector<4x256xf32>
    %930 = tpu.matmul %925, %668, %cst_227 {dimension_numbers = #tpu.dot_dimension_numbers<[1], [0], [0], [1], [0, 0, 1, 1], [], []>} : vector<4x32xf32>, vector<32x256xf32>, vector<4x256xf32> -> vector<4x256xf32>
    %931 = vector.extract_strided_slice %667 {offsets = [14, 0], sizes = [2, 128], strides = [1, 1]} : vector<16x256xf32> to vector<2x128xf32>
    %932 = vector.extract_strided_slice %930 {offsets = [0, 0], sizes = [2, 128], strides = [1, 1]} : vector<4x256xf32> to vector<2x128xf32>
    %933 = arith.addf %931, %932 : vector<2x128xf32>
    %934 = vector.extract_strided_slice %667 {offsets = [0, 128], sizes = [2, 128], strides = [1, 1]} : vector<16x256xf32> to vector<2x128xf32>
    %935 = vector.extract_strided_slice %930 {offsets = [2, 128], sizes = [2, 128], strides = [1, 1]} : vector<4x256xf32> to vector<2x128xf32>
    %936 = arith.addf %934, %935 : vector<2x128xf32>
    %937 = tpu.concatenate %933, %936 in 0 : vector<2x128xf32>, vector<2x128xf32> -> vector<4x128xf32>
    %938 = vector.extract_strided_slice %937 {offsets = [0, 0], sizes = [4, 32], strides = [1, 1]} : vector<4x128xf32> to vector<4x32xf32>
    %939 = arith.negf %938 : vector<4x32xf32>
    %940 = math.exp %939 : vector<4x32xf32>
    %cst_228 = arith.constant 1.000000e+00 : f32
    %941 = vector.broadcast %cst_228 : f32 to vector<4x32xf32>
    %942 = arith.addf %941, %940 : vector<4x32xf32>
    %943 = arith.divf %941, %942 : vector<4x32xf32>
    %944 = vector.extract_strided_slice %937 {offsets = [0, 32], sizes = [4, 32], strides = [1, 1]} : vector<4x128xf32> to vector<4x32xf32>
    %945 = arith.negf %944 : vector<4x32xf32>
    %946 = math.exp %945 : vector<4x32xf32>
    %cst_229 = arith.constant 1.000000e+00 : f32
    %947 = vector.broadcast %cst_229 : f32 to vector<4x32xf32>
    %948 = arith.addf %947, %946 : vector<4x32xf32>
    %949 = arith.divf %947, %948 : vector<4x32xf32>
    %950 = vector.extract_strided_slice %937 {offsets = [0, 64], sizes = [4, 32], strides = [1, 1]} : vector<4x128xf32> to vector<4x32xf32>
    %951 = math.tanh %950 : vector<4x32xf32>
    %952 = vector.extract_strided_slice %937 {offsets = [0, 96], sizes = [4, 32], strides = [1, 1]} : vector<4x128xf32> to vector<4x32xf32>
    %953 = arith.negf %952 : vector<4x32xf32>
    %954 = math.exp %953 : vector<4x32xf32>
    %cst_230 = arith.constant 1.000000e+00 : f32
    %955 = vector.broadcast %cst_230 : f32 to vector<4x32xf32>
    %956 = arith.addf %955, %954 : vector<4x32xf32>
    %957 = arith.divf %955, %956 : vector<4x32xf32>
    %958 = arith.mulf %949, %923 : vector<4x32xf32>
    %959 = arith.mulf %943, %951 : vector<4x32xf32>
    %960 = arith.addf %958, %959 : vector<4x32xf32>
    %961 = math.tanh %960 : vector<4x32xf32>
    %962 = arith.mulf %957, %961 : vector<4x32xf32>
    %963 = vector.extract_strided_slice %962 {offsets = [0, 0], sizes = [2, 32], strides = [1, 1]} : vector<4x32xf32> to vector<2x32xf32>
    %c14_231 = arith.constant 14 : index
    %c0_232 = arith.constant 0 : index
    %964 = vector.load %arg21[%c14_231, %c0_232] : memref<16x32xf32, #tpu.memory_space<vmem>>, vector<2x32xf32>
    tpu.vector_store %arg21[%c14_231, %c0_232], %963 {strides = array<i32>} : memref<16x32xf32, #tpu.memory_space<vmem>>, vector<2x32xf32>,
    %965 = vector.extract_strided_slice %962 {offsets = [2, 0], sizes = [2, 32], strides = [1, 1]} : vector<4x32xf32> to vector<2x32xf32>
    %c0_233 = arith.constant 0 : index
    %c0_234 = arith.constant 0 : index
    %966 = vector.load %arg22[%c0_233, %c0_234] : memref<16x32xf32, #tpu.memory_space<vmem>>, vector<2x32xf32>
    tpu.vector_store %arg22[%c0_233, %c0_234], %965 {strides = array<i32>} : memref<16x32xf32, #tpu.memory_space<vmem>>, vector<2x32xf32>,
    %c0_235 = arith.constant 0 : index
    %c0_236 = arith.constant 0 : index
    %967 = vector.load %arg21[%c0_235, %c0_236] : memref<16x32xf32, #tpu.memory_space<vmem>>, vector<16x32xf32>
    %968 = vector.broadcast %8 : vector<16x1xf32> to vector<16x32xf32>
    %969 = arith.mulf %967, %968 : vector<16x32xf32>
    %c0_237 = arith.constant 0 : index
    %c0_238 = arith.constant 0 : index
    %970 = vector.load %arg22[%c0_237, %c0_238] : memref<16x32xf32, #tpu.memory_space<vmem>>, vector<16x32xf32>
    %971 = vector.broadcast %8 : vector<16x1xf32> to vector<16x32xf32>
    %972 = arith.mulf %970, %971 : vector<16x32xf32>
    %c0_239 = arith.constant 0 : index
    %c0_240 = arith.constant 0 : index
    %973 = vector.load %arg14[%c0_239, %c0_240] : memref<64x32xf32, #tpu.memory_space<vmem>>, vector<64x32xf32>
    %974 = vector.extract_strided_slice %973 {offsets = [0, 0], sizes = [32, 32], strides = [1, 1]} : vector<64x32xf32> to vector<32x32xf32>
    %cst_241 = arith.constant dense<0.000000e+00> : vector<16x32xf32>
    %975 = tpu.matmul %969, %974, %cst_241 {dimension_numbers = #tpu.dot_dimension_numbers<[1], [0], [0], [1], [0, 0, 1, 1], [], []>} : vector<16x32xf32>, vector<32x32xf32>, vector<16x32xf32> -> vector<16x32xf32>
    %976 = vector.extract_strided_slice %973 {offsets = [32, 0], sizes = [32, 32], strides = [1, 1]} : vector<64x32xf32> to vector<32x32xf32>
    %cst_242 = arith.constant dense<0.000000e+00> : vector<16x32xf32>
    %977 = tpu.matmul %972, %976, %cst_242 {dimension_numbers = #tpu.dot_dimension_numbers<[1], [0], [0], [1], [0, 0, 1, 1], [], []>} : vector<16x32xf32>, vector<32x32xf32>, vector<16x32xf32> -> vector<16x32xf32>
    %978 = arith.addf %975, %977 : vector<16x32xf32>
    %c0_243 = arith.constant 0 : index
    %c0_244 = arith.constant 0 : index
    %979 = vector.load %arg15[%c0_243, %c0_244] : memref<1x32xf32, #tpu.memory_space<vmem>>, vector<1x32xf32>
    %980 = vector.broadcast %979 : vector<1x32xf32> to vector<16x32xf32>
    %981 = arith.addf %978, %980 : vector<16x32xf32>
    %cst_245 = arith.constant 0.000000e+00 : f32
    %982 = vector.broadcast %cst_245 : f32 to vector<16x32xf32>
    %983 = arith.maximumf %981, %982 : vector<16x32xf32>
    %c0_246 = arith.constant 0 : index
    %c0_247 = arith.constant 0 : index
    %984 = vector.load %arg16[%c0_246, %c0_247] : memref<32x7xf32, #tpu.memory_space<vmem>>, vector<32x7xf32>
    %cst_248 = arith.constant dense<0.000000e+00> : vector<16x7xf32>
    %985 = tpu.matmul %983, %984, %cst_248 {dimension_numbers = #tpu.dot_dimension_numbers<[1], [0], [0], [1], [0, 0, 1, 1], [], []>} : vector<16x32xf32>, vector<32x7xf32>, vector<16x7xf32> -> vector<16x7xf32>
    %c0_249 = arith.constant 0 : index
    %c0_250 = arith.constant 0 : index
    %986 = vector.load %arg17[%c0_249, %c0_250] : memref<1x7xf32, #tpu.memory_space<vmem>>, vector<1x7xf32>
    %987 = vector.broadcast %986 : vector<1x7xf32> to vector<16x7xf32>
    %988 = arith.addf %985, %987 : vector<16x7xf32>
    %cst_251 = arith.constant dense<0xFF800000> : vector<16xf32>
    %989 = vector.multi_reduction <maximumf>, %988, %cst_251 [1] : vector<16x7xf32> to vector<16xf32>
    %990 = vector.shape_cast %989 : vector<16xf32> to vector<16x1xf32>
    %991 = vector.broadcast %990 : vector<16x1xf32> to vector<16x7xf32>
    %992 = arith.subf %988, %991 : vector<16x7xf32>
    %993 = math.exp %992 : vector<16x7xf32>
    %cst_252 = arith.constant dense<0.000000e+00> : vector<16xf32>
    %994 = vector.multi_reduction <add>, %993, %cst_252 [1] : vector<16x7xf32> to vector<16xf32>
    %995 = vector.shape_cast %994 : vector<16xf32> to vector<16x1xf32>
    %996 = math.log %995 : vector<16x1xf32>
    %997 = vector.broadcast %996 : vector<16x1xf32> to vector<16x7xf32>
    %998 = arith.subf %992, %997 : vector<16x7xf32>
    %c0_253 = arith.constant 0 : index
    %c0_254 = arith.constant 0 : index
    %999 = vector.load %arg18[%c0_253, %c0_254] : memref<16x7xf32, #tpu.memory_space<vmem>>, vector<16x7xf32>
    tpu.vector_store %arg18[%c0_253, %c0_254], %998 {strides = array<i32>} : memref<16x7xf32, #tpu.memory_space<vmem>>, vector<16x7xf32>,
    return
  }
  func.func @transform_0(%arg0: i32) -> (i32, i32) {
    %c0_i32 = arith.constant 0 : i32
    %c0_i32_0 = arith.constant 0 : i32
    %c0_i32_1 = arith.constant 0 : i32
    return %c0_i32, %c0_i32_0 : i32, i32
  }
  func.func @transform_1(%arg0: i32) -> (i32, i32) {
    %c0_i32 = arith.constant 0 : i32
    %c0_i32_0 = arith.constant 0 : i32
    %c0_i32_1 = arith.constant 0 : i32
    return %c0_i32, %c0_i32_0 : i32, i32
  }
  func.func @transform_2(%arg0: i32) -> (i32, i32) {
    %c0_i32 = arith.constant 0 : i32
    %c0_i32_0 = arith.constant 0 : i32
    %c0_i32_1 = arith.constant 0 : i32
    return %c0_i32, %c0_i32_0 : i32, i32
  }
  func.func @transform_3(%arg0: i32) -> (i32, i32, i32) {
    %c0_i32 = arith.constant 0 : i32
    %c0_i32_0 = arith.constant 0 : i32
    %c0_i32_1 = arith.constant 0 : i32
    %c0_i32_2 = arith.constant 0 : i32
    return %c0_i32, %c0_i32_0, %c0_i32_1 : i32, i32, i32
  }
  func.func @transform_4(%arg0: i32) -> (i32, i32, i32) {
    %c0_i32 = arith.constant 0 : i32
    %c0_i32_0 = arith.constant 0 : i32
    %c0_i32_1 = arith.constant 0 : i32
    %c0_i32_2 = arith.constant 0 : i32
    return %c0_i32, %c0_i32_0, %c0_i32_1 : i32, i32, i32
  }
  func.func @transform_5(%arg0: i32) -> (i32, i32, i32) {
    %c0_i32 = arith.constant 0 : i32
    %c0_i32_0 = arith.constant 0 : i32
    %c0_i32_1 = arith.constant 0 : i32
    %c0_i32_2 = arith.constant 0 : i32
    return %c0_i32, %c0_i32_0, %c0_i32_1 : i32, i32, i32
  }
  func.func @transform_6(%arg0: i32) -> (i32, i32) {
    %c0_i32 = arith.constant 0 : i32
    %c0_i32_0 = arith.constant 0 : i32
    %c0_i32_1 = arith.constant 0 : i32
    return %c0_i32, %c0_i32_0 : i32, i32
  }
  func.func @transform_7(%arg0: i32) -> (i32, i32) {
    %c0_i32 = arith.constant 0 : i32
    %c0_i32_0 = arith.constant 0 : i32
    %c0_i32_1 = arith.constant 0 : i32
    return %c0_i32, %c0_i32_0 : i32, i32
  }
  func.func @transform_8(%arg0: i32) -> (i32, i32) {
    %c0_i32 = arith.constant 0 : i32
    %c0_i32_0 = arith.constant 0 : i32
    %c0_i32_1 = arith.constant 0 : i32
    return %c0_i32, %c0_i32_0 : i32, i32
  }
  func.func @transform_9(%arg0: i32) -> (i32, i32) {
    %c0_i32 = arith.constant 0 : i32
    %c0_i32_0 = arith.constant 0 : i32
    %c0_i32_1 = arith.constant 0 : i32
    return %c0_i32, %c0_i32_0 : i32, i32
  }
  func.func @transform_10(%arg0: i32) -> (i32, i32) {
    %c0_i32 = arith.constant 0 : i32
    %c0_i32_0 = arith.constant 0 : i32
    %c0_i32_1 = arith.constant 0 : i32
    return %c0_i32, %c0_i32_0 : i32, i32
  }
  func.func @transform_11(%arg0: i32) -> (i32, i32) {
    %c0_i32 = arith.constant 0 : i32
    %c0_i32_0 = arith.constant 0 : i32
    %c0_i32_1 = arith.constant 0 : i32
    return %c0_i32, %c0_i32_0 : i32, i32
  }
  func.func @transform_12(%arg0: i32) -> (i32, i32) {
    %c0_i32 = arith.constant 0 : i32
    %c0_i32_0 = arith.constant 0 : i32
    %c0_i32_1 = arith.constant 0 : i32
    return %c0_i32, %c0_i32_0 : i32, i32
  }
  func.func @transform_13(%arg0: i32) -> (i32, i32) {
    %c0_i32 = arith.constant 0 : i32
    %c0_i32_0 = arith.constant 0 : i32
    %c0_i32_1 = arith.constant 0 : i32
    return %c0_i32, %c0_i32_0 : i32, i32
  }
  func.func @transform_14(%arg0: i32) -> (i32, i32) {
    %c0_i32 = arith.constant 0 : i32
    %c0_i32_0 = arith.constant 0 : i32
    %c0_i32_1 = arith.constant 0 : i32
    return %c0_i32, %c0_i32_0 : i32, i32
  }
  func.func @transform_15(%arg0: i32) -> (i32, i32) {
    %c0_i32 = arith.constant 0 : i32
    %c0_i32_0 = arith.constant 0 : i32
    %c0_i32_1 = arith.constant 0 : i32
    return %c0_i32, %c0_i32_0 : i32, i32
  }
  func.func @transform_16(%arg0: i32) -> (i32, i32) {
    %c0_i32 = arith.constant 0 : i32
    %c0_i32_0 = arith.constant 0 : i32
    %c0_i32_1 = arith.constant 0 : i32
    return %c0_i32, %c0_i32_0 : i32, i32
  }
  func.func @transform_17(%arg0: i32) -> (i32, i32) {
    %c0_i32 = arith.constant 0 : i32
    %c0_i32_0 = arith.constant 0 : i32
    %c0_i32_1 = arith.constant 0 : i32
    return %c0_i32, %c0_i32_0 : i32, i32
  }
}

</mosaic_0001>

<llo_original>
// kernel: end2end_forward.1
$region0: #{end2end_forward.1}
  #allocation0 [shape = 'u32[]', space=smem, size = 0x4, offset = 0x4, fixed_abs, tag = 'smem constant byte address 0x4 - core index']
  #allocation1 [shape = 'u32[144,128]{1,0:T(1,128)}', space=vmem, size = 0x12000, scoped, tag = 'internal scratch']
  #allocation2 [shape = 'f32[16,32]{1,0:T(8,128)}', space=vmem, size = 0x2000, scoped, tag = 'scratch operand']
  #allocation3 [shape = 'f32[16,32]{1,0:T(8,128)}', space=vmem, size = 0x2000, scoped, tag = 'scratch operand']
  #allocation4 [shape = 'f32[16,32]{1,0:T(8,128)}', space=vmem, size = 0x2000, scoped, tag = 'scratch operand']
  #allocation5 [shape = 'f32[16,32]{1,0:T(8,128)}', space=vmem, size = 0x2000, scoped, tag = 'scratch operand']
  %s0 = inlined_call_operand.vmem [shape: s32[192,1], index: 0, kind: input, shape index: {}]
  %s1 = inlined_call_operand.vmem [shape: f32[16,1], index: 1, kind: input, shape index: {}]
  %s2 = inlined_call_operand.vmem [shape: f32[50,32], index: 2, kind: input, shape index: {}]
  %s3 = inlined_call_operand.vmem [shape: f32[9,32,16], index: 3, kind: input, shape index: {}]
  %s4 = inlined_call_operand.vmem [shape: f32[3,1,16], index: 4, kind: input, shape index: {}]
  %s5 = inlined_call_operand.vmem [shape: f32[3,16,32], index: 5, kind: input, shape index: {}]
  %s6 = inlined_call_operand.vmem [shape: f32[1,32], index: 6, kind: input, shape index: {}]
  %s7 = inlined_call_operand.vmem [shape: f32[32,256], index: 7, kind: input, shape index: {}]
  %s8 = inlined_call_operand.vmem [shape: f32[32,256], index: 8, kind: input, shape index: {}]
  %s9 = inlined_call_operand.vmem [shape: f32[1,256], index: 9, kind: input, shape index: {}]
  %s10 = inlined_call_operand.vmem [shape: f32[64,256], index: 10, kind: input, shape index: {}]
  %s11 = inlined_call_operand.vmem [shape: f32[32,256], index: 11, kind: input, shape index: {}]
  %s12 = inlined_call_operand.vmem [shape: f32[1,256], index: 12, kind: input, shape index: {}]
  %s13 = inlined_call_operand.vmem [shape: f32[64,32], index: 13, kind: input, shape index: {}]
  %s14 = inlined_call_operand.vmem [shape: f32[1,32], index: 14, kind: input, shape index: {}]
  %s15 = inlined_call_operand.vmem [shape: f32[32,7], index: 15, kind: input, shape index: {}]
  %s16 = inlined_call_operand.vmem [shape: f32[1,7], index: 16, kind: input, shape index: {}]
  %s17 = inlined_call_operand.vmem [shape: f32[16,7], index: 17, kind: output, shape index: {}]
  %s18 = sld [smem:[#allocation0]]
  $region78: #{end2end_forward.1} parent=0
    _
  %s20 = ssub.s32 1, %s18
  %s21 = scalar_select 0, %s20, %s18
  // Predicated region
  $region2: #{end2end_forward.1} parent=0 // pred_check
    _
  $region3: #{end2end_forward.1} parent=0 // pred_check_branch
    %23 = sbr.rel (0) target = $region5
  $region4: #{end2end_forward.1} parent=0 // pred_region
    _
  $region5: #{end2end_forward.1} parent=0 // pred_fallthru
    _
  // Predicated region
  $region6: #{end2end_forward.1} parent=0 // pred_check
    _
  $region7: #{end2end_forward.1} parent=0 // pred_check_branch
    %25 = sbr.rel (0) target = $region9
  $region8: #{end2end_forward.1} parent=0 // pred_region
    _
  $region9: #{end2end_forward.1} parent=0 // pred_fallthru
    _
  // Predicated region
  $region10: #{end2end_forward.1} parent=0 // pred_check
    _
  $region11: #{end2end_forward.1} parent=0 // pred_check_branch
    %27 = sbr.rel (0) target = $region13
  $region12: #{end2end_forward.1} parent=0 // pred_region
    _
  $region13: #{end2end_forward.1} parent=0 // pred_fallthru
    _
  // Predicated region
  $region14: #{end2end_forward.1} parent=0 // pred_check
    _
  $region15: #{end2end_forward.1} parent=0 // pred_check_branch
    %29 = sbr.rel (0) target = $region17
  $region16: #{end2end_forward.1} parent=0 // pred_region
    _
  $region17: #{end2end_forward.1} parent=0 // pred_fallthru
    _
  // Predicated region
  $region18: #{end2end_forward.1} parent=0 // pred_check
    _
  $region19: #{end2end_forward.1} parent=0 // pred_check_branch
    %31 = sbr.rel (0) target = $region21
  $region20: #{end2end_forward.1} parent=0 // pred_region
    _
  $region21: #{end2end_forward.1} parent=0 // pred_fallthru
    _
  // Predicated region
  $region22: #{end2end_forward.1} parent=0 // pred_check
    _
  $region23: #{end2end_forward.1} parent=0 // pred_check_branch
    %33 = sbr.rel (0) target = $region25
  $region24: #{end2end_forward.1} parent=0 // pred_region
    _
  $region25: #{end2end_forward.1} parent=0 // pred_fallthru
    _
  // Predicated region
  $region26: #{end2end_forward.1} parent=0 // pred_check
    _
  $region27: #{end2end_forward.1} parent=0 // pred_check_branch
    %35 = sbr.rel (0) target = $region29
  $region28: #{end2end_forward.1} parent=0 // pred_region
    _
  $region29: #{end2end_forward.1} parent=0 // pred_fallthru
    _
  // Predicated region
  $region30: #{end2end_forward.1} parent=0 // pred_check
    _
  $region31: #{end2end_forward.1} parent=0 // pred_check_branch
    %37 = sbr.rel (0) target = $region33
  $region32: #{end2end_forward.1} parent=0 // pred_region
    _
  $region33: #{end2end_forward.1} parent=0 // pred_fallthru
    _
  // Predicated region
  $region34: #{end2end_forward.1} parent=0 // pred_check
    _
  $region35: #{end2end_forward.1} parent=0 // pred_check_branch
    %39 = sbr.rel (0) target = $region37
  $region36: #{end2end_forward.1} parent=0 // pred_region
    _
  $region37: #{end2end_forward.1} parent=0 // pred_fallthru
    _
  // Predicated region
  $region38: #{end2end_forward.1} parent=0 // pred_check
    _
  $region39: #{end2end_forward.1} parent=0 // pred_check_branch
    %41 = sbr.rel (0) target = $region41
  $region40: #{end2end_forward.1} parent=0 // pred_region
    _
  $region41: #{end2end_forward.1} parent=0 // pred_fallthru
    _
  // Predicated region
  $region42: #{end2end_forward.1} parent=0 // pred_check
    _
  $region43: #{end2end_forward.1} parent=0 // pred_check_branch
    %43 = sbr.rel (0) target = $region45
  $region44: #{end2end_forward.1} parent=0 // pred_region
    _
  $region45: #{end2end_forward.1} parent=0 // pred_fallthru
    _
  // Predicated region
  $region46: #{end2end_forward.1} parent=0 // pred_check
    _
  $region47: #{end2end_forward.1} parent=0 // pred_check_branch
    %45 = sbr.rel (0) target = $region49
  $region48: #{end2end_forward.1} parent=0 // pred_region
    _
  $region49: #{end2end_forward.1} parent=0 // pred_fallthru
    _
  // Predicated region
  $region50: #{end2end_forward.1} parent=0 // pred_check
    _
  $region51: #{end2end_forward.1} parent=0 // pred_check_branch
    %47 = sbr.rel (0) target = $region53
  $region52: #{end2end_forward.1} parent=0 // pred_region
    _
  $region53: #{end2end_forward.1} parent=0 // pred_fallthru
    _
  // Predicated region
  $region54: #{end2end_forward.1} parent=0 // pred_check
    _
  $region55: #{end2end_forward.1} parent=0 // pred_check_branch
    %49 = sbr.rel (0) target = $region57
  $region56: #{end2end_forward.1} parent=0 // pred_region
    _
  $region57: #{end2end_forward.1} parent=0 // pred_fallthru
    _
  // Predicated region
  $region58: #{end2end_forward.1} parent=0 // pred_check
    _
  $region59: #{end2end_forward.1} parent=0 // pred_check_branch
    %51 = sbr.rel (0) target = $region61
  $region60: #{end2end_forward.1} parent=0 // pred_region
    _
  $region61: #{end2end_forward.1} parent=0 // pred_fallthru
    _
  // Predicated region
  $region62: #{end2end_forward.1} parent=0 // pred_check
    _
  $region63: #{end2end_forward.1} parent=0 // pred_check_branch
    %53 = sbr.rel (0) target = $region65
  $region64: #{end2end_forward.1} parent=0 // pred_region
    _
  $region65: #{end2end_forward.1} parent=0 // pred_fallthru
    _
  // Predicated region
  $region66: #{end2end_forward.1} parent=0 // pred_check
    _
  $region67: #{end2end_forward.1} parent=0 // pred_check_branch
    %55 = sbr.rel (0) target = $region69
  $region68: #{end2end_forward.1} parent=0 // pred_region
    _
  $region69: #{end2end_forward.1} parent=0 // pred_fallthru
    _
  %v56 = vld [vmem:[%s0] sm:$0xff]
  %v57 = vld [vmem:[%s0 + $0x8] sm:$0xff]
  %v58 = vld [vmem:[%s0 + $0x10] sm:$0xff]
  %v59 = vld [vmem:[%s0 + $0x18] sm:$0xff]
  %v60 = vld [vmem:[%s0 + $0x20] sm:$0xff]
  %v61 = vld [vmem:[%s0 + $0x28] sm:$0xff]
  %v62 = vld [vmem:[%s0 + $0x30] sm:$0xff]
  %v63 = vld [vmem:[%s0 + $0x38] sm:$0xff]
  %v64 = vld [vmem:[%s0 + $0x40] sm:$0xff]
  %v65 = vld [vmem:[%s0 + $0x48] sm:$0xff]
  %v66 = vld [vmem:[%s0 + $0x50] sm:$0xff]
  %v67 = vld [vmem:[%s0 + $0x58] sm:$0xff]
  %v68 = vld [vmem:[%s0 + $0x60] sm:$0xff]
  %v69 = vld [vmem:[%s0 + $0x68] sm:$0xff]
  %v70 = vld [vmem:[%s0 + $0x70] sm:$0xff]
  %v71 = vld [vmem:[%s0 + $0x78] sm:$0xff]
  %v72 = vld [vmem:[%s0 + $0x80] sm:$0xff]
  %v73 = vld [vmem:[%s0 + $0x88] sm:$0xff]
  %v74 = vld [vmem:[%s0 + $0x90] sm:$0xff]
  %v75 = vld [vmem:[%s0 + $0x98] sm:$0xff]
  %v76 = vld [vmem:[%s0 + $0xa0] sm:$0xff]
  %v77 = vld [vmem:[%s0 + $0xa8] sm:$0xff]
  %v78 = vld [vmem:[%s0 + $0xb0] sm:$0xff]
  %v79 = vld [vmem:[%s0 + $0xb8] sm:$0xff]
  %v80 = vlaneseq
  %v81 = vand.u32 %v80, 127
  %82 = vset.pattern.permute.xlu0 0
  %83 = vperm.xlu0 %82, %v56
  %v84 = vpop.permute.xlu0 %83
  %85 = vset.pattern.permute.xlu0 0
  %86 = vperm.xlu0 %85, %v57
  %v87 = vpop.permute.xlu0 %86
  %88 = vset.pattern.permute.xlu0 0
  %89 = vperm.xlu0 %88, %v58
  %v90 = vpop.permute.xlu0 %89
  %91 = vset.pattern.permute.xlu0 0
  %92 = vperm.xlu0 %91, %v59
  %v93 = vpop.permute.xlu0 %92
  %94 = vset.pattern.permute.xlu0 0
  %95 = vperm.xlu0 %94, %v60
  %v96 = vpop.permute.xlu0 %95
  %97 = vset.pattern.permute.xlu0 0
  %98 = vperm.xlu0 %97, %v61
  %v99 = vpop.permute.xlu0 %98
  %100 = vset.pattern.permute.xlu0 0
  %101 = vperm.xlu0 %100, %v62
  %v102 = vpop.permute.xlu0 %101
  %103 = vset.pattern.permute.xlu0 0
  %104 = vperm.xlu0 %103, %v63
  %v105 = vpop.permute.xlu0 %104
  %106 = vset.pattern.permute.xlu0 0
  %107 = vperm.xlu0 %106, %v64
  %v108 = vpop.permute.xlu0 %107
  %109 = vset.pattern.permute.xlu0 0
  %110 = vperm.xlu0 %109, %v65
  %v111 = vpop.permute.xlu0 %110
  %112 = vset.pattern.permute.xlu0 0
  %113 = vperm.xlu0 %112, %v66
  %v114 = vpop.permute.xlu0 %113
  %115 = vset.pattern.permute.xlu0 0
  %116 = vperm.xlu0 %115, %v67
  %v117 = vpop.permute.xlu0 %116
  %118 = vset.pattern.permute.xlu0 0
  %119 = vperm.xlu0 %118, %v68
  %v120 = vpop.permute.xlu0 %119
  %121 = vset.pattern.permute.xlu0 0
  %122 = vperm.xlu0 %121, %v69
  %v123 = vpop.permute.xlu0 %122
  %124 = vset.pattern.permute.xlu0 0
  %125 = vperm.xlu0 %124, %v70
  %v126 = vpop.permute.xlu0 %125
  %127 = vset.pattern.permute.xlu0 0
  %128 = vperm.xlu0 %127, %v71
  %v129 = vpop.permute.xlu0 %128
  %130 = vset.pattern.permute.xlu0 0
  %131 = vperm.xlu0 %130, %v72
  %v132 = vpop.permute.xlu0 %131
  %133 = vset.pattern.permute.xlu0 0
  %134 = vperm.xlu0 %133, %v73
  %v135 = vpop.permute.xlu0 %134
  %136 = vset.pattern.permute.xlu0 0
  %137 = vperm.xlu0 %136, %v74
  %v138 = vpop.permute.xlu0 %137
  %139 = vset.pattern.permute.xlu0 0
  %140 = vperm.xlu0 %139, %v75
  %v141 = vpop.permute.xlu0 %140
  %142 = vset.pattern.permute.xlu0 0
  %143 = vperm.xlu0 %142, %v76
  %v144 = vpop.permute.xlu0 %143
  %145 = vset.pattern.permute.xlu0 0
  %146 = vperm.xlu0 %145, %v77
  %v147 = vpop.permute.xlu0 %146
  %148 = vset.pattern.permute.xlu0 0
  %149 = vperm.xlu0 %148, %v78
  %v150 = vpop.permute.xlu0 %149
  %151 = vset.pattern.permute.xlu0 0
  %152 = vperm.xlu0 %151, %v79
  %v153 = vpop.permute.xlu0 %152
  %vm154 = vcmp.eq.s32.totalorder %v81, %v84
  %vm155 = vcmp.eq.s32.totalorder %v81, %v87
  %vm156 = vcmp.eq.s32.totalorder %v81, %v90
  %vm157 = vcmp.eq.s32.totalorder %v81, %v93
  %vm158 = vcmp.eq.s32.totalorder %v81, %v96
  %vm159 = vcmp.eq.s32.totalorder %v81, %v99
  %vm160 = vcmp.eq.s32.totalorder %v81, %v102
  %vm161 = vcmp.eq.s32.totalorder %v81, %v105
  %vm162 = vcmp.eq.s32.totalorder %v81, %v108
  %vm163 = vcmp.eq.s32.totalorder %v81, %v111
  %vm164 = vcmp.eq.s32.totalorder %v81, %v114
  %vm165 = vcmp.eq.s32.totalorder %v81, %v117
  %vm166 = vcmp.eq.s32.totalorder %v81, %v120
  %vm167 = vcmp.eq.s32.totalorder %v81, %v123
  %vm168 = vcmp.eq.s32.totalorder %v81, %v126
  %vm169 = vcmp.eq.s32.totalorder %v81, %v129
  %vm170 = vcmp.eq.s32.totalorder %v81, %v132
  %vm171 = vcmp.eq.s32.totalorder %v81, %v135
  %vm172 = vcmp.eq.s32.totalorder %v81, %v138
  %vm173 = vcmp.eq.s32.totalorder %v81, %v141
  %vm174 = vcmp.eq.s32.totalorder %v81, %v144
  %vm175 = vcmp.eq.s32.totalorder %v81, %v147
  %vm176 = vcmp.eq.s32.totalorder %v81, %v150
  %vm177 = vcmp.eq.s32.totalorder %v81, %v153
  %v178 = vsel %vm154, 1, 0
  %v179 = vsel %vm155, 1, 0
  %v180 = vsel %vm156, 1, 0
  %v181 = vsel %vm157, 1, 0
  %v182 = vsel %vm158, 1, 0
  %v183 = vsel %vm159, 1, 0
  %v184 = vsel %vm160, 1, 0
  %v185 = vsel %vm161, 1, 0
  %v186 = vsel %vm162, 1, 0
  %v187 = vsel %vm163, 1, 0
  %v188 = vsel %vm164, 1, 0
  %v189 = vsel %vm165, 1, 0
  %v190 = vsel %vm166, 1, 0
  %v191 = vsel %vm167, 1, 0
  %v192 = vsel %vm168, 1, 0
  %v193 = vsel %vm169, 1, 0
  %v194 = vsel %vm170, 1, 0
  %v195 = vsel %vm171, 1, 0
  %v196 = vsel %vm172, 1, 0
  %v197 = vsel %vm173, 1, 0
  %v198 = vsel %vm174, 1, 0
  %v199 = vsel %vm175, 1, 0
  %v200 = vsel %vm176, 1, 0
  %v201 = vsel %vm177, 1, 0
  %v202 = vcvt.s32.f32 %v178
  %v203 = vcvt.s32.f32 %v179
  %v204 = vcvt.s32.f32 %v180
  %v205 = vcvt.s32.f32 %v181
  %v206 = vcvt.s32.f32 %v182
  %v207 = vcvt.s32.f32 %v183
  %v208 = vcvt.s32.f32 %v184
  %v209 = vcvt.s32.f32 %v185
  %v210 = vcvt.s32.f32 %v186
  %v211 = vcvt.s32.f32 %v187
  %v212 = vcvt.s32.f32 %v188
  %v213 = vcvt.s32.f32 %v189
  %v214 = vcvt.s32.f32 %v190
  %v215 = vcvt.s32.f32 %v191
  %v216 = vcvt.s32.f32 %v192
  %v217 = vcvt.s32.f32 %v193
  %v218 = vcvt.s32.f32 %v194
  %v219 = vcvt.s32.f32 %v195
  %v220 = vcvt.s32.f32 %v196
  %v221 = vcvt.s32.f32 %v197
  %v222 = vcvt.s32.f32 %v198
  %v223 = vcvt.s32.f32 %v199
  %v224 = vcvt.s32.f32 %v200
  %v225 = vcvt.s32.f32 %v201
  %v226 = vld [vmem:[%s2] sm:$0xff]
  %v227 = vld [vmem:[%s2 + $0x8] sm:$0xff]
  %v228 = vld [vmem:[%s2 + $0x10] sm:$0xff]
  %v229 = vld [vmem:[%s2 + $0x18] sm:$0xff]
  %v230 = vld [vmem:[%s2 + $0x20] sm:$0xff]
  %v231 = vld [vmem:[%s2 + $0x28] sm:$0xff]
  %v232 = vld [vmem:[%s2 + $0x30] sm:$0x3]
  %vm233 = vcmask 408576
  %v235 = vsel %vm233, %v202, 0
  %v238 = vsel %vm233, %v203, 0
  %v241 = vsel %vm233, %v204, 0
  %v244 = vsel %vm233, %v205, 0
  %v247 = vsel %vm233, %v206, 0
  %v250 = vsel %vm233, %v207, 0
  %v253 = vsel %vm233, %v208, 0
  %v256 = vsel %vm233, %v209, 0
  %v259 = vsel %vm233, %v210, 0
  %v262 = vsel %vm233, %v211, 0
  %v265 = vsel %vm233, %v212, 0
  %v268 = vsel %vm233, %v213, 0
  %v271 = vsel %vm233, %v214, 0
  %v274 = vsel %vm233, %v215, 0
  %v277 = vsel %vm233, %v216, 0
  %v280 = vsel %vm233, %v217, 0
  %v283 = vsel %vm233, %v218, 0
  %v286 = vsel %vm233, %v219, 0
  %v289 = vsel %vm233, %v220, 0
  %v292 = vsel %vm233, %v221, 0
  %v295 = vsel %vm233, %v222, 0
  %v298 = vsel %vm233, %v223, 0
  %v301 = vsel %vm233, %v224, 0
  %v304 = vsel %vm233, %v225, 0
  %vm306 = vcmask 1041408
  %v308 = vsel %vm306, %v232, 0
  %310 = vmatprep.subr.mxu0 0.0
  %311 = vmatpush1.msra.mxu0 0.0
  %312 = vmatprep.subr.mxu0 0.0
  %313 = vmatpush1.msra.mxu0 0.0
  %314 = vmatprep.subr.mxu0 0.0
  %315 = vmatpush1.msra.mxu0 0.0
  %316 = vmatprep.subr.mxu0 0.0
  %317 = vmatpush1.msra.mxu0 0.0
  %318 = vmatprep.subr.mxu0 0.0
  %319 = vmatpush1.msra.mxu0 0.0
  %320 = vmatprep.subr.mxu0 0.0
  %321 = vmatpush1.msra.mxu0 0.0
  %322 = vmatprep.subr.mxu0 0.0
  %323 = vmatpush1.msra.mxu0 0.0
  %324 = vmatprep.subr.mxu0 0.0
  %325 = vmatpush1.msra.mxu0 0.0
  %326 = vmatprep.subr.mxu0 0.0
  %327 = vmatpush1.msra.mxu0 0.0
  %328 = vmatprep.subr.mxu0 0.0
  %329 = vmatpush1.msra.mxu0 %v308
  %330 = vmatprep.subr.mxu0 0.0
  %331 = vmatpush1.msra.mxu0 %v231
  %332 = vmatprep.subr.mxu0 0.0
  %333 = vmatpush1.msra.mxu0 %v230
  %334 = vmatprep.subr.mxu0 0.0
  %335 = vmatpush1.msra.mxu0 %v229
  %336 = vmatprep.subr.mxu0 0.0
  %337 = vmatpush1.msra.mxu0 %v228
  %338 = vmatprep.subr.mxu0 0.0
  %339 = vmatpush1.msra.mxu0 %v227
  %340 = vmatprep.subr.mxu0 0.0
  %341 = vmatpush1.msra.mxu0 %v226
  %342 = vmatprep.subr.mxu0 0.0
  %343 = vmatpush2.msra.mxu0 0.0
  %344 = vmatprep.subr.mxu0 0.0
  %345 = vmatpush2.msra.mxu0 0.0
  %346 = vmatprep.subr.mxu0 0.0
  %347 = vmatpush2.msra.mxu0 0.0
  %348 = vmatprep.subr.mxu0 0.0
  %349 = vmatpush2.msra.mxu0 0.0
  %350 = vmatprep.subr.mxu0 0.0
  %351 = vmatpush2.msra.mxu0 0.0
  %352 = vmatprep.subr.mxu0 0.0
  %353 = vmatpush2.msra.mxu0 0.0
  %354 = vmatprep.subr.mxu0 0.0
  %355 = vmatpush2.msra.mxu0 0.0
  %356 = vmatprep.subr.mxu0 0.0
  %357 = vmatpush2.msra.mxu0 0.0
  %358 = vmatprep.subr.mxu0 0.0
  %359 = vmatpush2.msra.mxu0 0.0
  %360 = vmatprep.subr.mxu0 0.0
  %361 = vmatpush2.msra.mxu0 0.0
  %362 = vmatprep.subr.mxu0 0.0
  %363 = vmatpush2.msra.mxu0 0.0
  %364 = vmatprep.subr.mxu0 0.0
  %365 = vmatpush2.msra.mxu0 0.0
  %366 = vmatprep.subr.mxu0 0.0
  %367 = vmatpush2.msra.mxu0 0.0
  %368 = vmatprep.subr.mxu0 0.0
  %369 = vmatpush2.msra.mxu0 0.0
  %370 = vmatprep.subr.mxu0 0.0
  %371 = vmatpush2.msra.mxu0 0.0
  %372 = vmatprep.subr.mxu0 0.0
  %373 = vmatpush2.msra.mxu0 0.0
  %374 = vmatprep.mubr.f32.mxu0 0.0
  %375 = vmatmul.mubr.f32.gmra.mxu0 %v235
  %v376 = vpop.f32.mrf.mxu0
  %v377 = vadd.f32 0.0, %v376
  %v378 = vpop.f32.mrf.mxu0
  %379 = vmatprep.mubr.f32.mxu0 0.0
  %380 = vmatmul.mubr.f32.gmra.mxu0 %v238
  %v381 = vpop.f32.mrf.mxu0
  %v382 = vadd.f32 0.0, %v381
  %v383 = vpop.f32.mrf.mxu0
  %384 = vmatprep.mubr.f32.mxu0 0.0
  %385 = vmatmul.mubr.f32.gmra.mxu0 %v241
  %v386 = vpop.f32.mrf.mxu0
  %v387 = vadd.f32 0.0, %v386
  %v388 = vpop.f32.mrf.mxu0
  %389 = vmatprep.mubr.f32.mxu0 0.0
  %390 = vmatmul.mubr.f32.gmra.mxu0 %v244
  %v391 = vpop.f32.mrf.mxu0
  %v392 = vadd.f32 0.0, %v391
  %v393 = vpop.f32.mrf.mxu0
  %394 = vmatprep.mubr.f32.mxu0 0.0
  %395 = vmatmul.mubr.f32.gmra.mxu0 %v247
  %v396 = vpop.f32.mrf.mxu0
  %v397 = vadd.f32 0.0, %v396
  %v398 = vpop.f32.mrf.mxu0
  %399 = vmatprep.mubr.f32.mxu0 0.0
  %400 = vmatmul.mubr.f32.gmra.mxu0 %v250
  %v401 = vpop.f32.mrf.mxu0
  %v402 = vadd.f32 0.0, %v401
  %v403 = vpop.f32.mrf.mxu0
  %404 = vmatprep.mubr.f32.mxu0 0.0
  %405 = vmatmul.mubr.f32.gmra.mxu0 %v253
  %v406 = vpop.f32.mrf.mxu0
  %v407 = vadd.f32 0.0, %v406
  %v408 = vpop.f32.mrf.mxu0
  %409 = vmatprep.mubr.f32.mxu0 0.0
  %410 = vmatmul.mubr.f32.gmra.mxu0 %v256
  %v411 = vpop.f32.mrf.mxu0
  %v412 = vadd.f32 0.0, %v411
  %v413 = vpop.f32.mrf.mxu0
  %414 = vmatprep.mubr.f32.mxu0 0.0
  %415 = vmatmul.mubr.f32.gmra.mxu0 %v259
  %v416 = vpop.f32.mrf.mxu0
  %v417 = vadd.f32 0.0, %v416
  %v418 = vpop.f32.mrf.mxu0
  %419 = vmatprep.mubr.f32.mxu0 0.0
  %420 = vmatmul.mubr.f32.gmra.mxu0 %v262
  %v421 = vpop.f32.mrf.mxu0
  %v422 = vadd.f32 0.0, %v421
  %v423 = vpop.f32.mrf.mxu0
  %424 = vmatprep.mubr.f32.mxu0 0.0
  %425 = vmatmul.mubr.f32.gmra.mxu0 %v265
  %v426 = vpop.f32.mrf.mxu0
  %v427 = vadd.f32 0.0, %v426
  %v428 = vpop.f32.mrf.mxu0
  %429 = vmatprep.mubr.f32.mxu0 0.0
  %430 = vmatmul.mubr.f32.gmra.mxu0 %v268
  %v431 = vpop.f32.mrf.mxu0
  %v432 = vadd.f32 0.0, %v431
  %v433 = vpop.f32.mrf.mxu0
  %434 = vmatprep.mubr.f32.mxu0 0.0
  %435 = vmatmul.mubr.f32.gmra.mxu0 %v271
  %v436 = vpop.f32.mrf.mxu0
  %v437 = vadd.f32 0.0, %v436
  %v438 = vpop.f32.mrf.mxu0
  %439 = vmatprep.mubr.f32.mxu0 0.0
  %440 = vmatmul.mubr.f32.gmra.mxu0 %v274
  %v441 = vpop.f32.mrf.mxu0
  %v442 = vadd.f32 0.0, %v441
  %v443 = vpop.f32.mrf.mxu0
  %444 = vmatprep.mubr.f32.mxu0 0.0
  %445 = vmatmul.mubr.f32.gmra.mxu0 %v277
  %v446 = vpop.f32.mrf.mxu0
  %v447 = vadd.f32 0.0, %v446
  %v448 = vpop.f32.mrf.mxu0
  %449 = vmatprep.mubr.f32.mxu0 0.0
  %450 = vmatmul.mubr.f32.gmra.mxu0 %v280
  %v451 = vpop.f32.mrf.mxu0
  %v452 = vadd.f32 0.0, %v451
  %v453 = vpop.f32.mrf.mxu0
  %454 = vmatprep.mubr.f32.mxu0 0.0
  %455 = vmatmul.mubr.f32.gmra.mxu0 %v283
  %v456 = vpop.f32.mrf.mxu0
  %v457 = vadd.f32 0.0, %v456
  %v458 = vpop.f32.mrf.mxu0
  %459 = vmatprep.mubr.f32.mxu0 0.0
  %460 = vmatmul.mubr.f32.gmra.mxu0 %v286
  %v461 = vpop.f32.mrf.mxu0
  %v462 = vadd.f32 0.0, %v461
  %v463 = vpop.f32.mrf.mxu0
  %464 = vmatprep.mubr.f32.mxu0 0.0
  %465 = vmatmul.mubr.f32.gmra.mxu0 %v289
  %v466 = vpop.f32.mrf.mxu0
  %v467 = vadd.f32 0.0, %v466
  %v468 = vpop.f32.mrf.mxu0
  %469 = vmatprep.mubr.f32.mxu0 0.0
  %470 = vmatmul.mubr.f32.gmra.mxu0 %v292
  %v471 = vpop.f32.mrf.mxu0
  %v472 = vadd.f32 0.0, %v471
  %v473 = vpop.f32.mrf.mxu0
  %474 = vmatprep.mubr.f32.mxu0 0.0
  %475 = vmatmul.mubr.f32.gmra.mxu0 %v295
  %v476 = vpop.f32.mrf.mxu0
  %v477 = vadd.f32 0.0, %v476
  %v478 = vpop.f32.mrf.mxu0
  %479 = vmatprep.mubr.f32.mxu0 0.0
  %480 = vmatmul.mubr.f32.gmra.mxu0 %v298
  %v481 = vpop.f32.mrf.mxu0
  %v482 = vadd.f32 0.0, %v481
  %v483 = vpop.f32.mrf.mxu0
  %484 = vmatprep.mubr.f32.mxu0 0.0
  %485 = vmatmul.mubr.f32.gmra.mxu0 %v301
  %v486 = vpop.f32.mrf.mxu0
  %v487 = vadd.f32 0.0, %v486
  %v488 = vpop.f32.mrf.mxu0
  %489 = vmatprep.mubr.f32.mxu0 0.0
  %490 = vmatmul.mubr.f32.gmra.mxu0 %v304
  %v491 = vpop.f32.mrf.mxu0
  %v492 = vadd.f32 0.0, %v491
  %v493 = vpop.f32.mrf.mxu0
  %494 = vdwg.mxu0
  %v495 = vld [vmem:[%s1] sm:$0xff]
  %v496 = vld [vmem:[%s1 + $0x8] sm:$0xff]
  %v497 = vld [vmem:[%s3] sm:$0xff]
  %v498 = vld [vmem:[%s3 + $0x8] sm:$0xff]
  %v499 = vld [vmem:[%s3 + $0x10] sm:$0xff]
  %v500 = vld [vmem:[%s3 + $0x18] sm:$0xff]
  %vm501 = vcmask 261120
  %v503 = vsel %vm501, %v377, 0
  %v506 = vsel %vm501, %v382, 0
  %v509 = vsel %vm501, %v387, 0
  %v512 = vsel %vm501, %v392, 0
  %v515 = vsel %vm501, %v397, 0
  %v518 = vsel %vm501, %v402, 0
  %v521 = vsel %vm501, %v407, 0
  %v524 = vsel %vm501, %v412, 0
  %v527 = vsel %vm501, %v417, 0
  %v530 = vsel %vm501, %v422, 0
  %v533 = vsel %vm501, %v427, 0
  %v536 = vsel %vm501, %v432, 0
  %v539 = vsel %vm501, %v437, 0
  %v542 = vsel %vm501, %v442, 0
  %v545 = vsel %vm501, %v447, 0
  %v548 = vsel %vm501, %v452, 0
  %v551 = vsel %vm501, %v457, 0
  %v554 = vsel %vm501, %v462, 0
  %v557 = vsel %vm501, %v467, 0
  %v560 = vsel %vm501, %v472, 0
  %v563 = vsel %vm501, %v477, 0
  %v566 = vsel %vm501, %v482, 0
  %v569 = vsel %vm501, %v487, 0
  %v572 = vsel %vm501, %v492, 0
  %574 = vmatprep.subr.mxu0 0.0
  %575 = vmatpush1.msra.mxu0 0.0
  %576 = vmatprep.subr.mxu0 0.0
  %577 = vmatpush1.msra.mxu0 0.0
  %578 = vmatprep.subr.mxu0 0.0
  %579 = vmatpush1.msra.mxu0 0.0
  %580 = vmatprep.subr.mxu0 0.0
  %581 = vmatpush1.msra.mxu0 0.0
  %582 = vmatprep.subr.mxu0 0.0
  %583 = vmatpush1.msra.mxu0 0.0
  %584 = vmatprep.subr.mxu0 0.0
  %585 = vmatpush1.msra.mxu0 0.0
  %586 = vmatprep.subr.mxu0 0.0
  %587 = vmatpush1.msra.mxu0 0.0
  %588 = vmatprep.subr.mxu0 0.0
  %589 = vmatpush1.msra.mxu0 0.0
  %590 = vmatprep.subr.mxu0 0.0
  %591 = vmatpush1.msra.mxu0 0.0
  %592 = vmatprep.subr.mxu0 0.0
  %593 = vmatpush1.msra.mxu0 0.0
  %594 = vmatprep.subr.mxu0 0.0
  %595 = vmatpush1.msra.mxu0 0.0
  %596 = vmatprep.subr.mxu0 0.0
  %597 = vmatpush1.msra.mxu0 0.0
  %598 = vmatprep.subr.mxu0 0.0
  %599 = vmatpush1.msra.mxu0 %v500
  %600 = vmatprep.subr.mxu0 0.0
  %601 = vmatpush1.msra.mxu0 %v499
  %602 = vmatprep.subr.mxu0 0.0
  %603 = vmatpush1.msra.mxu0 %v498
  %604 = vmatprep.subr.mxu0 0.0
  %605 = vmatpush1.msra.mxu0 %v497
  %606 = vmatprep.subr.mxu0 0.0
  %607 = vmatpush2.msra.mxu0 0.0
  %608 = vmatprep.subr.mxu0 0.0
  %609 = vmatpush2.msra.mxu0 0.0
  %610 = vmatprep.subr.mxu0 0.0
  %611 = vmatpush2.msra.mxu0 0.0
  %612 = vmatprep.subr.mxu0 0.0
  %613 = vmatpush2.msra.mxu0 0.0
  %614 = vmatprep.subr.mxu0 0.0
  %615 = vmatpush2.msra.mxu0 0.0
  %616 = vmatprep.subr.mxu0 0.0
  %617 = vmatpush2.msra.mxu0 0.0
  %618 = vmatprep.subr.mxu0 0.0
  %619 = vmatpush2.msra.mxu0 0.0
  %620 = vmatprep.subr.mxu0 0.0
  %621 = vmatpush2.msra.mxu0 0.0
  %622 = vmatprep.subr.mxu0 0.0
  %623 = vmatpush2.msra.mxu0 0.0
  %624 = vmatprep.subr.mxu0 0.0
  %625 = vmatpush2.msra.mxu0 0.0
  %626 = vmatprep.subr.mxu0 0.0
  %627 = vmatpush2.msra.mxu0 0.0
  %628 = vmatprep.subr.mxu0 0.0
  %629 = vmatpush2.msra.mxu0 0.0
  %630 = vmatprep.subr.mxu0 0.0
  %631 = vmatpush2.msra.mxu0 0.0
  %632 = vmatprep.subr.mxu0 0.0
  %633 = vmatpush2.msra.mxu0 0.0
  %634 = vmatprep.subr.mxu0 0.0
  %635 = vmatpush2.msra.mxu0 0.0
  %636 = vmatprep.subr.mxu0 0.0
  %637 = vmatpush2.msra.mxu0 0.0
  %638 = vmatprep.mubr.f32.mxu0 0.0
  %639 = vmatmul.mubr.f32.gmra.mxu0 %v503
  %v640 = vpop.f32.mrf.mxu0
  %v641 = vadd.f32 0.0, %v640
  %v642 = vpop.f32.mrf.mxu0
  %643 = vmatprep.mubr.f32.mxu0 0.0
  %644 = vmatmul.mubr.f32.gmra.mxu0 %v506
  %v645 = vpop.f32.mrf.mxu0
  %v646 = vadd.f32 0.0, %v645
  %v647 = vpop.f32.mrf.mxu0
  %648 = vmatprep.mubr.f32.mxu0 0.0
  %649 = vmatmul.mubr.f32.gmra.mxu0 %v509
  %v650 = vpop.f32.mrf.mxu0
  %v651 = vadd.f32 0.0, %v650
  %v652 = vpop.f32.mrf.mxu0
  %653 = vmatprep.mubr.f32.mxu0 0.0
  %654 = vmatmul.mubr.f32.gmra.mxu0 %v512
  %v655 = vpop.f32.mrf.mxu0
  %v656 = vadd.f32 0.0, %v655
  %v657 = vpop.f32.mrf.mxu0
  %658 = vmatprep.mubr.f32.mxu0 0.0
  %659 = vmatmul.mubr.f32.gmra.mxu0 %v515
  %v660 = vpop.f32.mrf.mxu0
  %v661 = vadd.f32 0.0, %v660
  %v662 = vpop.f32.mrf.mxu0
  %663 = vmatprep.mubr.f32.mxu0 0.0
  %664 = vmatmul.mubr.f32.gmra.mxu0 %v518
  %v665 = vpop.f32.mrf.mxu0
  %v666 = vadd.f32 0.0, %v665
  %v667 = vpop.f32.mrf.mxu0
  %668 = vmatprep.mubr.f32.mxu0 0.0
  %669 = vmatmul.mubr.f32.gmra.mxu0 %v521
  %v670 = vpop.f32.mrf.mxu0
  %v671 = vadd.f32 0.0, %v670
  %v672 = vpop.f32.mrf.mxu0
  %673 = vmatprep.mubr.f32.mxu0 0.0
  %674 = vmatmul.mubr.f32.gmra.mxu0 %v524
  %v675 = vpop.f32.mrf.mxu0
  %v676 = vadd.f32 0.0, %v675
  %v677 = vpop.f32.mrf.mxu0
  %678 = vmatprep.mubr.f32.mxu0 0.0
  %679 = vmatmul.mubr.f32.gmra.mxu0 %v527
  %v680 = vpop.f32.mrf.mxu0
  %v681 = vadd.f32 0.0, %v680
  %v682 = vpop.f32.mrf.mxu0
  %683 = vmatprep.mubr.f32.mxu0 0.0
  %684 = vmatmul.mubr.f32.gmra.mxu0 %v530
  %v685 = vpop.f32.mrf.mxu0
  %v686 = vadd.f32 0.0, %v685
  %v687 = vpop.f32.mrf.mxu0
  %688 = vmatprep.mubr.f32.mxu0 0.0
  %689 = vmatmul.mubr.f32.gmra.mxu0 %v533
  %v690 = vpop.f32.mrf.mxu0
  %v691 = vadd.f32 0.0, %v690
  %v692 = vpop.f32.mrf.mxu0
  %693 = vmatprep.mubr.f32.mxu0 0.0
  %694 = vmatmul.mubr.f32.gmra.mxu0 %v536
  %v695 = vpop.f32.mrf.mxu0
  %v696 = vadd.f32 0.0, %v695
  %v697 = vpop.f32.mrf.mxu0
  %698 = vmatprep.mubr.f32.mxu0 0.0
  %699 = vmatmul.mubr.f32.gmra.mxu0 %v539
  %v700 = vpop.f32.mrf.mxu0
  %v701 = vadd.f32 0.0, %v700
  %v702 = vpop.f32.mrf.mxu0
  %703 = vmatprep.mubr.f32.mxu0 0.0
  %704 = vmatmul.mubr.f32.gmra.mxu0 %v542
  %v705 = vpop.f32.mrf.mxu0
  %v706 = vadd.f32 0.0, %v705
  %v707 = vpop.f32.mrf.mxu0
  %708 = vmatprep.mubr.f32.mxu0 0.0
  %709 = vmatmul.mubr.f32.gmra.mxu0 %v545
  %v710 = vpop.f32.mrf.mxu0
  %v711 = vadd.f32 0.0, %v710
  %v712 = vpop.f32.mrf.mxu0
  %713 = vmatprep.mubr.f32.mxu0 0.0
  %714 = vmatmul.mubr.f32.gmra.mxu0 %v548
  %v715 = vpop.f32.mrf.mxu0
  %v716 = vadd.f32 0.0, %v715
  %v717 = vpop.f32.mrf.mxu0
  %718 = vmatprep.mubr.f32.mxu0 0.0
  %719 = vmatmul.mubr.f32.gmra.mxu0 %v551
  %v720 = vpop.f32.mrf.mxu0
  %v721 = vadd.f32 0.0, %v720
  %v722 = vpop.f32.mrf.mxu0
  %723 = vmatprep.mubr.f32.mxu0 0.0
  %724 = vmatmul.mubr.f32.gmra.mxu0 %v554
  %v725 = vpop.f32.mrf.mxu0
  %v726 = vadd.f32 0.0, %v725
  %v727 = vpop.f32.mrf.mxu0
  %728 = vmatprep.mubr.f32.mxu0 0.0
  %729 = vmatmul.mubr.f32.gmra.mxu0 %v557
  %v730 = vpop.f32.mrf.mxu0
  %v731 = vadd.f32 0.0, %v730
  %v732 = vpop.f32.mrf.mxu0
  %733 = vmatprep.mubr.f32.mxu0 0.0
  %734 = vmatmul.mubr.f32.gmra.mxu0 %v560
  %v735 = vpop.f32.mrf.mxu0
  %v736 = vadd.f32 0.0, %v735
  %v737 = vpop.f32.mrf.mxu0
  %738 = vmatprep.mubr.f32.mxu0 0.0
  %739 = vmatmul.mubr.f32.gmra.mxu0 %v563
  %v740 = vpop.f32.mrf.mxu0
  %v741 = vadd.f32 0.0, %v740
  %v742 = vpop.f32.mrf.mxu0
  %743 = vmatprep.mubr.f32.mxu0 0.0
  %744 = vmatmul.mubr.f32.gmra.mxu0 %v566
  %v745 = vpop.f32.mrf.mxu0
  %v746 = vadd.f32 0.0, %v745
  %v747 = vpop.f32.mrf.mxu0
  %748 = vmatprep.mubr.f32.mxu0 0.0
  %749 = vmatmul.mubr.f32.gmra.mxu0 %v569
  %v750 = vpop.f32.mrf.mxu0
  %v751 = vpop.f32.mrf.mxu0
  %752 = vmatprep.mubr.f32.mxu0 0.0
  %753 = vmatmul.mubr.f32.gmra.mxu0 %v572
  %v754 = vpop.f32.mrf.mxu0
  %v755 = vpop.f32.mrf.mxu0
  %756 = vdwg.mxu0
  %s757 = scalar_lea.vmem %s3, 32
  %v758 = vld [vmem:[%s757] sm:$0xff]
  %v759 = vld [vmem:[%s757 + $0x8] sm:$0xff]
  %v760 = vld [vmem:[%s757 + $0x10] sm:$0xff]
  %v761 = vld [vmem:[%s757 + $0x18] sm:$0xff]
  %762 = vmatprep.subr.mxu0 0.0
  %763 = vmatpush1.msra.mxu0 0.0
  %764 = vmatprep.subr.mxu0 0.0
  %765 = vmatpush1.msra.mxu0 0.0
  %766 = vmatprep.subr.mxu0 0.0
  %767 = vmatpush1.msra.mxu0 0.0
  %768 = vmatprep.subr.mxu0 0.0
  %769 = vmatpush1.msra.mxu0 0.0
  %770 = vmatprep.subr.mxu0 0.0
  %771 = vmatpush1.msra.mxu0 0.0
  %772 = vmatprep.subr.mxu0 0.0
  %773 = vmatpush1.msra.mxu0 0.0
  %774 = vmatprep.subr.mxu0 0.0
  %775 = vmatpush1.msra.mxu0 0.0
  %776 = vmatprep.subr.mxu0 0.0
  %777 = vmatpush1.msra.mxu0 0.0
  %778 = vmatprep.subr.mxu0 0.0
  %779 = vmatpush1.msra.mxu0 0.0
  %780 = vmatprep.subr.mxu0 0.0
  %781 = vmatpush1.msra.mxu0 0.0
  %782 = vmatprep.subr.mxu0 0.0
  %783 = vmatpush1.msra.mxu0 0.0
  %784 = vmatprep.subr.mxu0 0.0
  %785 = vmatpush1.msra.mxu0 0.0
  %786 = vmatprep.subr.mxu0 0.0
  %787 = vmatpush1.msra.mxu0 %v761
  %788 = vmatprep.subr.mxu0 0.0
  %789 = vmatpush1.msra.mxu0 %v760
  %790 = vmatprep.subr.mxu0 0.0
  %791 = vmatpush1.msra.mxu0 %v759
  %792 = vmatprep.subr.mxu0 0.0
  %793 = vmatpush1.msra.mxu0 %v758
  %794 = vmatprep.subr.mxu0 0.0
  %795 = vmatpush2.msra.mxu0 0.0
  %796 = vmatprep.subr.mxu0 0.0
  %797 = vmatpush2.msra.mxu0 0.0
  %798 = vmatprep.subr.mxu0 0.0
  %799 = vmatpush2.msra.mxu0 0.0
  %800 = vmatprep.subr.mxu0 0.0
  %801 = vmatpush2.msra.mxu0 0.0
  %802 = vmatprep.subr.mxu0 0.0
  %803 = vmatpush2.msra.mxu0 0.0
  %804 = vmatprep.subr.mxu0 0.0
  %805 = vmatpush2.msra.mxu0 0.0
  %806 = vmatprep.subr.mxu0 0.0
  %807 = vmatpush2.msra.mxu0 0.0
  %808 = vmatprep.subr.mxu0 0.0
  %809 = vmatpush2.msra.mxu0 0.0
  %810 = vmatprep.subr.mxu0 0.0
  %811 = vmatpush2.msra.mxu0 0.0
  %812 = vmatprep.subr.mxu0 0.0
  %813 = vmatpush2.msra.mxu0 0.0
  %814 = vmatprep.subr.mxu0 0.0
  %815 = vmatpush2.msra.mxu0 0.0
  %816 = vmatprep.subr.mxu0 0.0
  %817 = vmatpush2.msra.mxu0 0.0
  %818 = vmatprep.subr.mxu0 0.0
  %819 = vmatpush2.msra.mxu0 0.0
  %820 = vmatprep.subr.mxu0 0.0
  %821 = vmatpush2.msra.mxu0 0.0
  %822 = vmatprep.subr.mxu0 0.0
  %823 = vmatpush2.msra.mxu0 0.0
  %824 = vmatprep.subr.mxu0 0.0
  %825 = vmatpush2.msra.mxu0 0.0
  %826 = vmatprep.mubr.f32.mxu0 0.0
  %827 = vmatmul.mubr.f32.gmra.mxu0 %v503
  %v828 = vpop.f32.mrf.mxu0
  %v829 = vpop.f32.mrf.mxu0
  %830 = vmatprep.mubr.f32.mxu0 0.0
  %831 = vmatmul.mubr.f32.gmra.mxu0 %v506
  %v832 = vpop.f32.mrf.mxu0
  %v833 = vpop.f32.mrf.mxu0
  %834 = vmatprep.mubr.f32.mxu0 0.0
  %835 = vmatmul.mubr.f32.gmra.mxu0 %v509
  %v836 = vpop.f32.mrf.mxu0
  %v837 = vadd.f32 0.0, %v836
  %v838 = vpop.f32.mrf.mxu0
  %839 = vmatprep.mubr.f32.mxu0 0.0
  %840 = vmatmul.mubr.f32.gmra.mxu0 %v512
  %v841 = vpop.f32.mrf.mxu0
  %v842 = vadd.f32 0.0, %v841
  %v843 = vpop.f32.mrf.mxu0
  %844 = vmatprep.mubr.f32.mxu0 0.0
  %845 = vmatmul.mubr.f32.gmra.mxu0 %v515
  %v846 = vpop.f32.mrf.mxu0
  %v847 = vadd.f32 0.0, %v846
  %v848 = vpop.f32.mrf.mxu0
  %849 = vmatprep.mubr.f32.mxu0 0.0
  %850 = vmatmul.mubr.f32.gmra.mxu0 %v518
  %v851 = vpop.f32.mrf.mxu0
  %v852 = vadd.f32 0.0, %v851
  %v853 = vpop.f32.mrf.mxu0
  %854 = vmatprep.mubr.f32.mxu0 0.0
  %855 = vmatmul.mubr.f32.gmra.mxu0 %v521
  %v856 = vpop.f32.mrf.mxu0
  %v857 = vadd.f32 0.0, %v856
  %v858 = vpop.f32.mrf.mxu0
  %859 = vmatprep.mubr.f32.mxu0 0.0
  %860 = vmatmul.mubr.f32.gmra.mxu0 %v524
  %v861 = vpop.f32.mrf.mxu0
  %v862 = vadd.f32 0.0, %v861
  %v863 = vpop.f32.mrf.mxu0
  %864 = vmatprep.mubr.f32.mxu0 0.0
  %865 = vmatmul.mubr.f32.gmra.mxu0 %v527
  %v866 = vpop.f32.mrf.mxu0
  %v867 = vadd.f32 0.0, %v866
  %v868 = vpop.f32.mrf.mxu0
  %869 = vmatprep.mubr.f32.mxu0 0.0
  %870 = vmatmul.mubr.f32.gmra.mxu0 %v530
  %v871 = vpop.f32.mrf.mxu0
  %v872 = vadd.f32 0.0, %v871
  %v873 = vpop.f32.mrf.mxu0
  %874 = vmatprep.mubr.f32.mxu0 0.0
  %875 = vmatmul.mubr.f32.gmra.mxu0 %v533
  %v876 = vpop.f32.mrf.mxu0
  %v877 = vadd.f32 0.0, %v876
  %v878 = vpop.f32.mrf.mxu0
  %879 = vmatprep.mubr.f32.mxu0 0.0
  %880 = vmatmul.mubr.f32.gmra.mxu0 %v536
  %v881 = vpop.f32.mrf.mxu0
  %v882 = vadd.f32 0.0, %v881
  %v883 = vpop.f32.mrf.mxu0
  %884 = vmatprep.mubr.f32.mxu0 0.0
  %885 = vmatmul.mubr.f32.gmra.mxu0 %v539
  %v886 = vpop.f32.mrf.mxu0
  %v887 = vadd.f32 0.0, %v886
  %v888 = vpop.f32.mrf.mxu0
  %889 = vmatprep.mubr.f32.mxu0 0.0
  %890 = vmatmul.mubr.f32.gmra.mxu0 %v542
  %v891 = vpop.f32.mrf.mxu0
  %v892 = vadd.f32 0.0, %v891
  %v893 = vpop.f32.mrf.mxu0
  %894 = vmatprep.mubr.f32.mxu0 0.0
  %895 = vmatmul.mubr.f32.gmra.mxu0 %v545
  %v896 = vpop.f32.mrf.mxu0
  %v897 = vadd.f32 0.0, %v896
  %v898 = vpop.f32.mrf.mxu0
  %899 = vmatprep.mubr.f32.mxu0 0.0
  %900 = vmatmul.mubr.f32.gmra.mxu0 %v548
  %v901 = vpop.f32.mrf.mxu0
  %v902 = vadd.f32 0.0, %v901
  %v903 = vpop.f32.mrf.mxu0
  %904 = vmatprep.mubr.f32.mxu0 0.0
  %905 = vmatmul.mubr.f32.gmra.mxu0 %v551
  %v906 = vpop.f32.mrf.mxu0
  %v907 = vadd.f32 0.0, %v906
  %v908 = vpop.f32.mrf.mxu0
  %909 = vmatprep.mubr.f32.mxu0 0.0
  %910 = vmatmul.mubr.f32.gmra.mxu0 %v554
  %v911 = vpop.f32.mrf.mxu0
  %v912 = vadd.f32 0.0, %v911
  %v913 = vpop.f32.mrf.mxu0
  %914 = vmatprep.mubr.f32.mxu0 0.0
  %915 = vmatmul.mubr.f32.gmra.mxu0 %v557
  %v916 = vpop.f32.mrf.mxu0
  %v917 = vadd.f32 0.0, %v916
  %v918 = vpop.f32.mrf.mxu0
  %919 = vmatprep.mubr.f32.mxu0 0.0
  %920 = vmatmul.mubr.f32.gmra.mxu0 %v560
  %v921 = vpop.f32.mrf.mxu0
  %v922 = vadd.f32 0.0, %v921
  %v923 = vpop.f32.mrf.mxu0
  %924 = vmatprep.mubr.f32.mxu0 0.0
  %925 = vmatmul.mubr.f32.gmra.mxu0 %v563
  %v926 = vpop.f32.mrf.mxu0
  %v927 = vadd.f32 0.0, %v926
  %v928 = vpop.f32.mrf.mxu0
  %929 = vmatprep.mubr.f32.mxu0 0.0
  %930 = vmatmul.mubr.f32.gmra.mxu0 %v566
  %v931 = vpop.f32.mrf.mxu0
  %v932 = vadd.f32 0.0, %v931
  %v933 = vpop.f32.mrf.mxu0
  %934 = vmatprep.mubr.f32.mxu0 0.0
  %935 = vmatmul.mubr.f32.gmra.mxu0 %v569
  %v936 = vpop.f32.mrf.mxu0
  %v937 = vadd.f32 0.0, %v936
  %v938 = vpop.f32.mrf.mxu0
  %939 = vmatprep.mubr.f32.mxu0 0.0
  %940 = vmatmul.mubr.f32.gmra.mxu0 %v572
  %v941 = vpop.f32.mrf.mxu0
  %v942 = vadd.f32 0.0, %v941
  %v943 = vpop.f32.mrf.mxu0
  %944 = vdwg.mxu0
  %s945 = scalar_lea.vmem %s3, 64
  %v946 = vld [vmem:[%s945] sm:$0xff]
  %v947 = vld [vmem:[%s945 + $0x8] sm:$0xff]
  %v948 = vld [vmem:[%s945 + $0x10] sm:$0xff]
  %v949 = vld [vmem:[%s945 + $0x18] sm:$0xff]
  %950 = vmatprep.subr.mxu0 0.0
  %951 = vmatpush1.msra.mxu0 0.0
  %952 = vmatprep.subr.mxu0 0.0
  %953 = vmatpush1.msra.mxu0 0.0
  %954 = vmatprep.subr.mxu0 0.0
  %955 = vmatpush1.msra.mxu0 0.0
  %956 = vmatprep.subr.mxu0 0.0
  %957 = vmatpush1.msra.mxu0 0.0
  %958 = vmatprep.subr.mxu0 0.0
  %959 = vmatpush1.msra.mxu0 0.0
  %960 = vmatprep.subr.mxu0 0.0
  %961 = vmatpush1.msra.mxu0 0.0
  %962 = vmatprep.subr.mxu0 0.0
  %963 = vmatpush1.msra.mxu0 0.0
  %964 = vmatprep.subr.mxu0 0.0
  %965 = vmatpush1.msra.mxu0 0.0
  %966 = vmatprep.subr.mxu0 0.0
  %967 = vmatpush1.msra.mxu0 0.0
  %968 = vmatprep.subr.mxu0 0.0
  %969 = vmatpush1.msra.mxu0 0.0
  %970 = vmatprep.subr.mxu0 0.0
  %971 = vmatpush1.msra.mxu0 0.0
  %972 = vmatprep.subr.mxu0 0.0
  %973 = vmatpush1.msra.mxu0 0.0
  %974 = vmatprep.subr.mxu0 0.0
  %975 = vmatpush1.msra.mxu0 %v949
  %976 = vmatprep.subr.mxu0 0.0
  %977 = vmatpush1.msra.mxu0 %v948
  %978 = vmatprep.subr.mxu0 0.0
  %979 = vmatpush1.msra.mxu0 %v947
  %980 = vmatprep.subr.mxu0 0.0
  %981 = vmatpush1.msra.mxu0 %v946
  %982 = vmatprep.subr.mxu0 0.0
  %983 = vmatpush2.msra.mxu0 0.0
  %984 = vmatprep.subr.mxu0 0.0
  %985 = vmatpush2.msra.mxu0 0.0
  %986 = vmatprep.subr.mxu0 0.0
  %987 = vmatpush2.msra.mxu0 0.0
  %988 = vmatprep.subr.mxu0 0.0
  %989 = vmatpush2.msra.mxu0 0.0
  %990 = vmatprep.subr.mxu0 0.0
  %991 = vmatpush2.msra.mxu0 0.0
  %992 = vmatprep.subr.mxu0 0.0
  %993 = vmatpush2.msra.mxu0 0.0
  %994 = vmatprep.subr.mxu0 0.0
  %995 = vmatpush2.msra.mxu0 0.0
  %996 = vmatprep.subr.mxu0 0.0
  %997 = vmatpush2.msra.mxu0 0.0
  %998 = vmatprep.subr.mxu0 0.0
  %999 = vmatpush2.msra.mxu0 0.0
  %1000 = vmatprep.subr.mxu0 0.0
  %1001 = vmatpush2.msra.mxu0 0.0
  %1002 = vmatprep.subr.mxu0 0.0
  %1003 = vmatpush2.msra.mxu0 0.0
  %1004 = vmatprep.subr.mxu0 0.0
  %1005 = vmatpush2.msra.mxu0 0.0
  %1006 = vmatprep.subr.mxu0 0.0
  %1007 = vmatpush2.msra.mxu0 0.0
  %1008 = vmatprep.subr.mxu0 0.0
  %1009 = vmatpush2.msra.mxu0 0.0
  %1010 = vmatprep.subr.mxu0 0.0
  %1011 = vmatpush2.msra.mxu0 0.0
  %1012 = vmatprep.subr.mxu0 0.0
  %1013 = vmatpush2.msra.mxu0 0.0
  %1014 = vmatprep.mubr.f32.mxu0 0.0
  %1015 = vmatmul.mubr.f32.gmra.mxu0 %v503
  %v1016 = vpop.f32.mrf.mxu0
  %v1017 = vadd.f32 0.0, %v1016
  %v1018 = vpop.f32.mrf.mxu0
  %1019 = vmatprep.mubr.f32.mxu0 0.0
  %1020 = vmatmul.mubr.f32.gmra.mxu0 %v506
  %v1021 = vpop.f32.mrf.mxu0
  %v1022 = vadd.f32 0.0, %v1021
  %v1023 = vpop.f32.mrf.mxu0
  %1024 = vmatprep.mubr.f32.mxu0 0.0
  %1025 = vmatmul.mubr.f32.gmra.mxu0 %v509
  %v1026 = vpop.f32.mrf.mxu0
  %v1027 = vadd.f32 0.0, %v1026
  %v1028 = vpop.f32.mrf.mxu0
  %1029 = vmatprep.mubr.f32.mxu0 0.0
  %1030 = vmatmul.mubr.f32.gmra.mxu0 %v512
  %v1031 = vpop.f32.mrf.mxu0
  %v1032 = vadd.f32 0.0, %v1031
  %v1033 = vpop.f32.mrf.mxu0
  %1034 = vmatprep.mubr.f32.mxu0 0.0
  %1035 = vmatmul.mubr.f32.gmra.mxu0 %v515
  %v1036 = vpop.f32.mrf.mxu0
  %v1037 = vadd.f32 0.0, %v1036
  %v1038 = vpop.f32.mrf.mxu0
  %1039 = vmatprep.mubr.f32.mxu0 0.0
  %1040 = vmatmul.mubr.f32.gmra.mxu0 %v518
  %v1041 = vpop.f32.mrf.mxu0
  %v1042 = vadd.f32 0.0, %v1041
  %v1043 = vpop.f32.mrf.mxu0
  %1044 = vmatprep.mubr.f32.mxu0 0.0
  %1045 = vmatmul.mubr.f32.gmra.mxu0 %v521
  %v1046 = vpop.f32.mrf.mxu0
  %v1047 = vadd.f32 0.0, %v1046
  %v1048 = vpop.f32.mrf.mxu0
  %1049 = vmatprep.mubr.f32.mxu0 0.0
  %1050 = vmatmul.mubr.f32.gmra.mxu0 %v524
  %v1051 = vpop.f32.mrf.mxu0
  %v1052 = vadd.f32 0.0, %v1051
  %v1053 = vpop.f32.mrf.mxu0
  %1054 = vmatprep.mubr.f32.mxu0 0.0
  %1055 = vmatmul.mubr.f32.gmra.mxu0 %v527
  %v1056 = vpop.f32.mrf.mxu0
  %v1057 = vadd.f32 0.0, %v1056
  %v1058 = vpop.f32.mrf.mxu0
  %1059 = vmatprep.mubr.f32.mxu0 0.0
  %1060 = vmatmul.mubr.f32.gmra.mxu0 %v530
  %v1061 = vpop.f32.mrf.mxu0
  %v1062 = vadd.f32 0.0, %v1061
  %v1063 = vpop.f32.mrf.mxu0
  %1064 = vmatprep.mubr.f32.mxu0 0.0
  %1065 = vmatmul.mubr.f32.gmra.mxu0 %v533
  %v1066 = vpop.f32.mrf.mxu0
  %v1067 = vadd.f32 0.0, %v1066
  %v1068 = vpop.f32.mrf.mxu0
  %1069 = vmatprep.mubr.f32.mxu0 0.0
  %1070 = vmatmul.mubr.f32.gmra.mxu0 %v536
  %v1071 = vpop.f32.mrf.mxu0
  %v1072 = vadd.f32 0.0, %v1071
  %v1073 = vpop.f32.mrf.mxu0
  %1074 = vmatprep.mubr.f32.mxu0 0.0
  %1075 = vmatmul.mubr.f32.gmra.mxu0 %v539
  %v1076 = vpop.f32.mrf.mxu0
  %v1077 = vadd.f32 0.0, %v1076
  %v1078 = vpop.f32.mrf.mxu0
  %1079 = vmatprep.mubr.f32.mxu0 0.0
  %1080 = vmatmul.mubr.f32.gmra.mxu0 %v542
  %v1081 = vpop.f32.mrf.mxu0
  %v1082 = vadd.f32 0.0, %v1081
  %v1083 = vpop.f32.mrf.mxu0
  %1084 = vmatprep.mubr.f32.mxu0 0.0
  %1085 = vmatmul.mubr.f32.gmra.mxu0 %v545
  %v1086 = vpop.f32.mrf.mxu0
  %v1087 = vadd.f32 0.0, %v1086
  %v1088 = vpop.f32.mrf.mxu0
  %1089 = vmatprep.mubr.f32.mxu0 0.0
  %1090 = vmatmul.mubr.f32.gmra.mxu0 %v548
  %v1091 = vpop.f32.mrf.mxu0
  %v1092 = vadd.f32 0.0, %v1091
  %v1093 = vpop.f32.mrf.mxu0
  %1094 = vmatprep.mubr.f32.mxu0 0.0
  %1095 = vmatmul.mubr.f32.gmra.mxu0 %v551
  %v1096 = vpop.f32.mrf.mxu0
  %v1097 = vadd.f32 0.0, %v1096
  %v1098 = vpop.f32.mrf.mxu0
  %1099 = vmatprep.mubr.f32.mxu0 0.0
  %1100 = vmatmul.mubr.f32.gmra.mxu0 %v554
  %v1101 = vpop.f32.mrf.mxu0
  %v1102 = vadd.f32 0.0, %v1101
  %v1103 = vpop.f32.mrf.mxu0
  %1104 = vmatprep.mubr.f32.mxu0 0.0
  %1105 = vmatmul.mubr.f32.gmra.mxu0 %v557
  %v1106 = vpop.f32.mrf.mxu0
  %v1107 = vadd.f32 0.0, %v1106
  %v1108 = vpop.f32.mrf.mxu0
  %1109 = vmatprep.mubr.f32.mxu0 0.0
  %1110 = vmatmul.mubr.f32.gmra.mxu0 %v560
  %v1111 = vpop.f32.mrf.mxu0
  %v1112 = vadd.f32 0.0, %v1111
  %v1113 = vpop.f32.mrf.mxu0
  %1114 = vmatprep.mubr.f32.mxu0 0.0
  %1115 = vmatmul.mubr.f32.gmra.mxu0 %v563
  %v1116 = vpop.f32.mrf.mxu0
  %v1117 = vpop.f32.mrf.mxu0
  %1118 = vmatprep.mubr.f32.mxu0 0.0
  %1119 = vmatmul.mubr.f32.gmra.mxu0 %v566
  %v1120 = vpop.f32.mrf.mxu0
  %v1121 = vpop.f32.mrf.mxu0
  %1122 = vmatprep.mubr.f32.mxu0 0.0
  %1123 = vmatmul.mubr.f32.gmra.mxu0 %v569
  %v1124 = vpop.f32.mrf.mxu0
  %v1125 = vpop.f32.mrf.mxu0
  %1126 = vmatprep.mubr.f32.mxu0 0.0
  %1127 = vmatmul.mubr.f32.gmra.mxu0 %v572
  %v1128 = vpop.f32.mrf.mxu0
  %v1129 = vpop.f32.mrf.mxu0
  %1130 = vdwg.mxu0
  %s1131 = scalar_lea.vmem %s3, 96
  %v1132 = vld [vmem:[%s1131] sm:$0xff]
  %v1133 = vld [vmem:[%s1131 + $0x8] sm:$0xff]
  %v1134 = vld [vmem:[%s1131 + $0x10] sm:$0xff]
  %v1135 = vld [vmem:[%s1131 + $0x18] sm:$0xff]
  %1136 = vmatprep.subr.mxu0 0.0
  %1137 = vmatpush1.msra.mxu0 0.0
  %1138 = vmatprep.subr.mxu0 0.0
  %1139 = vmatpush1.msra.mxu0 0.0
  %1140 = vmatprep.subr.mxu0 0.0
  %1141 = vmatpush1.msra.mxu0 0.0
  %1142 = vmatprep.subr.mxu0 0.0
  %1143 = vmatpush1.msra.mxu0 0.0
  %1144 = vmatprep.subr.mxu0 0.0
  %1145 = vmatpush1.msra.mxu0 0.0
  %1146 = vmatprep.subr.mxu0 0.0
  %1147 = vmatpush1.msra.mxu0 0.0
  %1148 = vmatprep.subr.mxu0 0.0
  %1149 = vmatpush1.msra.mxu0 0.0
  %1150 = vmatprep.subr.mxu0 0.0
  %1151 = vmatpush1.msra.mxu0 0.0
  %1152 = vmatprep.subr.mxu0 0.0
  %1153 = vmatpush1.msra.mxu0 0.0
  %1154 = vmatprep.subr.mxu0 0.0
  %1155 = vmatpush1.msra.mxu0 0.0
  %1156 = vmatprep.subr.mxu0 0.0
  %1157 = vmatpush1.msra.mxu0 0.0
  %1158 = vmatprep.subr.mxu0 0.0
  %1159 = vmatpush1.msra.mxu0 0.0
  %1160 = vmatprep.subr.mxu0 0.0
  %1161 = vmatpush1.msra.mxu0 %v1135
  %1162 = vmatprep.subr.mxu0 0.0
  %1163 = vmatpush1.msra.mxu0 %v1134
  %1164 = vmatprep.subr.mxu0 0.0
  %1165 = vmatpush1.msra.mxu0 %v1133
  %1166 = vmatprep.subr.mxu0 0.0
  %1167 = vmatpush1.msra.mxu0 %v1132
  %1168 = vmatprep.subr.mxu0 0.0
  %1169 = vmatpush2.msra.mxu0 0.0
  %1170 = vmatprep.subr.mxu0 0.0
  %1171 = vmatpush2.msra.mxu0 0.0
  %1172 = vmatprep.subr.mxu0 0.0
  %1173 = vmatpush2.msra.mxu0 0.0
  %1174 = vmatprep.subr.mxu0 0.0
  %1175 = vmatpush2.msra.mxu0 0.0
  %1176 = vmatprep.subr.mxu0 0.0
  %1177 = vmatpush2.msra.mxu0 0.0
  %1178 = vmatprep.subr.mxu0 0.0
  %1179 = vmatpush2.msra.mxu0 0.0
  %1180 = vmatprep.subr.mxu0 0.0
  %1181 = vmatpush2.msra.mxu0 0.0
  %1182 = vmatprep.subr.mxu0 0.0
  %1183 = vmatpush2.msra.mxu0 0.0
  %1184 = vmatprep.subr.mxu0 0.0
  %1185 = vmatpush2.msra.mxu0 0.0
  %1186 = vmatprep.subr.mxu0 0.0
  %1187 = vmatpush2.msra.mxu0 0.0
  %1188 = vmatprep.subr.mxu0 0.0
  %1189 = vmatpush2.msra.mxu0 0.0
  %1190 = vmatprep.subr.mxu0 0.0
  %1191 = vmatpush2.msra.mxu0 0.0
  %1192 = vmatprep.subr.mxu0 0.0
  %1193 = vmatpush2.msra.mxu0 0.0
  %1194 = vmatprep.subr.mxu0 0.0
  %1195 = vmatpush2.msra.mxu0 0.0
  %1196 = vmatprep.subr.mxu0 0.0
  %1197 = vmatpush2.msra.mxu0 0.0
  %1198 = vmatprep.subr.mxu0 0.0
  %1199 = vmatpush2.msra.mxu0 0.0
  %1200 = vmatprep.mubr.f32.mxu0 0.0
  %1201 = vmatmul.mubr.f32.gmra.mxu0 %v503
  %v1202 = vpop.f32.mrf.mxu0
  %v1203 = vpop.f32.mrf.mxu0
  %1204 = vmatprep.mubr.f32.mxu0 0.0
  %1205 = vmatmul.mubr.f32.gmra.mxu0 %v506
  %v1206 = vpop.f32.mrf.mxu0
  %v1207 = vpop.f32.mrf.mxu0
  %1208 = vmatprep.mubr.f32.mxu0 0.0
  %1209 = vmatmul.mubr.f32.gmra.mxu0 %v509
  %v1210 = vpop.f32.mrf.mxu0
  %v1211 = vadd.f32 0.0, %v1210
  %v1212 = vpop.f32.mrf.mxu0
  %1213 = vmatprep.mubr.f32.mxu0 0.0
  %1214 = vmatmul.mubr.f32.gmra.mxu0 %v512
  %v1215 = vpop.f32.mrf.mxu0
  %v1216 = vadd.f32 0.0, %v1215
  %v1217 = vpop.f32.mrf.mxu0
  %1218 = vmatprep.mubr.f32.mxu0 0.0
  %1219 = vmatmul.mubr.f32.gmra.mxu0 %v515
  %v1220 = vpop.f32.mrf.mxu0
  %v1221 = vadd.f32 0.0, %v1220
  %v1222 = vpop.f32.mrf.mxu0
  %1223 = vmatprep.mubr.f32.mxu0 0.0
  %1224 = vmatmul.mubr.f32.gmra.mxu0 %v518
  %v1225 = vpop.f32.mrf.mxu0
  %v1226 = vadd.f32 0.0, %v1225
  %v1227 = vpop.f32.mrf.mxu0
  %1228 = vmatprep.mubr.f32.mxu0 0.0
  %1229 = vmatmul.mubr.f32.gmra.mxu0 %v521
  %v1230 = vpop.f32.mrf.mxu0
  %v1231 = vadd.f32 0.0, %v1230
  %v1232 = vpop.f32.mrf.mxu0
  %1233 = vmatprep.mubr.f32.mxu0 0.0
  %1234 = vmatmul.mubr.f32.gmra.mxu0 %v524
  %v1235 = vpop.f32.mrf.mxu0
  %v1236 = vadd.f32 0.0, %v1235
  %v1237 = vpop.f32.mrf.mxu0
  %1238 = vmatprep.mubr.f32.mxu0 0.0
  %1239 = vmatmul.mubr.f32.gmra.mxu0 %v527
  %v1240 = vpop.f32.mrf.mxu0
  %v1241 = vadd.f32 0.0, %v1240
  %v1242 = vpop.f32.mrf.mxu0
  %1243 = vmatprep.mubr.f32.mxu0 0.0
  %1244 = vmatmul.mubr.f32.gmra.mxu0 %v530
  %v1245 = vpop.f32.mrf.mxu0
  %v1246 = vadd.f32 0.0, %v1245
  %v1247 = vpop.f32.mrf.mxu0
  %1248 = vmatprep.mubr.f32.mxu0 0.0
  %1249 = vmatmul.mubr.f32.gmra.mxu0 %v533
  %v1250 = vpop.f32.mrf.mxu0
  %v1251 = vadd.f32 0.0, %v1250
  %v1252 = vpop.f32.mrf.mxu0
  %1253 = vmatprep.mubr.f32.mxu0 0.0
  %1254 = vmatmul.mubr.f32.gmra.mxu0 %v536
  %v1255 = vpop.f32.mrf.mxu0
  %v1256 = vadd.f32 0.0, %v1255
  %v1257 = vpop.f32.mrf.mxu0
  %1258 = vmatprep.mubr.f32.mxu0 0.0
  %1259 = vmatmul.mubr.f32.gmra.mxu0 %v539
  %v1260 = vpop.f32.mrf.mxu0
  %v1261 = vadd.f32 0.0, %v1260
  %v1262 = vpop.f32.mrf.mxu0
  %1263 = vmatprep.mubr.f32.mxu0 0.0
  %1264 = vmatmul.mubr.f32.gmra.mxu0 %v542
  %v1265 = vpop.f32.mrf.mxu0
  %v1266 = vadd.f32 0.0, %v1265
  %v1267 = vpop.f32.mrf.mxu0
  %1268 = vmatprep.mubr.f32.mxu0 0.0
  %1269 = vmatmul.mubr.f32.gmra.mxu0 %v545
  %v1270 = vpop.f32.mrf.mxu0
  %v1271 = vadd.f32 0.0, %v1270
  %v1272 = vpop.f32.mrf.mxu0
  %1273 = vmatprep.mubr.f32.mxu0 0.0
  %1274 = vmatmul.mubr.f32.gmra.mxu0 %v548
  %v1275 = vpop.f32.mrf.mxu0
  %v1276 = vadd.f32 0.0, %v1275
  %v1277 = vpop.f32.mrf.mxu0
  %1278 = vmatprep.mubr.f32.mxu0 0.0
  %1279 = vmatmul.mubr.f32.gmra.mxu0 %v551
  %v1280 = vpop.f32.mrf.mxu0
  %v1281 = vadd.f32 0.0, %v1280
  %v1282 = vpop.f32.mrf.mxu0
  %1283 = vmatprep.mubr.f32.mxu0 0.0
  %1284 = vmatmul.mubr.f32.gmra.mxu0 %v554
  %v1285 = vpop.f32.mrf.mxu0
  %v1286 = vadd.f32 0.0, %v1285
  %v1287 = vpop.f32.mrf.mxu0
  %1288 = vmatprep.mubr.f32.mxu0 0.0
  %1289 = vmatmul.mubr.f32.gmra.mxu0 %v557
  %v1290 = vpop.f32.mrf.mxu0
  %v1291 = vadd.f32 0.0, %v1290
  %v1292 = vpop.f32.mrf.mxu0
  %1293 = vmatprep.mubr.f32.mxu0 0.0
  %1294 = vmatmul.mubr.f32.gmra.mxu0 %v560
  %v1295 = vpop.f32.mrf.mxu0
  %v1296 = vadd.f32 0.0, %v1295
  %v1297 = vpop.f32.mrf.mxu0
  %1298 = vmatprep.mubr.f32.mxu0 0.0
  %1299 = vmatmul.mubr.f32.gmra.mxu0 %v563
  %v1300 = vpop.f32.mrf.mxu0
  %v1301 = vadd.f32 0.0, %v1300
  %v1302 = vpop.f32.mrf.mxu0
  %1303 = vmatprep.mubr.f32.mxu0 0.0
  %1304 = vmatmul.mubr.f32.gmra.mxu0 %v566
  %v1305 = vpop.f32.mrf.mxu0
  %v1306 = vadd.f32 0.0, %v1305
  %v1307 = vpop.f32.mrf.mxu0
  %1308 = vmatprep.mubr.f32.mxu0 0.0
  %1309 = vmatmul.mubr.f32.gmra.mxu0 %v569
  %v1310 = vpop.f32.mrf.mxu0
  %v1311 = vpop.f32.mrf.mxu0
  %1312 = vmatprep.mubr.f32.mxu0 0.0
  %1313 = vmatmul.mubr.f32.gmra.mxu0 %v572
  %v1314 = vpop.f32.mrf.mxu0
  %v1315 = vpop.f32.mrf.mxu0
  %1316 = vdwg.mxu0
  %s1317 = scalar_lea.vmem %s3, 128
  %v1318 = vld [vmem:[%s1317] sm:$0xff]
  %v1319 = vld [vmem:[%s1317 + $0x8] sm:$0xff]
  %v1320 = vld [vmem:[%s1317 + $0x10] sm:$0xff]
  %v1321 = vld [vmem:[%s1317 + $0x18] sm:$0xff]
  %1322 = vmatprep.subr.mxu0 0.0
  %1323 = vmatpush1.msra.mxu0 0.0
  %1324 = vmatprep.subr.mxu0 0.0
  %1325 = vmatpush1.msra.mxu0 0.0
  %1326 = vmatprep.subr.mxu0 0.0
  %1327 = vmatpush1.msra.mxu0 0.0
  %1328 = vmatprep.subr.mxu0 0.0
  %1329 = vmatpush1.msra.mxu0 0.0
  %1330 = vmatprep.subr.mxu0 0.0
  %1331 = vmatpush1.msra.mxu0 0.0
  %1332 = vmatprep.subr.mxu0 0.0
  %1333 = vmatpush1.msra.mxu0 0.0
  %1334 = vmatprep.subr.mxu0 0.0
  %1335 = vmatpush1.msra.mxu0 0.0
  %1336 = vmatprep.subr.mxu0 0.0
  %1337 = vmatpush1.msra.mxu0 0.0
  %1338 = vmatprep.subr.mxu0 0.0
  %1339 = vmatpush1.msra.mxu0 0.0
  %1340 = vmatprep.subr.mxu0 0.0
  %1341 = vmatpush1.msra.mxu0 0.0
  %1342 = vmatprep.subr.mxu0 0.0
  %1343 = vmatpush1.msra.mxu0 0.0
  %1344 = vmatprep.subr.mxu0 0.0
  %1345 = vmatpush1.msra.mxu0 0.0
  %1346 = vmatprep.subr.mxu0 0.0
  %1347 = vmatpush1.msra.mxu0 %v1321
  %1348 = vmatprep.subr.mxu0 0.0
  %1349 = vmatpush1.msra.mxu0 %v1320
  %1350 = vmatprep.subr.mxu0 0.0
  %1351 = vmatpush1.msra.mxu0 %v1319
  %1352 = vmatprep.subr.mxu0 0.0
  %1353 = vmatpush1.msra.mxu0 %v1318
  %1354 = vmatprep.subr.mxu0 0.0
  %1355 = vmatpush2.msra.mxu0 0.0
  %1356 = vmatprep.subr.mxu0 0.0
  %1357 = vmatpush2.msra.mxu0 0.0
  %1358 = vmatprep.subr.mxu0 0.0
  %1359 = vmatpush2.msra.mxu0 0.0
  %1360 = vmatprep.subr.mxu0 0.0
  %1361 = vmatpush2.msra.mxu0 0.0
  %1362 = vmatprep.subr.mxu0 0.0
  %1363 = vmatpush2.msra.mxu0 0.0
  %1364 = vmatprep.subr.mxu0 0.0
  %1365 = vmatpush2.msra.mxu0 0.0
  %1366 = vmatprep.subr.mxu0 0.0
  %1367 = vmatpush2.msra.mxu0 0.0
  %1368 = vmatprep.subr.mxu0 0.0
  %1369 = vmatpush2.msra.mxu0 0.0
  %1370 = vmatprep.subr.mxu0 0.0
  %1371 = vmatpush2.msra.mxu0 0.0
  %1372 = vmatprep.subr.mxu0 0.0
  %1373 = vmatpush2.msra.mxu0 0.0
  %1374 = vmatprep.subr.mxu0 0.0
  %1375 = vmatpush2.msra.mxu0 0.0
  %1376 = vmatprep.subr.mxu0 0.0
  %1377 = vmatpush2.msra.mxu0 0.0
  %1378 = vmatprep.subr.mxu0 0.0
  %1379 = vmatpush2.msra.mxu0 0.0
  %1380 = vmatprep.subr.mxu0 0.0
  %1381 = vmatpush2.msra.mxu0 0.0
  %1382 = vmatprep.subr.mxu0 0.0
  %1383 = vmatpush2.msra.mxu0 0.0
  %1384 = vmatprep.subr.mxu0 0.0
  %1385 = vmatpush2.msra.mxu0 0.0
  %1386 = vmatprep.mubr.f32.mxu0 0.0
  %1387 = vmatmul.mubr.f32.gmra.mxu0 %v503
  %v1388 = vpop.f32.mrf.mxu0
  %v1389 = vpop.f32.mrf.mxu0
  %1390 = vmatprep.mubr.f32.mxu0 0.0
  %1391 = vmatmul.mubr.f32.gmra.mxu0 %v506
  %v1392 = vpop.f32.mrf.mxu0
  %v1393 = vpop.f32.mrf.mxu0
  %1394 = vmatprep.mubr.f32.mxu0 0.0
  %1395 = vmatmul.mubr.f32.gmra.mxu0 %v509
  %v1396 = vpop.f32.mrf.mxu0
  %v1397 = vpop.f32.mrf.mxu0
  %1398 = vmatprep.mubr.f32.mxu0 0.0
  %1399 = vmatmul.mubr.f32.gmra.mxu0 %v512
  %v1400 = vpop.f32.mrf.mxu0
  %v1401 = vpop.f32.mrf.mxu0
  %1402 = vmatprep.mubr.f32.mxu0 0.0
  %1403 = vmatmul.mubr.f32.gmra.mxu0 %v515
  %v1404 = vpop.f32.mrf.mxu0
  %v1405 = vadd.f32 0.0, %v1404
  %v1406 = vpop.f32.mrf.mxu0
  %1407 = vmatprep.mubr.f32.mxu0 0.0
  %1408 = vmatmul.mubr.f32.gmra.mxu0 %v518
  %v1409 = vpop.f32.mrf.mxu0
  %v1410 = vadd.f32 0.0, %v1409
  %v1411 = vpop.f32.mrf.mxu0
  %1412 = vmatprep.mubr.f32.mxu0 0.0
  %1413 = vmatmul.mubr.f32.gmra.mxu0 %v521
  %v1414 = vpop.f32.mrf.mxu0
  %v1415 = vadd.f32 0.0, %v1414
  %v1416 = vpop.f32.mrf.mxu0
  %1417 = vmatprep.mubr.f32.mxu0 0.0
  %1418 = vmatmul.mubr.f32.gmra.mxu0 %v524
  %v1419 = vpop.f32.mrf.mxu0
  %v1420 = vadd.f32 0.0, %v1419
  %v1421 = vpop.f32.mrf.mxu0
  %1422 = vmatprep.mubr.f32.mxu0 0.0
  %1423 = vmatmul.mubr.f32.gmra.mxu0 %v527
  %v1424 = vpop.f32.mrf.mxu0
  %v1425 = vadd.f32 0.0, %v1424
  %v1426 = vpop.f32.mrf.mxu0
  %1427 = vmatprep.mubr.f32.mxu0 0.0
  %1428 = vmatmul.mubr.f32.gmra.mxu0 %v530
  %v1429 = vpop.f32.mrf.mxu0
  %v1430 = vadd.f32 0.0, %v1429
  %v1431 = vpop.f32.mrf.mxu0
  %1432 = vmatprep.mubr.f32.mxu0 0.0
  %1433 = vmatmul.mubr.f32.gmra.mxu0 %v533
  %v1434 = vpop.f32.mrf.mxu0
  %v1435 = vadd.f32 0.0, %v1434
  %v1436 = vpop.f32.mrf.mxu0
  %1437 = vmatprep.mubr.f32.mxu0 0.0
  %1438 = vmatmul.mubr.f32.gmra.mxu0 %v536
  %v1439 = vpop.f32.mrf.mxu0
  %v1440 = vadd.f32 0.0, %v1439
  %v1441 = vpop.f32.mrf.mxu0
  %1442 = vmatprep.mubr.f32.mxu0 0.0
  %1443 = vmatmul.mubr.f32.gmra.mxu0 %v539
  %v1444 = vpop.f32.mrf.mxu0
  %v1445 = vadd.f32 0.0, %v1444
  %v1446 = vpop.f32.mrf.mxu0
  %1447 = vmatprep.mubr.f32.mxu0 0.0
  %1448 = vmatmul.mubr.f32.gmra.mxu0 %v542
  %v1449 = vpop.f32.mrf.mxu0
  %v1450 = vadd.f32 0.0, %v1449
  %v1451 = vpop.f32.mrf.mxu0
  %1452 = vmatprep.mubr.f32.mxu0 0.0
  %1453 = vmatmul.mubr.f32.gmra.mxu0 %v545
  %v1454 = vpop.f32.mrf.mxu0
  %v1455 = vadd.f32 0.0, %v1454
  %v1456 = vpop.f32.mrf.mxu0
  %1457 = vmatprep.mubr.f32.mxu0 0.0
  %1458 = vmatmul.mubr.f32.gmra.mxu0 %v548
  %v1459 = vpop.f32.mrf.mxu0
  %v1460 = vadd.f32 0.0, %v1459
  %v1461 = vpop.f32.mrf.mxu0
  %1462 = vmatprep.mubr.f32.mxu0 0.0
  %1463 = vmatmul.mubr.f32.gmra.mxu0 %v551
  %v1464 = vpop.f32.mrf.mxu0
  %v1465 = vadd.f32 0.0, %v1464
  %v1466 = vpop.f32.mrf.mxu0
  %1467 = vmatprep.mubr.f32.mxu0 0.0
  %1468 = vmatmul.mubr.f32.gmra.mxu0 %v554
  %v1469 = vpop.f32.mrf.mxu0
  %v1470 = vadd.f32 0.0, %v1469
  %v1471 = vpop.f32.mrf.mxu0
  %1472 = vmatprep.mubr.f32.mxu0 0.0
  %1473 = vmatmul.mubr.f32.gmra.mxu0 %v557
  %v1474 = vpop.f32.mrf.mxu0
  %v1475 = vadd.f32 0.0, %v1474
  %v1476 = vpop.f32.mrf.mxu0
  %1477 = vmatprep.mubr.f32.mxu0 0.0
  %1478 = vmatmul.mubr.f32.gmra.mxu0 %v560
  %v1479 = vpop.f32.mrf.mxu0
  %v1480 = vadd.f32 0.0, %v1479
  %v1481 = vpop.f32.mrf.mxu0
  %1482 = vmatprep.mubr.f32.mxu0 0.0
  %1483 = vmatmul.mubr.f32.gmra.mxu0 %v563
  %v1484 = vpop.f32.mrf.mxu0
  %v1485 = vadd.f32 0.0, %v1484
  %v1486 = vpop.f32.mrf.mxu0
  %1487 = vmatprep.mubr.f32.mxu0 0.0
  %1488 = vmatmul.mubr.f32.gmra.mxu0 %v566
  %v1489 = vpop.f32.mrf.mxu0
  %v1490 = vadd.f32 0.0, %v1489
  %v1491 = vpop.f32.mrf.mxu0
  %1492 = vmatprep.mubr.f32.mxu0 0.0
  %1493 = vmatmul.mubr.f32.gmra.mxu0 %v569
  %v1494 = vpop.f32.mrf.mxu0
  %v1495 = vadd.f32 0.0, %v1494
  %v1496 = vpop.f32.mrf.mxu0
  %1497 = vmatprep.mubr.f32.mxu0 0.0
  %1498 = vmatmul.mubr.f32.gmra.mxu0 %v572
  %v1499 = vpop.f32.mrf.mxu0
  %v1500 = vadd.f32 0.0, %v1499
  %v1501 = vpop.f32.mrf.mxu0
  %1502 = vdwg.mxu0
  %s1503 = scalar_lea.vmem %s3, 160
  %v1504 = vld [vmem:[%s1503] sm:$0xff]
  %v1505 = vld [vmem:[%s1503 + $0x8] sm:$0xff]
  %v1506 = vld [vmem:[%s1503 + $0x10] sm:$0xff]
  %v1507 = vld [vmem:[%s1503 + $0x18] sm:$0xff]
  %1508 = vmatprep.subr.mxu0 0.0
  %1509 = vmatpush1.msra.mxu0 0.0
  %1510 = vmatprep.subr.mxu0 0.0
  %1511 = vmatpush1.msra.mxu0 0.0
  %1512 = vmatprep.subr.mxu0 0.0
  %1513 = vmatpush1.msra.mxu0 0.0
  %1514 = vmatprep.subr.mxu0 0.0
  %1515 = vmatpush1.msra.mxu0 0.0
  %1516 = vmatprep.subr.mxu0 0.0
  %1517 = vmatpush1.msra.mxu0 0.0
  %1518 = vmatprep.subr.mxu0 0.0
  %1519 = vmatpush1.msra.mxu0 0.0
  %1520 = vmatprep.subr.mxu0 0.0
  %1521 = vmatpush1.msra.mxu0 0.0
  %1522 = vmatprep.subr.mxu0 0.0
  %1523 = vmatpush1.msra.mxu0 0.0
  %1524 = vmatprep.subr.mxu0 0.0
  %1525 = vmatpush1.msra.mxu0 0.0
  %1526 = vmatprep.subr.mxu0 0.0
  %1527 = vmatpush1.msra.mxu0 0.0
  %1528 = vmatprep.subr.mxu0 0.0
  %1529 = vmatpush1.msra.mxu0 0.0
  %1530 = vmatprep.subr.mxu0 0.0
  %1531 = vmatpush1.msra.mxu0 0.0
  %1532 = vmatprep.subr.mxu0 0.0
  %1533 = vmatpush1.msra.mxu0 %v1507
  %1534 = vmatprep.subr.mxu0 0.0
  %1535 = vmatpush1.msra.mxu0 %v1506
  %1536 = vmatprep.subr.mxu0 0.0
  %1537 = vmatpush1.msra.mxu0 %v1505
  %1538 = vmatprep.subr.mxu0 0.0
  %1539 = vmatpush1.msra.mxu0 %v1504
  %1540 = vmatprep.subr.mxu0 0.0
  %1541 = vmatpush2.msra.mxu0 0.0
  %1542 = vmatprep.subr.mxu0 0.0
  %1543 = vmatpush2.msra.mxu0 0.0
  %1544 = vmatprep.subr.mxu0 0.0
  %1545 = vmatpush2.msra.mxu0 0.0
  %1546 = vmatprep.subr.mxu0 0.0
  %1547 = vmatpush2.msra.mxu0 0.0
  %1548 = vmatprep.subr.mxu0 0.0
  %1549 = vmatpush2.msra.mxu0 0.0
  %1550 = vmatprep.subr.mxu0 0.0
  %1551 = vmatpush2.msra.mxu0 0.0
  %1552 = vmatprep.subr.mxu0 0.0
  %1553 = vmatpush2.msra.mxu0 0.0
  %1554 = vmatprep.subr.mxu0 0.0
  %1555 = vmatpush2.msra.mxu0 0.0
  %1556 = vmatprep.subr.mxu0 0.0
  %1557 = vmatpush2.msra.mxu0 0.0
  %1558 = vmatprep.subr.mxu0 0.0
  %1559 = vmatpush2.msra.mxu0 0.0
  %1560 = vmatprep.subr.mxu0 0.0
  %1561 = vmatpush2.msra.mxu0 0.0
  %1562 = vmatprep.subr.mxu0 0.0
  %1563 = vmatpush2.msra.mxu0 0.0
  %1564 = vmatprep.subr.mxu0 0.0
  %1565 = vmatpush2.msra.mxu0 0.0
  %1566 = vmatprep.subr.mxu0 0.0
  %1567 = vmatpush2.msra.mxu0 0.0
  %1568 = vmatprep.subr.mxu0 0.0
  %1569 = vmatpush2.msra.mxu0 0.0
  %1570 = vmatprep.subr.mxu0 0.0
  %1571 = vmatpush2.msra.mxu0 0.0
  %1572 = vmatprep.mubr.f32.mxu0 0.0
  %1573 = vmatmul.mubr.f32.gmra.mxu0 %v503
  %v1574 = vpop.f32.mrf.mxu0
  %v1575 = vadd.f32 0.0, %v1574
  %v1576 = vpop.f32.mrf.mxu0
  %1577 = vmatprep.mubr.f32.mxu0 0.0
  %1578 = vmatmul.mubr.f32.gmra.mxu0 %v506
  %v1579 = vpop.f32.mrf.mxu0
  %v1580 = vadd.f32 0.0, %v1579
  %v1581 = vpop.f32.mrf.mxu0
  %1582 = vmatprep.mubr.f32.mxu0 0.0
  %1583 = vmatmul.mubr.f32.gmra.mxu0 %v509
  %v1584 = vpop.f32.mrf.mxu0
  %v1585 = vadd.f32 0.0, %v1584
  %v1586 = vpop.f32.mrf.mxu0
  %1587 = vmatprep.mubr.f32.mxu0 0.0
  %1588 = vmatmul.mubr.f32.gmra.mxu0 %v512
  %v1589 = vpop.f32.mrf.mxu0
  %v1590 = vadd.f32 0.0, %v1589
  %v1591 = vpop.f32.mrf.mxu0
  %1592 = vmatprep.mubr.f32.mxu0 0.0
  %1593 = vmatmul.mubr.f32.gmra.mxu0 %v515
  %v1594 = vpop.f32.mrf.mxu0
  %v1595 = vadd.f32 0.0, %v1594
  %v1596 = vpop.f32.mrf.mxu0
  %1597 = vmatprep.mubr.f32.mxu0 0.0
  %1598 = vmatmul.mubr.f32.gmra.mxu0 %v518
  %v1599 = vpop.f32.mrf.mxu0
  %v1600 = vadd.f32 0.0, %v1599
  %v1601 = vpop.f32.mrf.mxu0
  %1602 = vmatprep.mubr.f32.mxu0 0.0
  %1603 = vmatmul.mubr.f32.gmra.mxu0 %v521
  %v1604 = vpop.f32.mrf.mxu0
  %v1605 = vadd.f32 0.0, %v1604
  %v1606 = vpop.f32.mrf.mxu0
  %1607 = vmatprep.mubr.f32.mxu0 0.0
  %1608 = vmatmul.mubr.f32.gmra.mxu0 %v524
  %v1609 = vpop.f32.mrf.mxu0
  %v1610 = vadd.f32 0.0, %v1609
  %v1611 = vpop.f32.mrf.mxu0
  %1612 = vmatprep.mubr.f32.mxu0 0.0
  %1613 = vmatmul.mubr.f32.gmra.mxu0 %v527
  %v1614 = vpop.f32.mrf.mxu0
  %v1615 = vadd.f32 0.0, %v1614
  %v1616 = vpop.f32.mrf.mxu0
  %1617 = vmatprep.mubr.f32.mxu0 0.0
  %1618 = vmatmul.mubr.f32.gmra.mxu0 %v530
  %v1619 = vpop.f32.mrf.mxu0
  %v1620 = vadd.f32 0.0, %v1619
  %v1621 = vpop.f32.mrf.mxu0
  %1622 = vmatprep.mubr.f32.mxu0 0.0
  %1623 = vmatmul.mubr.f32.gmra.mxu0 %v533
  %v1624 = vpop.f32.mrf.mxu0
  %v1625 = vadd.f32 0.0, %v1624
  %v1626 = vpop.f32.mrf.mxu0
  %1627 = vmatprep.mubr.f32.mxu0 0.0
  %1628 = vmatmul.mubr.f32.gmra.mxu0 %v536
  %v1629 = vpop.f32.mrf.mxu0
  %v1630 = vadd.f32 0.0, %v1629
  %v1631 = vpop.f32.mrf.mxu0
  %1632 = vmatprep.mubr.f32.mxu0 0.0
  %1633 = vmatmul.mubr.f32.gmra.mxu0 %v539
  %v1634 = vpop.f32.mrf.mxu0
  %v1635 = vadd.f32 0.0, %v1634
  %v1636 = vpop.f32.mrf.mxu0
  %1637 = vmatprep.mubr.f32.mxu0 0.0
  %1638 = vmatmul.mubr.f32.gmra.mxu0 %v542
  %v1639 = vpop.f32.mrf.mxu0
  %v1640 = vadd.f32 0.0, %v1639
  %v1641 = vpop.f32.mrf.mxu0
  %1642 = vmatprep.mubr.f32.mxu0 0.0
  %1643 = vmatmul.mubr.f32.gmra.mxu0 %v545
  %v1644 = vpop.f32.mrf.mxu0
  %v1645 = vadd.f32 0.0, %v1644
  %v1646 = vpop.f32.mrf.mxu0
  %1647 = vmatprep.mubr.f32.mxu0 0.0
  %1648 = vmatmul.mubr.f32.gmra.mxu0 %v548
  %v1649 = vpop.f32.mrf.mxu0
  %v1650 = vadd.f32 0.0, %v1649
  %v1651 = vpop.f32.mrf.mxu0
  %1652 = vmatprep.mubr.f32.mxu0 0.0
  %1653 = vmatmul.mubr.f32.gmra.mxu0 %v551
  %v1654 = vpop.f32.mrf.mxu0
  %v1655 = vadd.f32 0.0, %v1654
  %v1656 = vpop.f32.mrf.mxu0
  %1657 = vmatprep.mubr.f32.mxu0 0.0
  %1658 = vmatmul.mubr.f32.gmra.mxu0 %v554
  %v1659 = vpop.f32.mrf.mxu0
  %v1660 = vadd.f32 0.0, %v1659
  %v1661 = vpop.f32.mrf.mxu0
  %1662 = vmatprep.mubr.f32.mxu0 0.0
  %1663 = vmatmul.mubr.f32.gmra.mxu0 %v557
  %v1664 = vpop.f32.mrf.mxu0
  %v1665 = vpop.f32.mrf.mxu0
  %1666 = vmatprep.mubr.f32.mxu0 0.0
  %1667 = vmatmul.mubr.f32.gmra.mxu0 %v560
  %v1668 = vpop.f32.mrf.mxu0
  %v1669 = vpop.f32.mrf.mxu0
  %1670 = vmatprep.mubr.f32.mxu0 0.0
  %1671 = vmatmul.mubr.f32.gmra.mxu0 %v563
  %v1672 = vpop.f32.mrf.mxu0
  %v1673 = vpop.f32.mrf.mxu0
  %1674 = vmatprep.mubr.f32.mxu0 0.0
  %1675 = vmatmul.mubr.f32.gmra.mxu0 %v566
  %v1676 = vpop.f32.mrf.mxu0
  %v1677 = vpop.f32.mrf.mxu0
  %1678 = vmatprep.mubr.f32.mxu0 0.0
  %1679 = vmatmul.mubr.f32.gmra.mxu0 %v569
  %v1680 = vpop.f32.mrf.mxu0
  %v1681 = vpop.f32.mrf.mxu0
  %1682 = vmatprep.mubr.f32.mxu0 0.0
  %1683 = vmatmul.mubr.f32.gmra.mxu0 %v572
  %v1684 = vpop.f32.mrf.mxu0
  %v1685 = vpop.f32.mrf.mxu0
  %1686 = vdwg.mxu0
  %s1687 = scalar_lea.vmem %s3, 192
  %v1688 = vld [vmem:[%s1687] sm:$0xff]
  %v1689 = vld [vmem:[%s1687 + $0x8] sm:$0xff]
  %v1690 = vld [vmem:[%s1687 + $0x10] sm:$0xff]
  %v1691 = vld [vmem:[%s1687 + $0x18] sm:$0xff]
  %1692 = vmatprep.subr.mxu0 0.0
  %1693 = vmatpush1.msra.mxu0 0.0
  %1694 = vmatprep.subr.mxu0 0.0
  %1695 = vmatpush1.msra.mxu0 0.0
  %1696 = vmatprep.subr.mxu0 0.0
  %1697 = vmatpush1.msra.mxu0 0.0
  %1698 = vmatprep.subr.mxu0 0.0
  %1699 = vmatpush1.msra.mxu0 0.0
  %1700 = vmatprep.subr.mxu0 0.0
  %1701 = vmatpush1.msra.mxu0 0.0
  %1702 = vmatprep.subr.mxu0 0.0
  %1703 = vmatpush1.msra.mxu0 0.0
  %1704 = vmatprep.subr.mxu0 0.0
  %1705 = vmatpush1.msra.mxu0 0.0
  %1706 = vmatprep.subr.mxu0 0.0
  %1707 = vmatpush1.msra.mxu0 0.0
  %1708 = vmatprep.subr.mxu0 0.0
  %1709 = vmatpush1.msra.mxu0 0.0
  %1710 = vmatprep.subr.mxu0 0.0
  %1711 = vmatpush1.msra.mxu0 0.0
  %1712 = vmatprep.subr.mxu0 0.0
  %1713 = vmatpush1.msra.mxu0 0.0
  %1714 = vmatprep.subr.mxu0 0.0
  %1715 = vmatpush1.msra.mxu0 0.0
  %1716 = vmatprep.subr.mxu0 0.0
  %1717 = vmatpush1.msra.mxu0 %v1691
  %1718 = vmatprep.subr.mxu0 0.0
  %1719 = vmatpush1.msra.mxu0 %v1690
  %1720 = vmatprep.subr.mxu0 0.0
  %1721 = vmatpush1.msra.mxu0 %v1689
  %1722 = vmatprep.subr.mxu0 0.0
  %1723 = vmatpush1.msra.mxu0 %v1688
  %1724 = vmatprep.subr.mxu0 0.0
  %1725 = vmatpush2.msra.mxu0 0.0
  %1726 = vmatprep.subr.mxu0 0.0
  %1727 = vmatpush2.msra.mxu0 0.0
  %1728 = vmatprep.subr.mxu0 0.0
  %1729 = vmatpush2.msra.mxu0 0.0
  %1730 = vmatprep.subr.mxu0 0.0
  %1731 = vmatpush2.msra.mxu0 0.0
  %1732 = vmatprep.subr.mxu0 0.0
  %1733 = vmatpush2.msra.mxu0 0.0
  %1734 = vmatprep.subr.mxu0 0.0
  %1735 = vmatpush2.msra.mxu0 0.0
  %1736 = vmatprep.subr.mxu0 0.0
  %1737 = vmatpush2.msra.mxu0 0.0
  %1738 = vmatprep.subr.mxu0 0.0
  %1739 = vmatpush2.msra.mxu0 0.0
  %1740 = vmatprep.subr.mxu0 0.0
  %1741 = vmatpush2.msra.mxu0 0.0
  %1742 = vmatprep.subr.mxu0 0.0
  %1743 = vmatpush2.msra.mxu0 0.0
  %1744 = vmatprep.subr.mxu0 0.0
  %1745 = vmatpush2.msra.mxu0 0.0
  %1746 = vmatprep.subr.mxu0 0.0
  %1747 = vmatpush2.msra.mxu0 0.0
  %1748 = vmatprep.subr.mxu0 0.0
  %1749 = vmatpush2.msra.mxu0 0.0
  %1750 = vmatprep.subr.mxu0 0.0
  %1751 = vmatpush2.msra.mxu0 0.0
  %1752 = vmatprep.subr.mxu0 0.0
  %1753 = vmatpush2.msra.mxu0 0.0
  %1754 = vmatprep.subr.mxu0 0.0
  %1755 = vmatpush2.msra.mxu0 0.0
  %1756 = vmatprep.mubr.f32.mxu0 0.0
  %1757 = vmatmul.mubr.f32.gmra.mxu0 %v503
  %v1758 = vpop.f32.mrf.mxu0
  %v1759 = vpop.f32.mrf.mxu0
  %1760 = vmatprep.mubr.f32.mxu0 0.0
  %1761 = vmatmul.mubr.f32.gmra.mxu0 %v506
  %v1762 = vpop.f32.mrf.mxu0
  %v1763 = vpop.f32.mrf.mxu0
  %1764 = vmatprep.mubr.f32.mxu0 0.0
  %1765 = vmatmul.mubr.f32.gmra.mxu0 %v509
  %v1766 = vpop.f32.mrf.mxu0
  %v1767 = vadd.f32 0.0, %v1766
  %v1768 = vpop.f32.mrf.mxu0
  %1769 = vmatprep.mubr.f32.mxu0 0.0
  %1770 = vmatmul.mubr.f32.gmra.mxu0 %v512
  %v1771 = vpop.f32.mrf.mxu0
  %v1772 = vadd.f32 0.0, %v1771
  %v1773 = vpop.f32.mrf.mxu0
  %1774 = vmatprep.mubr.f32.mxu0 0.0
  %1775 = vmatmul.mubr.f32.gmra.mxu0 %v515
  %v1776 = vpop.f32.mrf.mxu0
  %v1777 = vadd.f32 0.0, %v1776
  %v1778 = vpop.f32.mrf.mxu0
  %1779 = vmatprep.mubr.f32.mxu0 0.0
  %1780 = vmatmul.mubr.f32.gmra.mxu0 %v518
  %v1781 = vpop.f32.mrf.mxu0
  %v1782 = vadd.f32 0.0, %v1781
  %v1783 = vpop.f32.mrf.mxu0
  %1784 = vmatprep.mubr.f32.mxu0 0.0
  %1785 = vmatmul.mubr.f32.gmra.mxu0 %v521
  %v1786 = vpop.f32.mrf.mxu0
  %v1787 = vadd.f32 0.0, %v1786
  %v1788 = vpop.f32.mrf.mxu0
  %1789 = vmatprep.mubr.f32.mxu0 0.0
  %1790 = vmatmul.mubr.f32.gmra.mxu0 %v524
  %v1791 = vpop.f32.mrf.mxu0
  %v1792 = vadd.f32 0.0, %v1791
  %v1793 = vpop.f32.mrf.mxu0
  %1794 = vmatprep.mubr.f32.mxu0 0.0
  %1795 = vmatmul.mubr.f32.gmra.mxu0 %v527
  %v1796 = vpop.f32.mrf.mxu0
  %v1797 = vadd.f32 0.0, %v1796
  %v1798 = vpop.f32.mrf.mxu0
  %1799 = vmatprep.mubr.f32.mxu0 0.0
  %1800 = vmatmul.mubr.f32.gmra.mxu0 %v530
  %v1801 = vpop.f32.mrf.mxu0
  %v1802 = vadd.f32 0.0, %v1801
  %v1803 = vpop.f32.mrf.mxu0
  %1804 = vmatprep.mubr.f32.mxu0 0.0
  %1805 = vmatmul.mubr.f32.gmra.mxu0 %v533
  %v1806 = vpop.f32.mrf.mxu0
  %v1807 = vadd.f32 0.0, %v1806
  %v1808 = vpop.f32.mrf.mxu0
  %1809 = vmatprep.mubr.f32.mxu0 0.0
  %1810 = vmatmul.mubr.f32.gmra.mxu0 %v536
  %v1811 = vpop.f32.mrf.mxu0
  %v1812 = vadd.f32 0.0, %v1811
  %v1813 = vpop.f32.mrf.mxu0
  %1814 = vmatprep.mubr.f32.mxu0 0.0
  %1815 = vmatmul.mubr.f32.gmra.mxu0 %v539
  %v1816 = vpop.f32.mrf.mxu0
  %v1817 = vadd.f32 0.0, %v1816
  %v1818 = vpop.f32.mrf.mxu0
  %1819 = vmatprep.mubr.f32.mxu0 0.0
  %1820 = vmatmul.mubr.f32.gmra.mxu0 %v542
  %v1821 = vpop.f32.mrf.mxu0
  %v1822 = vadd.f32 0.0, %v1821
  %v1823 = vpop.f32.mrf.mxu0
  %1824 = vmatprep.mubr.f32.mxu0 0.0
  %1825 = vmatmul.mubr.f32.gmra.mxu0 %v545
  %v1826 = vpop.f32.mrf.mxu0
  %v1827 = vadd.f32 0.0, %v1826
  %v1828 = vpop.f32.mrf.mxu0
  %1829 = vmatprep.mubr.f32.mxu0 0.0
  %1830 = vmatmul.mubr.f32.gmra.mxu0 %v548
  %v1831 = vpop.f32.mrf.mxu0
  %v1832 = vadd.f32 0.0, %v1831
  %v1833 = vpop.f32.mrf.mxu0
  %1834 = vmatprep.mubr.f32.mxu0 0.0
  %1835 = vmatmul.mubr.f32.gmra.mxu0 %v551
  %v1836 = vpop.f32.mrf.mxu0
  %v1837 = vadd.f32 0.0, %v1836
  %v1838 = vpop.f32.mrf.mxu0
  %1839 = vmatprep.mubr.f32.mxu0 0.0
  %1840 = vmatmul.mubr.f32.gmra.mxu0 %v554
  %v1841 = vpop.f32.mrf.mxu0
  %v1842 = vadd.f32 0.0, %v1841
  %v1843 = vpop.f32.mrf.mxu0
  %1844 = vmatprep.mubr.f32.mxu0 0.0
  %1845 = vmatmul.mubr.f32.gmra.mxu0 %v557
  %v1846 = vpop.f32.mrf.mxu0
  %v1847 = vadd.f32 0.0, %v1846
  %v1848 = vpop.f32.mrf.mxu0
  %1849 = vmatprep.mubr.f32.mxu0 0.0
  %1850 = vmatmul.mubr.f32.gmra.mxu0 %v560
  %v1851 = vpop.f32.mrf.mxu0
  %v1852 = vadd.f32 0.0, %v1851
  %v1853 = vpop.f32.mrf.mxu0
  %1854 = vmatprep.mubr.f32.mxu0 0.0
  %1855 = vmatmul.mubr.f32.gmra.mxu0 %v563
  %v1856 = vpop.f32.mrf.mxu0
  %v1857 = vpop.f32.mrf.mxu0
  %1858 = vmatprep.mubr.f32.mxu0 0.0
  %1859 = vmatmul.mubr.f32.gmra.mxu0 %v566
  %v1860 = vpop.f32.mrf.mxu0
  %v1861 = vpop.f32.mrf.mxu0
  %1862 = vmatprep.mubr.f32.mxu0 0.0
  %1863 = vmatmul.mubr.f32.gmra.mxu0 %v569
  %v1864 = vpop.f32.mrf.mxu0
  %v1865 = vpop.f32.mrf.mxu0
  %1866 = vmatprep.mubr.f32.mxu0 0.0
  %1867 = vmatmul.mubr.f32.gmra.mxu0 %v572
  %v1868 = vpop.f32.mrf.mxu0
  %v1869 = vpop.f32.mrf.mxu0
  %1870 = vdwg.mxu0
  %s1871 = scalar_lea.vmem %s3, 224
  %v1872 = vld [vmem:[%s1871] sm:$0xff]
  %v1873 = vld [vmem:[%s1871 + $0x8] sm:$0xff]
  %v1874 = vld [vmem:[%s1871 + $0x10] sm:$0xff]
  %v1875 = vld [vmem:[%s1871 + $0x18] sm:$0xff]
  %1876 = vmatprep.subr.mxu0 0.0
  %1877 = vmatpush1.msra.mxu0 0.0
  %1878 = vmatprep.subr.mxu0 0.0
  %1879 = vmatpush1.msra.mxu0 0.0
  %1880 = vmatprep.subr.mxu0 0.0
  %1881 = vmatpush1.msra.mxu0 0.0
  %1882 = vmatprep.subr.mxu0 0.0
  %1883 = vmatpush1.msra.mxu0 0.0
  %1884 = vmatprep.subr.mxu0 0.0
  %1885 = vmatpush1.msra.mxu0 0.0
  %1886 = vmatprep.subr.mxu0 0.0
  %1887 = vmatpush1.msra.mxu0 0.0
  %1888 = vmatprep.subr.mxu0 0.0
  %1889 = vmatpush1.msra.mxu0 0.0
  %1890 = vmatprep.subr.mxu0 0.0
  %1891 = vmatpush1.msra.mxu0 0.0
  %1892 = vmatprep.subr.mxu0 0.0
  %1893 = vmatpush1.msra.mxu0 0.0
  %1894 = vmatprep.subr.mxu0 0.0
  %1895 = vmatpush1.msra.mxu0 0.0
  %1896 = vmatprep.subr.mxu0 0.0
  %1897 = vmatpush1.msra.mxu0 0.0
  %1898 = vmatprep.subr.mxu0 0.0
  %1899 = vmatpush1.msra.mxu0 0.0
  %1900 = vmatprep.subr.mxu0 0.0
  %1901 = vmatpush1.msra.mxu0 %v1875
  %1902 = vmatprep.subr.mxu0 0.0
  %1903 = vmatpush1.msra.mxu0 %v1874
  %1904 = vmatprep.subr.mxu0 0.0
  %1905 = vmatpush1.msra.mxu0 %v1873
  %1906 = vmatprep.subr.mxu0 0.0
  %1907 = vmatpush1.msra.mxu0 %v1872
  %1908 = vmatprep.subr.mxu0 0.0
  %1909 = vmatpush2.msra.mxu0 0.0
  %1910 = vmatprep.subr.mxu0 0.0
  %1911 = vmatpush2.msra.mxu0 0.0
  %1912 = vmatprep.subr.mxu0 0.0
  %1913 = vmatpush2.msra.mxu0 0.0
  %1914 = vmatprep.subr.mxu0 0.0
  %1915 = vmatpush2.msra.mxu0 0.0
  %1916 = vmatprep.subr.mxu0 0.0
  %1917 = vmatpush2.msra.mxu0 0.0
  %1918 = vmatprep.subr.mxu0 0.0
  %1919 = vmatpush2.msra.mxu0 0.0
  %1920 = vmatprep.subr.mxu0 0.0
  %1921 = vmatpush2.msra.mxu0 0.0
  %1922 = vmatprep.subr.mxu0 0.0
  %1923 = vmatpush2.msra.mxu0 0.0
  %1924 = vmatprep.subr.mxu0 0.0
  %1925 = vmatpush2.msra.mxu0 0.0
  %1926 = vmatprep.subr.mxu0 0.0
  %1927 = vmatpush2.msra.mxu0 0.0
  %1928 = vmatprep.subr.mxu0 0.0
  %1929 = vmatpush2.msra.mxu0 0.0
  %1930 = vmatprep.subr.mxu0 0.0
  %1931 = vmatpush2.msra.mxu0 0.0
  %1932 = vmatprep.subr.mxu0 0.0
  %1933 = vmatpush2.msra.mxu0 0.0
  %1934 = vmatprep.subr.mxu0 0.0
  %1935 = vmatpush2.msra.mxu0 0.0
  %1936 = vmatprep.subr.mxu0 0.0
  %1937 = vmatpush2.msra.mxu0 0.0
  %1938 = vmatprep.subr.mxu0 0.0
  %1939 = vmatpush2.msra.mxu0 0.0
  %1940 = vmatprep.mubr.f32.mxu0 0.0
  %1941 = vmatmul.mubr.f32.gmra.mxu0 %v503
  %v1942 = vpop.f32.mrf.mxu0
  %v1943 = vpop.f32.mrf.mxu0
  %1944 = vmatprep.mubr.f32.mxu0 0.0
  %1945 = vmatmul.mubr.f32.gmra.mxu0 %v506
  %v1946 = vpop.f32.mrf.mxu0
  %v1947 = vpop.f32.mrf.mxu0
  %1948 = vmatprep.mubr.f32.mxu0 0.0
  %1949 = vmatmul.mubr.f32.gmra.mxu0 %v509
  %v1950 = vpop.f32.mrf.mxu0
  %v1951 = vpop.f32.mrf.mxu0
  %1952 = vmatprep.mubr.f32.mxu0 0.0
  %1953 = vmatmul.mubr.f32.gmra.mxu0 %v512
  %v1954 = vpop.f32.mrf.mxu0
  %v1955 = vpop.f32.mrf.mxu0
  %1956 = vmatprep.mubr.f32.mxu0 0.0
  %1957 = vmatmul.mubr.f32.gmra.mxu0 %v515
  %v1958 = vpop.f32.mrf.mxu0
  %v1959 = vadd.f32 0.0, %v1958
  %v1960 = vpop.f32.mrf.mxu0
  %1961 = vmatprep.mubr.f32.mxu0 0.0
  %1962 = vmatmul.mubr.f32.gmra.mxu0 %v518
  %v1963 = vpop.f32.mrf.mxu0
  %v1964 = vadd.f32 0.0, %v1963
  %v1965 = vpop.f32.mrf.mxu0
  %1966 = vmatprep.mubr.f32.mxu0 0.0
  %1967 = vmatmul.mubr.f32.gmra.mxu0 %v521
  %v1968 = vpop.f32.mrf.mxu0
  %v1969 = vadd.f32 0.0, %v1968
  %v1970 = vpop.f32.mrf.mxu0
  %1971 = vmatprep.mubr.f32.mxu0 0.0
  %1972 = vmatmul.mubr.f32.gmra.mxu0 %v524
  %v1973 = vpop.f32.mrf.mxu0
  %v1974 = vadd.f32 0.0, %v1973
  %v1975 = vpop.f32.mrf.mxu0
  %1976 = vmatprep.mubr.f32.mxu0 0.0
  %1977 = vmatmul.mubr.f32.gmra.mxu0 %v527
  %v1978 = vpop.f32.mrf.mxu0
  %v1979 = vadd.f32 0.0, %v1978
  %v1980 = vpop.f32.mrf.mxu0
  %1981 = vmatprep.mubr.f32.mxu0 0.0
  %1982 = vmatmul.mubr.f32.gmra.mxu0 %v530
  %v1983 = vpop.f32.mrf.mxu0
  %v1984 = vadd.f32 0.0, %v1983
  %v1985 = vpop.f32.mrf.mxu0
  %1986 = vmatprep.mubr.f32.mxu0 0.0
  %1987 = vmatmul.mubr.f32.gmra.mxu0 %v533
  %v1988 = vpop.f32.mrf.mxu0
  %v1989 = vadd.f32 0.0, %v1988
  %v1990 = vpop.f32.mrf.mxu0
  %1991 = vmatprep.mubr.f32.mxu0 0.0
  %1992 = vmatmul.mubr.f32.gmra.mxu0 %v536
  %v1993 = vpop.f32.mrf.mxu0
  %v1994 = vadd.f32 0.0, %v1993
  %v1995 = vpop.f32.mrf.mxu0
  %1996 = vmatprep.mubr.f32.mxu0 0.0
  %1997 = vmatmul.mubr.f32.gmra.mxu0 %v539
  %v1998 = vpop.f32.mrf.mxu0
  %v1999 = vadd.f32 0.0, %v1998
  %v2000 = vpop.f32.mrf.mxu0
  %2001 = vmatprep.mubr.f32.mxu0 0.0
  %2002 = vmatmul.mubr.f32.gmra.mxu0 %v542
  %v2003 = vpop.f32.mrf.mxu0
  %v2004 = vadd.f32 0.0, %v2003
  %v2005 = vpop.f32.mrf.mxu0
  %2006 = vmatprep.mubr.f32.mxu0 0.0
  %2007 = vmatmul.mubr.f32.gmra.mxu0 %v545
  %v2008 = vpop.f32.mrf.mxu0
  %v2009 = vadd.f32 0.0, %v2008
  %v2010 = vpop.f32.mrf.mxu0
  %2011 = vmatprep.mubr.f32.mxu0 0.0
  %2012 = vmatmul.mubr.f32.gmra.mxu0 %v548
  %v2013 = vpop.f32.mrf.mxu0
  %v2014 = vadd.f32 0.0, %v2013
  %v2015 = vpop.f32.mrf.mxu0
  %2016 = vmatprep.mubr.f32.mxu0 0.0
  %2017 = vmatmul.mubr.f32.gmra.mxu0 %v551
  %v2018 = vpop.f32.mrf.mxu0
  %v2019 = vadd.f32 0.0, %v2018
  %v2020 = vpop.f32.mrf.mxu0
  %2021 = vmatprep.mubr.f32.mxu0 0.0
  %2022 = vmatmul.mubr.f32.gmra.mxu0 %v554
  %v2023 = vpop.f32.mrf.mxu0
  %v2024 = vadd.f32 0.0, %v2023
  %v2025 = vpop.f32.mrf.mxu0
  %2026 = vmatprep.mubr.f32.mxu0 0.0
  %2027 = vmatmul.mubr.f32.gmra.mxu0 %v557
  %v2028 = vpop.f32.mrf.mxu0
  %v2029 = vadd.f32 0.0, %v2028
  %v2030 = vpop.f32.mrf.mxu0
  %2031 = vmatprep.mubr.f32.mxu0 0.0
  %2032 = vmatmul.mubr.f32.gmra.mxu0 %v560
  %v2033 = vpop.f32.mrf.mxu0
  %v2034 = vadd.f32 0.0, %v2033
  %v2035 = vpop.f32.mrf.mxu0
  %2036 = vmatprep.mubr.f32.mxu0 0.0
  %2037 = vmatmul.mubr.f32.gmra.mxu0 %v563
  %v2038 = vpop.f32.mrf.mxu0
  %v2039 = vadd.f32 0.0, %v2038
  %v2040 = vpop.f32.mrf.mxu0
  %2041 = vmatprep.mubr.f32.mxu0 0.0
  %2042 = vmatmul.mubr.f32.gmra.mxu0 %v566
  %v2043 = vpop.f32.mrf.mxu0
  %v2044 = vadd.f32 0.0, %v2043
  %v2045 = vpop.f32.mrf.mxu0
  %2046 = vmatprep.mubr.f32.mxu0 0.0
  %2047 = vmatmul.mubr.f32.gmra.mxu0 %v569
  %v2048 = vpop.f32.mrf.mxu0
  %v2049 = vpop.f32.mrf.mxu0
  %2050 = vmatprep.mubr.f32.mxu0 0.0
  %2051 = vmatmul.mubr.f32.gmra.mxu0 %v572
  %v2052 = vpop.f32.mrf.mxu0
  %v2053 = vpop.f32.mrf.mxu0
  %2054 = vdwg.mxu0
  %s2055 = scalar_lea.vmem %s3, 256
  %v2056 = vld [vmem:[%s2055] sm:$0xff]
  %v2057 = vld [vmem:[%s2055 + $0x8] sm:$0xff]
  %v2058 = vld [vmem:[%s2055 + $0x10] sm:$0xff]
  %v2059 = vld [vmem:[%s2055 + $0x18] sm:$0xff]
  %2060 = vmatprep.subr.mxu0 0.0
  %2061 = vmatpush1.msra.mxu0 0.0
  %2062 = vmatprep.subr.mxu0 0.0
  %2063 = vmatpush1.msra.mxu0 0.0
  %2064 = vmatprep.subr.mxu0 0.0
  %2065 = vmatpush1.msra.mxu0 0.0
  %2066 = vmatprep.subr.mxu0 0.0
  %2067 = vmatpush1.msra.mxu0 0.0
  %2068 = vmatprep.subr.mxu0 0.0
  %2069 = vmatpush1.msra.mxu0 0.0
  %2070 = vmatprep.subr.mxu0 0.0
  %2071 = vmatpush1.msra.mxu0 0.0
  %2072 = vmatprep.subr.mxu0 0.0
  %2073 = vmatpush1.msra.mxu0 0.0
  %2074 = vmatprep.subr.mxu0 0.0
  %2075 = vmatpush1.msra.mxu0 0.0
  %2076 = vmatprep.subr.mxu0 0.0
  %2077 = vmatpush1.msra.mxu0 0.0
  %2078 = vmatprep.subr.mxu0 0.0
  %2079 = vmatpush1.msra.mxu0 0.0
  %2080 = vmatprep.subr.mxu0 0.0
  %2081 = vmatpush1.msra.mxu0 0.0
  %2082 = vmatprep.subr.mxu0 0.0
  %2083 = vmatpush1.msra.mxu0 0.0
  %2084 = vmatprep.subr.mxu0 0.0
  %2085 = vmatpush1.msra.mxu0 %v2059
  %2086 = vmatprep.subr.mxu0 0.0
  %2087 = vmatpush1.msra.mxu0 %v2058
  %2088 = vmatprep.subr.mxu0 0.0
  %2089 = vmatpush1.msra.mxu0 %v2057
  %2090 = vmatprep.subr.mxu0 0.0
  %2091 = vmatpush1.msra.mxu0 %v2056
  %2092 = vmatprep.subr.mxu0 0.0
  %2093 = vmatpush2.msra.mxu0 0.0
  %2094 = vmatprep.subr.mxu0 0.0
  %2095 = vmatpush2.msra.mxu0 0.0
  %2096 = vmatprep.subr.mxu0 0.0
  %2097 = vmatpush2.msra.mxu0 0.0
  %2098 = vmatprep.subr.mxu0 0.0
  %2099 = vmatpush2.msra.mxu0 0.0
  %2100 = vmatprep.subr.mxu0 0.0
  %2101 = vmatpush2.msra.mxu0 0.0
  %2102 = vmatprep.subr.mxu0 0.0
  %2103 = vmatpush2.msra.mxu0 0.0
  %2104 = vmatprep.subr.mxu0 0.0
  %2105 = vmatpush2.msra.mxu0 0.0
  %2106 = vmatprep.subr.mxu0 0.0
  %2107 = vmatpush2.msra.mxu0 0.0
  %2108 = vmatprep.subr.mxu0 0.0
  %2109 = vmatpush2.msra.mxu0 0.0
  %2110 = vmatprep.subr.mxu0 0.0
  %2111 = vmatpush2.msra.mxu0 0.0
  %2112 = vmatprep.subr.mxu0 0.0
  %2113 = vmatpush2.msra.mxu0 0.0
  %2114 = vmatprep.subr.mxu0 0.0
  %2115 = vmatpush2.msra.mxu0 0.0
  %2116 = vmatprep.subr.mxu0 0.0
  %2117 = vmatpush2.msra.mxu0 0.0
  %2118 = vmatprep.subr.mxu0 0.0
  %2119 = vmatpush2.msra.mxu0 0.0
  %2120 = vmatprep.subr.mxu0 0.0
  %2121 = vmatpush2.msra.mxu0 0.0
  %2122 = vmatprep.subr.mxu0 0.0
  %2123 = vmatpush2.msra.mxu0 0.0
  %2124 = vmatprep.mubr.f32.mxu0 0.0
  %2125 = vmatmul.mubr.f32.gmra.mxu0 %v503
  %v2126 = vpop.f32.mrf.mxu0
  %v2127 = vpop.f32.mrf.mxu0
  %2128 = vmatprep.mubr.f32.mxu0 0.0
  %2129 = vmatmul.mubr.f32.gmra.mxu0 %v506
  %v2130 = vpop.f32.mrf.mxu0
  %v2131 = vpop.f32.mrf.mxu0
  %2132 = vmatprep.mubr.f32.mxu0 0.0
  %2133 = vmatmul.mubr.f32.gmra.mxu0 %v509
  %v2134 = vpop.f32.mrf.mxu0
  %v2135 = vpop.f32.mrf.mxu0
  %2136 = vmatprep.mubr.f32.mxu0 0.0
  %2137 = vmatmul.mubr.f32.gmra.mxu0 %v512
  %v2138 = vpop.f32.mrf.mxu0
  %v2139 = vpop.f32.mrf.mxu0
  %2140 = vmatprep.mubr.f32.mxu0 0.0
  %2141 = vmatmul.mubr.f32.gmra.mxu0 %v515
  %v2142 = vpop.f32.mrf.mxu0
  %v2143 = vpop.f32.mrf.mxu0
  %2144 = vmatprep.mubr.f32.mxu0 0.0
  %2145 = vmatmul.mubr.f32.gmra.mxu0 %v518
  %v2146 = vpop.f32.mrf.mxu0
  %v2147 = vpop.f32.mrf.mxu0
  %2148 = vmatprep.mubr.f32.mxu0 0.0
  %2149 = vmatmul.mubr.f32.gmra.mxu0 %v521
  %v2150 = vpop.f32.mrf.mxu0
  %v2151 = vadd.f32 0.0, %v2150
  %v2152 = vpop.f32.mrf.mxu0
  %2153 = vmatprep.mubr.f32.mxu0 0.0
  %2154 = vmatmul.mubr.f32.gmra.mxu0 %v524
  %v2155 = vpop.f32.mrf.mxu0
  %v2156 = vadd.f32 0.0, %v2155
  %v2157 = vpop.f32.mrf.mxu0
  %2158 = vmatprep.mubr.f32.mxu0 0.0
  %2159 = vmatmul.mubr.f32.gmra.mxu0 %v527
  %v2160 = vpop.f32.mrf.mxu0
  %v2161 = vadd.f32 0.0, %v2160
  %v2162 = vpop.f32.mrf.mxu0
  %2163 = vmatprep.mubr.f32.mxu0 0.0
  %2164 = vmatmul.mubr.f32.gmra.mxu0 %v530
  %v2165 = vpop.f32.mrf.mxu0
  %v2166 = vadd.f32 0.0, %v2165
  %v2167 = vpop.f32.mrf.mxu0
  %2168 = vmatprep.mubr.f32.mxu0 0.0
  %2169 = vmatmul.mubr.f32.gmra.mxu0 %v533
  %v2170 = vpop.f32.mrf.mxu0
  %v2171 = vadd.f32 0.0, %v2170
  %v2172 = vpop.f32.mrf.mxu0
  %2173 = vmatprep.mubr.f32.mxu0 0.0
  %2174 = vmatmul.mubr.f32.gmra.mxu0 %v536
  %v2175 = vpop.f32.mrf.mxu0
  %v2176 = vadd.f32 0.0, %v2175
  %v2177 = vpop.f32.mrf.mxu0
  %2178 = vmatprep.mubr.f32.mxu0 0.0
  %2179 = vmatmul.mubr.f32.gmra.mxu0 %v539
  %v2180 = vpop.f32.mrf.mxu0
  %v2181 = vadd.f32 0.0, %v2180
  %v2182 = vpop.f32.mrf.mxu0
  %2183 = vmatprep.mubr.f32.mxu0 0.0
  %2184 = vmatmul.mubr.f32.gmra.mxu0 %v542
  %v2185 = vpop.f32.mrf.mxu0
  %v2186 = vadd.f32 0.0, %v2185
  %v2187 = vpop.f32.mrf.mxu0
  %2188 = vmatprep.mubr.f32.mxu0 0.0
  %2189 = vmatmul.mubr.f32.gmra.mxu0 %v545
  %v2190 = vpop.f32.mrf.mxu0
  %v2191 = vadd.f32 0.0, %v2190
  %v2192 = vpop.f32.mrf.mxu0
  %2193 = vmatprep.mubr.f32.mxu0 0.0
  %2194 = vmatmul.mubr.f32.gmra.mxu0 %v548
  %v2195 = vpop.f32.mrf.mxu0
  %v2196 = vadd.f32 0.0, %v2195
  %v2197 = vpop.f32.mrf.mxu0
  %2198 = vmatprep.mubr.f32.mxu0 0.0
  %2199 = vmatmul.mubr.f32.gmra.mxu0 %v551
  %v2200 = vpop.f32.mrf.mxu0
  %v2201 = vadd.f32 0.0, %v2200
  %v2202 = vpop.f32.mrf.mxu0
  %2203 = vmatprep.mubr.f32.mxu0 0.0
  %2204 = vmatmul.mubr.f32.gmra.mxu0 %v554
  %v2205 = vpop.f32.mrf.mxu0
  %v2206 = vadd.f32 0.0, %v2205
  %v2207 = vpop.f32.mrf.mxu0
  %2208 = vmatprep.mubr.f32.mxu0 0.0
  %2209 = vmatmul.mubr.f32.gmra.mxu0 %v557
  %v2210 = vpop.f32.mrf.mxu0
  %v2211 = vadd.f32 0.0, %v2210
  %v2212 = vpop.f32.mrf.mxu0
  %2213 = vmatprep.mubr.f32.mxu0 0.0
  %2214 = vmatmul.mubr.f32.gmra.mxu0 %v560
  %v2215 = vpop.f32.mrf.mxu0
  %v2216 = vadd.f32 0.0, %v2215
  %v2217 = vpop.f32.mrf.mxu0
  %2218 = vmatprep.mubr.f32.mxu0 0.0
  %2219 = vmatmul.mubr.f32.gmra.mxu0 %v563
  %v2220 = vpop.f32.mrf.mxu0
  %v2221 = vadd.f32 0.0, %v2220
  %v2222 = vpop.f32.mrf.mxu0
  %2223 = vmatprep.mubr.f32.mxu0 0.0
  %2224 = vmatmul.mubr.f32.gmra.mxu0 %v566
  %v2225 = vpop.f32.mrf.mxu0
  %v2226 = vadd.f32 0.0, %v2225
  %v2227 = vpop.f32.mrf.mxu0
  %2228 = vmatprep.mubr.f32.mxu0 0.0
  %2229 = vmatmul.mubr.f32.gmra.mxu0 %v569
  %v2230 = vpop.f32.mrf.mxu0
  %v2231 = vadd.f32 0.0, %v2230
  %v2232 = vpop.f32.mrf.mxu0
  %2233 = vmatprep.mubr.f32.mxu0 0.0
  %2234 = vmatmul.mubr.f32.gmra.mxu0 %v572
  %v2235 = vpop.f32.mrf.mxu0
  %v2236 = vadd.f32 0.0, %v2235
  %v2237 = vpop.f32.mrf.mxu0
  %2238 = vdwg.mxu0
  %v2239 = vld [vmem:[%s4] sm:$0x1]
  %v2240 = vadd.f32 %v641, %v837
  %v2241 = vadd.f32 %v646, %v842
  %v2243 = vlaneseq
  %v2244 = vshrl.u32 %v2243, 7
  %v2245 = vsub.s32 0, %v2244
  %v2246 = vrot.slane %v2239, %v2245
  %v2248 = vadd.f32 %v2240, %v2246
  %v2249 = vadd.f32 %v2241, %v2246
  %v2250 = vmax.f32 %v2248, 0.0
  %v2251 = vmax.f32 %v2249, 0.0
  %v2252 = vadd.f32 %v651, %v847
  %v2253 = vadd.f32 %v656, %v852
  %v2254 = vadd.f32 %v2252, %v2246
  %v2255 = vadd.f32 %v2253, %v2246
  %v2256 = vmax.f32 %v2254, 0.0
  %v2257 = vmax.f32 %v2255, 0.0
  %v2258 = vmax.f32 %v2250, %v2256
  %v2259 = vmax.f32 %v2251, %v2257
  %v2260 = vadd.f32 %v661, %v857
  %v2261 = vadd.f32 %v666, %v862
  %v2262 = vadd.f32 %v2260, %v2246
  %v2263 = vadd.f32 %v2261, %v2246
  %v2264 = vmax.f32 %v2262, 0.0
  %v2265 = vmax.f32 %v2263, 0.0
  %v2266 = vmax.f32 %v2258, %v2264
  %v2267 = vmax.f32 %v2259, %v2265
  %v2268 = vadd.f32 %v671, %v867
  %v2269 = vadd.f32 %v676, %v872
  %v2270 = vadd.f32 %v2268, %v2246
  %v2271 = vadd.f32 %v2269, %v2246
  %v2272 = vmax.f32 %v2270, 0.0
  %v2273 = vmax.f32 %v2271, 0.0
  %v2274 = vmax.f32 %v2266, %v2272
  %v2275 = vmax.f32 %v2267, %v2273
  %v2276 = vadd.f32 %v681, %v877
  %v2277 = vadd.f32 %v686, %v882
  %v2278 = vadd.f32 %v2276, %v2246
  %v2279 = vadd.f32 %v2277, %v2246
  %v2280 = vmax.f32 %v2278, 0.0
  %v2281 = vmax.f32 %v2279, 0.0
  %v2282 = vmax.f32 %v2274, %v2280
  %v2283 = vmax.f32 %v2275, %v2281
  %v2284 = vadd.f32 %v691, %v887
  %v2285 = vadd.f32 %v696, %v892
  %v2286 = vadd.f32 %v2284, %v2246
  %v2287 = vadd.f32 %v2285, %v2246
  %v2288 = vmax.f32 %v2286, 0.0
  %v2289 = vmax.f32 %v2287, 0.0
  %v2290 = vmax.f32 %v2282, %v2288
  %v2291 = vmax.f32 %v2283, %v2289
  %v2292 = vadd.f32 %v701, %v897
  %v2293 = vadd.f32 %v706, %v902
  %v2294 = vadd.f32 %v2292, %v2246
  %v2295 = vadd.f32 %v2293, %v2246
  %v2296 = vmax.f32 %v2294, 0.0
  %v2297 = vmax.f32 %v2295, 0.0
  %v2298 = vmax.f32 %v2290, %v2296
  %v2299 = vmax.f32 %v2291, %v2297
  %v2300 = vadd.f32 %v711, %v907
  %v2301 = vadd.f32 %v716, %v912
  %v2302 = vadd.f32 %v2300, %v2246
  %v2303 = vadd.f32 %v2301, %v2246
  %v2304 = vmax.f32 %v2302, 0.0
  %v2305 = vmax.f32 %v2303, 0.0
  %v2306 = vmax.f32 %v2298, %v2304
  %v2307 = vmax.f32 %v2299, %v2305
  %v2308 = vadd.f32 %v721, %v917
  %v2309 = vadd.f32 %v726, %v922
  %v2310 = vadd.f32 %v2308, %v2246
  %v2311 = vadd.f32 %v2309, %v2246
  %v2312 = vmax.f32 %v2310, 0.0
  %v2313 = vmax.f32 %v2311, 0.0
  %v2314 = vmax.f32 %v2306, %v2312
  %v2315 = vmax.f32 %v2307, %v2313
  %v2316 = vadd.f32 %v731, %v927
  %v2317 = vadd.f32 %v736, %v932
  %v2318 = vadd.f32 %v2316, %v2246
  %v2319 = vadd.f32 %v2317, %v2246
  %v2320 = vmax.f32 %v2318, 0.0
  %v2321 = vmax.f32 %v2319, 0.0
  %v2322 = vmax.f32 %v2314, %v2320
  %v2323 = vmax.f32 %v2315, %v2321
  %v2324 = vadd.f32 %v741, %v937
  %v2325 = vadd.f32 %v746, %v942
  %v2326 = vadd.f32 %v2324, %v2246
  %v2327 = vadd.f32 %v2325, %v2246
  %v2328 = vmax.f32 %v2326, 0.0
  %v2329 = vmax.f32 %v2327, 0.0
  %v2330 = vmax.f32 %v2322, %v2328
  %v2331 = vmax.f32 %v2323, %v2329
  %s2332 = scalar_lea.vmem %s4, 1
  %v2333 = vld [vmem:[%s2332] sm:$0x1]
  %v2334 = vadd.f32 %v1017, %v1211
  %v2335 = vadd.f32 %v1022, %v1216
  %v2336 = vadd.f32 %v2334, %v1405
  %v2337 = vadd.f32 %v2335, %v1410
  %v2339 = vlaneseq
  %v2340 = vshrl.u32 %v2339, 7
  %v2341 = vsub.s32 0, %v2340
  %v2342 = vrot.slane %v2333, %v2341
  %v2344 = vadd.f32 %v2336, %v2342
  %v2345 = vadd.f32 %v2337, %v2342
  %v2346 = vmax.f32 %v2344, 0.0
  %v2347 = vmax.f32 %v2345, 0.0
  %v2348 = vadd.f32 %v1027, %v1221
  %v2349 = vadd.f32 %v1032, %v1226
  %v2350 = vadd.f32 %v2348, %v1415
  %v2351 = vadd.f32 %v2349, %v1420
  %v2352 = vadd.f32 %v2350, %v2342
  %v2353 = vadd.f32 %v2351, %v2342
  %v2354 = vmax.f32 %v2352, 0.0
  %v2355 = vmax.f32 %v2353, 0.0
  %v2356 = vmax.f32 %v2346, %v2354
  %v2357 = vmax.f32 %v2347, %v2355
  %v2358 = vadd.f32 %v1037, %v1231
  %v2359 = vadd.f32 %v1042, %v1236
  %v2360 = vadd.f32 %v2358, %v1425
  %v2361 = vadd.f32 %v2359, %v1430
  %v2362 = vadd.f32 %v2360, %v2342
  %v2363 = vadd.f32 %v2361, %v2342
  %v2364 = vmax.f32 %v2362, 0.0
  %v2365 = vmax.f32 %v2363, 0.0
  %v2366 = vmax.f32 %v2356, %v2364
  %v2367 = vmax.f32 %v2357, %v2365
  %v2368 = vadd.f32 %v1047, %v1241
  %v2369 = vadd.f32 %v1052, %v1246
  %v2370 = vadd.f32 %v2368, %v1435
  %v2371 = vadd.f32 %v2369, %v1440
  %v2372 = vadd.f32 %v2370, %v2342
  %v2373 = vadd.f32 %v2371, %v2342
  %v2374 = vmax.f32 %v2372, 0.0
  %v2375 = vmax.f32 %v2373, 0.0
  %v2376 = vmax.f32 %v2366, %v2374
  %v2377 = vmax.f32 %v2367, %v2375
  %v2378 = vadd.f32 %v1057, %v1251
  %v2379 = vadd.f32 %v1062, %v1256
  %v2380 = vadd.f32 %v2378, %v1445
  %v2381 = vadd.f32 %v2379, %v1450
  %v2382 = vadd.f32 %v2380, %v2342
  %v2383 = vadd.f32 %v2381, %v2342
  %v2384 = vmax.f32 %v2382, 0.0
  %v2385 = vmax.f32 %v2383, 0.0
  %v2386 = vmax.f32 %v2376, %v2384
  %v2387 = vmax.f32 %v2377, %v2385
  %v2388 = vadd.f32 %v1067, %v1261
  %v2389 = vadd.f32 %v1072, %v1266
  %v2390 = vadd.f32 %v2388, %v1455
  %v2391 = vadd.f32 %v2389, %v1460
  %v2392 = vadd.f32 %v2390, %v2342
  %v2393 = vadd.f32 %v2391, %v2342
  %v2394 = vmax.f32 %v2392, 0.0
  %v2395 = vmax.f32 %v2393, 0.0
  %v2396 = vmax.f32 %v2386, %v2394
  %v2397 = vmax.f32 %v2387, %v2395
  %v2398 = vadd.f32 %v1077, %v1271
  %v2399 = vadd.f32 %v1082, %v1276
  %v2400 = vadd.f32 %v2398, %v1465
  %v2401 = vadd.f32 %v2399, %v1470
  %v2402 = vadd.f32 %v2400, %v2342
  %v2403 = vadd.f32 %v2401, %v2342
  %v2404 = vmax.f32 %v2402, 0.0
  %v2405 = vmax.f32 %v2403, 0.0
  %v2406 = vmax.f32 %v2396, %v2404
  %v2407 = vmax.f32 %v2397, %v2405
  %v2408 = vadd.f32 %v1087, %v1281
  %v2409 = vadd.f32 %v1092, %v1286
  %v2410 = vadd.f32 %v2408, %v1475
  %v2411 = vadd.f32 %v2409, %v1480
  %v2412 = vadd.f32 %v2410, %v2342
  %v2413 = vadd.f32 %v2411, %v2342
  %v2414 = vmax.f32 %v2412, 0.0
  %v2415 = vmax.f32 %v2413, 0.0
  %v2416 = vmax.f32 %v2406, %v2414
  %v2417 = vmax.f32 %v2407, %v2415
  %v2418 = vadd.f32 %v1097, %v1291
  %v2419 = vadd.f32 %v1102, %v1296
  %v2420 = vadd.f32 %v2418, %v1485
  %v2421 = vadd.f32 %v2419, %v1490
  %v2422 = vadd.f32 %v2420, %v2342
  %v2423 = vadd.f32 %v2421, %v2342
  %v2424 = vmax.f32 %v2422, 0.0
  %v2425 = vmax.f32 %v2423, 0.0
  %v2426 = vmax.f32 %v2416, %v2424
  %v2427 = vmax.f32 %v2417, %v2425
  %v2428 = vadd.f32 %v1107, %v1301
  %v2429 = vadd.f32 %v1112, %v1306
  %v2430 = vadd.f32 %v2428, %v1495
  %v2431 = vadd.f32 %v2429, %v1500
  %v2432 = vadd.f32 %v2430, %v2342
  %v2433 = vadd.f32 %v2431, %v2342
  %v2434 = vmax.f32 %v2432, 0.0
  %v2435 = vmax.f32 %v2433, 0.0
  %v2436 = vmax.f32 %v2426, %v2434
  %v2437 = vmax.f32 %v2427, %v2435
  %s2438 = scalar_lea.vmem %s4, 2
  %v2439 = vld [vmem:[%s2438] sm:$0x1]
  %v2440 = vadd.f32 %v1575, %v1767
  %v2441 = vadd.f32 %v1580, %v1772
  %v2442 = vadd.f32 %v2440, %v1959
  %v2443 = vadd.f32 %v2441, %v1964
  %v2444 = vadd.f32 %v2442, %v2151
  %v2445 = vadd.f32 %v2443, %v2156
  %v2447 = vlaneseq
  %v2448 = vshrl.u32 %v2447, 7
  %v2449 = vsub.s32 0, %v2448
  %v2450 = vrot.slane %v2439, %v2449
  %v2452 = vadd.f32 %v2444, %v2450
  %v2453 = vadd.f32 %v2445, %v2450
  %v2454 = vmax.f32 %v2452, 0.0
  %v2455 = vmax.f32 %v2453, 0.0
  %v2456 = vadd.f32 %v1585, %v1777
  %v2457 = vadd.f32 %v1590, %v1782
  %v2458 = vadd.f32 %v2456, %v1969
  %v2459 = vadd.f32 %v2457, %v1974
  %v2460 = vadd.f32 %v2458, %v2161
  %v2461 = vadd.f32 %v2459, %v2166
  %v2462 = vadd.f32 %v2460, %v2450
  %v2463 = vadd.f32 %v2461, %v2450
  %v2464 = vmax.f32 %v2462, 0.0
  %v2465 = vmax.f32 %v2463, 0.0
  %v2466 = vmax.f32 %v2454, %v2464
  %v2467 = vmax.f32 %v2455, %v2465
  %v2468 = vadd.f32 %v1595, %v1787
  %v2469 = vadd.f32 %v1600, %v1792
  %v2470 = vadd.f32 %v2468, %v1979
  %v2471 = vadd.f32 %v2469, %v1984
  %v2472 = vadd.f32 %v2470, %v2171
  %v2473 = vadd.f32 %v2471, %v2176
  %v2474 = vadd.f32 %v2472, %v2450
  %v2475 = vadd.f32 %v2473, %v2450
  %v2476 = vmax.f32 %v2474, 0.0
  %v2477 = vmax.f32 %v2475, 0.0
  %v2478 = vmax.f32 %v2466, %v2476
  %v2479 = vmax.f32 %v2467, %v2477
  %v2480 = vadd.f32 %v1605, %v1797
  %v2481 = vadd.f32 %v1610, %v1802
  %v2482 = vadd.f32 %v2480, %v1989
  %v2483 = vadd.f32 %v2481, %v1994
  %v2484 = vadd.f32 %v2482, %v2181
  %v2485 = vadd.f32 %v2483, %v2186
  %v2486 = vadd.f32 %v2484, %v2450
  %v2487 = vadd.f32 %v2485, %v2450
  %v2488 = vmax.f32 %v2486, 0.0
  %v2489 = vmax.f32 %v2487, 0.0
  %v2490 = vmax.f32 %v2478, %v2488
  %v2491 = vmax.f32 %v2479, %v2489
  %v2492 = vadd.f32 %v1615, %v1807
  %v2493 = vadd.f32 %v1620, %v1812
  %v2494 = vadd.f32 %v2492, %v1999
  %v2495 = vadd.f32 %v2493, %v2004
  %v2496 = vadd.f32 %v2494, %v2191
  %v2497 = vadd.f32 %v2495, %v2196
  %v2498 = vadd.f32 %v2496, %v2450
  %v2499 = vadd.f32 %v2497, %v2450
  %v2500 = vmax.f32 %v2498, 0.0
  %v2501 = vmax.f32 %v2499, 0.0
  %v2502 = vmax.f32 %v2490, %v2500
  %v2503 = vmax.f32 %v2491, %v2501
  %v2504 = vadd.f32 %v1625, %v1817
  %v2505 = vadd.f32 %v1630, %v1822
  %v2506 = vadd.f32 %v2504, %v2009
  %v2507 = vadd.f32 %v2505, %v2014
  %v2508 = vadd.f32 %v2506, %v2201
  %v2509 = vadd.f32 %v2507, %v2206
  %v2510 = vadd.f32 %v2508, %v2450
  %v2511 = vadd.f32 %v2509, %v2450
  %v2512 = vmax.f32 %v2510, 0.0
  %v2513 = vmax.f32 %v2511, 0.0
  %v2514 = vmax.f32 %v2502, %v2512
  %v2515 = vmax.f32 %v2503, %v2513
  %v2516 = vadd.f32 %v1635, %v1827
  %v2517 = vadd.f32 %v1640, %v1832
  %v2518 = vadd.f32 %v2516, %v2019
  %v2519 = vadd.f32 %v2517, %v2024
  %v2520 = vadd.f32 %v2518, %v2211
  %v2521 = vadd.f32 %v2519, %v2216
  %v2522 = vadd.f32 %v2520, %v2450
  %v2523 = vadd.f32 %v2521, %v2450
  %v2524 = vmax.f32 %v2522, 0.0
  %v2525 = vmax.f32 %v2523, 0.0
  %v2526 = vmax.f32 %v2514, %v2524
  %v2527 = vmax.f32 %v2515, %v2525
  %v2528 = vadd.f32 %v1645, %v1837
  %v2529 = vadd.f32 %v1650, %v1842
  %v2530 = vadd.f32 %v2528, %v2029
  %v2531 = vadd.f32 %v2529, %v2034
  %v2532 = vadd.f32 %v2530, %v2221
  %v2533 = vadd.f32 %v2531, %v2226
  %v2534 = vadd.f32 %v2532, %v2450
  %v2535 = vadd.f32 %v2533, %v2450
  %v2536 = vmax.f32 %v2534, 0.0
  %v2537 = vmax.f32 %v2535, 0.0
  %v2538 = vmax.f32 %v2526, %v2536
  %v2539 = vmax.f32 %v2527, %v2537
  %v2540 = vadd.f32 %v1655, %v1847
  %v2541 = vadd.f32 %v1660, %v1852
  %v2542 = vadd.f32 %v2540, %v2039
  %v2543 = vadd.f32 %v2541, %v2044
  %v2544 = vadd.f32 %v2542, %v2231
  %v2545 = vadd.f32 %v2543, %v2236
  %v2546 = vadd.f32 %v2544, %v2450
  %v2547 = vadd.f32 %v2545, %v2450
  %v2548 = vmax.f32 %v2546, 0.0
  %v2549 = vmax.f32 %v2547, 0.0
  %v2550 = vmax.f32 %v2538, %v2548
  %v2551 = vmax.f32 %v2539, %v2549
  %v2552 = vld [vmem:[%s6] sm:$0x1]
  %v2553 = vld [vmem:[%s5] sm:$0xff]
  %v2554 = vld [vmem:[%s5 + $0x8] sm:$0xff]
  %vm2555 = vcmask 130048
  %v2557 = vsel %vm2555, %v2330, 0
  %v2560 = vsel %vm2555, %v2331, 0
  %2562 = vmatprep.subr.mxu0 0.0
  %2563 = vmatpush1.msra.mxu0 0.0
  %2564 = vmatprep.subr.mxu0 0.0
  %2565 = vmatpush1.msra.mxu0 0.0
  %2566 = vmatprep.subr.mxu0 0.0
  %2567 = vmatpush1.msra.mxu0 0.0
  %2568 = vmatprep.subr.mxu0 0.0
  %2569 = vmatpush1.msra.mxu0 0.0
  %2570 = vmatprep.subr.mxu0 0.0
  %2571 = vmatpush1.msra.mxu0 0.0
  %2572 = vmatprep.subr.mxu0 0.0
  %2573 = vmatpush1.msra.mxu0 0.0
  %2574 = vmatprep.subr.mxu0 0.0
  %2575 = vmatpush1.msra.mxu0 0.0
  %2576 = vmatprep.subr.mxu0 0.0
  %2577 = vmatpush1.msra.mxu0 0.0
  %2578 = vmatprep.subr.mxu0 0.0
  %2579 = vmatpush1.msra.mxu0 0.0
  %2580 = vmatprep.subr.mxu0 0.0
  %2581 = vmatpush1.msra.mxu0 0.0
  %2582 = vmatprep.subr.mxu0 0.0
  %2583 = vmatpush1.msra.mxu0 0.0
  %2584 = vmatprep.subr.mxu0 0.0
  %2585 = vmatpush1.msra.mxu0 0.0
  %2586 = vmatprep.subr.mxu0 0.0
  %2587 = vmatpush1.msra.mxu0 0.0
  %2588 = vmatprep.subr.mxu0 0.0
  %2589 = vmatpush1.msra.mxu0 0.0
  %2590 = vmatprep.subr.mxu0 0.0
  %2591 = vmatpush1.msra.mxu0 %v2554
  %2592 = vmatprep.subr.mxu0 0.0
  %2593 = vmatpush1.msra.mxu0 %v2553
  %2594 = vmatprep.subr.mxu0 0.0
  %2595 = vmatpush2.msra.mxu0 0.0
  %2596 = vmatprep.subr.mxu0 0.0
  %2597 = vmatpush2.msra.mxu0 0.0
  %2598 = vmatprep.subr.mxu0 0.0
  %2599 = vmatpush2.msra.mxu0 0.0
  %2600 = vmatprep.subr.mxu0 0.0
  %2601 = vmatpush2.msra.mxu0 0.0
  %2602 = vmatprep.subr.mxu0 0.0
  %2603 = vmatpush2.msra.mxu0 0.0
  %2604 = vmatprep.subr.mxu0 0.0
  %2605 = vmatpush2.msra.mxu0 0.0
  %2606 = vmatprep.subr.mxu0 0.0
  %2607 = vmatpush2.msra.mxu0 0.0
  %2608 = vmatprep.subr.mxu0 0.0
  %2609 = vmatpush2.msra.mxu0 0.0
  %2610 = vmatprep.subr.mxu0 0.0
  %2611 = vmatpush2.msra.mxu0 0.0
  %2612 = vmatprep.subr.mxu0 0.0
  %2613 = vmatpush2.msra.mxu0 0.0
  %2614 = vmatprep.subr.mxu0 0.0
  %2615 = vmatpush2.msra.mxu0 0.0
  %2616 = vmatprep.subr.mxu0 0.0
  %2617 = vmatpush2.msra.mxu0 0.0
  %2618 = vmatprep.subr.mxu0 0.0
  %2619 = vmatpush2.msra.mxu0 0.0
  %2620 = vmatprep.subr.mxu0 0.0
  %2621 = vmatpush2.msra.mxu0 0.0
  %2622 = vmatprep.subr.mxu0 0.0
  %2623 = vmatpush2.msra.mxu0 0.0
  %2624 = vmatprep.subr.mxu0 0.0
  %2625 = vmatpush2.msra.mxu0 0.0
  %2626 = vmatprep.mubr.f32.mxu0 0.0
  %2627 = vmatmul.mubr.f32.gmra.mxu0 %v2557
  %v2628 = vpop.f32.mrf.mxu0
  %v2629 = vadd.f32 0.0, %v2628
  %v2630 = vpop.f32.mrf.mxu0
  %2631 = vmatprep.mubr.f32.mxu0 0.0
  %2632 = vmatmul.mubr.f32.gmra.mxu0 %v2560
  %v2633 = vpop.f32.mrf.mxu0
  %v2634 = vadd.f32 0.0, %v2633
  %v2635 = vpop.f32.mrf.mxu0
  %2636 = vdwg.mxu0
  %v2638 = vlaneseq
  %v2639 = vshrl.u32 %v2638, 7
  %v2640 = vsub.s32 0, %v2639
  %v2641 = vrot.slane %v2552, %v2640
  %v2643 = vadd.f32 %v2641, %v2629
  %v2644 = vadd.f32 %v2641, %v2634
  %s2645 = scalar_lea.vmem %s5, 16
  %v2646 = vld [vmem:[%s2645] sm:$0xff]
  %v2647 = vld [vmem:[%s2645 + $0x8] sm:$0xff]
  %v2649 = vsel %vm2555, %v2436, 0
  %v2652 = vsel %vm2555, %v2437, 0
  %2654 = vmatprep.subr.mxu0 0.0
  %2655 = vmatpush1.msra.mxu0 0.0
  %2656 = vmatprep.subr.mxu0 0.0
  %2657 = vmatpush1.msra.mxu0 0.0
  %2658 = vmatprep.subr.mxu0 0.0
  %2659 = vmatpush1.msra.mxu0 0.0
  %2660 = vmatprep.subr.mxu0 0.0
  %2661 = vmatpush1.msra.mxu0 0.0
  %2662 = vmatprep.subr.mxu0 0.0
  %2663 = vmatpush1.msra.mxu0 0.0
  %2664 = vmatprep.subr.mxu0 0.0
  %2665 = vmatpush1.msra.mxu0 0.0
  %2666 = vmatprep.subr.mxu0 0.0
  %2667 = vmatpush1.msra.mxu0 0.0
  %2668 = vmatprep.subr.mxu0 0.0
  %2669 = vmatpush1.msra.mxu0 0.0
  %2670 = vmatprep.subr.mxu0 0.0
  %2671 = vmatpush1.msra.mxu0 0.0
  %2672 = vmatprep.subr.mxu0 0.0
  %2673 = vmatpush1.msra.mxu0 0.0
  %2674 = vmatprep.subr.mxu0 0.0
  %2675 = vmatpush1.msra.mxu0 0.0
  %2676 = vmatprep.subr.mxu0 0.0
  %2677 = vmatpush1.msra.mxu0 0.0
  %2678 = vmatprep.subr.mxu0 0.0
  %2679 = vmatpush1.msra.mxu0 0.0
  %2680 = vmatprep.subr.mxu0 0.0
  %2681 = vmatpush1.msra.mxu0 0.0
  %2682 = vmatprep.subr.mxu0 0.0
  %2683 = vmatpush1.msra.mxu0 %v2647
  %2684 = vmatprep.subr.mxu0 0.0
  %2685 = vmatpush1.msra.mxu0 %v2646
  %2686 = vmatprep.subr.mxu0 0.0
  %2687 = vmatpush2.msra.mxu0 0.0
  %2688 = vmatprep.subr.mxu0 0.0
  %2689 = vmatpush2.msra.mxu0 0.0
  %2690 = vmatprep.subr.mxu0 0.0
  %2691 = vmatpush2.msra.mxu0 0.0
  %2692 = vmatprep.subr.mxu0 0.0
  %2693 = vmatpush2.msra.mxu0 0.0
  %2694 = vmatprep.subr.mxu0 0.0
  %2695 = vmatpush2.msra.mxu0 0.0
  %2696 = vmatprep.subr.mxu0 0.0
  %2697 = vmatpush2.msra.mxu0 0.0
  %2698 = vmatprep.subr.mxu0 0.0
  %2699 = vmatpush2.msra.mxu0 0.0
  %2700 = vmatprep.subr.mxu0 0.0
  %2701 = vmatpush2.msra.mxu0 0.0
  %2702 = vmatprep.subr.mxu0 0.0
  %2703 = vmatpush2.msra.mxu0 0.0
  %2704 = vmatprep.subr.mxu0 0.0
  %2705 = vmatpush2.msra.mxu0 0.0
  %2706 = vmatprep.subr.mxu0 0.0
  %2707 = vmatpush2.msra.mxu0 0.0
  %2708 = vmatprep.subr.mxu0 0.0
  %2709 = vmatpush2.msra.mxu0 0.0
  %2710 = vmatprep.subr.mxu0 0.0
  %2711 = vmatpush2.msra.mxu0 0.0
  %2712 = vmatprep.subr.mxu0 0.0
  %2713 = vmatpush2.msra.mxu0 0.0
  %2714 = vmatprep.subr.mxu0 0.0
  %2715 = vmatpush2.msra.mxu0 0.0
  %2716 = vmatprep.subr.mxu0 0.0
  %2717 = vmatpush2.msra.mxu0 0.0
  %2718 = vmatprep.mubr.f32.mxu0 0.0
  %2719 = vmatmul.mubr.f32.gmra.mxu0 %v2649
  %v2720 = vpop.f32.mrf.mxu0
  %v2721 = vadd.f32 0.0, %v2720
  %v2722 = vpop.f32.mrf.mxu0
  %2723 = vmatprep.mubr.f32.mxu0 0.0
  %2724 = vmatmul.mubr.f32.gmra.mxu0 %v2652
  %v2725 = vpop.f32.mrf.mxu0
  %v2726 = vadd.f32 0.0, %v2725
  %v2727 = vpop.f32.mrf.mxu0
  %2728 = vdwg.mxu0
  %v2729 = vadd.f32 %v2643, %v2721
  %v2730 = vadd.f32 %v2644, %v2726
  %s2731 = scalar_lea.vmem %s5, 32
  %v2732 = vld [vmem:[%s2731] sm:$0xff]
  %v2733 = vld [vmem:[%s2731 + $0x8] sm:$0xff]
  %v2735 = vsel %vm2555, %v2550, 0
  %v2738 = vsel %vm2555, %v2551, 0
  %2740 = vmatprep.subr.mxu0 0.0
  %2741 = vmatpush1.msra.mxu0 0.0
  %2742 = vmatprep.subr.mxu0 0.0
  %2743 = vmatpush1.msra.mxu0 0.0
  %2744 = vmatprep.subr.mxu0 0.0
  %2745 = vmatpush1.msra.mxu0 0.0
  %2746 = vmatprep.subr.mxu0 0.0
  %2747 = vmatpush1.msra.mxu0 0.0
  %2748 = vmatprep.subr.mxu0 0.0
  %2749 = vmatpush1.msra.mxu0 0.0
  %2750 = vmatprep.subr.mxu0 0.0
  %2751 = vmatpush1.msra.mxu0 0.0
  %2752 = vmatprep.subr.mxu0 0.0
  %2753 = vmatpush1.msra.mxu0 0.0
  %2754 = vmatprep.subr.mxu0 0.0
  %2755 = vmatpush1.msra.mxu0 0.0
  %2756 = vmatprep.subr.mxu0 0.0
  %2757 = vmatpush1.msra.mxu0 0.0
  %2758 = vmatprep.subr.mxu0 0.0
  %2759 = vmatpush1.msra.mxu0 0.0
  %2760 = vmatprep.subr.mxu0 0.0
  %2761 = vmatpush1.msra.mxu0 0.0
  %2762 = vmatprep.subr.mxu0 0.0
  %2763 = vmatpush1.msra.mxu0 0.0
  %2764 = vmatprep.subr.mxu0 0.0
  %2765 = vmatpush1.msra.mxu0 0.0
  %2766 = vmatprep.subr.mxu0 0.0
  %2767 = vmatpush1.msra.mxu0 0.0
  %2768 = vmatprep.subr.mxu0 0.0
  %2769 = vmatpush1.msra.mxu0 %v2733
  %2770 = vmatprep.subr.mxu0 0.0
  %2771 = vmatpush1.msra.mxu0 %v2732
  %2772 = vmatprep.subr.mxu0 0.0
  %2773 = vmatpush2.msra.mxu0 0.0
  %2774 = vmatprep.subr.mxu0 0.0
  %2775 = vmatpush2.msra.mxu0 0.0
  %2776 = vmatprep.subr.mxu0 0.0
  %2777 = vmatpush2.msra.mxu0 0.0
  %2778 = vmatprep.subr.mxu0 0.0
  %2779 = vmatpush2.msra.mxu0 0.0
  %2780 = vmatprep.subr.mxu0 0.0
  %2781 = vmatpush2.msra.mxu0 0.0
  %2782 = vmatprep.subr.mxu0 0.0
  %2783 = vmatpush2.msra.mxu0 0.0
  %2784 = vmatprep.subr.mxu0 0.0
  %2785 = vmatpush2.msra.mxu0 0.0
  %2786 = vmatprep.subr.mxu0 0.0
  %2787 = vmatpush2.msra.mxu0 0.0
  %2788 = vmatprep.subr.mxu0 0.0
  %2789 = vmatpush2.msra.mxu0 0.0
  %2790 = vmatprep.subr.mxu0 0.0
  %2791 = vmatpush2.msra.mxu0 0.0
  %2792 = vmatprep.subr.mxu0 0.0
  %2793 = vmatpush2.msra.mxu0 0.0
  %2794 = vmatprep.subr.mxu0 0.0
  %2795 = vmatpush2.msra.mxu0 0.0
  %2796 = vmatprep.subr.mxu0 0.0
  %2797 = vmatpush2.msra.mxu0 0.0
  %2798 = vmatprep.subr.mxu0 0.0
  %2799 = vmatpush2.msra.mxu0 0.0
  %2800 = vmatprep.subr.mxu0 0.0
  %2801 = vmatpush2.msra.mxu0 0.0
  %2802 = vmatprep.subr.mxu0 0.0
  %2803 = vmatpush2.msra.mxu0 0.0
  %2804 = vmatprep.mubr.f32.mxu0 0.0
  %2805 = vmatmul.mubr.f32.gmra.mxu0 %v2735
  %v2806 = vpop.f32.mrf.mxu0
  %v2807 = vadd.f32 0.0, %v2806
  %v2808 = vpop.f32.mrf.mxu0
  %2809 = vmatprep.mubr.f32.mxu0 0.0
  %2810 = vmatmul.mubr.f32.gmra.mxu0 %v2738
  %v2811 = vpop.f32.mrf.mxu0
  %v2812 = vadd.f32 0.0, %v2811
  %v2813 = vpop.f32.mrf.mxu0
  %2814 = vdwg.mxu0
  %v2815 = vadd.f32 %v2729, %v2807
  %v2816 = vadd.f32 %v2730, %v2812
  %v2817 = vmax.f32 %v2815, 0.0
  %v2818 = vmax.f32 %v2816, 0.0
  %2820 = vset.pattern.permute.xlu0 0
  %2821 = vperm.xlu0 %2820, %v495
  %v2822 = vpop.permute.xlu0 %2821
  %2825 = vset.pattern.permute.xlu0 0
  %2826 = vperm.xlu0 %2825, %v496
  %v2827 = vpop.permute.xlu0 %2826
  %v2829 = vmul.f32 %v2817, %v2822
  %v2830 = vmul.f32 %v2818, %v2827
  %v2831 = vld [vmem:[%s7] sm:$0xff]
  %v2832 = vld [vmem:[%s7 + $0x8] sm:$0xff]
  %v2833 = vld [vmem:[%s7 + $0x10] sm:$0xff]
  %v2834 = vld [vmem:[%s7 + $0x18] sm:$0xff]
  %v2835 = vld [vmem:[%s7 + $0x20] sm:$0xff]
  %v2836 = vld [vmem:[%s7 + $0x28] sm:$0xff]
  %v2837 = vld [vmem:[%s7 + $0x30] sm:$0xff]
  %v2838 = vld [vmem:[%s7 + $0x38] sm:$0xff]
  %v2839 = vld [vmem:[%s9] sm:$0x3]
  %v2841 = vlaneseq
  %v2842 = vshrl.u32 %v2841, 7
  %v2843 = vsub.s32 0, %v2842
  %v2844 = vrot.slane %v2839, %v2843
  %v2845 = vlaneseq
  %v2846 = vshrl.u32 %v2845, 7
  %v2847 = vsub.s32 1, %v2846
  %v2848 = vrot.slane %v2839, %v2847
  %v2852 = vsel %vm501, %v2829, 0
  %v2855 = vsel %vm501, %v2830, 0
  %2857 = vmatprep.subr.mxu0 0.0
  %2858 = vmatpush1.msra.mxu0 0.0
  %2859 = vmatprep.subr.mxu0 0.0
  %2860 = vmatpush1.msra.mxu0 0.0
  %2861 = vmatprep.subr.mxu0 0.0
  %2862 = vmatpush1.msra.mxu0 0.0
  %2863 = vmatprep.subr.mxu0 0.0
  %2864 = vmatpush1.msra.mxu0 0.0
  %2865 = vmatprep.subr.mxu0 0.0
  %2866 = vmatpush1.msra.mxu0 0.0
  %2867 = vmatprep.subr.mxu0 0.0
  %2868 = vmatpush1.msra.mxu0 0.0
  %2869 = vmatprep.subr.mxu0 0.0
  %2870 = vmatpush1.msra.mxu0 0.0
  %2871 = vmatprep.subr.mxu0 0.0
  %2872 = vmatpush1.msra.mxu0 0.0
  %2873 = vmatprep.subr.mxu0 0.0
  %2874 = vmatpush1.msra.mxu0 0.0
  %2875 = vmatprep.subr.mxu0 0.0
  %2876 = vmatpush1.msra.mxu0 0.0
  %2877 = vmatprep.subr.mxu0 0.0
  %2878 = vmatpush1.msra.mxu0 0.0
  %2879 = vmatprep.subr.mxu0 0.0
  %2880 = vmatpush1.msra.mxu0 0.0
  %2881 = vmatprep.subr.mxu0 %v2838
  %2882 = vmatpush1.msra.mxu0 %v2837
  %2883 = vmatprep.subr.mxu0 %v2836
  %2884 = vmatpush1.msra.mxu0 %v2835
  %2885 = vmatprep.subr.mxu0 %v2834
  %2886 = vmatpush1.msra.mxu0 %v2833
  %2887 = vmatprep.subr.mxu0 %v2832
  %2888 = vmatpush1.msra.mxu0 %v2831
  %2889 = vmatprep.subr.mxu0 0.0
  %2890 = vmatpush2.msra.mxu0 0.0
  %2891 = vmatprep.subr.mxu0 0.0
  %2892 = vmatpush2.msra.mxu0 0.0
  %2893 = vmatprep.subr.mxu0 0.0
  %2894 = vmatpush2.msra.mxu0 0.0
  %2895 = vmatprep.subr.mxu0 0.0
  %2896 = vmatpush2.msra.mxu0 0.0
  %2897 = vmatprep.subr.mxu0 0.0
  %2898 = vmatpush2.msra.mxu0 0.0
  %2899 = vmatprep.subr.mxu0 0.0
  %2900 = vmatpush2.msra.mxu0 0.0
  %2901 = vmatprep.subr.mxu0 0.0
  %2902 = vmatpush2.msra.mxu0 0.0
  %2903 = vmatprep.subr.mxu0 0.0
  %2904 = vmatpush2.msra.mxu0 0.0
  %2905 = vmatprep.subr.mxu0 0.0
  %2906 = vmatpush2.msra.mxu0 0.0
  %2907 = vmatprep.subr.mxu0 0.0
  %2908 = vmatpush2.msra.mxu0 0.0
  %2909 = vmatprep.subr.mxu0 0.0
  %2910 = vmatpush2.msra.mxu0 0.0
  %2911 = vmatprep.subr.mxu0 0.0
  %2912 = vmatpush2.msra.mxu0 0.0
  %2913 = vmatprep.subr.mxu0 0.0
  %2914 = vmatpush2.msra.mxu0 0.0
  %2915 = vmatprep.subr.mxu0 0.0
  %2916 = vmatpush2.msra.mxu0 0.0
  %2917 = vmatprep.subr.mxu0 0.0
  %2918 = vmatpush2.msra.mxu0 0.0
  %2919 = vmatprep.subr.mxu0 0.0
  %2920 = vmatpush2.msra.mxu0 0.0
  %2921 = vmatprep.mubr.f32.mxu0 0.0
  %2922 = vmatmul.mubr.f32.gmra.mxu0 %v2852
  %v2923 = vpop.f32.mrf.mxu0
  %v2924 = vadd.f32 %v2844, %v2923
  %v2925 = vpop.f32.mrf.mxu0
  %v2926 = vadd.f32 %v2848, %v2925
  %2927 = vmatprep.mubr.f32.mxu0 0.0
  %2928 = vmatmul.mubr.f32.gmra.mxu0 %v2855
  %v2929 = vpop.f32.mrf.mxu0
  %v2930 = vadd.f32 %v2844, %v2929
  %v2931 = vpop.f32.mrf.mxu0
  %v2932 = vadd.f32 %v2848, %v2931
  %2933 = vdwg.mxu0
  %v2934 = vld [vmem:[%s8] sm:$0xff]
  %v2935 = vld [vmem:[%s8 + $0x8] sm:$0xff]
  %v2936 = vld [vmem:[%s8 + $0x10] sm:$0xff]
  %v2937 = vld [vmem:[%s8 + $0x18] sm:$0xff]
  %v2938 = vld [vmem:[%s8 + $0x20] sm:$0xff]
  %v2939 = vld [vmem:[%s8 + $0x28] sm:$0xff]
  %v2940 = vld [vmem:[%s8 + $0x30] sm:$0xff]
  %v2941 = vld [vmem:[%s8 + $0x38] sm:$0xff]
  %v2943 = vsel %vm501, 0.0, 0
  %2945 = vmatprep.subr.mxu0 0.0
  %2946 = vmatpush1.msra.mxu0 0.0
  %2947 = vmatprep.subr.mxu0 0.0
  %2948 = vmatpush1.msra.mxu0 0.0
  %2949 = vmatprep.subr.mxu0 0.0
  %2950 = vmatpush1.msra.mxu0 0.0
  %2951 = vmatprep.subr.mxu0 0.0
  %2952 = vmatpush1.msra.mxu0 0.0
  %2953 = vmatprep.subr.mxu0 0.0
  %2954 = vmatpush1.msra.mxu0 0.0
  %2955 = vmatprep.subr.mxu0 0.0
  %2956 = vmatpush1.msra.mxu0 0.0
  %2957 = vmatprep.subr.mxu0 0.0
  %2958 = vmatpush1.msra.mxu0 0.0
  %2959 = vmatprep.subr.mxu0 0.0
  %2960 = vmatpush1.msra.mxu0 0.0
  %2961 = vmatprep.subr.mxu0 0.0
  %2962 = vmatpush1.msra.mxu0 0.0
  %2963 = vmatprep.subr.mxu0 0.0
  %2964 = vmatpush1.msra.mxu0 0.0
  %2965 = vmatprep.subr.mxu0 0.0
  %2966 = vmatpush1.msra.mxu0 0.0
  %2967 = vmatprep.subr.mxu0 0.0
  %2968 = vmatpush1.msra.mxu0 0.0
  %2969 = vmatprep.subr.mxu0 %v2941
  %2970 = vmatpush1.msra.mxu0 %v2940
  %2971 = vmatprep.subr.mxu0 %v2939
  %2972 = vmatpush1.msra.mxu0 %v2938
  %2973 = vmatprep.subr.mxu0 %v2937
  %2974 = vmatpush1.msra.mxu0 %v2936
  %2975 = vmatprep.subr.mxu0 %v2935
  %2976 = vmatpush1.msra.mxu0 %v2934
  %2977 = vmatprep.subr.mxu0 0.0
  %2978 = vmatpush2.msra.mxu0 0.0
  %2979 = vmatprep.subr.mxu0 0.0
  %2980 = vmatpush2.msra.mxu0 0.0
  %2981 = vmatprep.subr.mxu0 0.0
  %2982 = vmatpush2.msra.mxu0 0.0
  %2983 = vmatprep.subr.mxu0 0.0
  %2984 = vmatpush2.msra.mxu0 0.0
  %2985 = vmatprep.subr.mxu0 0.0
  %2986 = vmatpush2.msra.mxu0 0.0
  %2987 = vmatprep.subr.mxu0 0.0
  %2988 = vmatpush2.msra.mxu0 0.0
  %2989 = vmatprep.subr.mxu0 0.0
  %2990 = vmatpush2.msra.mxu0 0.0
  %2991 = vmatprep.subr.mxu0 0.0
  %2992 = vmatpush2.msra.mxu0 0.0
  %2993 = vmatprep.subr.mxu0 0.0
  %2994 = vmatpush2.msra.mxu0 0.0
  %2995 = vmatprep.subr.mxu0 0.0
  %2996 = vmatpush2.msra.mxu0 0.0
  %2997 = vmatprep.subr.mxu0 0.0
  %2998 = vmatpush2.msra.mxu0 0.0
  %2999 = vmatprep.subr.mxu0 0.0
  %3000 = vmatpush2.msra.mxu0 0.0
  %3001 = vmatprep.subr.mxu0 0.0
  %3002 = vmatpush2.msra.mxu0 0.0
  %3003 = vmatprep.subr.mxu0 0.0
  %3004 = vmatpush2.msra.mxu0 0.0
  %3005 = vmatprep.subr.mxu0 0.0
  %3006 = vmatpush2.msra.mxu0 0.0
  %3007 = vmatprep.subr.mxu0 0.0
  %3008 = vmatpush2.msra.mxu0 0.0
  %3009 = vmatprep.mubr.f32.mxu0 0.0
  %3010 = vmatmul.mubr.f32.gmra.mxu0 %v2943
  %v3011 = vpop.f32.mrf.mxu0
  %v3012 = vadd.f32 0.0, %v3011
  %v3013 = vpop.f32.mrf.mxu0
  %v3014 = vadd.f32 0.0, %v3013
  %3015 = vdwg.mxu0
  %v3016 = vadd.f32 %v2924, %v3012
  %v3018 = vrot.slane %v3014, 4
  %v3020 = vadd.f32 %v2932, %v3018
  %v3022 = vrot.slane %v3020, 4
  %v3024 = vsel %vm306, %v3016, %v3022
  %v3025 = vxor.u32 %v3024, 2147483648
  %v3026 = vmul.f32 %v3025, 1.442695
  %v3027 = vpow.pop %v3026
  %v3028 = vadd.f32 %v3027, 1.0
  %v3029 = vrcp.pop %v3028
  %v3030 = vmul.f32 1.0, %v3029
  %v3031 = vtanh.pop %v3024
  %v3032 = vmul.f32 %v3030, 0.0
  %3034 = vrot.lane.b32.xlu0 %v3031, 64
  %v3035 = vpop.permute.xlu0 %3034
  %v3037 = vmul.f32 %v3030, %v3035
  %3039 = vrot.lane.b32.xlu0 %v3037, 32
  %v3040 = vpop.permute.xlu0 %3039
  %v3042 = vadd.f32 %v3032, %v3040
  %v3043 = vtanh.pop %v3042
  %3045 = vrot.lane.b32.xlu0 %v3043, 64
  %v3046 = vpop.permute.xlu0 %3045
  %v3048 = vmul.f32 %v3030, %v3046
  %3050 = vrot.lane.b32.xlu0 %v3048, 32
  %v3051 = vpop.permute.xlu0 %3050
  %vm3053 = vcmask 254976
  %3054 = vst.msk [vmem:[#allocation2] sm:$0x3] %vm3053, %v3051
  %vm3055 = vcmask 257026
  %3056 = vst.msk [vmem:[#allocation3 + $0xc] sm:$0xc] %vm3055, %v3051
  %v3057 = vsel %vm501, %v3051, 0
  %3059 = vmatprep.subr.mxu0 0.0
  %3060 = vmatpush1.msra.mxu0 0.0
  %3061 = vmatprep.subr.mxu0 0.0
  %3062 = vmatpush1.msra.mxu0 0.0
  %3063 = vmatprep.subr.mxu0 0.0
  %3064 = vmatpush1.msra.mxu0 0.0
  %3065 = vmatprep.subr.mxu0 0.0
  %3066 = vmatpush1.msra.mxu0 0.0
  %3067 = vmatprep.subr.mxu0 0.0
  %3068 = vmatpush1.msra.mxu0 0.0
  %3069 = vmatprep.subr.mxu0 0.0
  %3070 = vmatpush1.msra.mxu0 0.0
  %3071 = vmatprep.subr.mxu0 0.0
  %3072 = vmatpush1.msra.mxu0 0.0
  %3073 = vmatprep.subr.mxu0 0.0
  %3074 = vmatpush1.msra.mxu0 0.0
  %3075 = vmatprep.subr.mxu0 0.0
  %3076 = vmatpush1.msra.mxu0 0.0
  %3077 = vmatprep.subr.mxu0 0.0
  %3078 = vmatpush1.msra.mxu0 0.0
  %3079 = vmatprep.subr.mxu0 0.0
  %3080 = vmatpush1.msra.mxu0 0.0
  %3081 = vmatprep.subr.mxu0 0.0
  %3082 = vmatpush1.msra.mxu0 0.0
  %3083 = vmatprep.subr.mxu0 %v2941
  %3084 = vmatpush1.msra.mxu0 %v2940
  %3085 = vmatprep.subr.mxu0 %v2939
  %3086 = vmatpush1.msra.mxu0 %v2938
  %3087 = vmatprep.subr.mxu0 %v2937
  %3088 = vmatpush1.msra.mxu0 %v2936
  %3089 = vmatprep.subr.mxu0 %v2935
  %3090 = vmatpush1.msra.mxu0 %v2934
  %3091 = vmatprep.subr.mxu0 0.0
  %3092 = vmatpush2.msra.mxu0 0.0
  %3093 = vmatprep.subr.mxu0 0.0
  %3094 = vmatpush2.msra.mxu0 0.0
  %3095 = vmatprep.subr.mxu0 0.0
  %3096 = vmatpush2.msra.mxu0 0.0
  %3097 = vmatprep.subr.mxu0 0.0
  %3098 = vmatpush2.msra.mxu0 0.0
  %3099 = vmatprep.subr.mxu0 0.0
  %3100 = vmatpush2.msra.mxu0 0.0
  %3101 = vmatprep.subr.mxu0 0.0
  %3102 = vmatpush2.msra.mxu0 0.0
  %3103 = vmatprep.subr.mxu0 0.0
  %3104 = vmatpush2.msra.mxu0 0.0
  %3105 = vmatprep.subr.mxu0 0.0
  %3106 = vmatpush2.msra.mxu0 0.0
  %3107 = vmatprep.subr.mxu0 0.0
  %3108 = vmatpush2.msra.mxu0 0.0
  %3109 = vmatprep.subr.mxu0 0.0
  %3110 = vmatpush2.msra.mxu0 0.0
  %3111 = vmatprep.subr.mxu0 0.0
  %3112 = vmatpush2.msra.mxu0 0.0
  %3113 = vmatprep.subr.mxu0 0.0
  %3114 = vmatpush2.msra.mxu0 0.0
  %3115 = vmatprep.subr.mxu0 0.0
  %3116 = vmatpush2.msra.mxu0 0.0
  %3117 = vmatprep.subr.mxu0 0.0
  %3118 = vmatpush2.msra.mxu0 0.0
  %3119 = vmatprep.subr.mxu0 0.0
  %3120 = vmatpush2.msra.mxu0 0.0
  %3121 = vmatprep.subr.mxu0 0.0
  %3122 = vmatpush2.msra.mxu0 0.0
  %3123 = vmatprep.mubr.f32.mxu0 0.0
  %3124 = vmatmul.mubr.f32.gmra.mxu0 %v3057
  %v3125 = vpop.f32.mrf.mxu0
  %v3126 = vadd.f32 0.0, %v3125
  %v3127 = vpop.f32.mrf.mxu0
  %v3128 = vadd.f32 0.0, %v3127
  %3129 = vdwg.mxu0
  %v3131 = vrot.slane %v3126, 6
  %v3133 = vadd.f32 %v2924, %v3131
  %v3135 = vrot.slane %v3128, 6
  %v3137 = vadd.f32 %v2932, %v3135
  %v3139 = vrot.slane %v3133, 2
  %v3142 = vrot.slane %v3137, 2
  %v3144 = vsel %vm306, %v3139, %v3142
  %v3145 = vxor.u32 %v3144, 2147483648
  %v3146 = vmul.f32 %v3145, 1.442695
  %v3147 = vpow.pop %v3146
  %v3148 = vadd.f32 %v3147, 1.0
  %v3149 = vrcp.pop %v3148
  %v3150 = vmul.f32 1.0, %v3149
  %v3151 = vtanh.pop %v3144
  %v3152 = vmul.f32 %v3150, %v3042
  %3154 = vrot.lane.b32.xlu0 %v3151, 64
  %v3155 = vpop.permute.xlu0 %3154
  %v3157 = vmul.f32 %v3150, %v3155
  %3159 = vrot.lane.b32.xlu0 %v3157, 32
  %v3160 = vpop.permute.xlu0 %3159
  %v3162 = vadd.f32 %v3152, %v3160
  %v3163 = vtanh.pop %v3162
  %3165 = vrot.lane.b32.xlu0 %v3163, 64
  %v3166 = vpop.permute.xlu0 %3165
  %v3168 = vmul.f32 %v3150, %v3166
  %3170 = vrot.lane.b32.xlu0 %v3168, 32
  %v3171 = vpop.permute.xlu0 %3170
  %3173 = vst.msk [vmem:[#allocation2 + $0x2] sm:$0x3] %vm3053, %v3171
  %3174 = vst.msk [vmem:[#allocation3 + $0xa] sm:$0xc] %vm3055, %v3171
  %v3175 = vsel %vm501, %v3171, 0
  %3177 = vmatprep.subr.mxu0 0.0
  %3178 = vmatpush1.msra.mxu0 0.0
  %3179 = vmatprep.subr.mxu0 0.0
  %3180 = vmatpush1.msra.mxu0 0.0
  %3181 = vmatprep.subr.mxu0 0.0
  %3182 = vmatpush1.msra.mxu0 0.0
  %3183 = vmatprep.subr.mxu0 0.0
  %3184 = vmatpush1.msra.mxu0 0.0
  %3185 = vmatprep.subr.mxu0 0.0
  %3186 = vmatpush1.msra.mxu0 0.0
  %3187 = vmatprep.subr.mxu0 0.0
  %3188 = vmatpush1.msra.mxu0 0.0
  %3189 = vmatprep.subr.mxu0 0.0
  %3190 = vmatpush1.msra.mxu0 0.0
  %3191 = vmatprep.subr.mxu0 0.0
  %3192 = vmatpush1.msra.mxu0 0.0
  %3193 = vmatprep.subr.mxu0 0.0
  %3194 = vmatpush1.msra.mxu0 0.0
  %3195 = vmatprep.subr.mxu0 0.0
  %3196 = vmatpush1.msra.mxu0 0.0
  %3197 = vmatprep.subr.mxu0 0.0
  %3198 = vmatpush1.msra.mxu0 0.0
  %3199 = vmatprep.subr.mxu0 0.0
  %3200 = vmatpush1.msra.mxu0 0.0
  %3201 = vmatprep.subr.mxu0 %v2941
  %3202 = vmatpush1.msra.mxu0 %v2940
  %3203 = vmatprep.subr.mxu0 %v2939
  %3204 = vmatpush1.msra.mxu0 %v2938
  %3205 = vmatprep.subr.mxu0 %v2937
  %3206 = vmatpush1.msra.mxu0 %v2936
  %3207 = vmatprep.subr.mxu0 %v2935
  %3208 = vmatpush1.msra.mxu0 %v2934
  %3209 = vmatprep.subr.mxu0 0.0
  %3210 = vmatpush2.msra.mxu0 0.0
  %3211 = vmatprep.subr.mxu0 0.0
  %3212 = vmatpush2.msra.mxu0 0.0
  %3213 = vmatprep.subr.mxu0 0.0
  %3214 = vmatpush2.msra.mxu0 0.0
  %3215 = vmatprep.subr.mxu0 0.0
  %3216 = vmatpush2.msra.mxu0 0.0
  %3217 = vmatprep.subr.mxu0 0.0
  %3218 = vmatpush2.msra.mxu0 0.0
  %3219 = vmatprep.subr.mxu0 0.0
  %3220 = vmatpush2.msra.mxu0 0.0
  %3221 = vmatprep.subr.mxu0 0.0
  %3222 = vmatpush2.msra.mxu0 0.0
  %3223 = vmatprep.subr.mxu0 0.0
  %3224 = vmatpush2.msra.mxu0 0.0
  %3225 = vmatprep.subr.mxu0 0.0
  %3226 = vmatpush2.msra.mxu0 0.0
  %3227 = vmatprep.subr.mxu0 0.0
  %3228 = vmatpush2.msra.mxu0 0.0
  %3229 = vmatprep.subr.mxu0 0.0
  %3230 = vmatpush2.msra.mxu0 0.0
  %3231 = vmatprep.subr.mxu0 0.0
  %3232 = vmatpush2.msra.mxu0 0.0
  %3233 = vmatprep.subr.mxu0 0.0
  %3234 = vmatpush2.msra.mxu0 0.0
  %3235 = vmatprep.subr.mxu0 0.0
  %3236 = vmatpush2.msra.mxu0 0.0
  %3237 = vmatprep.subr.mxu0 0.0
  %3238 = vmatpush2.msra.mxu0 0.0
  %3239 = vmatprep.subr.mxu0 0.0
  %3240 = vmatpush2.msra.mxu0 0.0
  %3241 = vmatprep.mubr.f32.mxu0 0.0
  %3242 = vmatmul.mubr.f32.gmra.mxu0 %v3175
  %v3243 = vpop.f32.mrf.mxu0
  %v3244 = vadd.f32 0.0, %v3243
  %v3245 = vpop.f32.mrf.mxu0
  %v3246 = vadd.f32 0.0, %v3245
  %3247 = vdwg.mxu0
  %v3249 = vrot.slane %v3244, 4
  %v3251 = vadd.f32 %v2924, %v3249
  %v3252 = vadd.f32 %v2932, %v3246
  %v3254 = vrot.slane %v3251, 4
  %v3256 = vsel %vm306, %v3254, %v3252
  %v3257 = vxor.u32 %v3256, 2147483648
  %v3258 = vmul.f32 %v3257, 1.442695
  %v3259 = vpow.pop %v3258
  %v3260 = vadd.f32 %v3259, 1.0
  %v3261 = vrcp.pop %v3260
  %v3262 = vmul.f32 1.0, %v3261
  %v3263 = vtanh.pop %v3256
  %v3264 = vmul.f32 %v3262, %v3162
  %3266 = vrot.lane.b32.xlu0 %v3263, 64
  %v3267 = vpop.permute.xlu0 %3266
  %v3269 = vmul.f32 %v3262, %v3267
  %3271 = vrot.lane.b32.xlu0 %v3269, 32
  %v3272 = vpop.permute.xlu0 %3271
  %v3274 = vadd.f32 %v3264, %v3272
  %v3275 = vtanh.pop %v3274
  %3277 = vrot.lane.b32.xlu0 %v3275, 64
  %v3278 = vpop.permute.xlu0 %3277
  %v3280 = vmul.f32 %v3262, %v3278
  %3282 = vrot.lane.b32.xlu0 %v3280, 32
  %v3283 = vpop.permute.xlu0 %3282
  %3285 = vst.msk [vmem:[#allocation2 + $0x4] sm:$0x3] %vm3053, %v3283
  %3286 = vst.msk [vmem:[#allocation3 + $0x8] sm:$0xc] %vm3055, %v3283
  %v3287 = vsel %vm501, %v3283, 0
  %3289 = vmatprep.subr.mxu0 0.0
  %3290 = vmatpush1.msra.mxu0 0.0
  %3291 = vmatprep.subr.mxu0 0.0
  %3292 = vmatpush1.msra.mxu0 0.0
  %3293 = vmatprep.subr.mxu0 0.0
  %3294 = vmatpush1.msra.mxu0 0.0
  %3295 = vmatprep.subr.mxu0 0.0
  %3296 = vmatpush1.msra.mxu0 0.0
  %3297 = vmatprep.subr.mxu0 0.0
  %3298 = vmatpush1.msra.mxu0 0.0
  %3299 = vmatprep.subr.mxu0 0.0
  %3300 = vmatpush1.msra.mxu0 0.0
  %3301 = vmatprep.subr.mxu0 0.0
  %3302 = vmatpush1.msra.mxu0 0.0
  %3303 = vmatprep.subr.mxu0 0.0
  %3304 = vmatpush1.msra.mxu0 0.0
  %3305 = vmatprep.subr.mxu0 0.0
  %3306 = vmatpush1.msra.mxu0 0.0
  %3307 = vmatprep.subr.mxu0 0.0
  %3308 = vmatpush1.msra.mxu0 0.0
  %3309 = vmatprep.subr.mxu0 0.0
  %3310 = vmatpush1.msra.mxu0 0.0
  %3311 = vmatprep.subr.mxu0 0.0
  %3312 = vmatpush1.msra.mxu0 0.0
  %3313 = vmatprep.subr.mxu0 %v2941
  %3314 = vmatpush1.msra.mxu0 %v2940
  %3315 = vmatprep.subr.mxu0 %v2939
  %3316 = vmatpush1.msra.mxu0 %v2938
  %3317 = vmatprep.subr.mxu0 %v2937
  %3318 = vmatpush1.msra.mxu0 %v2936
  %3319 = vmatprep.subr.mxu0 %v2935
  %3320 = vmatpush1.msra.mxu0 %v2934
  %3321 = vmatprep.subr.mxu0 0.0
  %3322 = vmatpush2.msra.mxu0 0.0
  %3323 = vmatprep.subr.mxu0 0.0
  %3324 = vmatpush2.msra.mxu0 0.0
  %3325 = vmatprep.subr.mxu0 0.0
  %3326 = vmatpush2.msra.mxu0 0.0
  %3327 = vmatprep.subr.mxu0 0.0
  %3328 = vmatpush2.msra.mxu0 0.0
  %3329 = vmatprep.subr.mxu0 0.0
  %3330 = vmatpush2.msra.mxu0 0.0
  %3331 = vmatprep.subr.mxu0 0.0
  %3332 = vmatpush2.msra.mxu0 0.0
  %3333 = vmatprep.subr.mxu0 0.0
  %3334 = vmatpush2.msra.mxu0 0.0
  %3335 = vmatprep.subr.mxu0 0.0
  %3336 = vmatpush2.msra.mxu0 0.0
  %3337 = vmatprep.subr.mxu0 0.0
  %3338 = vmatpush2.msra.mxu0 0.0
  %3339 = vmatprep.subr.mxu0 0.0
  %3340 = vmatpush2.msra.mxu0 0.0
  %3341 = vmatprep.subr.mxu0 0.0
  %3342 = vmatpush2.msra.mxu0 0.0
  %3343 = vmatprep.subr.mxu0 0.0
  %3344 = vmatpush2.msra.mxu0 0.0
  %3345 = vmatprep.subr.mxu0 0.0
  %3346 = vmatpush2.msra.mxu0 0.0
  %3347 = vmatprep.subr.mxu0 0.0
  %3348 = vmatpush2.msra.mxu0 0.0
  %3349 = vmatprep.subr.mxu0 0.0
  %3350 = vmatpush2.msra.mxu0 0.0
  %3351 = vmatprep.subr.mxu0 0.0
  %3352 = vmatpush2.msra.mxu0 0.0
  %3353 = vmatprep.mubr.f32.mxu0 0.0
  %3354 = vmatmul.mubr.f32.gmra.mxu0 %v3287
  %v3355 = vpop.f32.mrf.mxu0
  %v3356 = vadd.f32 0.0, %v3355
  %v3357 = vpop.f32.mrf.mxu0
  %v3358 = vadd.f32 0.0, %v3357
  %3359 = vdwg.mxu0
  %v3361 = vrot.slane %v3356, 2
  %v3363 = vadd.f32 %v2924, %v3361
  %v3365 = vrot.slane %v3358, 2
  %v3367 = vadd.f32 %v2932, %v3365
  %v3369 = vrot.slane %v3363, 6
  %v3372 = vrot.slane %v3367, 6
  %v3374 = vsel %vm306, %v3369, %v3372
  %v3375 = vxor.u32 %v3374, 2147483648
  %v3376 = vmul.f32 %v3375, 1.442695
  %v3377 = vpow.pop %v3376
  %v3378 = vadd.f32 %v3377, 1.0
  %v3379 = vrcp.pop %v3378
  %v3380 = vmul.f32 1.0, %v3379
  %v3381 = vtanh.pop %v3374
  %v3382 = vmul.f32 %v3380, %v3274
  %3384 = vrot.lane.b32.xlu0 %v3381, 64
  %v3385 = vpop.permute.xlu0 %3384
  %v3387 = vmul.f32 %v3380, %v3385
  %3389 = vrot.lane.b32.xlu0 %v3387, 32
  %v3390 = vpop.permute.xlu0 %3389
  %v3392 = vadd.f32 %v3382, %v3390
  %v3393 = vtanh.pop %v3392
  %3395 = vrot.lane.b32.xlu0 %v3393, 64
  %v3396 = vpop.permute.xlu0 %3395
  %v3398 = vmul.f32 %v3380, %v3396
  %3400 = vrot.lane.b32.xlu0 %v3398, 32
  %v3401 = vpop.permute.xlu0 %3400
  %3403 = vst.msk [vmem:[#allocation2 + $0x6] sm:$0x3] %vm3053, %v3401
  %3404 = vst.msk [vmem:[#allocation3 + $0x6] sm:$0xc] %vm3055, %v3401
  %v3405 = vsel %vm501, %v3401, 0
  %3407 = vmatprep.subr.mxu0 0.0
  %3408 = vmatpush1.msra.mxu0 0.0
  %3409 = vmatprep.subr.mxu0 0.0
  %3410 = vmatpush1.msra.mxu0 0.0
  %3411 = vmatprep.subr.mxu0 0.0
  %3412 = vmatpush1.msra.mxu0 0.0
  %3413 = vmatprep.subr.mxu0 0.0
  %3414 = vmatpush1.msra.mxu0 0.0
  %3415 = vmatprep.subr.mxu0 0.0
  %3416 = vmatpush1.msra.mxu0 0.0
  %3417 = vmatprep.subr.mxu0 0.0
  %3418 = vmatpush1.msra.mxu0 0.0
  %3419 = vmatprep.subr.mxu0 0.0
  %3420 = vmatpush1.msra.mxu0 0.0
  %3421 = vmatprep.subr.mxu0 0.0
  %3422 = vmatpush1.msra.mxu0 0.0
  %3423 = vmatprep.subr.mxu0 0.0
  %3424 = vmatpush1.msra.mxu0 0.0
  %3425 = vmatprep.subr.mxu0 0.0
  %3426 = vmatpush1.msra.mxu0 0.0
  %3427 = vmatprep.subr.mxu0 0.0
  %3428 = vmatpush1.msra.mxu0 0.0
  %3429 = vmatprep.subr.mxu0 0.0
  %3430 = vmatpush1.msra.mxu0 0.0
  %3431 = vmatprep.subr.mxu0 %v2941
  %3432 = vmatpush1.msra.mxu0 %v2940
  %3433 = vmatprep.subr.mxu0 %v2939
  %3434 = vmatpush1.msra.mxu0 %v2938
  %3435 = vmatprep.subr.mxu0 %v2937
  %3436 = vmatpush1.msra.mxu0 %v2936
  %3437 = vmatprep.subr.mxu0 %v2935
  %3438 = vmatpush1.msra.mxu0 %v2934
  %3439 = vmatprep.subr.mxu0 0.0
  %3440 = vmatpush2.msra.mxu0 0.0
  %3441 = vmatprep.subr.mxu0 0.0
  %3442 = vmatpush2.msra.mxu0 0.0
  %3443 = vmatprep.subr.mxu0 0.0
  %3444 = vmatpush2.msra.mxu0 0.0
  %3445 = vmatprep.subr.mxu0 0.0
  %3446 = vmatpush2.msra.mxu0 0.0
  %3447 = vmatprep.subr.mxu0 0.0
  %3448 = vmatpush2.msra.mxu0 0.0
  %3449 = vmatprep.subr.mxu0 0.0
  %3450 = vmatpush2.msra.mxu0 0.0
  %3451 = vmatprep.subr.mxu0 0.0
  %3452 = vmatpush2.msra.mxu0 0.0
  %3453 = vmatprep.subr.mxu0 0.0
  %3454 = vmatpush2.msra.mxu0 0.0
  %3455 = vmatprep.subr.mxu0 0.0
  %3456 = vmatpush2.msra.mxu0 0.0
  %3457 = vmatprep.subr.mxu0 0.0
  %3458 = vmatpush2.msra.mxu0 0.0
  %3459 = vmatprep.subr.mxu0 0.0
  %3460 = vmatpush2.msra.mxu0 0.0
  %3461 = vmatprep.subr.mxu0 0.0
  %3462 = vmatpush2.msra.mxu0 0.0
  %3463 = vmatprep.subr.mxu0 0.0
  %3464 = vmatpush2.msra.mxu0 0.0
  %3465 = vmatprep.subr.mxu0 0.0
  %3466 = vmatpush2.msra.mxu0 0.0
  %3467 = vmatprep.subr.mxu0 0.0
  %3468 = vmatpush2.msra.mxu0 0.0
  %3469 = vmatprep.subr.mxu0 0.0
  %3470 = vmatpush2.msra.mxu0 0.0
  %3471 = vmatprep.mubr.f32.mxu0 0.0
  %3472 = vmatmul.mubr.f32.gmra.mxu0 %v3405
  %v3473 = vpop.f32.mrf.mxu0
  %v3474 = vadd.f32 0.0, %v3473
  %v3475 = vpop.f32.mrf.mxu0
  %v3476 = vadd.f32 0.0, %v3475
  %3477 = vdwg.mxu0
  %v3478 = vadd.f32 %v2930, %v3474
  %v3480 = vrot.slane %v3476, 4
  %v3482 = vadd.f32 %v2926, %v3480
  %v3484 = vrot.slane %v3482, 4
  %v3486 = vsel %vm306, %v3478, %v3484
  %v3487 = vxor.u32 %v3486, 2147483648
  %v3488 = vmul.f32 %v3487, 1.442695
  %v3489 = vpow.pop %v3488
  %v3490 = vadd.f32 %v3489, 1.0
  %v3491 = vrcp.pop %v3490
  %v3492 = vmul.f32 1.0, %v3491
  %v3493 = vtanh.pop %v3486
  %v3494 = vmul.f32 %v3492, %v3392
  %3496 = vrot.lane.b32.xlu0 %v3493, 64
  %v3497 = vpop.permute.xlu0 %3496
  %v3499 = vmul.f32 %v3492, %v3497
  %3501 = vrot.lane.b32.xlu0 %v3499, 32
  %v3502 = vpop.permute.xlu0 %3501
  %v3504 = vadd.f32 %v3494, %v3502
  %v3505 = vtanh.pop %v3504
  %3507 = vrot.lane.b32.xlu0 %v3505, 64
  %v3508 = vpop.permute.xlu0 %3507
  %v3510 = vmul.f32 %v3492, %v3508
  %3512 = vrot.lane.b32.xlu0 %v3510, 32
  %v3513 = vpop.permute.xlu0 %3512
  %3515 = vst.msk [vmem:[#allocation2 + $0x8] sm:$0x3] %vm3053, %v3513
  %3516 = vst.msk [vmem:[#allocation3 + $0x4] sm:$0xc] %vm3055, %v3513
  %v3517 = vsel %vm501, %v3513, 0
  %3519 = vmatprep.subr.mxu0 0.0
  %3520 = vmatpush1.msra.mxu0 0.0
  %3521 = vmatprep.subr.mxu0 0.0
  %3522 = vmatpush1.msra.mxu0 0.0
  %3523 = vmatprep.subr.mxu0 0.0
  %3524 = vmatpush1.msra.mxu0 0.0
  %3525 = vmatprep.subr.mxu0 0.0
  %3526 = vmatpush1.msra.mxu0 0.0
  %3527 = vmatprep.subr.mxu0 0.0
  %3528 = vmatpush1.msra.mxu0 0.0
  %3529 = vmatprep.subr.mxu0 0.0
  %3530 = vmatpush1.msra.mxu0 0.0
  %3531 = vmatprep.subr.mxu0 0.0
  %3532 = vmatpush1.msra.mxu0 0.0
  %3533 = vmatprep.subr.mxu0 0.0
  %3534 = vmatpush1.msra.mxu0 0.0
  %3535 = vmatprep.subr.mxu0 0.0
  %3536 = vmatpush1.msra.mxu0 0.0
  %3537 = vmatprep.subr.mxu0 0.0
  %3538 = vmatpush1.msra.mxu0 0.0
  %3539 = vmatprep.subr.mxu0 0.0
  %3540 = vmatpush1.msra.mxu0 0.0
  %3541 = vmatprep.subr.mxu0 0.0
  %3542 = vmatpush1.msra.mxu0 0.0
  %3543 = vmatprep.subr.mxu0 %v2941
  %3544 = vmatpush1.msra.mxu0 %v2940
  %3545 = vmatprep.subr.mxu0 %v2939
  %3546 = vmatpush1.msra.mxu0 %v2938
  %3547 = vmatprep.subr.mxu0 %v2937
  %3548 = vmatpush1.msra.mxu0 %v2936
  %3549 = vmatprep.subr.mxu0 %v2935
  %3550 = vmatpush1.msra.mxu0 %v2934
  %3551 = vmatprep.subr.mxu0 0.0
  %3552 = vmatpush2.msra.mxu0 0.0
  %3553 = vmatprep.subr.mxu0 0.0
  %3554 = vmatpush2.msra.mxu0 0.0
  %3555 = vmatprep.subr.mxu0 0.0
  %3556 = vmatpush2.msra.mxu0 0.0
  %3557 = vmatprep.subr.mxu0 0.0
  %3558 = vmatpush2.msra.mxu0 0.0
  %3559 = vmatprep.subr.mxu0 0.0
  %3560 = vmatpush2.msra.mxu0 0.0
  %3561 = vmatprep.subr.mxu0 0.0
  %3562 = vmatpush2.msra.mxu0 0.0
  %3563 = vmatprep.subr.mxu0 0.0
  %3564 = vmatpush2.msra.mxu0 0.0
  %3565 = vmatprep.subr.mxu0 0.0
  %3566 = vmatpush2.msra.mxu0 0.0
  %3567 = vmatprep.subr.mxu0 0.0
  %3568 = vmatpush2.msra.mxu0 0.0
  %3569 = vmatprep.subr.mxu0 0.0
  %3570 = vmatpush2.msra.mxu0 0.0
  %3571 = vmatprep.subr.mxu0 0.0
  %3572 = vmatpush2.msra.mxu0 0.0
  %3573 = vmatprep.subr.mxu0 0.0
  %3574 = vmatpush2.msra.mxu0 0.0
  %3575 = vmatprep.subr.mxu0 0.0
  %3576 = vmatpush2.msra.mxu0 0.0
  %3577 = vmatprep.subr.mxu0 0.0
  %3578 = vmatpush2.msra.mxu0 0.0
  %3579 = vmatprep.subr.mxu0 0.0
  %3580 = vmatpush2.msra.mxu0 0.0
  %3581 = vmatprep.subr.mxu0 0.0
  %3582 = vmatpush2.msra.mxu0 0.0
  %3583 = vmatprep.mubr.f32.mxu0 0.0
  %3584 = vmatmul.mubr.f32.gmra.mxu0 %v3517
  %v3585 = vpop.f32.mrf.mxu0
  %v3586 = vadd.f32 0.0, %v3585
  %v3587 = vpop.f32.mrf.mxu0
  %v3588 = vadd.f32 0.0, %v3587
  %3589 = vdwg.mxu0
  %v3591 = vrot.slane %v3586, 6
  %v3593 = vadd.f32 %v2930, %v3591
  %v3595 = vrot.slane %v3588, 6
  %v3597 = vadd.f32 %v2926, %v3595
  %v3599 = vrot.slane %v3593, 2
  %v3602 = vrot.slane %v3597, 2
  %v3604 = vsel %vm306, %v3599, %v3602
  %v3605 = vxor.u32 %v3604, 2147483648
  %v3606 = vmul.f32 %v3605, 1.442695
  %v3607 = vpow.pop %v3606
  %v3608 = vadd.f32 %v3607, 1.0
  %v3609 = vrcp.pop %v3608
  %v3610 = vmul.f32 1.0, %v3609
  %v3611 = vtanh.pop %v3604
  %v3612 = vmul.f32 %v3610, %v3504
  %3614 = vrot.lane.b32.xlu0 %v3611, 64
  %v3615 = vpop.permute.xlu0 %3614
  %v3617 = vmul.f32 %v3610, %v3615
  %3619 = vrot.lane.b32.xlu0 %v3617, 32
  %v3620 = vpop.permute.xlu0 %3619
  %v3622 = vadd.f32 %v3612, %v3620
  %v3623 = vtanh.pop %v3622
  %3625 = vrot.lane.b32.xlu0 %v3623, 64
  %v3626 = vpop.permute.xlu0 %3625
  %v3628 = vmul.f32 %v3610, %v3626
  %3630 = vrot.lane.b32.xlu0 %v3628, 32
  %v3631 = vpop.permute.xlu0 %3630
  %3633 = vst.msk [vmem:[#allocation2 + $0xa] sm:$0x3] %vm3053, %v3631
  %3634 = vst.msk [vmem:[#allocation3 + $0x2] sm:$0xc] %vm3055, %v3631
  %v3635 = vsel %vm501, %v3631, 0
  %3637 = vmatprep.subr.mxu0 0.0
  %3638 = vmatpush1.msra.mxu0 0.0
  %3639 = vmatprep.subr.mxu0 0.0
  %3640 = vmatpush1.msra.mxu0 0.0
  %3641 = vmatprep.subr.mxu0 0.0
  %3642 = vmatpush1.msra.mxu0 0.0
  %3643 = vmatprep.subr.mxu0 0.0
  %3644 = vmatpush1.msra.mxu0 0.0
  %3645 = vmatprep.subr.mxu0 0.0
  %3646 = vmatpush1.msra.mxu0 0.0
  %3647 = vmatprep.subr.mxu0 0.0
  %3648 = vmatpush1.msra.mxu0 0.0
  %3649 = vmatprep.subr.mxu0 0.0
  %3650 = vmatpush1.msra.mxu0 0.0
  %3651 = vmatprep.subr.mxu0 0.0
  %3652 = vmatpush1.msra.mxu0 0.0
  %3653 = vmatprep.subr.mxu0 0.0
  %3654 = vmatpush1.msra.mxu0 0.0
  %3655 = vmatprep.subr.mxu0 0.0
  %3656 = vmatpush1.msra.mxu0 0.0
  %3657 = vmatprep.subr.mxu0 0.0
  %3658 = vmatpush1.msra.mxu0 0.0
  %3659 = vmatprep.subr.mxu0 0.0
  %3660 = vmatpush1.msra.mxu0 0.0
  %3661 = vmatprep.subr.mxu0 %v2941
  %3662 = vmatpush1.msra.mxu0 %v2940
  %3663 = vmatprep.subr.mxu0 %v2939
  %3664 = vmatpush1.msra.mxu0 %v2938
  %3665 = vmatprep.subr.mxu0 %v2937
  %3666 = vmatpush1.msra.mxu0 %v2936
  %3667 = vmatprep.subr.mxu0 %v2935
  %3668 = vmatpush1.msra.mxu0 %v2934
  %3669 = vmatprep.subr.mxu0 0.0
  %3670 = vmatpush2.msra.mxu0 0.0
  %3671 = vmatprep.subr.mxu0 0.0
  %3672 = vmatpush2.msra.mxu0 0.0
  %3673 = vmatprep.subr.mxu0 0.0
  %3674 = vmatpush2.msra.mxu0 0.0
  %3675 = vmatprep.subr.mxu0 0.0
  %3676 = vmatpush2.msra.mxu0 0.0
  %3677 = vmatprep.subr.mxu0 0.0
  %3678 = vmatpush2.msra.mxu0 0.0
  %3679 = vmatprep.subr.mxu0 0.0
  %3680 = vmatpush2.msra.mxu0 0.0
  %3681 = vmatprep.subr.mxu0 0.0
  %3682 = vmatpush2.msra.mxu0 0.0
  %3683 = vmatprep.subr.mxu0 0.0
  %3684 = vmatpush2.msra.mxu0 0.0
  %3685 = vmatprep.subr.mxu0 0.0
  %3686 = vmatpush2.msra.mxu0 0.0
  %3687 = vmatprep.subr.mxu0 0.0
  %3688 = vmatpush2.msra.mxu0 0.0
  %3689 = vmatprep.subr.mxu0 0.0
  %3690 = vmatpush2.msra.mxu0 0.0
  %3691 = vmatprep.subr.mxu0 0.0
  %3692 = vmatpush2.msra.mxu0 0.0
  %3693 = vmatprep.subr.mxu0 0.0
  %3694 = vmatpush2.msra.mxu0 0.0
  %3695 = vmatprep.subr.mxu0 0.0
  %3696 = vmatpush2.msra.mxu0 0.0
  %3697 = vmatprep.subr.mxu0 0.0
  %3698 = vmatpush2.msra.mxu0 0.0
  %3699 = vmatprep.subr.mxu0 0.0
  %3700 = vmatpush2.msra.mxu0 0.0
  %3701 = vmatprep.mubr.f32.mxu0 0.0
  %3702 = vmatmul.mubr.f32.gmra.mxu0 %v3635
  %v3703 = vpop.f32.mrf.mxu0
  %v3704 = vadd.f32 0.0, %v3703
  %v3705 = vpop.f32.mrf.mxu0
  %v3706 = vadd.f32 0.0, %v3705
  %3707 = vdwg.mxu0
  %v3709 = vrot.slane %v3704, 4
  %v3711 = vadd.f32 %v2930, %v3709
  %v3712 = vadd.f32 %v2926, %v3706
  %v3714 = vrot.slane %v3711, 4
  %v3716 = vsel %vm306, %v3714, %v3712
  %v3717 = vxor.u32 %v3716, 2147483648
  %v3718 = vmul.f32 %v3717, 1.442695
  %v3719 = vpow.pop %v3718
  %v3720 = vadd.f32 %v3719, 1.0
  %v3721 = vrcp.pop %v3720
  %v3722 = vmul.f32 1.0, %v3721
  %v3723 = vtanh.pop %v3716
  %v3724 = vmul.f32 %v3722, %v3622
  %3726 = vrot.lane.b32.xlu0 %v3723, 64
  %v3727 = vpop.permute.xlu0 %3726
  %v3729 = vmul.f32 %v3722, %v3727
  %3731 = vrot.lane.b32.xlu0 %v3729, 32
  %v3732 = vpop.permute.xlu0 %3731
  %v3734 = vadd.f32 %v3724, %v3732
  %v3735 = vtanh.pop %v3734
  %3737 = vrot.lane.b32.xlu0 %v3735, 64
  %v3738 = vpop.permute.xlu0 %3737
  %v3740 = vmul.f32 %v3722, %v3738
  %3742 = vrot.lane.b32.xlu0 %v3740, 32
  %v3743 = vpop.permute.xlu0 %3742
  %3745 = vst.msk [vmem:[#allocation2 + $0xc] sm:$0x3] %vm3053, %v3743
  %3746 = vst.msk [vmem:[#allocation3] sm:$0xc] %vm3055, %v3743
  %v3747 = vsel %vm501, %v3743, 0
  %3749 = vmatprep.subr.mxu0 0.0
  %3750 = vmatpush1.msra.mxu0 0.0
  %3751 = vmatprep.subr.mxu0 0.0
  %3752 = vmatpush1.msra.mxu0 0.0
  %3753 = vmatprep.subr.mxu0 0.0
  %3754 = vmatpush1.msra.mxu0 0.0
  %3755 = vmatprep.subr.mxu0 0.0
  %3756 = vmatpush1.msra.mxu0 0.0
  %3757 = vmatprep.subr.mxu0 0.0
  %3758 = vmatpush1.msra.mxu0 0.0
  %3759 = vmatprep.subr.mxu0 0.0
  %3760 = vmatpush1.msra.mxu0 0.0
  %3761 = vmatprep.subr.mxu0 0.0
  %3762 = vmatpush1.msra.mxu0 0.0
  %3763 = vmatprep.subr.mxu0 0.0
  %3764 = vmatpush1.msra.mxu0 0.0
  %3765 = vmatprep.subr.mxu0 0.0
  %3766 = vmatpush1.msra.mxu0 0.0
  %3767 = vmatprep.subr.mxu0 0.0
  %3768 = vmatpush1.msra.mxu0 0.0
  %3769 = vmatprep.subr.mxu0 0.0
  %3770 = vmatpush1.msra.mxu0 0.0
  %3771 = vmatprep.subr.mxu0 0.0
  %3772 = vmatpush1.msra.mxu0 0.0
  %3773 = vmatprep.subr.mxu0 %v2941
  %3774 = vmatpush1.msra.mxu0 %v2940
  %3775 = vmatprep.subr.mxu0 %v2939
  %3776 = vmatpush1.msra.mxu0 %v2938
  %3777 = vmatprep.subr.mxu0 %v2937
  %3778 = vmatpush1.msra.mxu0 %v2936
  %3779 = vmatprep.subr.mxu0 %v2935
  %3780 = vmatpush1.msra.mxu0 %v2934
  %3781 = vmatprep.subr.mxu0 0.0
  %3782 = vmatpush2.msra.mxu0 0.0
  %3783 = vmatprep.subr.mxu0 0.0
  %3784 = vmatpush2.msra.mxu0 0.0
  %3785 = vmatprep.subr.mxu0 0.0
  %3786 = vmatpush2.msra.mxu0 0.0
  %3787 = vmatprep.subr.mxu0 0.0
  %3788 = vmatpush2.msra.mxu0 0.0
  %3789 = vmatprep.subr.mxu0 0.0
  %3790 = vmatpush2.msra.mxu0 0.0
  %3791 = vmatprep.subr.mxu0 0.0
  %3792 = vmatpush2.msra.mxu0 0.0
  %3793 = vmatprep.subr.mxu0 0.0
  %3794 = vmatpush2.msra.mxu0 0.0
  %3795 = vmatprep.subr.mxu0 0.0
  %3796 = vmatpush2.msra.mxu0 0.0
  %3797 = vmatprep.subr.mxu0 0.0
  %3798 = vmatpush2.msra.mxu0 0.0
  %3799 = vmatprep.subr.mxu0 0.0
  %3800 = vmatpush2.msra.mxu0 0.0
  %3801 = vmatprep.subr.mxu0 0.0
  %3802 = vmatpush2.msra.mxu0 0.0
  %3803 = vmatprep.subr.mxu0 0.0
  %3804 = vmatpush2.msra.mxu0 0.0
  %3805 = vmatprep.subr.mxu0 0.0
  %3806 = vmatpush2.msra.mxu0 0.0
  %3807 = vmatprep.subr.mxu0 0.0
  %3808 = vmatpush2.msra.mxu0 0.0
  %3809 = vmatprep.subr.mxu0 0.0
  %3810 = vmatpush2.msra.mxu0 0.0
  %3811 = vmatprep.subr.mxu0 0.0
  %3812 = vmatpush2.msra.mxu0 0.0
  %3813 = vmatprep.mubr.f32.mxu0 0.0
  %3814 = vmatmul.mubr.f32.gmra.mxu0 %v3747
  %v3815 = vpop.f32.mrf.mxu0
  %v3816 = vadd.f32 0.0, %v3815
  %v3817 = vpop.f32.mrf.mxu0
  %v3818 = vadd.f32 0.0, %v3817
  %3819 = vdwg.mxu0
  %v3821 = vrot.slane %v3816, 2
  %v3823 = vadd.f32 %v2930, %v3821
  %v3825 = vrot.slane %v3818, 2
  %v3827 = vadd.f32 %v2926, %v3825
  %v3829 = vrot.slane %v3823, 6
  %v3832 = vrot.slane %v3827, 6
  %v3834 = vsel %vm306, %v3829, %v3832
  %v3835 = vxor.u32 %v3834, 2147483648
  %v3836 = vmul.f32 %v3835, 1.442695
  %v3837 = vpow.pop %v3836
  %v3838 = vadd.f32 %v3837, 1.0
  %v3839 = vrcp.pop %v3838
  %v3840 = vmul.f32 1.0, %v3839
  %v3841 = vtanh.pop %v3834
  %v3842 = vmul.f32 %v3840, %v3734
  %3844 = vrot.lane.b32.xlu0 %v3841, 64
  %v3845 = vpop.permute.xlu0 %3844
  %v3847 = vmul.f32 %v3840, %v3845
  %3849 = vrot.lane.b32.xlu0 %v3847, 32
  %v3850 = vpop.permute.xlu0 %3849
  %v3852 = vadd.f32 %v3842, %v3850
  %v3853 = vtanh.pop %v3852
  %3855 = vrot.lane.b32.xlu0 %v3853, 64
  %v3856 = vpop.permute.xlu0 %3855
  %v3858 = vmul.f32 %v3840, %v3856
  %3860 = vrot.lane.b32.xlu0 %v3858, 32
  %v3861 = vpop.permute.xlu0 %3860
  %3863 = vst.msk [vmem:[#allocation2 + $0xe] sm:$0x3] %vm3053, %v3861
  %3864 = vst.msk [vmem:[#allocation3 - $0x2] sm:$0xc] %vm3055, %v3861
  %v3865 = vld [vmem:[#allocation2] sm:$0xff]
  %v3866 = vld [vmem:[#allocation2 + $0x8] sm:$0xff]
  %v3867 = vld [vmem:[#allocation3] sm:$0xff]
  %v3868 = vld [vmem:[#allocation3 + $0x8] sm:$0xff]
  %v3869 = vld [vmem:[%s10] sm:$0xff]
  %v3870 = vld [vmem:[%s10 + $0x8] sm:$0xff]
  %v3871 = vld [vmem:[%s10 + $0x10] sm:$0xff]
  %v3872 = vld [vmem:[%s10 + $0x18] sm:$0xff]
  %v3873 = vld [vmem:[%s10 + $0x20] sm:$0xff]
  %v3874 = vld [vmem:[%s10 + $0x28] sm:$0xff]
  %v3875 = vld [vmem:[%s10 + $0x30] sm:$0xff]
  %v3876 = vld [vmem:[%s10 + $0x38] sm:$0xff]
  %v3877 = vld [vmem:[%s10 + $0x40] sm:$0xff]
  %v3878 = vld [vmem:[%s10 + $0x48] sm:$0xff]
  %v3879 = vld [vmem:[%s10 + $0x50] sm:$0xff]
  %v3880 = vld [vmem:[%s10 + $0x58] sm:$0xff]
  %v3881 = vld [vmem:[%s10 + $0x60] sm:$0xff]
  %v3882 = vld [vmem:[%s10 + $0x68] sm:$0xff]
  %v3883 = vld [vmem:[%s10 + $0x70] sm:$0xff]
  %v3884 = vld [vmem:[%s10 + $0x78] sm:$0xff]
  %v3886 = vsel %vm501, %v3867, 0
  %v3889 = vsel %vm501, %v3868, 0
  %3891 = vmatprep.subr.mxu0 0.0
  %3892 = vmatpush1.msra.mxu0 0.0
  %3893 = vmatprep.subr.mxu0 0.0
  %3894 = vmatpush1.msra.mxu0 0.0
  %3895 = vmatprep.subr.mxu0 0.0
  %3896 = vmatpush1.msra.mxu0 0.0
  %3897 = vmatprep.subr.mxu0 0.0
  %3898 = vmatpush1.msra.mxu0 0.0
  %3899 = vmatprep.subr.mxu0 0.0
  %3900 = vmatpush1.msra.mxu0 0.0
  %3901 = vmatprep.subr.mxu0 0.0
  %3902 = vmatpush1.msra.mxu0 0.0
  %3903 = vmatprep.subr.mxu0 0.0
  %3904 = vmatpush1.msra.mxu0 0.0
  %3905 = vmatprep.subr.mxu0 0.0
  %3906 = vmatpush1.msra.mxu0 0.0
  %3907 = vmatprep.subr.mxu0 0.0
  %3908 = vmatpush1.msra.mxu0 0.0
  %3909 = vmatprep.subr.mxu0 0.0
  %3910 = vmatpush1.msra.mxu0 0.0
  %3911 = vmatprep.subr.mxu0 0.0
  %3912 = vmatpush1.msra.mxu0 0.0
  %3913 = vmatprep.subr.mxu0 0.0
  %3914 = vmatpush1.msra.mxu0 0.0
  %3915 = vmatprep.subr.mxu0 %v3884
  %3916 = vmatpush1.msra.mxu0 %v3883
  %3917 = vmatprep.subr.mxu0 %v3882
  %3918 = vmatpush1.msra.mxu0 %v3881
  %3919 = vmatprep.subr.mxu0 %v3880
  %3920 = vmatpush1.msra.mxu0 %v3879
  %3921 = vmatprep.subr.mxu0 %v3878
  %3922 = vmatpush1.msra.mxu0 %v3877
  %3923 = vmatprep.subr.mxu0 0.0
  %3924 = vmatpush2.msra.mxu0 0.0
  %3925 = vmatprep.subr.mxu0 0.0
  %3926 = vmatpush2.msra.mxu0 0.0
  %3927 = vmatprep.subr.mxu0 0.0
  %3928 = vmatpush2.msra.mxu0 0.0
  %3929 = vmatprep.subr.mxu0 0.0
  %3930 = vmatpush2.msra.mxu0 0.0
  %3931 = vmatprep.subr.mxu0 0.0
  %3932 = vmatpush2.msra.mxu0 0.0
  %3933 = vmatprep.subr.mxu0 0.0
  %3934 = vmatpush2.msra.mxu0 0.0
  %3935 = vmatprep.subr.mxu0 0.0
  %3936 = vmatpush2.msra.mxu0 0.0
  %3937 = vmatprep.subr.mxu0 0.0
  %3938 = vmatpush2.msra.mxu0 0.0
  %3939 = vmatprep.subr.mxu0 0.0
  %3940 = vmatpush2.msra.mxu0 0.0
  %3941 = vmatprep.subr.mxu0 0.0
  %3942 = vmatpush2.msra.mxu0 0.0
  %3943 = vmatprep.subr.mxu0 0.0
  %3944 = vmatpush2.msra.mxu0 0.0
  %3945 = vmatprep.subr.mxu0 0.0
  %3946 = vmatpush2.msra.mxu0 0.0
  %3947 = vmatprep.subr.mxu0 0.0
  %3948 = vmatpush2.msra.mxu0 0.0
  %3949 = vmatprep.subr.mxu0 0.0
  %3950 = vmatpush2.msra.mxu0 0.0
  %3951 = vmatprep.subr.mxu0 0.0
  %3952 = vmatpush2.msra.mxu0 0.0
  %3953 = vmatprep.subr.mxu0 0.0
  %3954 = vmatpush2.msra.mxu0 0.0
  %3955 = vmatprep.mubr.f32.mxu0 0.0
  %3956 = vmatmul.mubr.f32.gmra.mxu0 %v3886
  %v3957 = vpop.f32.mrf.mxu0
  %v3958 = vadd.f32 0.0, %v3957
  %v3959 = vpop.f32.mrf.mxu0
  %v3960 = vadd.f32 0.0, %v3959
  %3961 = vmatprep.mubr.f32.mxu0 0.0
  %3962 = vmatmul.mubr.f32.gmra.mxu0 %v3889
  %v3963 = vpop.f32.mrf.mxu0
  %v3964 = vadd.f32 0.0, %v3963
  %v3965 = vpop.f32.mrf.mxu0
  %v3966 = vadd.f32 0.0, %v3965
  %3967 = vdwg.mxu0
  %v3969 = vsel %vm501, %v3865, 0
  %v3972 = vsel %vm501, %v3866, 0
  %3974 = vmatprep.subr.mxu0 0.0
  %3975 = vmatpush1.msra.mxu0 0.0
  %3976 = vmatprep.subr.mxu0 0.0
  %3977 = vmatpush1.msra.mxu0 0.0
  %3978 = vmatprep.subr.mxu0 0.0
  %3979 = vmatpush1.msra.mxu0 0.0
  %3980 = vmatprep.subr.mxu0 0.0
  %3981 = vmatpush1.msra.mxu0 0.0
  %3982 = vmatprep.subr.mxu0 0.0
  %3983 = vmatpush1.msra.mxu0 0.0
  %3984 = vmatprep.subr.mxu0 0.0
  %3985 = vmatpush1.msra.mxu0 0.0
  %3986 = vmatprep.subr.mxu0 0.0
  %3987 = vmatpush1.msra.mxu0 0.0
  %3988 = vmatprep.subr.mxu0 0.0
  %3989 = vmatpush1.msra.mxu0 0.0
  %3990 = vmatprep.subr.mxu0 0.0
  %3991 = vmatpush1.msra.mxu0 0.0
  %3992 = vmatprep.subr.mxu0 0.0
  %3993 = vmatpush1.msra.mxu0 0.0
  %3994 = vmatprep.subr.mxu0 0.0
  %3995 = vmatpush1.msra.mxu0 0.0
  %3996 = vmatprep.subr.mxu0 0.0
  %3997 = vmatpush1.msra.mxu0 0.0
  %3998 = vmatprep.subr.mxu0 %v3876
  %3999 = vmatpush1.msra.mxu0 %v3875
  %4000 = vmatprep.subr.mxu0 %v3874
  %4001 = vmatpush1.msra.mxu0 %v3873
  %4002 = vmatprep.subr.mxu0 %v3872
  %4003 = vmatpush1.msra.mxu0 %v3871
  %4004 = vmatprep.subr.mxu0 %v3870
  %4005 = vmatpush1.msra.mxu0 %v3869
  %4006 = vmatprep.subr.mxu0 0.0
  %4007 = vmatpush2.msra.mxu0 0.0
  %4008 = vmatprep.subr.mxu0 0.0
  %4009 = vmatpush2.msra.mxu0 0.0
  %4010 = vmatprep.subr.mxu0 0.0
  %4011 = vmatpush2.msra.mxu0 0.0
  %4012 = vmatprep.subr.mxu0 0.0
  %4013 = vmatpush2.msra.mxu0 0.0
  %4014 = vmatprep.subr.mxu0 0.0
  %4015 = vmatpush2.msra.mxu0 0.0
  %4016 = vmatprep.subr.mxu0 0.0
  %4017 = vmatpush2.msra.mxu0 0.0
  %4018 = vmatprep.subr.mxu0 0.0
  %4019 = vmatpush2.msra.mxu0 0.0
  %4020 = vmatprep.subr.mxu0 0.0
  %4021 = vmatpush2.msra.mxu0 0.0
  %4022 = vmatprep.subr.mxu0 0.0
  %4023 = vmatpush2.msra.mxu0 0.0
  %4024 = vmatprep.subr.mxu0 0.0
  %4025 = vmatpush2.msra.mxu0 0.0
  %4026 = vmatprep.subr.mxu0 0.0
  %4027 = vmatpush2.msra.mxu0 0.0
  %4028 = vmatprep.subr.mxu0 0.0
  %4029 = vmatpush2.msra.mxu0 0.0
  %4030 = vmatprep.subr.mxu0 0.0
  %4031 = vmatpush2.msra.mxu0 0.0
  %4032 = vmatprep.subr.mxu0 0.0
  %4033 = vmatpush2.msra.mxu0 0.0
  %4034 = vmatprep.subr.mxu0 0.0
  %4035 = vmatpush2.msra.mxu0 0.0
  %4036 = vmatprep.subr.mxu0 0.0
  %4037 = vmatpush2.msra.mxu0 0.0
  %4038 = vmatprep.mubr.f32.mxu0 0.0
  %4039 = vmatmul.mubr.f32.gmra.mxu0 %v3969
  %v4040 = vpop.f32.mrf.mxu0
  %v4041 = vadd.f32 %v3958, %v4040
  %v4042 = vpop.f32.mrf.mxu0
  %v4043 = vadd.f32 %v3960, %v4042
  %4044 = vmatprep.mubr.f32.mxu0 0.0
  %4045 = vmatmul.mubr.f32.gmra.mxu0 %v3972
  %v4046 = vpop.f32.mrf.mxu0
  %v4047 = vadd.f32 %v3964, %v4046
  %v4048 = vpop.f32.mrf.mxu0
  %v4049 = vadd.f32 %v3966, %v4048
  %4050 = vdwg.mxu0
  %v4051 = vld [vmem:[%s12] sm:$0x3]
  %v4053 = vlaneseq
  %v4054 = vshrl.u32 %v4053, 7
  %v4055 = vsub.s32 0, %v4054
  %v4056 = vrot.slane %v4051, %v4055
  %v4057 = vlaneseq
  %v4058 = vshrl.u32 %v4057, 7
  %v4059 = vsub.s32 1, %v4058
  %v4060 = vrot.slane %v4051, %v4059
  %v4063 = vadd.f32 %v4041, %v4056
  %v4064 = vadd.f32 %v4043, %v4060
  %v4065 = vadd.f32 %v4047, %v4056
  %v4066 = vadd.f32 %v4049, %v4060
  %v4067 = vld [vmem:[%s11] sm:$0xff]
  %v4068 = vld [vmem:[%s11 + $0x8] sm:$0xff]
  %v4069 = vld [vmem:[%s11 + $0x10] sm:$0xff]
  %v4070 = vld [vmem:[%s11 + $0x18] sm:$0xff]
  %v4071 = vld [vmem:[%s11 + $0x20] sm:$0xff]
  %v4072 = vld [vmem:[%s11 + $0x28] sm:$0xff]
  %v4073 = vld [vmem:[%s11 + $0x30] sm:$0xff]
  %v4074 = vld [vmem:[%s11 + $0x38] sm:$0xff]
  %4075 = vmatprep.subr.mxu0 0.0
  %4076 = vmatpush1.msra.mxu0 0.0
  %4077 = vmatprep.subr.mxu0 0.0
  %4078 = vmatpush1.msra.mxu0 0.0
  %4079 = vmatprep.subr.mxu0 0.0
  %4080 = vmatpush1.msra.mxu0 0.0
  %4081 = vmatprep.subr.mxu0 0.0
  %4082 = vmatpush1.msra.mxu0 0.0
  %4083 = vmatprep.subr.mxu0 0.0
  %4084 = vmatpush1.msra.mxu0 0.0
  %4085 = vmatprep.subr.mxu0 0.0
  %4086 = vmatpush1.msra.mxu0 0.0
  %4087 = vmatprep.subr.mxu0 0.0
  %4088 = vmatpush1.msra.mxu0 0.0
  %4089 = vmatprep.subr.mxu0 0.0
  %4090 = vmatpush1.msra.mxu0 0.0
  %4091 = vmatprep.subr.mxu0 0.0
  %4092 = vmatpush1.msra.mxu0 0.0
  %4093 = vmatprep.subr.mxu0 0.0
  %4094 = vmatpush1.msra.mxu0 0.0
  %4095 = vmatprep.subr.mxu0 0.0
  %4096 = vmatpush1.msra.mxu0 0.0
  %4097 = vmatprep.subr.mxu0 0.0
  %4098 = vmatpush1.msra.mxu0 0.0
  %4099 = vmatprep.subr.mxu0 %v4074
  %4100 = vmatpush1.msra.mxu0 %v4073
  %4101 = vmatprep.subr.mxu0 %v4072
  %4102 = vmatpush1.msra.mxu0 %v4071
  %4103 = vmatprep.subr.mxu0 %v4070
  %4104 = vmatpush1.msra.mxu0 %v4069
  %4105 = vmatprep.subr.mxu0 %v4068
  %4106 = vmatpush1.msra.mxu0 %v4067
  %4107 = vmatprep.subr.mxu0 0.0
  %4108 = vmatpush2.msra.mxu0 0.0
  %4109 = vmatprep.subr.mxu0 0.0
  %4110 = vmatpush2.msra.mxu0 0.0
  %4111 = vmatprep.subr.mxu0 0.0
  %4112 = vmatpush2.msra.mxu0 0.0
  %4113 = vmatprep.subr.mxu0 0.0
  %4114 = vmatpush2.msra.mxu0 0.0
  %4115 = vmatprep.subr.mxu0 0.0
  %4116 = vmatpush2.msra.mxu0 0.0
  %4117 = vmatprep.subr.mxu0 0.0
  %4118 = vmatpush2.msra.mxu0 0.0
  %4119 = vmatprep.subr.mxu0 0.0
  %4120 = vmatpush2.msra.mxu0 0.0
  %4121 = vmatprep.subr.mxu0 0.0
  %4122 = vmatpush2.msra.mxu0 0.0
  %4123 = vmatprep.subr.mxu0 0.0
  %4124 = vmatpush2.msra.mxu0 0.0
  %4125 = vmatprep.subr.mxu0 0.0
  %4126 = vmatpush2.msra.mxu0 0.0
  %4127 = vmatprep.subr.mxu0 0.0
  %4128 = vmatpush2.msra.mxu0 0.0
  %4129 = vmatprep.subr.mxu0 0.0
  %4130 = vmatpush2.msra.mxu0 0.0
  %4131 = vmatprep.subr.mxu0 0.0
  %4132 = vmatpush2.msra.mxu0 0.0
  %4133 = vmatprep.subr.mxu0 0.0
  %4134 = vmatpush2.msra.mxu0 0.0
  %4135 = vmatprep.subr.mxu0 0.0
  %4136 = vmatpush2.msra.mxu0 0.0
  %4137 = vmatprep.subr.mxu0 0.0
  %4138 = vmatpush2.msra.mxu0 0.0
  %4139 = vmatprep.mubr.f32.mxu0 0.0
  %4140 = vmatmul.mubr.f32.gmra.mxu0 %v2943
  %v4141 = vpop.f32.mrf.mxu0
  %v4142 = vadd.f32 0.0, %v4141
  %v4143 = vpop.f32.mrf.mxu0
  %v4144 = vadd.f32 0.0, %v4143
  %4145 = vdwg.mxu0
  %v4146 = vadd.f32 %v4063, %v4142
  %v4148 = vrot.slane %v4144, 4
  %v4150 = vadd.f32 %v4066, %v4148
  %v4152 = vrot.slane %v4150, 4
  %v4154 = vsel %vm306, %v4146, %v4152
  %v4155 = vxor.u32 %v4154, 2147483648
  %v4156 = vmul.f32 %v4155, 1.442695
  %v4157 = vpow.pop %v4156
  %v4158 = vadd.f32 %v4157, 1.0
  %v4159 = vrcp.pop %v4158
  %v4160 = vmul.f32 1.0, %v4159
  %v4161 = vtanh.pop %v4154
  %v4162 = vmul.f32 %v4160, 0.0
  %4164 = vrot.lane.b32.xlu0 %v4161, 64
  %v4165 = vpop.permute.xlu0 %4164
  %v4167 = vmul.f32 %v4160, %v4165
  %4169 = vrot.lane.b32.xlu0 %v4167, 32
  %v4170 = vpop.permute.xlu0 %4169
  %v4172 = vadd.f32 %v4162, %v4170
  %v4173 = vtanh.pop %v4172
  %4175 = vrot.lane.b32.xlu0 %v4173, 64
  %v4176 = vpop.permute.xlu0 %4175
  %v4178 = vmul.f32 %v4160, %v4176
  %4180 = vrot.lane.b32.xlu0 %v4178, 32
  %v4181 = vpop.permute.xlu0 %4180
  %4183 = vst.msk [vmem:[#allocation4] sm:$0x3] %vm3053, %v4181
  %4184 = vst.msk [vmem:[#allocation5 + $0xc] sm:$0xc] %vm3055, %v4181
  %v4185 = vsel %vm501, %v4181, 0
  %4187 = vmatprep.subr.mxu0 0.0
  %4188 = vmatpush1.msra.mxu0 0.0
  %4189 = vmatprep.subr.mxu0 0.0
  %4190 = vmatpush1.msra.mxu0 0.0
  %4191 = vmatprep.subr.mxu0 0.0
  %4192 = vmatpush1.msra.mxu0 0.0
  %4193 = vmatprep.subr.mxu0 0.0
  %4194 = vmatpush1.msra.mxu0 0.0
  %4195 = vmatprep.subr.mxu0 0.0
  %4196 = vmatpush1.msra.mxu0 0.0
  %4197 = vmatprep.subr.mxu0 0.0
  %4198 = vmatpush1.msra.mxu0 0.0
  %4199 = vmatprep.subr.mxu0 0.0
  %4200 = vmatpush1.msra.mxu0 0.0
  %4201 = vmatprep.subr.mxu0 0.0
  %4202 = vmatpush1.msra.mxu0 0.0
  %4203 = vmatprep.subr.mxu0 0.0
  %4204 = vmatpush1.msra.mxu0 0.0
  %4205 = vmatprep.subr.mxu0 0.0
  %4206 = vmatpush1.msra.mxu0 0.0
  %4207 = vmatprep.subr.mxu0 0.0
  %4208 = vmatpush1.msra.mxu0 0.0
  %4209 = vmatprep.subr.mxu0 0.0
  %4210 = vmatpush1.msra.mxu0 0.0
  %4211 = vmatprep.subr.mxu0 %v4074
  %4212 = vmatpush1.msra.mxu0 %v4073
  %4213 = vmatprep.subr.mxu0 %v4072
  %4214 = vmatpush1.msra.mxu0 %v4071
  %4215 = vmatprep.subr.mxu0 %v4070
  %4216 = vmatpush1.msra.mxu0 %v4069
  %4217 = vmatprep.subr.mxu0 %v4068
  %4218 = vmatpush1.msra.mxu0 %v4067
  %4219 = vmatprep.subr.mxu0 0.0
  %4220 = vmatpush2.msra.mxu0 0.0
  %4221 = vmatprep.subr.mxu0 0.0
  %4222 = vmatpush2.msra.mxu0 0.0
  %4223 = vmatprep.subr.mxu0 0.0
  %4224 = vmatpush2.msra.mxu0 0.0
  %4225 = vmatprep.subr.mxu0 0.0
  %4226 = vmatpush2.msra.mxu0 0.0
  %4227 = vmatprep.subr.mxu0 0.0
  %4228 = vmatpush2.msra.mxu0 0.0
  %4229 = vmatprep.subr.mxu0 0.0
  %4230 = vmatpush2.msra.mxu0 0.0
  %4231 = vmatprep.subr.mxu0 0.0
  %4232 = vmatpush2.msra.mxu0 0.0
  %4233 = vmatprep.subr.mxu0 0.0
  %4234 = vmatpush2.msra.mxu0 0.0
  %4235 = vmatprep.subr.mxu0 0.0
  %4236 = vmatpush2.msra.mxu0 0.0
  %4237 = vmatprep.subr.mxu0 0.0
  %4238 = vmatpush2.msra.mxu0 0.0
  %4239 = vmatprep.subr.mxu0 0.0
  %4240 = vmatpush2.msra.mxu0 0.0
  %4241 = vmatprep.subr.mxu0 0.0
  %4242 = vmatpush2.msra.mxu0 0.0
  %4243 = vmatprep.subr.mxu0 0.0
  %4244 = vmatpush2.msra.mxu0 0.0
  %4245 = vmatprep.subr.mxu0 0.0
  %4246 = vmatpush2.msra.mxu0 0.0
  %4247 = vmatprep.subr.mxu0 0.0
  %4248 = vmatpush2.msra.mxu0 0.0
  %4249 = vmatprep.subr.mxu0 0.0
  %4250 = vmatpush2.msra.mxu0 0.0
  %4251 = vmatprep.mubr.f32.mxu0 0.0
  %4252 = vmatmul.mubr.f32.gmra.mxu0 %v4185
  %v4253 = vpop.f32.mrf.mxu0
  %v4254 = vadd.f32 0.0, %v4253
  %v4255 = vpop.f32.mrf.mxu0
  %v4256 = vadd.f32 0.0, %v4255
  %4257 = vdwg.mxu0
  %v4259 = vrot.slane %v4254, 6
  %v4261 = vadd.f32 %v4063, %v4259
  %v4263 = vrot.slane %v4256, 6
  %v4265 = vadd.f32 %v4066, %v4263
  %v4267 = vrot.slane %v4261, 2
  %v4270 = vrot.slane %v4265, 2
  %v4272 = vsel %vm306, %v4267, %v4270
  %v4273 = vxor.u32 %v4272, 2147483648
  %v4274 = vmul.f32 %v4273, 1.442695
  %v4275 = vpow.pop %v4274
  %v4276 = vadd.f32 %v4275, 1.0
  %v4277 = vrcp.pop %v4276
  %v4278 = vmul.f32 1.0, %v4277
  %v4279 = vtanh.pop %v4272
  %v4280 = vmul.f32 %v4278, %v4172
  %4282 = vrot.lane.b32.xlu0 %v4279, 64
  %v4283 = vpop.permute.xlu0 %4282
  %v4285 = vmul.f32 %v4278, %v4283
  %4287 = vrot.lane.b32.xlu0 %v4285, 32
  %v4288 = vpop.permute.xlu0 %4287
  %v4290 = vadd.f32 %v4280, %v4288
  %v4291 = vtanh.pop %v4290
  %4293 = vrot.lane.b32.xlu0 %v4291, 64
  %v4294 = vpop.permute.xlu0 %4293
  %v4296 = vmul.f32 %v4278, %v4294
  %4298 = vrot.lane.b32.xlu0 %v4296, 32
  %v4299 = vpop.permute.xlu0 %4298
  %4301 = vst.msk [vmem:[#allocation4 + $0x2] sm:$0x3] %vm3053, %v4299
  %4302 = vst.msk [vmem:[#allocation5 + $0xa] sm:$0xc] %vm3055, %v4299
  %v4303 = vsel %vm501, %v4299, 0
  %4305 = vmatprep.subr.mxu0 0.0
  %4306 = vmatpush1.msra.mxu0 0.0
  %4307 = vmatprep.subr.mxu0 0.0
  %4308 = vmatpush1.msra.mxu0 0.0
  %4309 = vmatprep.subr.mxu0 0.0
  %4310 = vmatpush1.msra.mxu0 0.0
  %4311 = vmatprep.subr.mxu0 0.0
  %4312 = vmatpush1.msra.mxu0 0.0
  %4313 = vmatprep.subr.mxu0 0.0
  %4314 = vmatpush1.msra.mxu0 0.0
  %4315 = vmatprep.subr.mxu0 0.0
  %4316 = vmatpush1.msra.mxu0 0.0
  %4317 = vmatprep.subr.mxu0 0.0
  %4318 = vmatpush1.msra.mxu0 0.0
  %4319 = vmatprep.subr.mxu0 0.0
  %4320 = vmatpush1.msra.mxu0 0.0
  %4321 = vmatprep.subr.mxu0 0.0
  %4322 = vmatpush1.msra.mxu0 0.0
  %4323 = vmatprep.subr.mxu0 0.0
  %4324 = vmatpush1.msra.mxu0 0.0
  %4325 = vmatprep.subr.mxu0 0.0
  %4326 = vmatpush1.msra.mxu0 0.0
  %4327 = vmatprep.subr.mxu0 0.0
  %4328 = vmatpush1.msra.mxu0 0.0
  %4329 = vmatprep.subr.mxu0 %v4074
  %4330 = vmatpush1.msra.mxu0 %v4073
  %4331 = vmatprep.subr.mxu0 %v4072
  %4332 = vmatpush1.msra.mxu0 %v4071
  %4333 = vmatprep.subr.mxu0 %v4070
  %4334 = vmatpush1.msra.mxu0 %v4069
  %4335 = vmatprep.subr.mxu0 %v4068
  %4336 = vmatpush1.msra.mxu0 %v4067
  %4337 = vmatprep.subr.mxu0 0.0
  %4338 = vmatpush2.msra.mxu0 0.0
  %4339 = vmatprep.subr.mxu0 0.0
  %4340 = vmatpush2.msra.mxu0 0.0
  %4341 = vmatprep.subr.mxu0 0.0
  %4342 = vmatpush2.msra.mxu0 0.0
  %4343 = vmatprep.subr.mxu0 0.0
  %4344 = vmatpush2.msra.mxu0 0.0
  %4345 = vmatprep.subr.mxu0 0.0
  %4346 = vmatpush2.msra.mxu0 0.0
  %4347 = vmatprep.subr.mxu0 0.0
  %4348 = vmatpush2.msra.mxu0 0.0
  %4349 = vmatprep.subr.mxu0 0.0
  %4350 = vmatpush2.msra.mxu0 0.0
  %4351 = vmatprep.subr.mxu0 0.0
  %4352 = vmatpush2.msra.mxu0 0.0
  %4353 = vmatprep.subr.mxu0 0.0
  %4354 = vmatpush2.msra.mxu0 0.0
  %4355 = vmatprep.subr.mxu0 0.0
  %4356 = vmatpush2.msra.mxu0 0.0
  %4357 = vmatprep.subr.mxu0 0.0
  %4358 = vmatpush2.msra.mxu0 0.0
  %4359 = vmatprep.subr.mxu0 0.0
  %4360 = vmatpush2.msra.mxu0 0.0
  %4361 = vmatprep.subr.mxu0 0.0
  %4362 = vmatpush2.msra.mxu0 0.0
  %4363 = vmatprep.subr.mxu0 0.0
  %4364 = vmatpush2.msra.mxu0 0.0
  %4365 = vmatprep.subr.mxu0 0.0
  %4366 = vmatpush2.msra.mxu0 0.0
  %4367 = vmatprep.subr.mxu0 0.0
  %4368 = vmatpush2.msra.mxu0 0.0
  %4369 = vmatprep.mubr.f32.mxu0 0.0
  %4370 = vmatmul.mubr.f32.gmra.mxu0 %v4303
  %v4371 = vpop.f32.mrf.mxu0
  %v4372 = vadd.f32 0.0, %v4371
  %v4373 = vpop.f32.mrf.mxu0
  %v4374 = vadd.f32 0.0, %v4373
  %4375 = vdwg.mxu0
  %v4377 = vrot.slane %v4372, 4
  %v4379 = vadd.f32 %v4063, %v4377
  %v4380 = vadd.f32 %v4066, %v4374
  %v4382 = vrot.slane %v4379, 4
  %v4384 = vsel %vm306, %v4382, %v4380
  %v4385 = vxor.u32 %v4384, 2147483648
  %v4386 = vmul.f32 %v4385, 1.442695
  %v4387 = vpow.pop %v4386
  %v4388 = vadd.f32 %v4387, 1.0
  %v4389 = vrcp.pop %v4388
  %v4390 = vmul.f32 1.0, %v4389
  %v4391 = vtanh.pop %v4384
  %v4392 = vmul.f32 %v4390, %v4290
  %4394 = vrot.lane.b32.xlu0 %v4391, 64
  %v4395 = vpop.permute.xlu0 %4394
  %v4397 = vmul.f32 %v4390, %v4395
  %4399 = vrot.lane.b32.xlu0 %v4397, 32
  %v4400 = vpop.permute.xlu0 %4399
  %v4402 = vadd.f32 %v4392, %v4400
  %v4403 = vtanh.pop %v4402
  %4405 = vrot.lane.b32.xlu0 %v4403, 64
  %v4406 = vpop.permute.xlu0 %4405
  %v4408 = vmul.f32 %v4390, %v4406
  %4410 = vrot.lane.b32.xlu0 %v4408, 32
  %v4411 = vpop.permute.xlu0 %4410
  %4413 = vst.msk [vmem:[#allocation4 + $0x4] sm:$0x3] %vm3053, %v4411
  %4414 = vst.msk [vmem:[#allocation5 + $0x8] sm:$0xc] %vm3055, %v4411
  %v4415 = vsel %vm501, %v4411, 0
  %4417 = vmatprep.subr.mxu0 0.0
  %4418 = vmatpush1.msra.mxu0 0.0
  %4419 = vmatprep.subr.mxu0 0.0
  %4420 = vmatpush1.msra.mxu0 0.0
  %4421 = vmatprep.subr.mxu0 0.0
  %4422 = vmatpush1.msra.mxu0 0.0
  %4423 = vmatprep.subr.mxu0 0.0
  %4424 = vmatpush1.msra.mxu0 0.0
  %4425 = vmatprep.subr.mxu0 0.0
  %4426 = vmatpush1.msra.mxu0 0.0
  %4427 = vmatprep.subr.mxu0 0.0
  %4428 = vmatpush1.msra.mxu0 0.0
  %4429 = vmatprep.subr.mxu0 0.0
  %4430 = vmatpush1.msra.mxu0 0.0
  %4431 = vmatprep.subr.mxu0 0.0
  %4432 = vmatpush1.msra.mxu0 0.0
  %4433 = vmatprep.subr.mxu0 0.0
  %4434 = vmatpush1.msra.mxu0 0.0
  %4435 = vmatprep.subr.mxu0 0.0
  %4436 = vmatpush1.msra.mxu0 0.0
  %4437 = vmatprep.subr.mxu0 0.0
  %4438 = vmatpush1.msra.mxu0 0.0
  %4439 = vmatprep.subr.mxu0 0.0
  %4440 = vmatpush1.msra.mxu0 0.0
  %4441 = vmatprep.subr.mxu0 %v4074
  %4442 = vmatpush1.msra.mxu0 %v4073
  %4443 = vmatprep.subr.mxu0 %v4072
  %4444 = vmatpush1.msra.mxu0 %v4071
  %4445 = vmatprep.subr.mxu0 %v4070
  %4446 = vmatpush1.msra.mxu0 %v4069
  %4447 = vmatprep.subr.mxu0 %v4068
  %4448 = vmatpush1.msra.mxu0 %v4067
  %4449 = vmatprep.subr.mxu0 0.0
  %4450 = vmatpush2.msra.mxu0 0.0
  %4451 = vmatprep.subr.mxu0 0.0
  %4452 = vmatpush2.msra.mxu0 0.0
  %4453 = vmatprep.subr.mxu0 0.0
  %4454 = vmatpush2.msra.mxu0 0.0
  %4455 = vmatprep.subr.mxu0 0.0
  %4456 = vmatpush2.msra.mxu0 0.0
  %4457 = vmatprep.subr.mxu0 0.0
  %4458 = vmatpush2.msra.mxu0 0.0
  %4459 = vmatprep.subr.mxu0 0.0
  %4460 = vmatpush2.msra.mxu0 0.0
  %4461 = vmatprep.subr.mxu0 0.0
  %4462 = vmatpush2.msra.mxu0 0.0
  %4463 = vmatprep.subr.mxu0 0.0
  %4464 = vmatpush2.msra.mxu0 0.0
  %4465 = vmatprep.subr.mxu0 0.0
  %4466 = vmatpush2.msra.mxu0 0.0
  %4467 = vmatprep.subr.mxu0 0.0
  %4468 = vmatpush2.msra.mxu0 0.0
  %4469 = vmatprep.subr.mxu0 0.0
  %4470 = vmatpush2.msra.mxu0 0.0
  %4471 = vmatprep.subr.mxu0 0.0
  %4472 = vmatpush2.msra.mxu0 0.0
  %4473 = vmatprep.subr.mxu0 0.0
  %4474 = vmatpush2.msra.mxu0 0.0
  %4475 = vmatprep.subr.mxu0 0.0
  %4476 = vmatpush2.msra.mxu0 0.0
  %4477 = vmatprep.subr.mxu0 0.0
  %4478 = vmatpush2.msra.mxu0 0.0
  %4479 = vmatprep.subr.mxu0 0.0
  %4480 = vmatpush2.msra.mxu0 0.0
  %4481 = vmatprep.mubr.f32.mxu0 0.0
  %4482 = vmatmul.mubr.f32.gmra.mxu0 %v4415
  %v4483 = vpop.f32.mrf.mxu0
  %v4484 = vadd.f32 0.0, %v4483
  %v4485 = vpop.f32.mrf.mxu0
  %v4486 = vadd.f32 0.0, %v4485
  %4487 = vdwg.mxu0
  %v4489 = vrot.slane %v4484, 2
  %v4491 = vadd.f32 %v4063, %v4489
  %v4493 = vrot.slane %v4486, 2
  %v4495 = vadd.f32 %v4066, %v4493
  %v4497 = vrot.slane %v4491, 6
  %v4500 = vrot.slane %v4495, 6
  %v4502 = vsel %vm306, %v4497, %v4500
  %v4503 = vxor.u32 %v4502, 2147483648
  %v4504 = vmul.f32 %v4503, 1.442695
  %v4505 = vpow.pop %v4504
  %v4506 = vadd.f32 %v4505, 1.0
  %v4507 = vrcp.pop %v4506
  %v4508 = vmul.f32 1.0, %v4507
  %v4509 = vtanh.pop %v4502
  %v4510 = vmul.f32 %v4508, %v4402
  %4512 = vrot.lane.b32.xlu0 %v4509, 64
  %v4513 = vpop.permute.xlu0 %4512
  %v4515 = vmul.f32 %v4508, %v4513
  %4517 = vrot.lane.b32.xlu0 %v4515, 32
  %v4518 = vpop.permute.xlu0 %4517
  %v4520 = vadd.f32 %v4510, %v4518
  %v4521 = vtanh.pop %v4520
  %4523 = vrot.lane.b32.xlu0 %v4521, 64
  %v4524 = vpop.permute.xlu0 %4523
  %v4526 = vmul.f32 %v4508, %v4524
  %4528 = vrot.lane.b32.xlu0 %v4526, 32
  %v4529 = vpop.permute.xlu0 %4528
  %4531 = vst.msk [vmem:[#allocation4 + $0x6] sm:$0x3] %vm3053, %v4529
  %4532 = vst.msk [vmem:[#allocation5 + $0x6] sm:$0xc] %vm3055, %v4529
  %v4533 = vsel %vm501, %v4529, 0
  %4535 = vmatprep.subr.mxu0 0.0
  %4536 = vmatpush1.msra.mxu0 0.0
  %4537 = vmatprep.subr.mxu0 0.0
  %4538 = vmatpush1.msra.mxu0 0.0
  %4539 = vmatprep.subr.mxu0 0.0
  %4540 = vmatpush1.msra.mxu0 0.0
  %4541 = vmatprep.subr.mxu0 0.0
  %4542 = vmatpush1.msra.mxu0 0.0
  %4543 = vmatprep.subr.mxu0 0.0
  %4544 = vmatpush1.msra.mxu0 0.0
  %4545 = vmatprep.subr.mxu0 0.0
  %4546 = vmatpush1.msra.mxu0 0.0
  %4547 = vmatprep.subr.mxu0 0.0
  %4548 = vmatpush1.msra.mxu0 0.0
  %4549 = vmatprep.subr.mxu0 0.0
  %4550 = vmatpush1.msra.mxu0 0.0
  %4551 = vmatprep.subr.mxu0 0.0
  %4552 = vmatpush1.msra.mxu0 0.0
  %4553 = vmatprep.subr.mxu0 0.0
  %4554 = vmatpush1.msra.mxu0 0.0
  %4555 = vmatprep.subr.mxu0 0.0
  %4556 = vmatpush1.msra.mxu0 0.0
  %4557 = vmatprep.subr.mxu0 0.0
  %4558 = vmatpush1.msra.mxu0 0.0
  %4559 = vmatprep.subr.mxu0 %v4074
  %4560 = vmatpush1.msra.mxu0 %v4073
  %4561 = vmatprep.subr.mxu0 %v4072
  %4562 = vmatpush1.msra.mxu0 %v4071
  %4563 = vmatprep.subr.mxu0 %v4070
  %4564 = vmatpush1.msra.mxu0 %v4069
  %4565 = vmatprep.subr.mxu0 %v4068
  %4566 = vmatpush1.msra.mxu0 %v4067
  %4567 = vmatprep.subr.mxu0 0.0
  %4568 = vmatpush2.msra.mxu0 0.0
  %4569 = vmatprep.subr.mxu0 0.0
  %4570 = vmatpush2.msra.mxu0 0.0
  %4571 = vmatprep.subr.mxu0 0.0
  %4572 = vmatpush2.msra.mxu0 0.0
  %4573 = vmatprep.subr.mxu0 0.0
  %4574 = vmatpush2.msra.mxu0 0.0
  %4575 = vmatprep.subr.mxu0 0.0
  %4576 = vmatpush2.msra.mxu0 0.0
  %4577 = vmatprep.subr.mxu0 0.0
  %4578 = vmatpush2.msra.mxu0 0.0
  %4579 = vmatprep.subr.mxu0 0.0
  %4580 = vmatpush2.msra.mxu0 0.0
  %4581 = vmatprep.subr.mxu0 0.0
  %4582 = vmatpush2.msra.mxu0 0.0
  %4583 = vmatprep.subr.mxu0 0.0
  %4584 = vmatpush2.msra.mxu0 0.0
  %4585 = vmatprep.subr.mxu0 0.0
  %4586 = vmatpush2.msra.mxu0 0.0
  %4587 = vmatprep.subr.mxu0 0.0
  %4588 = vmatpush2.msra.mxu0 0.0
  %4589 = vmatprep.subr.mxu0 0.0
  %4590 = vmatpush2.msra.mxu0 0.0
  %4591 = vmatprep.subr.mxu0 0.0
  %4592 = vmatpush2.msra.mxu0 0.0
  %4593 = vmatprep.subr.mxu0 0.0
  %4594 = vmatpush2.msra.mxu0 0.0
  %4595 = vmatprep.subr.mxu0 0.0
  %4596 = vmatpush2.msra.mxu0 0.0
  %4597 = vmatprep.subr.mxu0 0.0
  %4598 = vmatpush2.msra.mxu0 0.0
  %4599 = vmatprep.mubr.f32.mxu0 0.0
  %4600 = vmatmul.mubr.f32.gmra.mxu0 %v4533
  %v4601 = vpop.f32.mrf.mxu0
  %v4602 = vadd.f32 0.0, %v4601
  %v4603 = vpop.f32.mrf.mxu0
  %v4604 = vadd.f32 0.0, %v4603
  %4605 = vdwg.mxu0
  %v4606 = vadd.f32 %v4065, %v4602
  %v4608 = vrot.slane %v4604, 4
  %v4610 = vadd.f32 %v4064, %v4608
  %v4612 = vrot.slane %v4610, 4
  %v4614 = vsel %vm306, %v4606, %v4612
  %v4615 = vxor.u32 %v4614, 2147483648
  %v4616 = vmul.f32 %v4615, 1.442695
  %v4617 = vpow.pop %v4616
  %v4618 = vadd.f32 %v4617, 1.0
  %v4619 = vrcp.pop %v4618
  %v4620 = vmul.f32 1.0, %v4619
  %v4621 = vtanh.pop %v4614
  %v4622 = vmul.f32 %v4620, %v4520
  %4624 = vrot.lane.b32.xlu0 %v4621, 64
  %v4625 = vpop.permute.xlu0 %4624
  %v4627 = vmul.f32 %v4620, %v4625
  %4629 = vrot.lane.b32.xlu0 %v4627, 32
  %v4630 = vpop.permute.xlu0 %4629
  %v4632 = vadd.f32 %v4622, %v4630
  %v4633 = vtanh.pop %v4632
  %4635 = vrot.lane.b32.xlu0 %v4633, 64
  %v4636 = vpop.permute.xlu0 %4635
  %v4638 = vmul.f32 %v4620, %v4636
  %4640 = vrot.lane.b32.xlu0 %v4638, 32
  %v4641 = vpop.permute.xlu0 %4640
  %4643 = vst.msk [vmem:[#allocation4 + $0x8] sm:$0x3] %vm3053, %v4641
  %4644 = vst.msk [vmem:[#allocation5 + $0x4] sm:$0xc] %vm3055, %v4641
  %v4645 = vsel %vm501, %v4641, 0
  %4647 = vmatprep.subr.mxu0 0.0
  %4648 = vmatpush1.msra.mxu0 0.0
  %4649 = vmatprep.subr.mxu0 0.0
  %4650 = vmatpush1.msra.mxu0 0.0
  %4651 = vmatprep.subr.mxu0 0.0
  %4652 = vmatpush1.msra.mxu0 0.0
  %4653 = vmatprep.subr.mxu0 0.0
  %4654 = vmatpush1.msra.mxu0 0.0
  %4655 = vmatprep.subr.mxu0 0.0
  %4656 = vmatpush1.msra.mxu0 0.0
  %4657 = vmatprep.subr.mxu0 0.0
  %4658 = vmatpush1.msra.mxu0 0.0
  %4659 = vmatprep.subr.mxu0 0.0
  %4660 = vmatpush1.msra.mxu0 0.0
  %4661 = vmatprep.subr.mxu0 0.0
  %4662 = vmatpush1.msra.mxu0 0.0
  %4663 = vmatprep.subr.mxu0 0.0
  %4664 = vmatpush1.msra.mxu0 0.0
  %4665 = vmatprep.subr.mxu0 0.0
  %4666 = vmatpush1.msra.mxu0 0.0
  %4667 = vmatprep.subr.mxu0 0.0
  %4668 = vmatpush1.msra.mxu0 0.0
  %4669 = vmatprep.subr.mxu0 0.0
  %4670 = vmatpush1.msra.mxu0 0.0
  %4671 = vmatprep.subr.mxu0 %v4074
  %4672 = vmatpush1.msra.mxu0 %v4073
  %4673 = vmatprep.subr.mxu0 %v4072
  %4674 = vmatpush1.msra.mxu0 %v4071
  %4675 = vmatprep.subr.mxu0 %v4070
  %4676 = vmatpush1.msra.mxu0 %v4069
  %4677 = vmatprep.subr.mxu0 %v4068
  %4678 = vmatpush1.msra.mxu0 %v4067
  %4679 = vmatprep.subr.mxu0 0.0
  %4680 = vmatpush2.msra.mxu0 0.0
  %4681 = vmatprep.subr.mxu0 0.0
  %4682 = vmatpush2.msra.mxu0 0.0
  %4683 = vmatprep.subr.mxu0 0.0
  %4684 = vmatpush2.msra.mxu0 0.0
  %4685 = vmatprep.subr.mxu0 0.0
  %4686 = vmatpush2.msra.mxu0 0.0
  %4687 = vmatprep.subr.mxu0 0.0
  %4688 = vmatpush2.msra.mxu0 0.0
  %4689 = vmatprep.subr.mxu0 0.0
  %4690 = vmatpush2.msra.mxu0 0.0
  %4691 = vmatprep.subr.mxu0 0.0
  %4692 = vmatpush2.msra.mxu0 0.0
  %4693 = vmatprep.subr.mxu0 0.0
  %4694 = vmatpush2.msra.mxu0 0.0
  %4695 = vmatprep.subr.mxu0 0.0
  %4696 = vmatpush2.msra.mxu0 0.0
  %4697 = vmatprep.subr.mxu0 0.0
  %4698 = vmatpush2.msra.mxu0 0.0
  %4699 = vmatprep.subr.mxu0 0.0
  %4700 = vmatpush2.msra.mxu0 0.0
  %4701 = vmatprep.subr.mxu0 0.0
  %4702 = vmatpush2.msra.mxu0 0.0
  %4703 = vmatprep.subr.mxu0 0.0
  %4704 = vmatpush2.msra.mxu0 0.0
  %4705 = vmatprep.subr.mxu0 0.0
  %4706 = vmatpush2.msra.mxu0 0.0
  %4707 = vmatprep.subr.mxu0 0.0
  %4708 = vmatpush2.msra.mxu0 0.0
  %4709 = vmatprep.subr.mxu0 0.0
  %4710 = vmatpush2.msra.mxu0 0.0
  %4711 = vmatprep.mubr.f32.mxu0 0.0
  %4712 = vmatmul.mubr.f32.gmra.mxu0 %v4645
  %v4713 = vpop.f32.mrf.mxu0
  %v4714 = vadd.f32 0.0, %v4713
  %v4715 = vpop.f32.mrf.mxu0
  %v4716 = vadd.f32 0.0, %v4715
  %4717 = vdwg.mxu0
  %v4719 = vrot.slane %v4714, 6
  %v4721 = vadd.f32 %v4065, %v4719
  %v4723 = vrot.slane %v4716, 6
  %v4725 = vadd.f32 %v4064, %v4723
  %v4727 = vrot.slane %v4721, 2
  %v4730 = vrot.slane %v4725, 2
  %v4732 = vsel %vm306, %v4727, %v4730
  %v4733 = vxor.u32 %v4732, 2147483648
  %v4734 = vmul.f32 %v4733, 1.442695
  %v4735 = vpow.pop %v4734
  %v4736 = vadd.f32 %v4735, 1.0
  %v4737 = vrcp.pop %v4736
  %v4738 = vmul.f32 1.0, %v4737
  %v4739 = vtanh.pop %v4732
  %v4740 = vmul.f32 %v4738, %v4632
  %4742 = vrot.lane.b32.xlu0 %v4739, 64
  %v4743 = vpop.permute.xlu0 %4742
  %v4745 = vmul.f32 %v4738, %v4743
  %4747 = vrot.lane.b32.xlu0 %v4745, 32
  %v4748 = vpop.permute.xlu0 %4747
  %v4750 = vadd.f32 %v4740, %v4748
  %v4751 = vtanh.pop %v4750
  %4753 = vrot.lane.b32.xlu0 %v4751, 64
  %v4754 = vpop.permute.xlu0 %4753
  %v4756 = vmul.f32 %v4738, %v4754
  %4758 = vrot.lane.b32.xlu0 %v4756, 32
  %v4759 = vpop.permute.xlu0 %4758
  %4761 = vst.msk [vmem:[#allocation4 + $0xa] sm:$0x3] %vm3053, %v4759
  %4762 = vst.msk [vmem:[#allocation5 + $0x2] sm:$0xc] %vm3055, %v4759
  %v4763 = vsel %vm501, %v4759, 0
  %4765 = vmatprep.subr.mxu0 0.0
  %4766 = vmatpush1.msra.mxu0 0.0
  %4767 = vmatprep.subr.mxu0 0.0
  %4768 = vmatpush1.msra.mxu0 0.0
  %4769 = vmatprep.subr.mxu0 0.0
  %4770 = vmatpush1.msra.mxu0 0.0
  %4771 = vmatprep.subr.mxu0 0.0
  %4772 = vmatpush1.msra.mxu0 0.0
  %4773 = vmatprep.subr.mxu0 0.0
  %4774 = vmatpush1.msra.mxu0 0.0
  %4775 = vmatprep.subr.mxu0 0.0
  %4776 = vmatpush1.msra.mxu0 0.0
  %4777 = vmatprep.subr.mxu0 0.0
  %4778 = vmatpush1.msra.mxu0 0.0
  %4779 = vmatprep.subr.mxu0 0.0
  %4780 = vmatpush1.msra.mxu0 0.0
  %4781 = vmatprep.subr.mxu0 0.0
  %4782 = vmatpush1.msra.mxu0 0.0
  %4783 = vmatprep.subr.mxu0 0.0
  %4784 = vmatpush1.msra.mxu0 0.0
  %4785 = vmatprep.subr.mxu0 0.0
  %4786 = vmatpush1.msra.mxu0 0.0
  %4787 = vmatprep.subr.mxu0 0.0
  %4788 = vmatpush1.msra.mxu0 0.0
  %4789 = vmatprep.subr.mxu0 %v4074
  %4790 = vmatpush1.msra.mxu0 %v4073
  %4791 = vmatprep.subr.mxu0 %v4072
  %4792 = vmatpush1.msra.mxu0 %v4071
  %4793 = vmatprep.subr.mxu0 %v4070
  %4794 = vmatpush1.msra.mxu0 %v4069
  %4795 = vmatprep.subr.mxu0 %v4068
  %4796 = vmatpush1.msra.mxu0 %v4067
  %4797 = vmatprep.subr.mxu0 0.0
  %4798 = vmatpush2.msra.mxu0 0.0
  %4799 = vmatprep.subr.mxu0 0.0
  %4800 = vmatpush2.msra.mxu0 0.0
  %4801 = vmatprep.subr.mxu0 0.0
  %4802 = vmatpush2.msra.mxu0 0.0
  %4803 = vmatprep.subr.mxu0 0.0
  %4804 = vmatpush2.msra.mxu0 0.0
  %4805 = vmatprep.subr.mxu0 0.0
  %4806 = vmatpush2.msra.mxu0 0.0
  %4807 = vmatprep.subr.mxu0 0.0
  %4808 = vmatpush2.msra.mxu0 0.0
  %4809 = vmatprep.subr.mxu0 0.0
  %4810 = vmatpush2.msra.mxu0 0.0
  %4811 = vmatprep.subr.mxu0 0.0
  %4812 = vmatpush2.msra.mxu0 0.0
  %4813 = vmatprep.subr.mxu0 0.0
  %4814 = vmatpush2.msra.mxu0 0.0
  %4815 = vmatprep.subr.mxu0 0.0
  %4816 = vmatpush2.msra.mxu0 0.0
  %4817 = vmatprep.subr.mxu0 0.0
  %4818 = vmatpush2.msra.mxu0 0.0
  %4819 = vmatprep.subr.mxu0 0.0
  %4820 = vmatpush2.msra.mxu0 0.0
  %4821 = vmatprep.subr.mxu0 0.0
  %4822 = vmatpush2.msra.mxu0 0.0
  %4823 = vmatprep.subr.mxu0 0.0
  %4824 = vmatpush2.msra.mxu0 0.0
  %4825 = vmatprep.subr.mxu0 0.0
  %4826 = vmatpush2.msra.mxu0 0.0
  %4827 = vmatprep.subr.mxu0 0.0
  %4828 = vmatpush2.msra.mxu0 0.0
  %4829 = vmatprep.mubr.f32.mxu0 0.0
  %4830 = vmatmul.mubr.f32.gmra.mxu0 %v4763
  %v4831 = vpop.f32.mrf.mxu0
  %v4832 = vadd.f32 0.0, %v4831
  %v4833 = vpop.f32.mrf.mxu0
  %v4834 = vadd.f32 0.0, %v4833
  %4835 = vdwg.mxu0
  %v4837 = vrot.slane %v4832, 4
  %v4839 = vadd.f32 %v4065, %v4837
  %v4840 = vadd.f32 %v4064, %v4834
  %v4842 = vrot.slane %v4839, 4
  %v4844 = vsel %vm306, %v4842, %v4840
  %v4845 = vxor.u32 %v4844, 2147483648
  %v4846 = vmul.f32 %v4845, 1.442695
  %v4847 = vpow.pop %v4846
  %v4848 = vadd.f32 %v4847, 1.0
  %v4849 = vrcp.pop %v4848
  %v4850 = vmul.f32 1.0, %v4849
  %v4851 = vtanh.pop %v4844
  %v4852 = vmul.f32 %v4850, %v4750
  %4854 = vrot.lane.b32.xlu0 %v4851, 64
  %v4855 = vpop.permute.xlu0 %4854
  %v4857 = vmul.f32 %v4850, %v4855
  %4859 = vrot.lane.b32.xlu0 %v4857, 32
  %v4860 = vpop.permute.xlu0 %4859
  %v4862 = vadd.f32 %v4852, %v4860
  %v4863 = vtanh.pop %v4862
  %4865 = vrot.lane.b32.xlu0 %v4863, 64
  %v4866 = vpop.permute.xlu0 %4865
  %v4868 = vmul.f32 %v4850, %v4866
  %4870 = vrot.lane.b32.xlu0 %v4868, 32
  %v4871 = vpop.permute.xlu0 %4870
  %4873 = vst.msk [vmem:[#allocation4 + $0xc] sm:$0x3] %vm3053, %v4871
  %4874 = vst.msk [vmem:[#allocation5] sm:$0xc] %vm3055, %v4871
  %v4875 = vsel %vm501, %v4871, 0
  %4877 = vmatprep.subr.mxu0 0.0
  %4878 = vmatpush1.msra.mxu0 0.0
  %4879 = vmatprep.subr.mxu0 0.0
  %4880 = vmatpush1.msra.mxu0 0.0
  %4881 = vmatprep.subr.mxu0 0.0
  %4882 = vmatpush1.msra.mxu0 0.0
  %4883 = vmatprep.subr.mxu0 0.0
  %4884 = vmatpush1.msra.mxu0 0.0
  %4885 = vmatprep.subr.mxu0 0.0
  %4886 = vmatpush1.msra.mxu0 0.0
  %4887 = vmatprep.subr.mxu0 0.0
  %4888 = vmatpush1.msra.mxu0 0.0
  %4889 = vmatprep.subr.mxu0 0.0
  %4890 = vmatpush1.msra.mxu0 0.0
  %4891 = vmatprep.subr.mxu0 0.0
  %4892 = vmatpush1.msra.mxu0 0.0
  %4893 = vmatprep.subr.mxu0 0.0
  %4894 = vmatpush1.msra.mxu0 0.0
  %4895 = vmatprep.subr.mxu0 0.0
  %4896 = vmatpush1.msra.mxu0 0.0
  %4897 = vmatprep.subr.mxu0 0.0
  %4898 = vmatpush1.msra.mxu0 0.0
  %4899 = vmatprep.subr.mxu0 0.0
  %4900 = vmatpush1.msra.mxu0 0.0
  %4901 = vmatprep.subr.mxu0 %v4074
  %4902 = vmatpush1.msra.mxu0 %v4073
  %4903 = vmatprep.subr.mxu0 %v4072
  %4904 = vmatpush1.msra.mxu0 %v4071
  %4905 = vmatprep.subr.mxu0 %v4070
  %4906 = vmatpush1.msra.mxu0 %v4069
  %4907 = vmatprep.subr.mxu0 %v4068
  %4908 = vmatpush1.msra.mxu0 %v4067
  %4909 = vmatprep.subr.mxu0 0.0
  %4910 = vmatpush2.msra.mxu0 0.0
  %4911 = vmatprep.subr.mxu0 0.0
  %4912 = vmatpush2.msra.mxu0 0.0
  %4913 = vmatprep.subr.mxu0 0.0
  %4914 = vmatpush2.msra.mxu0 0.0
  %4915 = vmatprep.subr.mxu0 0.0
  %4916 = vmatpush2.msra.mxu0 0.0
  %4917 = vmatprep.subr.mxu0 0.0
  %4918 = vmatpush2.msra.mxu0 0.0
  %4919 = vmatprep.subr.mxu0 0.0
  %4920 = vmatpush2.msra.mxu0 0.0
  %4921 = vmatprep.subr.mxu0 0.0
  %4922 = vmatpush2.msra.mxu0 0.0
  %4923 = vmatprep.subr.mxu0 0.0
  %4924 = vmatpush2.msra.mxu0 0.0
  %4925 = vmatprep.subr.mxu0 0.0
  %4926 = vmatpush2.msra.mxu0 0.0
  %4927 = vmatprep.subr.mxu0 0.0
  %4928 = vmatpush2.msra.mxu0 0.0
  %4929 = vmatprep.subr.mxu0 0.0
  %4930 = vmatpush2.msra.mxu0 0.0
  %4931 = vmatprep.subr.mxu0 0.0
  %4932 = vmatpush2.msra.mxu0 0.0
  %4933 = vmatprep.subr.mxu0 0.0
  %4934 = vmatpush2.msra.mxu0 0.0
  %4935 = vmatprep.subr.mxu0 0.0
  %4936 = vmatpush2.msra.mxu0 0.0
  %4937 = vmatprep.subr.mxu0 0.0
  %4938 = vmatpush2.msra.mxu0 0.0
  %4939 = vmatprep.subr.mxu0 0.0
  %4940 = vmatpush2.msra.mxu0 0.0
  %4941 = vmatprep.mubr.f32.mxu0 0.0
  %4942 = vmatmul.mubr.f32.gmra.mxu0 %v4875
  %v4943 = vpop.f32.mrf.mxu0
  %v4944 = vadd.f32 0.0, %v4943
  %v4945 = vpop.f32.mrf.mxu0
  %v4946 = vadd.f32 0.0, %v4945
  %4947 = vdwg.mxu0
  %v4949 = vrot.slane %v4944, 2
  %v4951 = vadd.f32 %v4065, %v4949
  %v4953 = vrot.slane %v4946, 2
  %v4955 = vadd.f32 %v4064, %v4953
  %v4957 = vrot.slane %v4951, 6
  %v4960 = vrot.slane %v4955, 6
  %v4962 = vsel %vm306, %v4957, %v4960
  %v4963 = vxor.u32 %v4962, 2147483648
  %v4964 = vmul.f32 %v4963, 1.442695
  %v4965 = vpow.pop %v4964
  %v4966 = vadd.f32 %v4965, 1.0
  %v4967 = vrcp.pop %v4966
  %v4968 = vmul.f32 1.0, %v4967
  %v4969 = vtanh.pop %v4962
  %v4970 = vmul.f32 %v4968, %v4862
  %4972 = vrot.lane.b32.xlu0 %v4969, 64
  %v4973 = vpop.permute.xlu0 %4972
  %v4975 = vmul.f32 %v4968, %v4973
  %4977 = vrot.lane.b32.xlu0 %v4975, 32
  %v4978 = vpop.permute.xlu0 %4977
  %v4980 = vadd.f32 %v4970, %v4978
  %v4981 = vtanh.pop %v4980
  %4983 = vrot.lane.b32.xlu0 %v4981, 64
  %v4984 = vpop.permute.xlu0 %4983
  %v4986 = vmul.f32 %v4968, %v4984
  %4988 = vrot.lane.b32.xlu0 %v4986, 32
  %v4989 = vpop.permute.xlu0 %4988
  %4991 = vst.msk [vmem:[#allocation4 + $0xe] sm:$0x3] %vm3053, %v4989
  %4992 = vst.msk [vmem:[#allocation5 - $0x2] sm:$0xc] %vm3055, %v4989
  %v4993 = vld [vmem:[#allocation4] sm:$0xff]
  %v4994 = vld [vmem:[#allocation4 + $0x8] sm:$0xff]
  %v4995 = vmul.f32 %v4993, %v2822
  %v4996 = vmul.f32 %v4994, %v2827
  %v4997 = vld [vmem:[#allocation5] sm:$0xff]
  %v4998 = vld [vmem:[#allocation5 + $0x8] sm:$0xff]
  %v4999 = vmul.f32 %v4997, %v2822
  %v5000 = vmul.f32 %v4998, %v2827
  %v5001 = vld [vmem:[%s13] sm:$0xff]
  %v5002 = vld [vmem:[%s13 + $0x8] sm:$0xff]
  %v5003 = vld [vmem:[%s13 + $0x10] sm:$0xff]
  %v5004 = vld [vmem:[%s13 + $0x18] sm:$0xff]
  %v5005 = vld [vmem:[%s13 + $0x20] sm:$0xff]
  %v5006 = vld [vmem:[%s13 + $0x28] sm:$0xff]
  %v5007 = vld [vmem:[%s13 + $0x30] sm:$0xff]
  %v5008 = vld [vmem:[%s13 + $0x38] sm:$0xff]
  %v5010 = vsel %vm501, %v4999, 0
  %v5013 = vsel %vm501, %v5000, 0
  %5015 = vmatprep.subr.mxu0 0.0
  %5016 = vmatpush1.msra.mxu0 0.0
  %5017 = vmatprep.subr.mxu0 0.0
  %5018 = vmatpush1.msra.mxu0 0.0
  %5019 = vmatprep.subr.mxu0 0.0
  %5020 = vmatpush1.msra.mxu0 0.0
  %5021 = vmatprep.subr.mxu0 0.0
  %5022 = vmatpush1.msra.mxu0 0.0
  %5023 = vmatprep.subr.mxu0 0.0
  %5024 = vmatpush1.msra.mxu0 0.0
  %5025 = vmatprep.subr.mxu0 0.0
  %5026 = vmatpush1.msra.mxu0 0.0
  %5027 = vmatprep.subr.mxu0 0.0
  %5028 = vmatpush1.msra.mxu0 0.0
  %5029 = vmatprep.subr.mxu0 0.0
  %5030 = vmatpush1.msra.mxu0 0.0
  %5031 = vmatprep.subr.mxu0 0.0
  %5032 = vmatpush1.msra.mxu0 0.0
  %5033 = vmatprep.subr.mxu0 0.0
  %5034 = vmatpush1.msra.mxu0 0.0
  %5035 = vmatprep.subr.mxu0 0.0
  %5036 = vmatpush1.msra.mxu0 0.0
  %5037 = vmatprep.subr.mxu0 0.0
  %5038 = vmatpush1.msra.mxu0 0.0
  %5039 = vmatprep.subr.mxu0 0.0
  %5040 = vmatpush1.msra.mxu0 %v5008
  %5041 = vmatprep.subr.mxu0 0.0
  %5042 = vmatpush1.msra.mxu0 %v5007
  %5043 = vmatprep.subr.mxu0 0.0
  %5044 = vmatpush1.msra.mxu0 %v5006
  %5045 = vmatprep.subr.mxu0 0.0
  %5046 = vmatpush1.msra.mxu0 %v5005
  %5047 = vmatprep.subr.mxu0 0.0
  %5048 = vmatpush2.msra.mxu0 0.0
  %5049 = vmatprep.subr.mxu0 0.0
  %5050 = vmatpush2.msra.mxu0 0.0
  %5051 = vmatprep.subr.mxu0 0.0
  %5052 = vmatpush2.msra.mxu0 0.0
  %5053 = vmatprep.subr.mxu0 0.0
  %5054 = vmatpush2.msra.mxu0 0.0
  %5055 = vmatprep.subr.mxu0 0.0
  %5056 = vmatpush2.msra.mxu0 0.0
  %5057 = vmatprep.subr.mxu0 0.0
  %5058 = vmatpush2.msra.mxu0 0.0
  %5059 = vmatprep.subr.mxu0 0.0
  %5060 = vmatpush2.msra.mxu0 0.0
  %5061 = vmatprep.subr.mxu0 0.0
  %5062 = vmatpush2.msra.mxu0 0.0
  %5063 = vmatprep.subr.mxu0 0.0
  %5064 = vmatpush2.msra.mxu0 0.0
  %5065 = vmatprep.subr.mxu0 0.0
  %5066 = vmatpush2.msra.mxu0 0.0
  %5067 = vmatprep.subr.mxu0 0.0
  %5068 = vmatpush2.msra.mxu0 0.0
  %5069 = vmatprep.subr.mxu0 0.0
  %5070 = vmatpush2.msra.mxu0 0.0
  %5071 = vmatprep.subr.mxu0 0.0
  %5072 = vmatpush2.msra.mxu0 0.0
  %5073 = vmatprep.subr.mxu0 0.0
  %5074 = vmatpush2.msra.mxu0 0.0
  %5075 = vmatprep.subr.mxu0 0.0
  %5076 = vmatpush2.msra.mxu0 0.0
  %5077 = vmatprep.subr.mxu0 0.0
  %5078 = vmatpush2.msra.mxu0 0.0
  %5079 = vmatprep.mubr.f32.mxu0 0.0
  %5080 = vmatmul.mubr.f32.gmra.mxu0 %v5010
  %v5081 = vpop.f32.mrf.mxu0
  %v5082 = vadd.f32 0.0, %v5081
  %v5083 = vpop.f32.mrf.mxu0
  %5084 = vmatprep.mubr.f32.mxu0 0.0
  %5085 = vmatmul.mubr.f32.gmra.mxu0 %v5013
  %v5086 = vpop.f32.mrf.mxu0
  %v5087 = vadd.f32 0.0, %v5086
  %v5088 = vpop.f32.mrf.mxu0
  %5089 = vdwg.mxu0
  %v5091 = vsel %vm501, %v4995, 0
  %v5094 = vsel %vm501, %v4996, 0
  %5096 = vmatprep.subr.mxu0 0.0
  %5097 = vmatpush1.msra.mxu0 0.0
  %5098 = vmatprep.subr.mxu0 0.0
  %5099 = vmatpush1.msra.mxu0 0.0
  %5100 = vmatprep.subr.mxu0 0.0
  %5101 = vmatpush1.msra.mxu0 0.0
  %5102 = vmatprep.subr.mxu0 0.0
  %5103 = vmatpush1.msra.mxu0 0.0
  %5104 = vmatprep.subr.mxu0 0.0
  %5105 = vmatpush1.msra.mxu0 0.0
  %5106 = vmatprep.subr.mxu0 0.0
  %5107 = vmatpush1.msra.mxu0 0.0
  %5108 = vmatprep.subr.mxu0 0.0
  %5109 = vmatpush1.msra.mxu0 0.0
  %5110 = vmatprep.subr.mxu0 0.0
  %5111 = vmatpush1.msra.mxu0 0.0
  %5112 = vmatprep.subr.mxu0 0.0
  %5113 = vmatpush1.msra.mxu0 0.0
  %5114 = vmatprep.subr.mxu0 0.0
  %5115 = vmatpush1.msra.mxu0 0.0
  %5116 = vmatprep.subr.mxu0 0.0
  %5117 = vmatpush1.msra.mxu0 0.0
  %5118 = vmatprep.subr.mxu0 0.0
  %5119 = vmatpush1.msra.mxu0 0.0
  %5120 = vmatprep.subr.mxu0 0.0
  %5121 = vmatpush1.msra.mxu0 %v5004
  %5122 = vmatprep.subr.mxu0 0.0
  %5123 = vmatpush1.msra.mxu0 %v5003
  %5124 = vmatprep.subr.mxu0 0.0
  %5125 = vmatpush1.msra.mxu0 %v5002
  %5126 = vmatprep.subr.mxu0 0.0
  %5127 = vmatpush1.msra.mxu0 %v5001
  %5128 = vmatprep.subr.mxu0 0.0
  %5129 = vmatpush2.msra.mxu0 0.0
  %5130 = vmatprep.subr.mxu0 0.0
  %5131 = vmatpush2.msra.mxu0 0.0
  %5132 = vmatprep.subr.mxu0 0.0
  %5133 = vmatpush2.msra.mxu0 0.0
  %5134 = vmatprep.subr.mxu0 0.0
  %5135 = vmatpush2.msra.mxu0 0.0
  %5136 = vmatprep.subr.mxu0 0.0
  %5137 = vmatpush2.msra.mxu0 0.0
  %5138 = vmatprep.subr.mxu0 0.0
  %5139 = vmatpush2.msra.mxu0 0.0
  %5140 = vmatprep.subr.mxu0 0.0
  %5141 = vmatpush2.msra.mxu0 0.0
  %5142 = vmatprep.subr.mxu0 0.0
  %5143 = vmatpush2.msra.mxu0 0.0
  %5144 = vmatprep.subr.mxu0 0.0
  %5145 = vmatpush2.msra.mxu0 0.0
  %5146 = vmatprep.subr.mxu0 0.0
  %5147 = vmatpush2.msra.mxu0 0.0
  %5148 = vmatprep.subr.mxu0 0.0
  %5149 = vmatpush2.msra.mxu0 0.0
  %5150 = vmatprep.subr.mxu0 0.0
  %5151 = vmatpush2.msra.mxu0 0.0
  %5152 = vmatprep.subr.mxu0 0.0
  %5153 = vmatpush2.msra.mxu0 0.0
  %5154 = vmatprep.subr.mxu0 0.0
  %5155 = vmatpush2.msra.mxu0 0.0
  %5156 = vmatprep.subr.mxu0 0.0
  %5157 = vmatpush2.msra.mxu0 0.0
  %5158 = vmatprep.subr.mxu0 0.0
  %5159 = vmatpush2.msra.mxu0 0.0
  %5160 = vmatprep.mubr.f32.mxu0 0.0
  %5161 = vmatmul.mubr.f32.gmra.mxu0 %v5091
  %v5162 = vpop.f32.mrf.mxu0
  %v5163 = vadd.f32 %v5082, %v5162
  %v5164 = vpop.f32.mrf.mxu0
  %5165 = vmatprep.mubr.f32.mxu0 0.0
  %5166 = vmatmul.mubr.f32.gmra.mxu0 %v5094
  %v5167 = vpop.f32.mrf.mxu0
  %v5168 = vadd.f32 %v5087, %v5167
  %v5169 = vpop.f32.mrf.mxu0
  %5170 = vdwg.mxu0
  %v5171 = vld [vmem:[%s14] sm:$0x1]
  %v5173 = vlaneseq
  %v5174 = vshrl.u32 %v5173, 7
  %v5175 = vsub.s32 0, %v5174
  %v5176 = vrot.slane %v5171, %v5175
  %v5178 = vadd.f32 %v5163, %v5176
  %v5179 = vadd.f32 %v5168, %v5176
  %v5180 = vmax.f32 %v5178, 0.0
  %v5181 = vmax.f32 %v5179, 0.0
  %v5182 = vld [vmem:[%s15] sm:$0xff]
  %v5183 = vld [vmem:[%s15 + $0x8] sm:$0xff]
  %v5184 = vld [vmem:[%s15 + $0x10] sm:$0xff]
  %v5185 = vld [vmem:[%s15 + $0x18] sm:$0xff]
  %v5186 = vld [vmem:[%s16] sm:$0x1]
  %v5188 = vlaneseq
  %v5189 = vshrl.u32 %v5188, 7
  %v5190 = vsub.s32 0, %v5189
  %v5191 = vrot.slane %v5186, %v5190
  %v5194 = vsel %vm501, %v5180, 0
  %v5197 = vsel %vm501, %v5181, 0
  %5199 = vmatprep.subr.mxu0 0.0
  %5200 = vmatpush1.msra.mxu0 0.0
  %5201 = vmatprep.subr.mxu0 0.0
  %5202 = vmatpush1.msra.mxu0 0.0
  %5203 = vmatprep.subr.mxu0 0.0
  %5204 = vmatpush1.msra.mxu0 0.0
  %5205 = vmatprep.subr.mxu0 0.0
  %5206 = vmatpush1.msra.mxu0 0.0
  %5207 = vmatprep.subr.mxu0 0.0
  %5208 = vmatpush1.msra.mxu0 0.0
  %5209 = vmatprep.subr.mxu0 0.0
  %5210 = vmatpush1.msra.mxu0 0.0
  %5211 = vmatprep.subr.mxu0 0.0
  %5212 = vmatpush1.msra.mxu0 0.0
  %5213 = vmatprep.subr.mxu0 0.0
  %5214 = vmatpush1.msra.mxu0 0.0
  %5215 = vmatprep.subr.mxu0 0.0
  %5216 = vmatpush1.msra.mxu0 0.0
  %5217 = vmatprep.subr.mxu0 0.0
  %5218 = vmatpush1.msra.mxu0 0.0
  %5219 = vmatprep.subr.mxu0 0.0
  %5220 = vmatpush1.msra.mxu0 0.0
  %5221 = vmatprep.subr.mxu0 0.0
  %5222 = vmatpush1.msra.mxu0 0.0
  %5223 = vmatprep.subr.mxu0 0.0
  %5224 = vmatpush1.msra.mxu0 %v5185
  %5225 = vmatprep.subr.mxu0 0.0
  %5226 = vmatpush1.msra.mxu0 %v5184
  %5227 = vmatprep.subr.mxu0 0.0
  %5228 = vmatpush1.msra.mxu0 %v5183
  %5229 = vmatprep.subr.mxu0 0.0
  %5230 = vmatpush1.msra.mxu0 %v5182
  %5231 = vmatprep.subr.mxu0 0.0
  %5232 = vmatpush2.msra.mxu0 0.0
  %5233 = vmatprep.subr.mxu0 0.0
  %5234 = vmatpush2.msra.mxu0 0.0
  %5235 = vmatprep.subr.mxu0 0.0
  %5236 = vmatpush2.msra.mxu0 0.0
  %5237 = vmatprep.subr.mxu0 0.0
  %5238 = vmatpush2.msra.mxu0 0.0
  %5239 = vmatprep.subr.mxu0 0.0
  %5240 = vmatpush2.msra.mxu0 0.0
  %5241 = vmatprep.subr.mxu0 0.0
  %5242 = vmatpush2.msra.mxu0 0.0
  %5243 = vmatprep.subr.mxu0 0.0
  %5244 = vmatpush2.msra.mxu0 0.0
  %5245 = vmatprep.subr.mxu0 0.0
  %5246 = vmatpush2.msra.mxu0 0.0
  %5247 = vmatprep.subr.mxu0 0.0
  %5248 = vmatpush2.msra.mxu0 0.0
  %5249 = vmatprep.subr.mxu0 0.0
  %5250 = vmatpush2.msra.mxu0 0.0
  %5251 = vmatprep.subr.mxu0 0.0
  %5252 = vmatpush2.msra.mxu0 0.0
  %5253 = vmatprep.subr.mxu0 0.0
  %5254 = vmatpush2.msra.mxu0 0.0
  %5255 = vmatprep.subr.mxu0 0.0
  %5256 = vmatpush2.msra.mxu0 0.0
  %5257 = vmatprep.subr.mxu0 0.0
  %5258 = vmatpush2.msra.mxu0 0.0
  %5259 = vmatprep.subr.mxu0 0.0
  %5260 = vmatpush2.msra.mxu0 0.0
  %5261 = vmatprep.subr.mxu0 0.0
  %5262 = vmatpush2.msra.mxu0 0.0
  %5263 = vmatprep.mubr.f32.mxu0 0.0
  %5264 = vmatmul.mubr.f32.gmra.mxu0 %v5194
  %v5265 = vpop.f32.mrf.mxu0
  %v5266 = vadd.f32 %v5191, %v5265
  %v5267 = vpop.f32.mrf.mxu0
  %5268 = vmatprep.mubr.f32.mxu0 0.0
  %5269 = vmatmul.mubr.f32.gmra.mxu0 %v5197
  %v5270 = vpop.f32.mrf.mxu0
  %v5271 = vadd.f32 %v5191, %v5270
  %v5272 = vpop.f32.mrf.mxu0
  %5273 = vdwg.mxu0
  %vm5274 = vcmask 56320
  %v5275 = vsel %vm5274, %v5266, -inf
  %5276 = vmax.xlane.f32.xlu0 %v5275
  %v5277 = vpop.xlane.xlu0 %5276
  %v5278 = vsel %vm5274, %v5271, -inf
  %5279 = vmax.xlane.f32.xlu0 %v5278
  %v5280 = vpop.xlane.xlu0 %5279
  %v5281 = vsub.f32 %v5266, %v5277
  %v5282 = vsub.f32 %v5271, %v5280
  %v5283 = vmul.f32 %v5281, 1.442695
  %v5284 = vpow.pop %v5283
  %v5285 = vmul.f32 %v5282, 1.442695
  %v5286 = vpow.pop %v5285
  %v5287 = vsel %vm5274, %v5284, 0.0
  %5288 = vadd.xlane.f32.xlu0 %v5287
  %v5289 = vpop.xlane.xlu0 %5288
  %v5290 = vsel %vm5274, %v5286, 0.0
  %5291 = vadd.xlane.f32.xlu0 %v5290
  %v5292 = vpop.xlane.xlu0 %5291
  %v5293 = vlog2.pop %v5289
  %v5294 = vmul.f32 %v5293, 0.6931472
  %v5295 = vlog2.pop %v5292
  %v5296 = vmul.f32 %v5295, 0.6931472
  %v5297 = vsub.f32 %v5281, %v5294
  %v5298 = vsub.f32 %v5282, %v5296
  %5299 = vst.msk [vmem:[%s17] sm:$0xff] %vm5274, %v5297
  %5300 = vst.msk [vmem:[%s17 + $0x8] sm:$0xff] %vm5274, %v5298
  // Predicated region
  $region70: #{end2end_forward.1} parent=0 // pred_check
    _
  $region71: #{end2end_forward.1} parent=0 // pred_check_branch
    %5302 = sbr.rel (0) target = $region73
  $region72: #{end2end_forward.1} parent=0 // pred_region
    _
  $region73: #{end2end_forward.1} parent=0 // pred_fallthru
    _
  // Predicated region
  $region74: #{end2end_forward.1} parent=0 // pred_check
    _
  $region75: #{end2end_forward.1} parent=0 // pred_check_branch
    %5304 = sbr.rel (0) target = $region77
  $region76: #{end2end_forward.1} parent=0 // pred_region
    _
  $region77: #{end2end_forward.1} parent=0 // pred_fallthru
    _

</llo_original>
